<compile_context>
chip_gen: v7x
topology: tpu7x:2x2x1
jax: 0.10.0
libtpu: 0.0.40
codegen_flags: <defaults>
</compile_context>

<pallas_src>
import functools

import jax
import jax.numpy as jnp
from jax.experimental import pallas as pl
from jax.experimental.pallas import tpu as pltpu

# Explicit VMEM budget: every kernel below needs < ~8 MiB, 32 MiB leaves ample
# headroom on v7x (64 MiB physical) while raising the v5e default.
_VMEM_LIMIT = 32 * 1024 * 1024


def _round_up(x, m):
    return (x + m - 1) // m * m


# ----------------------------------------------------------------------------
# Kernel 1: single-K-step matmul + fused bias (+ReLU), direct writeback
# (no scratch accumulator, no init/finalize phases).
# ----------------------------------------------------------------------------
def _matmul_bias_kernel(x_ref, w_ref, b_ref, o_ref, *, apply_relu):
    acc = jnp.dot(x_ref[...], w_ref[...], preferred_element_type=jnp.float32)
    acc = acc + b_ref[...]                      # (1, N) broadcasts over rows
    if apply_relu:
        acc = jnp.maximum(acc, 0.0)
    o_ref[...] = acc.astype(o_ref.dtype)


def _pick_tm(m_rows, k_cols, target_bytes=2 * 1024 * 1024):
    """X tile ~2 MiB (bf16), multiple of 8, clamped to [256, 4096]."""
    tm = target_bytes // (2 * k_cols)
    tm = min(4096, max(256, tm))
    tm = max(8, (tm // 8) * 8)
    return int(min(tm, m_rows))


def pallas_matmul_bias(x, w, b, *, apply_relu, out_dtype=jnp.bfloat16):
    """Y = x @ w + b (optional ReLU).  x:(M,K), w:(K,N), b:(N,).

    bf16 MXU inputs, f32 accumulation.  When N < 128 (and divides 128), q
    consecutive rows are packed into one lane-dense row of width q*N using a
    block-diagonal weight, so output stores are full 128-lane vst's.
    """
    M, K = x.shape
    Kw, N = w.shape
    assert K == Kw
    x = x.astype(jnp.bfloat16)
    w = w.astype(jnp.bfloat16)

    q = 128 // N if (N < 128 and 128 % N == 0) else 1

    Mp = _round_up(M, 8 * q)
    if Mp != M:
        x = jnp.pad(x, ((0, Mp - M), (0, 0)))

    if q > 1:
        xq = x.reshape(Mp // q, q * K)                      # free: contiguous
        wq = jnp.zeros((q, K, q, N), w.dtype)
        for r in range(q):                                   # block-diagonal
            wq = wq.at[r, :, r, :].set(w)
        wq = wq.reshape(q * K, q * N)
        bq = jnp.tile(b.astype(jnp.float32), q).reshape(1, q * N)
    else:
        xq = x
        wq = w
        bq = b.astype(jnp.float32).reshape(1, N)

    Mq, Kq = xq.shape
    Nq = wq.shape[1]

    tm = _pick_tm(Mq, Kq)
    grid = (pl.cdiv(Mq, tm),)

    out_isz = jnp.dtype(out_dtype).itemsize
    cost = pl.CostEstimate(
        flops=int(2 * Mq * Kq * Nq),
        transcendentals=0,
        bytes_accessed=int((Mq * Kq + Kq * Nq) * 2 + Nq * 4 + Mq * Nq * out_isz),
    )

    out = pl.pallas_call(
        functools.partial(_matmul_bias_kernel, apply_relu=apply_relu),
        out_shape=jax.ShapeDtypeStruct((Mq, Nq), out_dtype),
        grid=grid,
        in_specs=[
            pl.BlockSpec((tm, Kq), lambda i: (i, 0)),
            pl.BlockSpec((Kq, Nq), lambda i: (0, 0)),       # resident weight
            pl.BlockSpec((1, Nq), lambda i: (0, 0)),
        ],
        out_specs=pl.BlockSpec((tm, Nq), lambda i: (i, 0)),
        compiler_params=pltpu.CompilerParams(
            dimension_semantics=("parallel",),
            vmem_limit_bytes=_VMEM_LIMIT,
        ),
        cost_estimate=cost,
    )(xq, wq, bq)

    if q > 1:
        out = out.reshape(Mp, N)
    if Mp != M:
        out = out[:M]
    return out


# ----------------------------------------------------------------------------
# Kernel 2: per-output-row 3x3 stride-1 conv with all 9 taps fused in-kernel
# (no im2col materialization).
# ----------------------------------------------------------------------------
def _conv3x3_row_kernel(x0_ref, x1_ref, x2_ref, w_ref, b_ref, o_ref, *,
                        wo, cin, apply_relu):
    rows = (x0_ref[...], x1_ref[...], x2_ref[...])          # each (W+2, Cin)
    acc = None
    for di in range(3):
        for dj in range(3):
            t = di * 3 + dj
            d = jnp.dot(rows[di][dj:dj + wo, :],
                        w_ref[t * cin:(t + 1) * cin, :],
                        preferred_element_type=jnp.float32)
            acc = d if acc is None else acc + d
    acc = acc + b_ref[...]
    if apply_relu:
        acc = jnp.maximum(acc, 0.0)
    o_ref[...] = acc.astype(o_ref.dtype)


def conv3x3_s1(x, w, b, relu=True, out_dtype=jnp.bfloat16):
    """3x3, stride 1, pad 1 conv.  x: NHWC bf16, w: torch (Cout,Cin,3,3)."""
    N, H, W, Cin = x.shape
    Cout = w.shape[0]
    xp = jnp.pad(x.astype(jnp.bfloat16), ((0, 0), (1, 1), (1, 1), (0, 0)))
    wmat = jnp.transpose(w, (2, 3, 1, 0)).reshape(9 * Cin, Cout)
    wmat = wmat.astype(jnp.bfloat16)
    b2 = b.astype(jnp.float32).reshape(1, Cout)
    Wp = W + 2

    out_isz = jnp.dtype(out_dtype).itemsize
    cost = pl.CostEstimate(
        flops=int(2 * N * H * W * 9 * Cin * Cout),
        transcendentals=0,
        bytes_accessed=int(3 * N * H * Wp * Cin * 2 + 9 * Cin * Cout * 2
                           + Cout * 4 + N * H * W * Cout * out_isz),
    )

    # The same padded array is passed three times with row-shifted index maps;
    # each grid step DMAs rows h, h+1, h+2 (no 9x im2col copy ever exists).
    row_specs = [
        pl.BlockSpec((None, None, Wp, Cin), (lambda n, h, _d=d: (n, h + _d, 0, 0)))
        for d in range(3)
    ]
    out = pl.pallas_call(
        functools.partial(_conv3x3_row_kernel, wo=W, cin=Cin, apply_relu=relu),
        out_shape=jax.ShapeDtypeStruct((N, H, W, Cout), out_dtype),
        grid=(N, H),
        in_specs=row_specs + [
            pl.BlockSpec((9 * Cin, Cout), lambda n, h: (0, 0)),   # resident
            pl.BlockSpec((1, Cout), lambda n, h: (0, 0)),
        ],
        out_specs=pl.BlockSpec((None, None, W, Cout), lambda n, h: (n, h, 0, 0)),
        compiler_params=pltpu.CompilerParams(
            dimension_semantics=("parallel", "parallel"),
            vmem_limit_bytes=_VMEM_LIMIT,
        ),
        cost_estimate=cost,
    )(xp, xp, xp, wmat, b2)
    return out


# ----------------------------------------------------------------------------
# Stride-2 3x3 conv: im2col (only 2.25x here) feeding the lane-dense matmul.
# TODO(synk): fuse the stride-2 taps too (parity-split input + per-row kernel)
# to remove the remaining im2col copy on the down path.
# ----------------------------------------------------------------------------
def _im2col(x, k, stride, pad):
    N, H, W, C = x.shape
    xp = jnp.pad(x, ((0, 0), (pad, pad), (pad, pad), (0, 0)))
    Ho = (H + 2 * pad - k) // stride + 1
    Wo = (W + 2 * pad - k) // stride + 1
    patches = []
    for di in range(k):
        for dj in range(k):
            patches.append(
                xp[:, di:di + stride * (Ho - 1) + 1:stride,
                      dj:dj + stride * (Wo - 1) + 1:stride, :])
    cols = jnp.concatenate(patches, axis=-1)
    return cols.reshape(N * Ho * Wo, k * k * C), (N, Ho, Wo)


def conv3x3_s2(x, w, b, relu=True, out_dtype=jnp.bfloat16):
    Cout, Cin, k, _ = w.shape
    cols, (N, Ho, Wo) = _im2col(x.astype(jnp.bfloat16), k, 2, 1)
    wmat = jnp.transpose(w, (2, 3, 1, 0)).reshape(k * k * Cin, Cout)
    y = pallas_matmul_bias(cols, wmat, b, apply_relu=relu, out_dtype=out_dtype)
    return y.reshape(N, Ho, Wo, Cout)


# ----------------------------------------------------------------------------
# Kernel 3: per-row ConvTranspose2d(3, stride=2, pad=1, output_padding=1)
# via sub-pixel decomposition, 4 taps fused in-kernel, parity-packed output.
# ----------------------------------------------------------------------------
def _fused_convt_weight_bias(wt, b):
    """wt: torch (Cin, Cout, 3, 3) -> Wf (4*Cin, 4*Cout), bf (4*Cout,).

    Taps:     p0=x[a,b], p1=x[a,b+1], p2=x[a+1,b], p3=x[a+1,b+1]
    Parities: ee=out[2a,2b], eo=out[2a,2b+1], oe=out[2a+1,2b], oo.
    (out[o] = sum x[i]*w[k], o = 2i - 1 + k  for s=2, p=1, op=1.)
    """
    Cin, Cout = wt.shape[0], wt.shape[1]
    w = wt.astype(jnp.float32)
    Wf = jnp.zeros((4, Cin, 4, Cout), jnp.float32)
    Wf = Wf.at[0, :, 0, :].set(w[:, :, 1, 1])                       # ee
    Wf = Wf.at[0, :, 1, :].set(w[:, :, 1, 2])                       # eo
    Wf = Wf.at[1, :, 1, :].set(w[:, :, 1, 0])
    Wf = Wf.at[0, :, 2, :].set(w[:, :, 2, 1])                       # oe
    Wf = Wf.at[2, :, 2, :].set(w[:, :, 0, 1])
    Wf = Wf.at[0, :, 3, :].set(w[:, :, 2, 2])                       # oo
    Wf = Wf.at[1, :, 3, :].set(w[:, :, 2, 0])
    Wf = Wf.at[2, :, 3, :].set(w[:, :, 0, 2])
    Wf = Wf.at[3, :, 3, :].set(w[:, :, 0, 0])
    Wf = Wf.reshape(4 * Cin, 4 * Cout)
    bf = jnp.tile(b.astype(jnp.float32), 4)
    return Wf, bf


def _convt_row_kernel(x0_ref, x1_ref, w_ref, b_ref, o_ref, *, w_in, cin,
                      apply_relu):
    r0 = x0_ref[...]                                        # (W+1, Cin)
    r1 = x1_ref[...]
    taps = (r0[0:w_in, :], r0[1:w_in + 1, :], r1[0:w_in, :], r1[1:w_in + 1, :])
    acc = None
    for t in range(4):
        d = jnp.dot(taps[t], w_ref[t * cin:(t + 1) * cin, :],
                    preferred_element_type=jnp.float32)
        acc = d if acc is None else acc + d
    acc = acc + b_ref[...]
    if apply_relu:
        acc = jnp.maximum(acc, 0.0)
    o_ref[...] = acc.astype(o_ref.dtype)


def conv_transpose_parity(x, wt, b, relu=True, out_dtype=jnp.bfloat16):
    """x: (N,H,W,Cin) -> parity-packed (N,H,W,4*Cout) [ee|eo|oe|oo]."""
    N, H, W, Cin = x.shape
    Cout = wt.shape[1]
    Wf, bf = _fused_convt_weight_bias(wt, b)
    Wf = Wf.astype(jnp.bfloat16)
    bf2 = bf.reshape(1, 4 * Cout)
    xp = jnp.pad(x.astype(jnp.bfloat16), ((0, 0), (0, 1), (0, 1), (0, 0)))

    out_isz = jnp.dtype(out_dtype).itemsize
    cost = pl.CostEstimate(
        flops=int(2 * N * H * W * 4 * Cin * 4 * Cout),
        transcendentals=0,
        bytes_accessed=int(2 * N * H * (W + 1) * Cin * 2 + 16 * Cin * Cout * 2
                           + 4 * Cout * 4 + N * H * W * 4 * Cout * out_isz),
    )

    yp = pl.pallas_call(
        functools.partial(_convt_row_kernel, w_in=W, cin=Cin, apply_relu=relu),
        out_shape=jax.ShapeDtypeStruct((N, H, W, 4 * Cout), out_dtype),
        grid=(N, H),
        in_specs=[
            pl.BlockSpec((None, None, W + 1, Cin), lambda n, h: (n, h, 0, 0)),
            pl.BlockSpec((None, None, W + 1, Cin), lambda n, h: (n, h + 1, 0, 0)),
            pl.BlockSpec((4 * Cin, 4 * Cout), lambda n, h: (0, 0)),
            pl.BlockSpec((1, 4 * Cout), lambda n, h: (0, 0)),
        ],
        out_specs=pl.BlockSpec((None, None, W, 4 * Cout),
                               lambda n, h: (n, h, 0, 0)),
        compiler_params=pltpu.CompilerParams(
            dimension_semantics=("parallel", "parallel"),
            vmem_limit_bytes=_VMEM_LIMIT,
        ),
        cost_estimate=cost,
    )(xp, xp, Wf, bf2)
    return yp


def _interleave_parity(yp, cout):
    """(N,H,W,4*cout) parity-packed -> interleaved (N,2H,2W,cout)."""
    N, H, W, _ = yp.shape
    y = yp.reshape(N, H, W, 2, 2, cout)
    y = jnp.transpose(y, (0, 1, 3, 2, 4, 5)).reshape(N, 2 * H, 2 * W, cout)
    return y


def logits_in_parity_space(y4p, wl, bl, out_dtype=jnp.float32):
    """Apply the 1x1 logits conv on up4's parity-packed output (block-diagonal
    per-parity weight), then interleave only num_classes channels."""
    N, H, W, C4 = y4p.shape
    C = C4 // 4
    nc = wl.shape[0]
    wl2 = wl.reshape(nc, C).T                               # (C, nc)
    wbd = jnp.zeros((4, C, 4, nc), jnp.float32)
    for r in range(4):
        wbd = wbd.at[r, :, r, :].set(wl2)
    wbd = wbd.reshape(4 * C, 4 * nc)
    bbd = jnp.tile(bl.astype(jnp.float32), 4)
    y = pallas_matmul_bias(y4p.reshape(N * H * W, 4 * C), wbd, bbd,
                           apply_relu=False, out_dtype=out_dtype)
    y = y.reshape(N, H, W, 4 * nc)
    return _interleave_parity(y, nc)


# ----------------------------------------------------------------------------
# Parameter init (deterministic, PyTorch-style uniform fan-in bounds)
# ----------------------------------------------------------------------------
def _init_conv(key, cout, cin, k):
    k1, k2 = jax.random.split(key)
    bound = 1.0 / float(jnp.sqrt(cin * k * k))
    w = jax.random.uniform(k1, (cout, cin, k, k), jnp.float32, -bound, bound)
    b = jax.random.uniform(k2, (cout,), jnp.float32, -bound, bound)
    return w, b


def _init_conv_transpose(key, cin, cout, k):
    k1, k2 = jax.random.split(key)
    bound = 1.0 / float(jnp.sqrt(cout * k * k))
    w = jax.random.uniform(k1, (cin, cout, k, k), jnp.float32, -bound, bound)
    b = jax.random.uniform(k2, (cout,), jnp.float32, -bound, bound)
    return w, b


def init_unet_params(key, in_channels=3, num_classes=3):
    keys = jax.random.split(key, 16)
    params = {}
    down_ch = [(in_channels, 16), (16, 32), (32, 64), (64, 128)]
    for i, (ci, co) in enumerate(down_ch):
        params[f"down{i+1}_conv1"] = _init_conv(keys[2 * i], co, ci, 3)
        params[f"down{i+1}_conv2"] = _init_conv(keys[2 * i + 1], co, co, 3)
    up_ch = [(128, 64), (64, 32), (32, 16), (16, 16)]
    for i, (ci, co) in enumerate(up_ch):
        params[f"up{i+1}"] = _init_conv_transpose(keys[8 + i], ci, co, 3)
    params["logits"] = _init_conv(keys[12], num_classes, 16, 1)
    # TODO(synk): input_mean/input_std buffers and Up_Block BatchNorm exist in
    # the torch __init__ but are not used in its forward(), so they are omitted.
    return params


# ----------------------------------------------------------------------------
# UNET forward
# ----------------------------------------------------------------------------
def unet_forward(params, x_nchw):
    x = jnp.transpose(x_nchw, (0, 2, 3, 1)).astype(jnp.bfloat16)  # NHWC, bf16

    # Down blocks: strided conv + ReLU, conv + ReLU.
    for i in range(1, 5):
        w1, b1 = params[f"down{i}_conv1"]
        w2, b2 = params[f"down{i}_conv2"]
        x = conv3x3_s2(x, w1, b1, relu=True)     # im2col (2.25x) + packed matmul
        x = conv3x3_s1(x, w2, b2, relu=True)     # fused 9-tap per-row kernel

    # Up blocks: transposed conv + ReLU (torch forward skips the BatchNorm).
    for i in range(1, 4):
        w, b = params[f"up{i}"]
        yp = conv_transpose_parity(x, w, b, relu=True)
        x = _interleave_parity(yp, w.shape[1])
    w, b = params["up4"]
    y4p = conv_transpose_parity(x, w, b, relu=True)   # keep parity-packed

    # 1x1 logits conv applied per parity, interleave only num_classes channels.
    wl, bl = params["logits"]
    logits = logits_in_parity_space(y4p, wl, bl, out_dtype=jnp.float32)
    return jnp.transpose(logits, (0, 3, 1, 2))        # (b, num_classes, h, w)


# ----------------------------------------------------------------------------
if __name__ == "__main__":
    key = jax.random.PRNGKey(0)
    pkey, xkey = jax.random.split(key)

    params = init_unet_params(pkey, in_channels=3, num_classes=3)
    # Small but UNET-consistent shape: H=W=16 survives the 4x /2 downsampling.
    x = jax.random.uniform(xkey, (2, 3, 16, 16), jnp.float32)

    logits = jax.jit(unet_forward)(params, x)
    logits = jax.block_until_ready(logits)

    assert logits.shape == (2, 3, 16, 16), logits.shape
    assert logits.dtype == jnp.float32
    assert bool(jnp.all(jnp.isfinite(logits)))
    print("KERNEL_OK")
</pallas_src>

<mosaic_0001>
module attributes {stable_mosaic.version = 11 : i64} {
  func.func @_matmul_bias_kernel(%arg0: i32, %arg1: memref<16x216xbf16, #tpu.memory_space<vmem>>, %arg2: memref<216x128xbf16, #tpu.memory_space<vmem>>, %arg3: memref<1x128xf32, #tpu.memory_space<vmem>>, %arg4: memref<16x128xbf16, #tpu.memory_space<vmem>>) attributes {dimension_semantics = [#tpu.dimension_semantics<parallel>], iteration_bounds = array<i64: 1>, scalar_prefetch = 0 : i64, scratch_operands = 0 : i64, tpu.core_type = #tpu.core_type<tc>, window_params = [{transform_indices = @transform_0, window_bounds = array<i64: 16, 216>}, {pipeline_mode = #tpu.pipeline_mode<synchronous>, transform_indices = @transform_1, window_bounds = array<i64: 216, 128>}, {pipeline_mode = #tpu.pipeline_mode<synchronous>, transform_indices = @transform_2, window_bounds = array<i64: 1, 128>}, {transform_indices = @transform_3, window_bounds = array<i64: 16, 128>}]} {
    %c0 = arith.constant 0 : index
    %c0_0 = arith.constant 0 : index
    %0 = vector.load %arg1[%c0, %c0_0] : memref<16x216xbf16, #tpu.memory_space<vmem>>, vector<16x216xbf16>
    %c0_1 = arith.constant 0 : index
    %c0_2 = arith.constant 0 : index
    %1 = vector.load %arg2[%c0_1, %c0_2] : memref<216x128xbf16, #tpu.memory_space<vmem>>, vector<216x128xbf16>
    %cst = arith.constant dense<0.000000e+00> : vector<16x128xf32>
    %2 = tpu.matmul %0, %1, %cst {dimension_numbers = #tpu.dot_dimension_numbers<[1], [0], [0], [1], [0, 0, 1, 1], [], []>} : vector<16x216xbf16>, vector<216x128xbf16>, vector<16x128xf32> -> vector<16x128xf32>
    %c0_3 = arith.constant 0 : index
    %c0_4 = arith.constant 0 : index
    %3 = vector.load %arg3[%c0_3, %c0_4] : memref<1x128xf32, #tpu.memory_space<vmem>>, vector<1x128xf32>
    %4 = vector.broadcast %3 : vector<1x128xf32> to vector<16x128xf32>
    %5 = arith.addf %2, %4 : vector<16x128xf32>
    %cst_5 = arith.constant 0.000000e+00 : f32
    %6 = vector.broadcast %cst_5 : f32 to vector<16x128xf32>
    %7 = arith.maximumf %5, %6 : vector<16x128xf32>
    %8 = arith.truncf %7 : vector<16x128xf32> to vector<16x128xbf16>
    %c0_6 = arith.constant 0 : index
    %c0_7 = arith.constant 0 : index
    %9 = vector.load %arg4[%c0_6, %c0_7] : memref<16x128xbf16, #tpu.memory_space<vmem>>, vector<16x128xbf16>
    tpu.vector_store %arg4[%c0_6, %c0_7], %8 {strides = array<i32>} : memref<16x128xbf16, #tpu.memory_space<vmem>>, vector<16x128xbf16>,
    return
  }
  func.func @transform_0(%arg0: i32) -> (i32, i32) {
    %c0_i32 = arith.constant 0 : i32
    %c0_i32_0 = arith.constant 0 : i32
    return %arg0, %c0_i32 : i32, i32
  }
  func.func @transform_1(%arg0: i32) -> (i32, i32) {
    %c0_i32 = arith.constant 0 : i32
    %c0_i32_0 = arith.constant 0 : i32
    %c0_i32_1 = arith.constant 0 : i32
    return %c0_i32, %c0_i32_0 : i32, i32
  }
  func.func @transform_2(%arg0: i32) -> (i32, i32) {
    %c0_i32 = arith.constant 0 : i32
    %c0_i32_0 = arith.constant 0 : i32
    %c0_i32_1 = arith.constant 0 : i32
    return %c0_i32, %c0_i32_0 : i32, i32
  }
  func.func @transform_3(%arg0: i32) -> (i32, i32) {
    %c0_i32 = arith.constant 0 : i32
    %c0_i32_0 = arith.constant 0 : i32
    return %arg0, %c0_i32 : i32, i32
  }
}

module attributes {stable_mosaic.version = 11 : i64} {
  func.func @_conv3x3_row_kernel(%arg0: i32, %arg1: i32, %arg2: memref<1x1x10x16xbf16, #tpu.memory_space<vmem>>, %arg3: memref<1x1x10x16xbf16, #tpu.memory_space<vmem>>, %arg4: memref<1x1x10x16xbf16, #tpu.memory_space<vmem>>, %arg5: memref<144x16xbf16, #tpu.memory_space<vmem>>, %arg6: memref<1x16xf32, #tpu.memory_space<vmem>>, %arg7: memref<1x1x8x16xbf16, #tpu.memory_space<vmem>>) attributes {dimension_semantics = [#tpu.dimension_semantics<parallel>, #tpu.dimension_semantics<parallel>], iteration_bounds = array<i64: 2, 8>, scalar_prefetch = 0 : i64, scratch_operands = 0 : i64, tpu.core_type = #tpu.core_type<tc>, window_params = [{transform_indices = @transform_0, window_bounds = array<i64: 1, 1, 10, 16>}, {transform_indices = @transform_1, window_bounds = array<i64: 1, 1, 10, 16>}, {transform_indices = @transform_2, window_bounds = array<i64: 1, 1, 10, 16>}, {pipeline_mode = #tpu.pipeline_mode<synchronous>, transform_indices = @transform_3, window_bounds = array<i64: 144, 16>}, {pipeline_mode = #tpu.pipeline_mode<synchronous>, transform_indices = @transform_4, window_bounds = array<i64: 1, 16>}, {transform_indices = @transform_5, window_bounds = array<i64: 1, 1, 8, 16>}]} {
    %c0 = arith.constant 0 : index
    %c0_0 = arith.constant 0 : index
    %c0_1 = arith.constant 0 : index
    %c0_2 = arith.constant 0 : index
    %0 = vector.load %arg2[%c0, %c0_0, %c0_1, %c0_2] : memref<1x1x10x16xbf16, #tpu.memory_space<vmem>>, vector<1x1x10x16xbf16>
    %1 = vector.shape_cast %0 : vector<1x1x10x16xbf16> to vector<10x16xbf16>
    %c0_3 = arith.constant 0 : index
    %c0_4 = arith.constant 0 : index
    %c0_5 = arith.constant 0 : index
    %c0_6 = arith.constant 0 : index
    %2 = vector.load %arg3[%c0_3, %c0_4, %c0_5, %c0_6] : memref<1x1x10x16xbf16, #tpu.memory_space<vmem>>, vector<1x1x10x16xbf16>
    %3 = vector.shape_cast %2 : vector<1x1x10x16xbf16> to vector<10x16xbf16>
    %c0_7 = arith.constant 0 : index
    %c0_8 = arith.constant 0 : index
    %c0_9 = arith.constant 0 : index
    %c0_10 = arith.constant 0 : index
    %4 = vector.load %arg4[%c0_7, %c0_8, %c0_9, %c0_10] : memref<1x1x10x16xbf16, #tpu.memory_space<vmem>>, vector<1x1x10x16xbf16>
    %5 = vector.shape_cast %4 : vector<1x1x10x16xbf16> to vector<10x16xbf16>
    %6 = vector.extract_strided_slice %1 {offsets = [0, 0], sizes = [8, 16], strides = [1, 1]} : vector<10x16xbf16> to vector<8x16xbf16>
    %c0_11 = arith.constant 0 : index
    %c0_12 = arith.constant 0 : index
    %7 = vector.load %arg5[%c0_11, %c0_12] : memref<144x16xbf16, #tpu.memory_space<vmem>>, vector<16x16xbf16>
    %cst = arith.constant dense<0.000000e+00> : vector<8x16xf32>
    %8 = tpu.matmul %6, %7, %cst {dimension_numbers = #tpu.dot_dimension_numbers<[1], [0], [0], [1], [0, 0, 1, 1], [], []>} : vector<8x16xbf16>, vector<16x16xbf16>, vector<8x16xf32> -> vector<8x16xf32>
    %9 = vector.extract_strided_slice %1 {offsets = [1, 0], sizes = [8, 16], strides = [1, 1]} : vector<10x16xbf16> to vector<8x16xbf16>
    %c16 = arith.constant 16 : index
    %c0_13 = arith.constant 0 : index
    %10 = vector.load %arg5[%c16, %c0_13] : memref<144x16xbf16, #tpu.memory_space<vmem>>, vector<16x16xbf16>
    %cst_14 = arith.constant dense<0.000000e+00> : vector<8x16xf32>
    %11 = tpu.matmul %9, %10, %cst_14 {dimension_numbers = #tpu.dot_dimension_numbers<[1], [0], [0], [1], [0, 0, 1, 1], [], []>} : vector<8x16xbf16>, vector<16x16xbf16>, vector<8x16xf32> -> vector<8x16xf32>
    %12 = arith.addf %8, %11 : vector<8x16xf32>
    %13 = vector.extract_strided_slice %1 {offsets = [2, 0], sizes = [8, 16], strides = [1, 1]} : vector<10x16xbf16> to vector<8x16xbf16>
    %c32 = arith.constant 32 : index
    %c0_15 = arith.constant 0 : index
    %14 = vector.load %arg5[%c32, %c0_15] : memref<144x16xbf16, #tpu.memory_space<vmem>>, vector<16x16xbf16>
    %cst_16 = arith.constant dense<0.000000e+00> : vector<8x16xf32>
    %15 = tpu.matmul %13, %14, %cst_16 {dimension_numbers = #tpu.dot_dimension_numbers<[1], [0], [0], [1], [0, 0, 1, 1], [], []>} : vector<8x16xbf16>, vector<16x16xbf16>, vector<8x16xf32> -> vector<8x16xf32>
    %16 = arith.addf %12, %15 : vector<8x16xf32>
    %17 = vector.extract_strided_slice %3 {offsets = [0, 0], sizes = [8, 16], strides = [1, 1]} : vector<10x16xbf16> to vector<8x16xbf16>
    %c48 = arith.constant 48 : index
    %c0_17 = arith.constant 0 : index
    %18 = vector.load %arg5[%c48, %c0_17] : memref<144x16xbf16, #tpu.memory_space<vmem>>, vector<16x16xbf16>
    %cst_18 = arith.constant dense<0.000000e+00> : vector<8x16xf32>
    %19 = tpu.matmul %17, %18, %cst_18 {dimension_numbers = #tpu.dot_dimension_numbers<[1], [0], [0], [1], [0, 0, 1, 1], [], []>} : vector<8x16xbf16>, vector<16x16xbf16>, vector<8x16xf32> -> vector<8x16xf32>
    %20 = arith.addf %16, %19 : vector<8x16xf32>
    %21 = vector.extract_strided_slice %3 {offsets = [1, 0], sizes = [8, 16], strides = [1, 1]} : vector<10x16xbf16> to vector<8x16xbf16>
    %c64 = arith.constant 64 : index
    %c0_19 = arith.constant 0 : index
    %22 = vector.load %arg5[%c64, %c0_19] : memref<144x16xbf16, #tpu.memory_space<vmem>>, vector<16x16xbf16>
    %cst_20 = arith.constant dense<0.000000e+00> : vector<8x16xf32>
    %23 = tpu.matmul %21, %22, %cst_20 {dimension_numbers = #tpu.dot_dimension_numbers<[1], [0], [0], [1], [0, 0, 1, 1], [], []>} : vector<8x16xbf16>, vector<16x16xbf16>, vector<8x16xf32> -> vector<8x16xf32>
    %24 = arith.addf %20, %23 : vector<8x16xf32>
    %25 = vector.extract_strided_slice %3 {offsets = [2, 0], sizes = [8, 16], strides = [1, 1]} : vector<10x16xbf16> to vector<8x16xbf16>
    %c80 = arith.constant 80 : index
    %c0_21 = arith.constant 0 : index
    %26 = vector.load %arg5[%c80, %c0_21] : memref<144x16xbf16, #tpu.memory_space<vmem>>, vector<16x16xbf16>
    %cst_22 = arith.constant dense<0.000000e+00> : vector<8x16xf32>
    %27 = tpu.matmul %25, %26, %cst_22 {dimension_numbers = #tpu.dot_dimension_numbers<[1], [0], [0], [1], [0, 0, 1, 1], [], []>} : vector<8x16xbf16>, vector<16x16xbf16>, vector<8x16xf32> -> vector<8x16xf32>
    %28 = arith.addf %24, %27 : vector<8x16xf32>
    %29 = vector.extract_strided_slice %5 {offsets = [0, 0], sizes = [8, 16], strides = [1, 1]} : vector<10x16xbf16> to vector<8x16xbf16>
    %c96 = arith.constant 96 : index
    %c0_23 = arith.constant 0 : index
    %30 = vector.load %arg5[%c96, %c0_23] : memref<144x16xbf16, #tpu.memory_space<vmem>>, vector<16x16xbf16>
    %cst_24 = arith.constant dense<0.000000e+00> : vector<8x16xf32>
    %31 = tpu.matmul %29, %30, %cst_24 {dimension_numbers = #tpu.dot_dimension_numbers<[1], [0], [0], [1], [0, 0, 1, 1], [], []>} : vector<8x16xbf16>, vector<16x16xbf16>, vector<8x16xf32> -> vector<8x16xf32>
    %32 = arith.addf %28, %31 : vector<8x16xf32>
    %33 = vector.extract_strided_slice %5 {offsets = [1, 0], sizes = [8, 16], strides = [1, 1]} : vector<10x16xbf16> to vector<8x16xbf16>
    %c112 = arith.constant 112 : index
    %c0_25 = arith.constant 0 : index
    %34 = vector.load %arg5[%c112, %c0_25] : memref<144x16xbf16, #tpu.memory_space<vmem>>, vector<16x16xbf16>
    %cst_26 = arith.constant dense<0.000000e+00> : vector<8x16xf32>
    %35 = tpu.matmul %33, %34, %cst_26 {dimension_numbers = #tpu.dot_dimension_numbers<[1], [0], [0], [1], [0, 0, 1, 1], [], []>} : vector<8x16xbf16>, vector<16x16xbf16>, vector<8x16xf32> -> vector<8x16xf32>
    %36 = arith.addf %32, %35 : vector<8x16xf32>
    %37 = vector.extract_strided_slice %5 {offsets = [2, 0], sizes = [8, 16], strides = [1, 1]} : vector<10x16xbf16> to vector<8x16xbf16>
    %c128 = arith.constant 128 : index
    %c0_27 = arith.constant 0 : index
    %38 = vector.load %arg5[%c128, %c0_27] : memref<144x16xbf16, #tpu.memory_space<vmem>>, vector<16x16xbf16>
    %cst_28 = arith.constant dense<0.000000e+00> : vector<8x16xf32>
    %39 = tpu.matmul %37, %38, %cst_28 {dimension_numbers = #tpu.dot_dimension_numbers<[1], [0], [0], [1], [0, 0, 1, 1], [], []>} : vector<8x16xbf16>, vector<16x16xbf16>, vector<8x16xf32> -> vector<8x16xf32>
    %40 = arith.addf %36, %39 : vector<8x16xf32>
    %c0_29 = arith.constant 0 : index
    %c0_30 = arith.constant 0 : index
    %41 = vector.load %arg6[%c0_29, %c0_30] : memref<1x16xf32, #tpu.memory_space<vmem>>, vector<1x16xf32>
    %42 = vector.broadcast %41 : vector<1x16xf32> to vector<8x16xf32>
    %43 = arith.addf %40, %42 : vector<8x16xf32>
    %cst_31 = arith.constant 0.000000e+00 : f32
    %44 = vector.broadcast %cst_31 : f32 to vector<8x16xf32>
    %45 = arith.maximumf %43, %44 : vector<8x16xf32>
    %46 = arith.truncf %45 : vector<8x16xf32> to vector<8x16xbf16>
    %c0_32 = arith.constant 0 : index
    %c0_33 = arith.constant 0 : index
    %c0_34 = arith.constant 0 : index
    %c0_35 = arith.constant 0 : index
    %47 = vector.load %arg7[%c0_32, %c0_33, %c0_34, %c0_35] : memref<1x1x8x16xbf16, #tpu.memory_space<vmem>>, vector<1x1x8x16xbf16>
    %48 = vector.shape_cast %47 : vector<1x1x8x16xbf16> to vector<8x16xbf16>
    %49 = vector.shape_cast %46 : vector<8x16xbf16> to vector<1x1x8x16xbf16>
    tpu.vector_store %arg7[%c0_32, %c0_33, %c0_34, %c0_35], %49 {strides = array<i32>} : memref<1x1x8x16xbf16, #tpu.memory_space<vmem>>, vector<1x1x8x16xbf16>,
    return
  }
  func.func @transform_0(%arg0: i32, %arg1: i32) -> (i32, i32, i32, i32) {
    %c0_i32 = arith.constant 0 : i32
    %0 = arith.addi %arg1, %c0_i32 : i32
    %c0_i32_0 = arith.constant 0 : i32
    %c0_i32_1 = arith.constant 0 : i32
    %c0_i32_2 = arith.constant 0 : i32
    return %arg0, %0, %c0_i32_0, %c0_i32_1 : i32, i32, i32, i32
  }
  func.func @transform_1(%arg0: i32, %arg1: i32) -> (i32, i32, i32, i32) {
    %c1_i32 = arith.constant 1 : i32
    %0 = arith.addi %arg1, %c1_i32 : i32
    %c0_i32 = arith.constant 0 : i32
    %c0_i32_0 = arith.constant 0 : i32
    %c0_i32_1 = arith.constant 0 : i32
    return %arg0, %0, %c0_i32, %c0_i32_0 : i32, i32, i32, i32
  }
  func.func @transform_2(%arg0: i32, %arg1: i32) -> (i32, i32, i32, i32) {
    %c2_i32 = arith.constant 2 : i32
    %0 = arith.addi %arg1, %c2_i32 : i32
    %c0_i32 = arith.constant 0 : i32
    %c0_i32_0 = arith.constant 0 : i32
    %c0_i32_1 = arith.constant 0 : i32
    return %arg0, %0, %c0_i32, %c0_i32_0 : i32, i32, i32, i32
  }
  func.func @transform_3(%arg0: i32, %arg1: i32) -> (i32, i32) {
    %c0_i32 = arith.constant 0 : i32
    %c0_i32_0 = arith.constant 0 : i32
    %c0_i32_1 = arith.constant 0 : i32
    return %c0_i32, %c0_i32_0 : i32, i32
  }
  func.func @transform_4(%arg0: i32, %arg1: i32) -> (i32, i32) {
    %c0_i32 = arith.constant 0 : i32
    %c0_i32_0 = arith.constant 0 : i32
    %c0_i32_1 = arith.constant 0 : i32
    return %c0_i32, %c0_i32_0 : i32, i32
  }
  func.func @transform_5(%arg0: i32, %arg1: i32) -> (i32, i32, i32, i32) {
    %c0_i32 = arith.constant 0 : i32
    %c0_i32_0 = arith.constant 0 : i32
    %c0_i32_1 = arith.constant 0 : i32
    return %arg0, %arg1, %c0_i32, %c0_i32_0 : i32, i32, i32, i32
  }
}

module attributes {stable_mosaic.version = 11 : i64} {
  func.func @_matmul_bias_kernel(%arg0: i32, %arg1: memref<8x576xbf16, #tpu.memory_space<vmem>>, %arg2: memref<576x128xbf16, #tpu.memory_space<vmem>>, %arg3: memref<1x128xf32, #tpu.memory_space<vmem>>, %arg4: memref<8x128xbf16, #tpu.memory_space<vmem>>) attributes {dimension_semantics = [#tpu.dimension_semantics<parallel>], iteration_bounds = array<i64: 1>, scalar_prefetch = 0 : i64, scratch_operands = 0 : i64, tpu.core_type = #tpu.core_type<tc>, window_params = [{transform_indices = @transform_0, window_bounds = array<i64: 8, 576>}, {pipeline_mode = #tpu.pipeline_mode<synchronous>, transform_indices = @transform_1, window_bounds = array<i64: 576, 128>}, {pipeline_mode = #tpu.pipeline_mode<synchronous>, transform_indices = @transform_2, window_bounds = array<i64: 1, 128>}, {transform_indices = @transform_3, window_bounds = array<i64: 8, 128>}]} {
    %c0 = arith.constant 0 : index
    %c0_0 = arith.constant 0 : index
    %0 = vector.load %arg1[%c0, %c0_0] : memref<8x576xbf16, #tpu.memory_space<vmem>>, vector<8x576xbf16>
    %c0_1 = arith.constant 0 : index
    %c0_2 = arith.constant 0 : index
    %1 = vector.load %arg2[%c0_1, %c0_2] : memref<576x128xbf16, #tpu.memory_space<vmem>>, vector<576x128xbf16>
    %cst = arith.constant dense<0.000000e+00> : vector<8x128xf32>
    %2 = tpu.matmul %0, %1, %cst {dimension_numbers = #tpu.dot_dimension_numbers<[1], [0], [0], [1], [0, 0, 1, 1], [], []>} : vector<8x576xbf16>, vector<576x128xbf16>, vector<8x128xf32> -> vector<8x128xf32>
    %c0_3 = arith.constant 0 : index
    %c0_4 = arith.constant 0 : index
    %3 = vector.load %arg3[%c0_3, %c0_4] : memref<1x128xf32, #tpu.memory_space<vmem>>, vector<1x128xf32>
    %4 = vector.broadcast %3 : vector<1x128xf32> to vector<8x128xf32>
    %5 = arith.addf %2, %4 : vector<8x128xf32>
    %cst_5 = arith.constant 0.000000e+00 : f32
    %6 = vector.broadcast %cst_5 : f32 to vector<8x128xf32>
    %7 = arith.maximumf %5, %6 : vector<8x128xf32>
    %8 = arith.truncf %7 : vector<8x128xf32> to vector<8x128xbf16>
    %c0_6 = arith.constant 0 : index
    %c0_7 = arith.constant 0 : index
    %9 = vector.load %arg4[%c0_6, %c0_7] : memref<8x128xbf16, #tpu.memory_space<vmem>>, vector<8x128xbf16>
    tpu.vector_store %arg4[%c0_6, %c0_7], %8 {strides = array<i32>} : memref<8x128xbf16, #tpu.memory_space<vmem>>, vector<8x128xbf16>,
    return
  }
  func.func @transform_0(%arg0: i32) -> (i32, i32) {
    %c0_i32 = arith.constant 0 : i32
    %c0_i32_0 = arith.constant 0 : i32
    return %arg0, %c0_i32 : i32, i32
  }
  func.func @transform_1(%arg0: i32) -> (i32, i32) {
    %c0_i32 = arith.constant 0 : i32
    %c0_i32_0 = arith.constant 0 : i32
    %c0_i32_1 = arith.constant 0 : i32
    return %c0_i32, %c0_i32_0 : i32, i32
  }
  func.func @transform_2(%arg0: i32) -> (i32, i32) {
    %c0_i32 = arith.constant 0 : i32
    %c0_i32_0 = arith.constant 0 : i32
    %c0_i32_1 = arith.constant 0 : i32
    return %c0_i32, %c0_i32_0 : i32, i32
  }
  func.func @transform_3(%arg0: i32) -> (i32, i32) {
    %c0_i32 = arith.constant 0 : i32
    %c0_i32_0 = arith.constant 0 : i32
    return %arg0, %c0_i32 : i32, i32
  }
}

module attributes {stable_mosaic.version = 11 : i64} {
  func.func @_conv3x3_row_kernel(%arg0: i32, %arg1: i32, %arg2: memref<1x1x6x32xbf16, #tpu.memory_space<vmem>>, %arg3: memref<1x1x6x32xbf16, #tpu.memory_space<vmem>>, %arg4: memref<1x1x6x32xbf16, #tpu.memory_space<vmem>>, %arg5: memref<288x32xbf16, #tpu.memory_space<vmem>>, %arg6: memref<1x32xf32, #tpu.memory_space<vmem>>, %arg7: memref<1x1x4x32xbf16, #tpu.memory_space<vmem>>) attributes {dimension_semantics = [#tpu.dimension_semantics<parallel>, #tpu.dimension_semantics<parallel>], iteration_bounds = array<i64: 2, 4>, scalar_prefetch = 0 : i64, scratch_operands = 0 : i64, tpu.core_type = #tpu.core_type<tc>, window_params = [{transform_indices = @transform_0, window_bounds = array<i64: 1, 1, 6, 32>}, {transform_indices = @transform_1, window_bounds = array<i64: 1, 1, 6, 32>}, {transform_indices = @transform_2, window_bounds = array<i64: 1, 1, 6, 32>}, {pipeline_mode = #tpu.pipeline_mode<synchronous>, transform_indices = @transform_3, window_bounds = array<i64: 288, 32>}, {pipeline_mode = #tpu.pipeline_mode<synchronous>, transform_indices = @transform_4, window_bounds = array<i64: 1, 32>}, {transform_indices = @transform_5, window_bounds = array<i64: 1, 1, 4, 32>}]} {
    %c0 = arith.constant 0 : index
    %c0_0 = arith.constant 0 : index
    %c0_1 = arith.constant 0 : index
    %c0_2 = arith.constant 0 : index
    %0 = vector.load %arg2[%c0, %c0_0, %c0_1, %c0_2] : memref<1x1x6x32xbf16, #tpu.memory_space<vmem>>, vector<1x1x6x32xbf16>
    %1 = vector.shape_cast %0 : vector<1x1x6x32xbf16> to vector<6x32xbf16>
    %c0_3 = arith.constant 0 : index
    %c0_4 = arith.constant 0 : index
    %c0_5 = arith.constant 0 : index
    %c0_6 = arith.constant 0 : index
    %2 = vector.load %arg3[%c0_3, %c0_4, %c0_5, %c0_6] : memref<1x1x6x32xbf16, #tpu.memory_space<vmem>>, vector<1x1x6x32xbf16>
    %3 = vector.shape_cast %2 : vector<1x1x6x32xbf16> to vector<6x32xbf16>
    %c0_7 = arith.constant 0 : index
    %c0_8 = arith.constant 0 : index
    %c0_9 = arith.constant 0 : index
    %c0_10 = arith.constant 0 : index
    %4 = vector.load %arg4[%c0_7, %c0_8, %c0_9, %c0_10] : memref<1x1x6x32xbf16, #tpu.memory_space<vmem>>, vector<1x1x6x32xbf16>
    %5 = vector.shape_cast %4 : vector<1x1x6x32xbf16> to vector<6x32xbf16>
    %6 = vector.extract_strided_slice %1 {offsets = [0, 0], sizes = [4, 32], strides = [1, 1]} : vector<6x32xbf16> to vector<4x32xbf16>
    %c0_11 = arith.constant 0 : index
    %c0_12 = arith.constant 0 : index
    %7 = vector.load %arg5[%c0_11, %c0_12] : memref<288x32xbf16, #tpu.memory_space<vmem>>, vector<32x32xbf16>
    %cst = arith.constant dense<0.000000e+00> : vector<4x32xf32>
    %8 = tpu.matmul %6, %7, %cst {dimension_numbers = #tpu.dot_dimension_numbers<[1], [0], [0], [1], [0, 0, 1, 1], [], []>} : vector<4x32xbf16>, vector<32x32xbf16>, vector<4x32xf32> -> vector<4x32xf32>
    %9 = vector.extract_strided_slice %1 {offsets = [1, 0], sizes = [4, 32], strides = [1, 1]} : vector<6x32xbf16> to vector<4x32xbf16>
    %c32 = arith.constant 32 : index
    %c0_13 = arith.constant 0 : index
    %10 = vector.load %arg5[%c32, %c0_13] : memref<288x32xbf16, #tpu.memory_space<vmem>>, vector<32x32xbf16>
    %cst_14 = arith.constant dense<0.000000e+00> : vector<4x32xf32>
    %11 = tpu.matmul %9, %10, %cst_14 {dimension_numbers = #tpu.dot_dimension_numbers<[1], [0], [0], [1], [0, 0, 1, 1], [], []>} : vector<4x32xbf16>, vector<32x32xbf16>, vector<4x32xf32> -> vector<4x32xf32>
    %12 = arith.addf %8, %11 : vector<4x32xf32>
    %13 = vector.extract_strided_slice %1 {offsets = [2, 0], sizes = [4, 32], strides = [1, 1]} : vector<6x32xbf16> to vector<4x32xbf16>
    %c64 = arith.constant 64 : index
    %c0_15 = arith.constant 0 : index
    %14 = vector.load %arg5[%c64, %c0_15] : memref<288x32xbf16, #tpu.memory_space<vmem>>, vector<32x32xbf16>
    %cst_16 = arith.constant dense<0.000000e+00> : vector<4x32xf32>
    %15 = tpu.matmul %13, %14, %cst_16 {dimension_numbers = #tpu.dot_dimension_numbers<[1], [0], [0], [1], [0, 0, 1, 1], [], []>} : vector<4x32xbf16>, vector<32x32xbf16>, vector<4x32xf32> -> vector<4x32xf32>
    %16 = arith.addf %12, %15 : vector<4x32xf32>
    %17 = vector.extract_strided_slice %3 {offsets = [0, 0], sizes = [4, 32], strides = [1, 1]} : vector<6x32xbf16> to vector<4x32xbf16>
    %c96 = arith.constant 96 : index
    %c0_17 = arith.constant 0 : index
    %18 = vector.load %arg5[%c96, %c0_17] : memref<288x32xbf16, #tpu.memory_space<vmem>>, vector<32x32xbf16>
    %cst_18 = arith.constant dense<0.000000e+00> : vector<4x32xf32>
    %19 = tpu.matmul %17, %18, %cst_18 {dimension_numbers = #tpu.dot_dimension_numbers<[1], [0], [0], [1], [0, 0, 1, 1], [], []>} : vector<4x32xbf16>, vector<32x32xbf16>, vector<4x32xf32> -> vector<4x32xf32>
    %20 = arith.addf %16, %19 : vector<4x32xf32>
    %21 = vector.extract_strided_slice %3 {offsets = [1, 0], sizes = [4, 32], strides = [1, 1]} : vector<6x32xbf16> to vector<4x32xbf16>
    %c128 = arith.constant 128 : index
    %c0_19 = arith.constant 0 : index
    %22 = vector.load %arg5[%c128, %c0_19] : memref<288x32xbf16, #tpu.memory_space<vmem>>, vector<32x32xbf16>
    %cst_20 = arith.constant dense<0.000000e+00> : vector<4x32xf32>
    %23 = tpu.matmul %21, %22, %cst_20 {dimension_numbers = #tpu.dot_dimension_numbers<[1], [0], [0], [1], [0, 0, 1, 1], [], []>} : vector<4x32xbf16>, vector<32x32xbf16>, vector<4x32xf32> -> vector<4x32xf32>
    %24 = arith.addf %20, %23 : vector<4x32xf32>
    %25 = vector.extract_strided_slice %3 {offsets = [2, 0], sizes = [4, 32], strides = [1, 1]} : vector<6x32xbf16> to vector<4x32xbf16>
    %c160 = arith.constant 160 : index
    %c0_21 = arith.constant 0 : index
    %26 = vector.load %arg5[%c160, %c0_21] : memref<288x32xbf16, #tpu.memory_space<vmem>>, vector<32x32xbf16>
    %cst_22 = arith.constant dense<0.000000e+00> : vector<4x32xf32>
    %27 = tpu.matmul %25, %26, %cst_22 {dimension_numbers = #tpu.dot_dimension_numbers<[1], [0], [0], [1], [0, 0, 1, 1], [], []>} : vector<4x32xbf16>, vector<32x32xbf16>, vector<4x32xf32> -> vector<4x32xf32>
    %28 = arith.addf %24, %27 : vector<4x32xf32>
    %29 = vector.extract_strided_slice %5 {offsets = [0, 0], sizes = [4, 32], strides = [1, 1]} : vector<6x32xbf16> to vector<4x32xbf16>
    %c192 = arith.constant 192 : index
    %c0_23 = arith.constant 0 : index
    %30 = vector.load %arg5[%c192, %c0_23] : memref<288x32xbf16, #tpu.memory_space<vmem>>, vector<32x32xbf16>
    %cst_24 = arith.constant dense<0.000000e+00> : vector<4x32xf32>
    %31 = tpu.matmul %29, %30, %cst_24 {dimension_numbers = #tpu.dot_dimension_numbers<[1], [0], [0], [1], [0, 0, 1, 1], [], []>} : vector<4x32xbf16>, vector<32x32xbf16>, vector<4x32xf32> -> vector<4x32xf32>
    %32 = arith.addf %28, %31 : vector<4x32xf32>
    %33 = vector.extract_strided_slice %5 {offsets = [1, 0], sizes = [4, 32], strides = [1, 1]} : vector<6x32xbf16> to vector<4x32xbf16>
    %c224 = arith.constant 224 : index
    %c0_25 = arith.constant 0 : index
    %34 = vector.load %arg5[%c224, %c0_25] : memref<288x32xbf16, #tpu.memory_space<vmem>>, vector<32x32xbf16>
    %cst_26 = arith.constant dense<0.000000e+00> : vector<4x32xf32>
    %35 = tpu.matmul %33, %34, %cst_26 {dimension_numbers = #tpu.dot_dimension_numbers<[1], [0], [0], [1], [0, 0, 1, 1], [], []>} : vector<4x32xbf16>, vector<32x32xbf16>, vector<4x32xf32> -> vector<4x32xf32>
    %36 = arith.addf %32, %35 : vector<4x32xf32>
    %37 = vector.extract_strided_slice %5 {offsets = [2, 0], sizes = [4, 32], strides = [1, 1]} : vector<6x32xbf16> to vector<4x32xbf16>
    %c256 = arith.constant 256 : index
    %c0_27 = arith.constant 0 : index
    %38 = vector.load %arg5[%c256, %c0_27] : memref<288x32xbf16, #tpu.memory_space<vmem>>, vector<32x32xbf16>
    %cst_28 = arith.constant dense<0.000000e+00> : vector<4x32xf32>
    %39 = tpu.matmul %37, %38, %cst_28 {dimension_numbers = #tpu.dot_dimension_numbers<[1], [0], [0], [1], [0, 0, 1, 1], [], []>} : vector<4x32xbf16>, vector<32x32xbf16>, vector<4x32xf32> -> vector<4x32xf32>
    %40 = arith.addf %36, %39 : vector<4x32xf32>
    %c0_29 = arith.constant 0 : index
    %c0_30 = arith.constant 0 : index
    %41 = vector.load %arg6[%c0_29, %c0_30] : memref<1x32xf32, #tpu.memory_space<vmem>>, vector<1x32xf32>
    %42 = vector.broadcast %41 : vector<1x32xf32> to vector<4x32xf32>
    %43 = arith.addf %40, %42 : vector<4x32xf32>
    %cst_31 = arith.constant 0.000000e+00 : f32
    %44 = vector.broadcast %cst_31 : f32 to vector<4x32xf32>
    %45 = arith.maximumf %43, %44 : vector<4x32xf32>
    %46 = arith.truncf %45 : vector<4x32xf32> to vector<4x32xbf16>
    %c0_32 = arith.constant 0 : index
    %c0_33 = arith.constant 0 : index
    %c0_34 = arith.constant 0 : index
    %c0_35 = arith.constant 0 : index
    %47 = vector.load %arg7[%c0_32, %c0_33, %c0_34, %c0_35] : memref<1x1x4x32xbf16, #tpu.memory_space<vmem>>, vector<1x1x4x32xbf16>
    %48 = vector.shape_cast %47 : vector<1x1x4x32xbf16> to vector<4x32xbf16>
    %49 = vector.shape_cast %46 : vector<4x32xbf16> to vector<1x1x4x32xbf16>
    tpu.vector_store %arg7[%c0_32, %c0_33, %c0_34, %c0_35], %49 {strides = array<i32>} : memref<1x1x4x32xbf16, #tpu.memory_space<vmem>>, vector<1x1x4x32xbf16>,
    return
  }
  func.func @transform_0(%arg0: i32, %arg1: i32) -> (i32, i32, i32, i32) {
    %c0_i32 = arith.constant 0 : i32
    %0 = arith.addi %arg1, %c0_i32 : i32
    %c0_i32_0 = arith.constant 0 : i32
    %c0_i32_1 = arith.constant 0 : i32
    %c0_i32_2 = arith.constant 0 : i32
    return %arg0, %0, %c0_i32_0, %c0_i32_1 : i32, i32, i32, i32
  }
  func.func @transform_1(%arg0: i32, %arg1: i32) -> (i32, i32, i32, i32) {
    %c1_i32 = arith.constant 1 : i32
    %0 = arith.addi %arg1, %c1_i32 : i32
    %c0_i32 = arith.constant 0 : i32
    %c0_i32_0 = arith.constant 0 : i32
    %c0_i32_1 = arith.constant 0 : i32
    return %arg0, %0, %c0_i32, %c0_i32_0 : i32, i32, i32, i32
  }
  func.func @transform_2(%arg0: i32, %arg1: i32) -> (i32, i32, i32, i32) {
    %c2_i32 = arith.constant 2 : i32
    %0 = arith.addi %arg1, %c2_i32 : i32
    %c0_i32 = arith.constant 0 : i32
    %c0_i32_0 = arith.constant 0 : i32
    %c0_i32_1 = arith.constant 0 : i32
    return %arg0, %0, %c0_i32, %c0_i32_0 : i32, i32, i32, i32
  }
  func.func @transform_3(%arg0: i32, %arg1: i32) -> (i32, i32) {
    %c0_i32 = arith.constant 0 : i32
    %c0_i32_0 = arith.constant 0 : i32
    %c0_i32_1 = arith.constant 0 : i32
    return %c0_i32, %c0_i32_0 : i32, i32
  }
  func.func @transform_4(%arg0: i32, %arg1: i32) -> (i32, i32) {
    %c0_i32 = arith.constant 0 : i32
    %c0_i32_0 = arith.constant 0 : i32
    %c0_i32_1 = arith.constant 0 : i32
    return %c0_i32, %c0_i32_0 : i32, i32
  }
  func.func @transform_5(%arg0: i32, %arg1: i32) -> (i32, i32, i32, i32) {
    %c0_i32 = arith.constant 0 : i32
    %c0_i32_0 = arith.constant 0 : i32
    %c0_i32_1 = arith.constant 0 : i32
    return %arg0, %arg1, %c0_i32, %c0_i32_0 : i32, i32, i32, i32
  }
}

module attributes {stable_mosaic.version = 11 : i64} {
  func.func @_conv3x3_row_kernel(%arg0: i32, %arg1: i32, %arg2: memref<1x1x4x64xbf16, #tpu.memory_space<vmem>>, %arg3: memref<1x1x4x64xbf16, #tpu.memory_space<vmem>>, %arg4: memref<1x1x4x64xbf16, #tpu.memory_space<vmem>>, %arg5: memref<576x64xbf16, #tpu.memory_space<vmem>>, %arg6: memref<1x64xf32, #tpu.memory_space<vmem>>, %arg7: memref<1x1x2x64xbf16, #tpu.memory_space<vmem>>) attributes {dimension_semantics = [#tpu.dimension_semantics<parallel>, #tpu.dimension_semantics<parallel>], iteration_bounds = array<i64: 2, 2>, scalar_prefetch = 0 : i64, scratch_operands = 0 : i64, tpu.core_type = #tpu.core_type<tc>, window_params = [{transform_indices = @transform_0, window_bounds = array<i64: 1, 1, 4, 64>}, {transform_indices = @transform_1, window_bounds = array<i64: 1, 1, 4, 64>}, {transform_indices = @transform_2, window_bounds = array<i64: 1, 1, 4, 64>}, {pipeline_mode = #tpu.pipeline_mode<synchronous>, transform_indices = @transform_3, window_bounds = array<i64: 576, 64>}, {pipeline_mode = #tpu.pipeline_mode<synchronous>, transform_indices = @transform_4, window_bounds = array<i64: 1, 64>}, {transform_indices = @transform_5, window_bounds = array<i64: 1, 1, 2, 64>}]} {
    %c0 = arith.constant 0 : index
    %c0_0 = arith.constant 0 : index
    %c0_1 = arith.constant 0 : index
    %c0_2 = arith.constant 0 : index
    %0 = vector.load %arg2[%c0, %c0_0, %c0_1, %c0_2] : memref<1x1x4x64xbf16, #tpu.memory_space<vmem>>, vector<1x1x4x64xbf16>
    %1 = vector.shape_cast %0 : vector<1x1x4x64xbf16> to vector<4x64xbf16>
    %c0_3 = arith.constant 0 : index
    %c0_4 = arith.constant 0 : index
    %c0_5 = arith.constant 0 : index
    %c0_6 = arith.constant 0 : index
    %2 = vector.load %arg3[%c0_3, %c0_4, %c0_5, %c0_6] : memref<1x1x4x64xbf16, #tpu.memory_space<vmem>>, vector<1x1x4x64xbf16>
    %3 = vector.shape_cast %2 : vector<1x1x4x64xbf16> to vector<4x64xbf16>
    %c0_7 = arith.constant 0 : index
    %c0_8 = arith.constant 0 : index
    %c0_9 = arith.constant 0 : index
    %c0_10 = arith.constant 0 : index
    %4 = vector.load %arg4[%c0_7, %c0_8, %c0_9, %c0_10] : memref<1x1x4x64xbf16, #tpu.memory_space<vmem>>, vector<1x1x4x64xbf16>
    %5 = vector.shape_cast %4 : vector<1x1x4x64xbf16> to vector<4x64xbf16>
    %6 = vector.extract_strided_slice %1 {offsets = [0, 0], sizes = [2, 64], strides = [1, 1]} : vector<4x64xbf16> to vector<2x64xbf16>
    %c0_11 = arith.constant 0 : index
    %c0_12 = arith.constant 0 : index
    %7 = vector.load %arg5[%c0_11, %c0_12] : memref<576x64xbf16, #tpu.memory_space<vmem>>, vector<64x64xbf16>
    %cst = arith.constant dense<0.000000e+00> : vector<2x64xf32>
    %8 = tpu.matmul %6, %7, %cst {dimension_numbers = #tpu.dot_dimension_numbers<[1], [0], [0], [1], [0, 0, 1, 1], [], []>} : vector<2x64xbf16>, vector<64x64xbf16>, vector<2x64xf32> -> vector<2x64xf32>
    %9 = vector.extract_strided_slice %1 {offsets = [1, 0], sizes = [2, 64], strides = [1, 1]} : vector<4x64xbf16> to vector<2x64xbf16>
    %c64 = arith.constant 64 : index
    %c0_13 = arith.constant 0 : index
    %10 = vector.load %arg5[%c64, %c0_13] : memref<576x64xbf16, #tpu.memory_space<vmem>>, vector<64x64xbf16>
    %cst_14 = arith.constant dense<0.000000e+00> : vector<2x64xf32>
    %11 = tpu.matmul %9, %10, %cst_14 {dimension_numbers = #tpu.dot_dimension_numbers<[1], [0], [0], [1], [0, 0, 1, 1], [], []>} : vector<2x64xbf16>, vector<64x64xbf16>, vector<2x64xf32> -> vector<2x64xf32>
    %12 = arith.addf %8, %11 : vector<2x64xf32>
    %13 = vector.extract_strided_slice %1 {offsets = [2, 0], sizes = [2, 64], strides = [1, 1]} : vector<4x64xbf16> to vector<2x64xbf16>
    %c128 = arith.constant 128 : index
    %c0_15 = arith.constant 0 : index
    %14 = vector.load %arg5[%c128, %c0_15] : memref<576x64xbf16, #tpu.memory_space<vmem>>, vector<64x64xbf16>
    %cst_16 = arith.constant dense<0.000000e+00> : vector<2x64xf32>
    %15 = tpu.matmul %13, %14, %cst_16 {dimension_numbers = #tpu.dot_dimension_numbers<[1], [0], [0], [1], [0, 0, 1, 1], [], []>} : vector<2x64xbf16>, vector<64x64xbf16>, vector<2x64xf32> -> vector<2x64xf32>
    %16 = arith.addf %12, %15 : vector<2x64xf32>
    %17 = vector.extract_strided_slice %3 {offsets = [0, 0], sizes = [2, 64], strides = [1, 1]} : vector<4x64xbf16> to vector<2x64xbf16>
    %c192 = arith.constant 192 : index
    %c0_17 = arith.constant 0 : index
    %18 = vector.load %arg5[%c192, %c0_17] : memref<576x64xbf16, #tpu.memory_space<vmem>>, vector<64x64xbf16>
    %cst_18 = arith.constant dense<0.000000e+00> : vector<2x64xf32>
    %19 = tpu.matmul %17, %18, %cst_18 {dimension_numbers = #tpu.dot_dimension_numbers<[1], [0], [0], [1], [0, 0, 1, 1], [], []>} : vector<2x64xbf16>, vector<64x64xbf16>, vector<2x64xf32> -> vector<2x64xf32>
    %20 = arith.addf %16, %19 : vector<2x64xf32>
    %21 = vector.extract_strided_slice %3 {offsets = [1, 0], sizes = [2, 64], strides = [1, 1]} : vector<4x64xbf16> to vector<2x64xbf16>
    %c256 = arith.constant 256 : index
    %c0_19 = arith.constant 0 : index
    %22 = vector.load %arg5[%c256, %c0_19] : memref<576x64xbf16, #tpu.memory_space<vmem>>, vector<64x64xbf16>
    %cst_20 = arith.constant dense<0.000000e+00> : vector<2x64xf32>
    %23 = tpu.matmul %21, %22, %cst_20 {dimension_numbers = #tpu.dot_dimension_numbers<[1], [0], [0], [1], [0, 0, 1, 1], [], []>} : vector<2x64xbf16>, vector<64x64xbf16>, vector<2x64xf32> -> vector<2x64xf32>
    %24 = arith.addf %20, %23 : vector<2x64xf32>
    %25 = vector.extract_strided_slice %3 {offsets = [2, 0], sizes = [2, 64], strides = [1, 1]} : vector<4x64xbf16> to vector<2x64xbf16>
    %c320 = arith.constant 320 : index
    %c0_21 = arith.constant 0 : index
    %26 = vector.load %arg5[%c320, %c0_21] : memref<576x64xbf16, #tpu.memory_space<vmem>>, vector<64x64xbf16>
    %cst_22 = arith.constant dense<0.000000e+00> : vector<2x64xf32>
    %27 = tpu.matmul %25, %26, %cst_22 {dimension_numbers = #tpu.dot_dimension_numbers<[1], [0], [0], [1], [0, 0, 1, 1], [], []>} : vector<2x64xbf16>, vector<64x64xbf16>, vector<2x64xf32> -> vector<2x64xf32>
    %28 = arith.addf %24, %27 : vector<2x64xf32>
    %29 = vector.extract_strided_slice %5 {offsets = [0, 0], sizes = [2, 64], strides = [1, 1]} : vector<4x64xbf16> to vector<2x64xbf16>
    %c384 = arith.constant 384 : index
    %c0_23 = arith.constant 0 : index
    %30 = vector.load %arg5[%c384, %c0_23] : memref<576x64xbf16, #tpu.memory_space<vmem>>, vector<64x64xbf16>
    %cst_24 = arith.constant dense<0.000000e+00> : vector<2x64xf32>
    %31 = tpu.matmul %29, %30, %cst_24 {dimension_numbers = #tpu.dot_dimension_numbers<[1], [0], [0], [1], [0, 0, 1, 1], [], []>} : vector<2x64xbf16>, vector<64x64xbf16>, vector<2x64xf32> -> vector<2x64xf32>
    %32 = arith.addf %28, %31 : vector<2x64xf32>
    %33 = vector.extract_strided_slice %5 {offsets = [1, 0], sizes = [2, 64], strides = [1, 1]} : vector<4x64xbf16> to vector<2x64xbf16>
    %c448 = arith.constant 448 : index
    %c0_25 = arith.constant 0 : index
    %34 = vector.load %arg5[%c448, %c0_25] : memref<576x64xbf16, #tpu.memory_space<vmem>>, vector<64x64xbf16>
    %cst_26 = arith.constant dense<0.000000e+00> : vector<2x64xf32>
    %35 = tpu.matmul %33, %34, %cst_26 {dimension_numbers = #tpu.dot_dimension_numbers<[1], [0], [0], [1], [0, 0, 1, 1], [], []>} : vector<2x64xbf16>, vector<64x64xbf16>, vector<2x64xf32> -> vector<2x64xf32>
    %36 = arith.addf %32, %35 : vector<2x64xf32>
    %37 = vector.extract_strided_slice %5 {offsets = [2, 0], sizes = [2, 64], strides = [1, 1]} : vector<4x64xbf16> to vector<2x64xbf16>
    %c512 = arith.constant 512 : index
    %c0_27 = arith.constant 0 : index
    %38 = vector.load %arg5[%c512, %c0_27] : memref<576x64xbf16, #tpu.memory_space<vmem>>, vector<64x64xbf16>
    %cst_28 = arith.constant dense<0.000000e+00> : vector<2x64xf32>
    %39 = tpu.matmul %37, %38, %cst_28 {dimension_numbers = #tpu.dot_dimension_numbers<[1], [0], [0], [1], [0, 0, 1, 1], [], []>} : vector<2x64xbf16>, vector<64x64xbf16>, vector<2x64xf32> -> vector<2x64xf32>
    %40 = arith.addf %36, %39 : vector<2x64xf32>
    %c0_29 = arith.constant 0 : index
    %c0_30 = arith.constant 0 : index
    %41 = vector.load %arg6[%c0_29, %c0_30] : memref<1x64xf32, #tpu.memory_space<vmem>>, vector<1x64xf32>
    %42 = vector.broadcast %41 : vector<1x64xf32> to vector<2x64xf32>
    %43 = arith.addf %40, %42 : vector<2x64xf32>
    %cst_31 = arith.constant 0.000000e+00 : f32
    %44 = vector.broadcast %cst_31 : f32 to vector<2x64xf32>
    %45 = arith.maximumf %43, %44 : vector<2x64xf32>
    %46 = arith.truncf %45 : vector<2x64xf32> to vector<2x64xbf16>
    %c0_32 = arith.constant 0 : index
    %c0_33 = arith.constant 0 : index
    %c0_34 = arith.constant 0 : index
    %c0_35 = arith.constant 0 : index
    %47 = vector.load %arg7[%c0_32, %c0_33, %c0_34, %c0_35] : memref<1x1x2x64xbf16, #tpu.memory_space<vmem>>, vector<1x1x2x64xbf16>
    %48 = vector.shape_cast %47 : vector<1x1x2x64xbf16> to vector<2x64xbf16>
    %49 = vector.shape_cast %46 : vector<2x64xbf16> to vector<1x1x2x64xbf16>
    tpu.vector_store %arg7[%c0_32, %c0_33, %c0_34, %c0_35], %49 {strides = array<i32>} : memref<1x1x2x64xbf16, #tpu.memory_space<vmem>>, vector<1x1x2x64xbf16>,
    return
  }
  func.func @transform_0(%arg0: i32, %arg1: i32) -> (i32, i32, i32, i32) {
    %c0_i32 = arith.constant 0 : i32
    %0 = arith.addi %arg1, %c0_i32 : i32
    %c0_i32_0 = arith.constant 0 : i32
    %c0_i32_1 = arith.constant 0 : i32
    %c0_i32_2 = arith.constant 0 : i32
    return %arg0, %0, %c0_i32_0, %c0_i32_1 : i32, i32, i32, i32
  }
  func.func @transform_1(%arg0: i32, %arg1: i32) -> (i32, i32, i32, i32) {
    %c1_i32 = arith.constant 1 : i32
    %0 = arith.addi %arg1, %c1_i32 : i32
    %c0_i32 = arith.constant 0 : i32
    %c0_i32_0 = arith.constant 0 : i32
    %c0_i32_1 = arith.constant 0 : i32
    return %arg0, %0, %c0_i32, %c0_i32_0 : i32, i32, i32, i32
  }
  func.func @transform_2(%arg0: i32, %arg1: i32) -> (i32, i32, i32, i32) {
    %c2_i32 = arith.constant 2 : i32
    %0 = arith.addi %arg1, %c2_i32 : i32
    %c0_i32 = arith.constant 0 : i32
    %c0_i32_0 = arith.constant 0 : i32
    %c0_i32_1 = arith.constant 0 : i32
    return %arg0, %0, %c0_i32, %c0_i32_0 : i32, i32, i32, i32
  }
  func.func @transform_3(%arg0: i32, %arg1: i32) -> (i32, i32) {
    %c0_i32 = arith.constant 0 : i32
    %c0_i32_0 = arith.constant 0 : i32
    %c0_i32_1 = arith.constant 0 : i32
    return %c0_i32, %c0_i32_0 : i32, i32
  }
  func.func @transform_4(%arg0: i32, %arg1: i32) -> (i32, i32) {
    %c0_i32 = arith.constant 0 : i32
    %c0_i32_0 = arith.constant 0 : i32
    %c0_i32_1 = arith.constant 0 : i32
    return %c0_i32, %c0_i32_0 : i32, i32
  }
  func.func @transform_5(%arg0: i32, %arg1: i32) -> (i32, i32, i32, i32) {
    %c0_i32 = arith.constant 0 : i32
    %c0_i32_0 = arith.constant 0 : i32
    %c0_i32_1 = arith.constant 0 : i32
    return %arg0, %arg1, %c0_i32, %c0_i32_0 : i32, i32, i32, i32
  }
}

module attributes {stable_mosaic.version = 11 : i64} {
  func.func @_conv3x3_row_kernel(%arg0: i32, %arg1: i32, %arg2: memref<1x1x3x128xbf16, #tpu.memory_space<vmem>>, %arg3: memref<1x1x3x128xbf16, #tpu.memory_space<vmem>>, %arg4: memref<1x1x3x128xbf16, #tpu.memory_space<vmem>>, %arg5: memref<1152x128xbf16, #tpu.memory_space<vmem>>, %arg6: memref<1x128xf32, #tpu.memory_space<vmem>>, %arg7: memref<1x1x1x128xbf16, #tpu.memory_space<vmem>>) attributes {dimension_semantics = [#tpu.dimension_semantics<parallel>, #tpu.dimension_semantics<parallel>], iteration_bounds = array<i64: 2, 1>, scalar_prefetch = 0 : i64, scratch_operands = 0 : i64, tpu.core_type = #tpu.core_type<tc>, window_params = [{transform_indices = @transform_0, window_bounds = array<i64: 1, 1, 3, 128>}, {transform_indices = @transform_1, window_bounds = array<i64: 1, 1, 3, 128>}, {transform_indices = @transform_2, window_bounds = array<i64: 1, 1, 3, 128>}, {pipeline_mode = #tpu.pipeline_mode<synchronous>, transform_indices = @transform_3, window_bounds = array<i64: 1152, 128>}, {pipeline_mode = #tpu.pipeline_mode<synchronous>, transform_indices = @transform_4, window_bounds = array<i64: 1, 128>}, {transform_indices = @transform_5, window_bounds = array<i64: 1, 1, 1, 128>}]} {
    %c0 = arith.constant 0 : index
    %c0_0 = arith.constant 0 : index
    %c0_1 = arith.constant 0 : index
    %c0_2 = arith.constant 0 : index
    %0 = vector.load %arg2[%c0, %c0_0, %c0_1, %c0_2] : memref<1x1x3x128xbf16, #tpu.memory_space<vmem>>, vector<1x1x3x128xbf16>
    %1 = vector.shape_cast %0 : vector<1x1x3x128xbf16> to vector<3x128xbf16>
    %c0_3 = arith.constant 0 : index
    %c0_4 = arith.constant 0 : index
    %c0_5 = arith.constant 0 : index
    %c0_6 = arith.constant 0 : index
    %2 = vector.load %arg3[%c0_3, %c0_4, %c0_5, %c0_6] : memref<1x1x3x128xbf16, #tpu.memory_space<vmem>>, vector<1x1x3x128xbf16>
    %3 = vector.shape_cast %2 : vector<1x1x3x128xbf16> to vector<3x128xbf16>
    %c0_7 = arith.constant 0 : index
    %c0_8 = arith.constant 0 : index
    %c0_9 = arith.constant 0 : index
    %c0_10 = arith.constant 0 : index
    %4 = vector.load %arg4[%c0_7, %c0_8, %c0_9, %c0_10] : memref<1x1x3x128xbf16, #tpu.memory_space<vmem>>, vector<1x1x3x128xbf16>
    %5 = vector.shape_cast %4 : vector<1x1x3x128xbf16> to vector<3x128xbf16>
    %6 = vector.extract_strided_slice %1 {offsets = [0, 0], sizes = [1, 128], strides = [1, 1]} : vector<3x128xbf16> to vector<1x128xbf16>
    %c0_11 = arith.constant 0 : index
    %c0_12 = arith.constant 0 : index
    %7 = vector.load %arg5[%c0_11, %c0_12] : memref<1152x128xbf16, #tpu.memory_space<vmem>>, vector<128x128xbf16>
    %cst = arith.constant dense<0.000000e+00> : vector<1x128xf32>
    %8 = tpu.matmul %6, %7, %cst {dimension_numbers = #tpu.dot_dimension_numbers<[1], [0], [0], [1], [0, 0, 1, 1], [], []>} : vector<1x128xbf16>, vector<128x128xbf16>, vector<1x128xf32> -> vector<1x128xf32>
    %9 = vector.extract_strided_slice %1 {offsets = [1, 0], sizes = [1, 128], strides = [1, 1]} : vector<3x128xbf16> to vector<1x128xbf16>
    %c128 = arith.constant 128 : index
    %c0_13 = arith.constant 0 : index
    %10 = vector.load %arg5[%c128, %c0_13] : memref<1152x128xbf16, #tpu.memory_space<vmem>>, vector<128x128xbf16>
    %cst_14 = arith.constant dense<0.000000e+00> : vector<1x128xf32>
    %11 = tpu.matmul %9, %10, %cst_14 {dimension_numbers = #tpu.dot_dimension_numbers<[1], [0], [0], [1], [0, 0, 1, 1], [], []>} : vector<1x128xbf16>, vector<128x128xbf16>, vector<1x128xf32> -> vector<1x128xf32>
    %12 = arith.addf %8, %11 : vector<1x128xf32>
    %13 = vector.extract_strided_slice %1 {offsets = [2, 0], sizes = [1, 128], strides = [1, 1]} : vector<3x128xbf16> to vector<1x128xbf16>
    %c256 = arith.constant 256 : index
    %c0_15 = arith.constant 0 : index
    %14 = vector.load %arg5[%c256, %c0_15] : memref<1152x128xbf16, #tpu.memory_space<vmem>>, vector<128x128xbf16>
    %cst_16 = arith.constant dense<0.000000e+00> : vector<1x128xf32>
    %15 = tpu.matmul %13, %14, %cst_16 {dimension_numbers = #tpu.dot_dimension_numbers<[1], [0], [0], [1], [0, 0, 1, 1], [], []>} : vector<1x128xbf16>, vector<128x128xbf16>, vector<1x128xf32> -> vector<1x128xf32>
    %16 = arith.addf %12, %15 : vector<1x128xf32>
    %17 = vector.extract_strided_slice %3 {offsets = [0, 0], sizes = [1, 128], strides = [1, 1]} : vector<3x128xbf16> to vector<1x128xbf16>
    %c384 = arith.constant 384 : index
    %c0_17 = arith.constant 0 : index
    %18 = vector.load %arg5[%c384, %c0_17] : memref<1152x128xbf16, #tpu.memory_space<vmem>>, vector<128x128xbf16>
    %cst_18 = arith.constant dense<0.000000e+00> : vector<1x128xf32>
    %19 = tpu.matmul %17, %18, %cst_18 {dimension_numbers = #tpu.dot_dimension_numbers<[1], [0], [0], [1], [0, 0, 1, 1], [], []>} : vector<1x128xbf16>, vector<128x128xbf16>, vector<1x128xf32> -> vector<1x128xf32>
    %20 = arith.addf %16, %19 : vector<1x128xf32>
    %21 = vector.extract_strided_slice %3 {offsets = [1, 0], sizes = [1, 128], strides = [1, 1]} : vector<3x128xbf16> to vector<1x128xbf16>
    %c512 = arith.constant 512 : index
    %c0_19 = arith.constant 0 : index
    %22 = vector.load %arg5[%c512, %c0_19] : memref<1152x128xbf16, #tpu.memory_space<vmem>>, vector<128x128xbf16>
    %cst_20 = arith.constant dense<0.000000e+00> : vector<1x128xf32>
    %23 = tpu.matmul %21, %22, %cst_20 {dimension_numbers = #tpu.dot_dimension_numbers<[1], [0], [0], [1], [0, 0, 1, 1], [], []>} : vector<1x128xbf16>, vector<128x128xbf16>, vector<1x128xf32> -> vector<1x128xf32>
    %24 = arith.addf %20, %23 : vector<1x128xf32>
    %25 = vector.extract_strided_slice %3 {offsets = [2, 0], sizes = [1, 128], strides = [1, 1]} : vector<3x128xbf16> to vector<1x128xbf16>
    %c640 = arith.constant 640 : index
    %c0_21 = arith.constant 0 : index
    %26 = vector.load %arg5[%c640, %c0_21] : memref<1152x128xbf16, #tpu.memory_space<vmem>>, vector<128x128xbf16>
    %cst_22 = arith.constant dense<0.000000e+00> : vector<1x128xf32>
    %27 = tpu.matmul %25, %26, %cst_22 {dimension_numbers = #tpu.dot_dimension_numbers<[1], [0], [0], [1], [0, 0, 1, 1], [], []>} : vector<1x128xbf16>, vector<128x128xbf16>, vector<1x128xf32> -> vector<1x128xf32>
    %28 = arith.addf %24, %27 : vector<1x128xf32>
    %29 = vector.extract_strided_slice %5 {offsets = [0, 0], sizes = [1, 128], strides = [1, 1]} : vector<3x128xbf16> to vector<1x128xbf16>
    %c768 = arith.constant 768 : index
    %c0_23 = arith.constant 0 : index
    %30 = vector.load %arg5[%c768, %c0_23] : memref<1152x128xbf16, #tpu.memory_space<vmem>>, vector<128x128xbf16>
    %cst_24 = arith.constant dense<0.000000e+00> : vector<1x128xf32>
    %31 = tpu.matmul %29, %30, %cst_24 {dimension_numbers = #tpu.dot_dimension_numbers<[1], [0], [0], [1], [0, 0, 1, 1], [], []>} : vector<1x128xbf16>, vector<128x128xbf16>, vector<1x128xf32> -> vector<1x128xf32>
    %32 = arith.addf %28, %31 : vector<1x128xf32>
    %33 = vector.extract_strided_slice %5 {offsets = [1, 0], sizes = [1, 128], strides = [1, 1]} : vector<3x128xbf16> to vector<1x128xbf16>
    %c896 = arith.constant 896 : index
    %c0_25 = arith.constant 0 : index
    %34 = vector.load %arg5[%c896, %c0_25] : memref<1152x128xbf16, #tpu.memory_space<vmem>>, vector<128x128xbf16>
    %cst_26 = arith.constant dense<0.000000e+00> : vector<1x128xf32>
    %35 = tpu.matmul %33, %34, %cst_26 {dimension_numbers = #tpu.dot_dimension_numbers<[1], [0], [0], [1], [0, 0, 1, 1], [], []>} : vector<1x128xbf16>, vector<128x128xbf16>, vector<1x128xf32> -> vector<1x128xf32>
    %36 = arith.addf %32, %35 : vector<1x128xf32>
    %37 = vector.extract_strided_slice %5 {offsets = [2, 0], sizes = [1, 128], strides = [1, 1]} : vector<3x128xbf16> to vector<1x128xbf16>
    %c1024 = arith.constant 1024 : index
    %c0_27 = arith.constant 0 : index
    %38 = vector.load %arg5[%c1024, %c0_27] : memref<1152x128xbf16, #tpu.memory_space<vmem>>, vector<128x128xbf16>
    %cst_28 = arith.constant dense<0.000000e+00> : vector<1x128xf32>
    %39 = tpu.matmul %37, %38, %cst_28 {dimension_numbers = #tpu.dot_dimension_numbers<[1], [0], [0], [1], [0, 0, 1, 1], [], []>} : vector<1x128xbf16>, vector<128x128xbf16>, vector<1x128xf32> -> vector<1x128xf32>
    %40 = arith.addf %36, %39 : vector<1x128xf32>
    %c0_29 = arith.constant 0 : index
    %c0_30 = arith.constant 0 : index
    %41 = vector.load %arg6[%c0_29, %c0_30] : memref<1x128xf32, #tpu.memory_space<vmem>>, vector<1x128xf32>
    %42 = arith.addf %40, %41 : vector<1x128xf32>
    %cst_31 = arith.constant 0.000000e+00 : f32
    %43 = vector.broadcast %cst_31 : f32 to vector<1x128xf32>
    %44 = arith.maximumf %42, %43 : vector<1x128xf32>
    %45 = arith.truncf %44 : vector<1x128xf32> to vector<1x128xbf16>
    %c0_32 = arith.constant 0 : index
    %c0_33 = arith.constant 0 : index
    %c0_34 = arith.constant 0 : index
    %c0_35 = arith.constant 0 : index
    %46 = vector.load %arg7[%c0_32, %c0_33, %c0_34, %c0_35] : memref<1x1x1x128xbf16, #tpu.memory_space<vmem>>, vector<1x1x1x128xbf16>
    %47 = vector.shape_cast %46 : vector<1x1x1x128xbf16> to vector<1x128xbf16>
    %48 = vector.shape_cast %45 : vector<1x128xbf16> to vector<1x1x1x128xbf16>
    tpu.vector_store %arg7[%c0_32, %c0_33, %c0_34, %c0_35], %48 {strides = array<i32>} : memref<1x1x1x128xbf16, #tpu.memory_space<vmem>>, vector<1x1x1x128xbf16>,
    return
  }
  func.func @transform_0(%arg0: i32, %arg1: i32) -> (i32, i32, i32, i32) {
    %c0_i32 = arith.constant 0 : i32
    %0 = arith.addi %arg1, %c0_i32 : i32
    %c0_i32_0 = arith.constant 0 : i32
    %c0_i32_1 = arith.constant 0 : i32
    %c0_i32_2 = arith.constant 0 : i32
    return %arg0, %0, %c0_i32_0, %c0_i32_1 : i32, i32, i32, i32
  }
  func.func @transform_1(%arg0: i32, %arg1: i32) -> (i32, i32, i32, i32) {
    %c1_i32 = arith.constant 1 : i32
    %0 = arith.addi %arg1, %c1_i32 : i32
    %c0_i32 = arith.constant 0 : i32
    %c0_i32_0 = arith.constant 0 : i32
    %c0_i32_1 = arith.constant 0 : i32
    return %arg0, %0, %c0_i32, %c0_i32_0 : i32, i32, i32, i32
  }
  func.func @transform_2(%arg0: i32, %arg1: i32) -> (i32, i32, i32, i32) {
    %c2_i32 = arith.constant 2 : i32
    %0 = arith.addi %arg1, %c2_i32 : i32
    %c0_i32 = arith.constant 0 : i32
    %c0_i32_0 = arith.constant 0 : i32
    %c0_i32_1 = arith.constant 0 : i32
    return %arg0, %0, %c0_i32, %c0_i32_0 : i32, i32, i32, i32
  }
  func.func @transform_3(%arg0: i32, %arg1: i32) -> (i32, i32) {
    %c0_i32 = arith.constant 0 : i32
    %c0_i32_0 = arith.constant 0 : i32
    %c0_i32_1 = arith.constant 0 : i32
    return %c0_i32, %c0_i32_0 : i32, i32
  }
  func.func @transform_4(%arg0: i32, %arg1: i32) -> (i32, i32) {
    %c0_i32 = arith.constant 0 : i32
    %c0_i32_0 = arith.constant 0 : i32
    %c0_i32_1 = arith.constant 0 : i32
    return %c0_i32, %c0_i32_0 : i32, i32
  }
  func.func @transform_5(%arg0: i32, %arg1: i32) -> (i32, i32, i32, i32) {
    %c0_i32 = arith.constant 0 : i32
    %c0_i32_0 = arith.constant 0 : i32
    %c0_i32_1 = arith.constant 0 : i32
    return %arg0, %arg1, %c0_i32, %c0_i32_0 : i32, i32, i32, i32
  }
}

module attributes {stable_mosaic.version = 11 : i64} {
  func.func @_convt_row_kernel(%arg0: i32, %arg1: i32, %arg2: memref<1x1x2x128xbf16, #tpu.memory_space<vmem>>, %arg3: memref<1x1x2x128xbf16, #tpu.memory_space<vmem>>, %arg4: memref<512x256xbf16, #tpu.memory_space<vmem>>, %arg5: memref<1x256xf32, #tpu.memory_space<vmem>>, %arg6: memref<1x1x1x256xbf16, #tpu.memory_space<vmem>>) attributes {dimension_semantics = [#tpu.dimension_semantics<parallel>, #tpu.dimension_semantics<parallel>], iteration_bounds = array<i64: 2, 1>, scalar_prefetch = 0 : i64, scratch_operands = 0 : i64, tpu.core_type = #tpu.core_type<tc>, window_params = [{transform_indices = @transform_0, window_bounds = array<i64: 1, 1, 2, 128>}, {transform_indices = @transform_1, window_bounds = array<i64: 1, 1, 2, 128>}, {pipeline_mode = #tpu.pipeline_mode<synchronous>, transform_indices = @transform_2, window_bounds = array<i64: 512, 256>}, {pipeline_mode = #tpu.pipeline_mode<synchronous>, transform_indices = @transform_3, window_bounds = array<i64: 1, 256>}, {transform_indices = @transform_4, window_bounds = array<i64: 1, 1, 1, 256>}]} {
    %c0 = arith.constant 0 : index
    %c0_0 = arith.constant 0 : index
    %c0_1 = arith.constant 0 : index
    %c0_2 = arith.constant 0 : index
    %0 = vector.load %arg2[%c0, %c0_0, %c0_1, %c0_2] : memref<1x1x2x128xbf16, #tpu.memory_space<vmem>>, vector<1x1x2x128xbf16>
    %1 = vector.shape_cast %0 : vector<1x1x2x128xbf16> to vector<2x128xbf16>
    %c0_3 = arith.constant 0 : index
    %c0_4 = arith.constant 0 : index
    %c0_5 = arith.constant 0 : index
    %c0_6 = arith.constant 0 : index
    %2 = vector.load %arg3[%c0_3, %c0_4, %c0_5, %c0_6] : memref<1x1x2x128xbf16, #tpu.memory_space<vmem>>, vector<1x1x2x128xbf16>
    %3 = vector.shape_cast %2 : vector<1x1x2x128xbf16> to vector<2x128xbf16>
    %4 = vector.extract_strided_slice %1 {offsets = [0, 0], sizes = [1, 128], strides = [1, 1]} : vector<2x128xbf16> to vector<1x128xbf16>
    %5 = vector.extract_strided_slice %1 {offsets = [1, 0], sizes = [1, 128], strides = [1, 1]} : vector<2x128xbf16> to vector<1x128xbf16>
    %6 = vector.extract_strided_slice %3 {offsets = [0, 0], sizes = [1, 128], strides = [1, 1]} : vector<2x128xbf16> to vector<1x128xbf16>
    %7 = vector.extract_strided_slice %3 {offsets = [1, 0], sizes = [1, 128], strides = [1, 1]} : vector<2x128xbf16> to vector<1x128xbf16>
    %c0_7 = arith.constant 0 : index
    %c0_8 = arith.constant 0 : index
    %8 = vector.load %arg4[%c0_7, %c0_8] : memref<512x256xbf16, #tpu.memory_space<vmem>>, vector<128x256xbf16>
    %cst = arith.constant dense<0.000000e+00> : vector<1x256xf32>
    %9 = tpu.matmul %4, %8, %cst {dimension_numbers = #tpu.dot_dimension_numbers<[1], [0], [0], [1], [0, 0, 1, 1], [], []>} : vector<1x128xbf16>, vector<128x256xbf16>, vector<1x256xf32> -> vector<1x256xf32>
    %c128 = arith.constant 128 : index
    %c0_9 = arith.constant 0 : index
    %10 = vector.load %arg4[%c128, %c0_9] : memref<512x256xbf16, #tpu.memory_space<vmem>>, vector<128x256xbf16>
    %cst_10 = arith.constant dense<0.000000e+00> : vector<1x256xf32>
    %11 = tpu.matmul %5, %10, %cst_10 {dimension_numbers = #tpu.dot_dimension_numbers<[1], [0], [0], [1], [0, 0, 1, 1], [], []>} : vector<1x128xbf16>, vector<128x256xbf16>, vector<1x256xf32> -> vector<1x256xf32>
    %12 = arith.addf %9, %11 : vector<1x256xf32>
    %c256 = arith.constant 256 : index
    %c0_11 = arith.constant 0 : index
    %13 = vector.load %arg4[%c256, %c0_11] : memref<512x256xbf16, #tpu.memory_space<vmem>>, vector<128x256xbf16>
    %cst_12 = arith.constant dense<0.000000e+00> : vector<1x256xf32>
    %14 = tpu.matmul %6, %13, %cst_12 {dimension_numbers = #tpu.dot_dimension_numbers<[1], [0], [0], [1], [0, 0, 1, 1], [], []>} : vector<1x128xbf16>, vector<128x256xbf16>, vector<1x256xf32> -> vector<1x256xf32>
    %15 = arith.addf %12, %14 : vector<1x256xf32>
    %c384 = arith.constant 384 : index
    %c0_13 = arith.constant 0 : index
    %16 = vector.load %arg4[%c384, %c0_13] : memref<512x256xbf16, #tpu.memory_space<vmem>>, vector<128x256xbf16>
    %cst_14 = arith.constant dense<0.000000e+00> : vector<1x256xf32>
    %17 = tpu.matmul %7, %16, %cst_14 {dimension_numbers = #tpu.dot_dimension_numbers<[1], [0], [0], [1], [0, 0, 1, 1], [], []>} : vector<1x128xbf16>, vector<128x256xbf16>, vector<1x256xf32> -> vector<1x256xf32>
    %18 = arith.addf %15, %17 : vector<1x256xf32>
    %c0_15 = arith.constant 0 : index
    %c0_16 = arith.constant 0 : index
    %19 = vector.load %arg5[%c0_15, %c0_16] : memref<1x256xf32, #tpu.memory_space<vmem>>, vector<1x256xf32>
    %20 = arith.addf %18, %19 : vector<1x256xf32>
    %cst_17 = arith.constant 0.000000e+00 : f32
    %21 = vector.broadcast %cst_17 : f32 to vector<1x256xf32>
    %22 = arith.maximumf %20, %21 : vector<1x256xf32>
    %23 = arith.truncf %22 : vector<1x256xf32> to vector<1x256xbf16>
    %c0_18 = arith.constant 0 : index
    %c0_19 = arith.constant 0 : index
    %c0_20 = arith.constant 0 : index
    %c0_21 = arith.constant 0 : index
    %24 = vector.load %arg6[%c0_18, %c0_19, %c0_20, %c0_21] : memref<1x1x1x256xbf16, #tpu.memory_space<vmem>>, vector<1x1x1x256xbf16>
    %25 = vector.shape_cast %24 : vector<1x1x1x256xbf16> to vector<1x256xbf16>
    %26 = vector.shape_cast %23 : vector<1x256xbf16> to vector<1x1x1x256xbf16>
    tpu.vector_store %arg6[%c0_18, %c0_19, %c0_20, %c0_21], %26 {strides = array<i32>} : memref<1x1x1x256xbf16, #tpu.memory_space<vmem>>, vector<1x1x1x256xbf16>,
    return
  }
  func.func @transform_0(%arg0: i32, %arg1: i32) -> (i32, i32, i32, i32) {
    %c0_i32 = arith.constant 0 : i32
    %c0_i32_0 = arith.constant 0 : i32
    %c0_i32_1 = arith.constant 0 : i32
    return %arg0, %arg1, %c0_i32, %c0_i32_0 : i32, i32, i32, i32
  }
  func.func @transform_1(%arg0: i32, %arg1: i32) -> (i32, i32, i32, i32) {
    %c1_i32 = arith.constant 1 : i32
    %0 = arith.addi %arg1, %c1_i32 : i32
    %c0_i32 = arith.constant 0 : i32
    %c0_i32_0 = arith.constant 0 : i32
    %c0_i32_1 = arith.constant 0 : i32
    return %arg0, %0, %c0_i32, %c0_i32_0 : i32, i32, i32, i32
  }
  func.func @transform_2(%arg0: i32, %arg1: i32) -> (i32, i32) {
    %c0_i32 = arith.constant 0 : i32
    %c0_i32_0 = arith.constant 0 : i32
    %c0_i32_1 = arith.constant 0 : i32
    return %c0_i32, %c0_i32_0 : i32, i32
  }
  func.func @transform_3(%arg0: i32, %arg1: i32) -> (i32, i32) {
    %c0_i32 = arith.constant 0 : i32
    %c0_i32_0 = arith.constant 0 : i32
    %c0_i32_1 = arith.constant 0 : i32
    return %c0_i32, %c0_i32_0 : i32, i32
  }
  func.func @transform_4(%arg0: i32, %arg1: i32) -> (i32, i32, i32, i32) {
    %c0_i32 = arith.constant 0 : i32
    %c0_i32_0 = arith.constant 0 : i32
    %c0_i32_1 = arith.constant 0 : i32
    return %arg0, %arg1, %c0_i32, %c0_i32_0 : i32, i32, i32, i32
  }
}

module attributes {stable_mosaic.version = 11 : i64} {
  func.func @_convt_row_kernel(%arg0: i32, %arg1: i32, %arg2: memref<1x1x3x64xbf16, #tpu.memory_space<vmem>>, %arg3: memref<1x1x3x64xbf16, #tpu.memory_space<vmem>>, %arg4: memref<256x128xbf16, #tpu.memory_space<vmem>>, %arg5: memref<1x128xf32, #tpu.memory_space<vmem>>, %arg6: memref<1x1x2x128xbf16, #tpu.memory_space<vmem>>) attributes {dimension_semantics = [#tpu.dimension_semantics<parallel>, #tpu.dimension_semantics<parallel>], iteration_bounds = array<i64: 2, 2>, scalar_prefetch = 0 : i64, scratch_operands = 0 : i64, tpu.core_type = #tpu.core_type<tc>, window_params = [{transform_indices = @transform_0, window_bounds = array<i64: 1, 1, 3, 64>}, {transform_indices = @transform_1, window_bounds = array<i64: 1, 1, 3, 64>}, {pipeline_mode = #tpu.pipeline_mode<synchronous>, transform_indices = @transform_2, window_bounds = array<i64: 256, 128>}, {pipeline_mode = #tpu.pipeline_mode<synchronous>, transform_indices = @transform_3, window_bounds = array<i64: 1, 128>}, {transform_indices = @transform_4, window_bounds = array<i64: 1, 1, 2, 128>}]} {
    %c0 = arith.constant 0 : index
    %c0_0 = arith.constant 0 : index
    %c0_1 = arith.constant 0 : index
    %c0_2 = arith.constant 0 : index
    %0 = vector.load %arg2[%c0, %c0_0, %c0_1, %c0_2] : memref<1x1x3x64xbf16, #tpu.memory_space<vmem>>, vector<1x1x3x64xbf16>
    %1 = vector.shape_cast %0 : vector<1x1x3x64xbf16> to vector<3x64xbf16>
    %c0_3 = arith.constant 0 : index
    %c0_4 = arith.constant 0 : index
    %c0_5 = arith.constant 0 : index
    %c0_6 = arith.constant 0 : index
    %2 = vector.load %arg3[%c0_3, %c0_4, %c0_5, %c0_6] : memref<1x1x3x64xbf16, #tpu.memory_space<vmem>>, vector<1x1x3x64xbf16>
    %3 = vector.shape_cast %2 : vector<1x1x3x64xbf16> to vector<3x64xbf16>
    %4 = vector.extract_strided_slice %1 {offsets = [0, 0], sizes = [2, 64], strides = [1, 1]} : vector<3x64xbf16> to vector<2x64xbf16>
    %5 = vector.extract_strided_slice %1 {offsets = [1, 0], sizes = [2, 64], strides = [1, 1]} : vector<3x64xbf16> to vector<2x64xbf16>
    %6 = vector.extract_strided_slice %3 {offsets = [0, 0], sizes = [2, 64], strides = [1, 1]} : vector<3x64xbf16> to vector<2x64xbf16>
    %7 = vector.extract_strided_slice %3 {offsets = [1, 0], sizes = [2, 64], strides = [1, 1]} : vector<3x64xbf16> to vector<2x64xbf16>
    %c0_7 = arith.constant 0 : index
    %c0_8 = arith.constant 0 : index
    %8 = vector.load %arg4[%c0_7, %c0_8] : memref<256x128xbf16, #tpu.memory_space<vmem>>, vector<64x128xbf16>
    %cst = arith.constant dense<0.000000e+00> : vector<2x128xf32>
    %9 = tpu.matmul %4, %8, %cst {dimension_numbers = #tpu.dot_dimension_numbers<[1], [0], [0], [1], [0, 0, 1, 1], [], []>} : vector<2x64xbf16>, vector<64x128xbf16>, vector<2x128xf32> -> vector<2x128xf32>
    %c64 = arith.constant 64 : index
    %c0_9 = arith.constant 0 : index
    %10 = vector.load %arg4[%c64, %c0_9] : memref<256x128xbf16, #tpu.memory_space<vmem>>, vector<64x128xbf16>
    %cst_10 = arith.constant dense<0.000000e+00> : vector<2x128xf32>
    %11 = tpu.matmul %5, %10, %cst_10 {dimension_numbers = #tpu.dot_dimension_numbers<[1], [0], [0], [1], [0, 0, 1, 1], [], []>} : vector<2x64xbf16>, vector<64x128xbf16>, vector<2x128xf32> -> vector<2x128xf32>
    %12 = arith.addf %9, %11 : vector<2x128xf32>
    %c128 = arith.constant 128 : index
    %c0_11 = arith.constant 0 : index
    %13 = vector.load %arg4[%c128, %c0_11] : memref<256x128xbf16, #tpu.memory_space<vmem>>, vector<64x128xbf16>
    %cst_12 = arith.constant dense<0.000000e+00> : vector<2x128xf32>
    %14 = tpu.matmul %6, %13, %cst_12 {dimension_numbers = #tpu.dot_dimension_numbers<[1], [0], [0], [1], [0, 0, 1, 1], [], []>} : vector<2x64xbf16>, vector<64x128xbf16>, vector<2x128xf32> -> vector<2x128xf32>
    %15 = arith.addf %12, %14 : vector<2x128xf32>
    %c192 = arith.constant 192 : index
    %c0_13 = arith.constant 0 : index
    %16 = vector.load %arg4[%c192, %c0_13] : memref<256x128xbf16, #tpu.memory_space<vmem>>, vector<64x128xbf16>
    %cst_14 = arith.constant dense<0.000000e+00> : vector<2x128xf32>
    %17 = tpu.matmul %7, %16, %cst_14 {dimension_numbers = #tpu.dot_dimension_numbers<[1], [0], [0], [1], [0, 0, 1, 1], [], []>} : vector<2x64xbf16>, vector<64x128xbf16>, vector<2x128xf32> -> vector<2x128xf32>
    %18 = arith.addf %15, %17 : vector<2x128xf32>
    %c0_15 = arith.constant 0 : index
    %c0_16 = arith.constant 0 : index
    %19 = vector.load %arg5[%c0_15, %c0_16] : memref<1x128xf32, #tpu.memory_space<vmem>>, vector<1x128xf32>
    %20 = vector.broadcast %19 : vector<1x128xf32> to vector<2x128xf32>
    %21 = arith.addf %18, %20 : vector<2x128xf32>
    %cst_17 = arith.constant 0.000000e+00 : f32
    %22 = vector.broadcast %cst_17 : f32 to vector<2x128xf32>
    %23 = arith.maximumf %21, %22 : vector<2x128xf32>
    %24 = arith.truncf %23 : vector<2x128xf32> to vector<2x128xbf16>
    %c0_18 = arith.constant 0 : index
    %c0_19 = arith.constant 0 : index
    %c0_20 = arith.constant 0 : index
    %c0_21 = arith.constant 0 : index
    %25 = vector.load %arg6[%c0_18, %c0_19, %c0_20, %c0_21] : memref<1x1x2x128xbf16, #tpu.memory_space<vmem>>, vector<1x1x2x128xbf16>
    %26 = vector.shape_cast %25 : vector<1x1x2x128xbf16> to vector<2x128xbf16>
    %27 = vector.shape_cast %24 : vector<2x128xbf16> to vector<1x1x2x128xbf16>
    tpu.vector_store %arg6[%c0_18, %c0_19, %c0_20, %c0_21], %27 {strides = array<i32>} : memref<1x1x2x128xbf16, #tpu.memory_space<vmem>>, vector<1x1x2x128xbf16>,
    return
  }
  func.func @transform_0(%arg0: i32, %arg1: i32) -> (i32, i32, i32, i32) {
    %c0_i32 = arith.constant 0 : i32
    %c0_i32_0 = arith.constant 0 : i32
    %c0_i32_1 = arith.constant 0 : i32
    return %arg0, %arg1, %c0_i32, %c0_i32_0 : i32, i32, i32, i32
  }
  func.func @transform_1(%arg0: i32, %arg1: i32) -> (i32, i32, i32, i32) {
    %c1_i32 = arith.constant 1 : i32
    %0 = arith.addi %arg1, %c1_i32 : i32
    %c0_i32 = arith.constant 0 : i32
    %c0_i32_0 = arith.constant 0 : i32
    %c0_i32_1 = arith.constant 0 : i32
    return %arg0, %0, %c0_i32, %c0_i32_0 : i32, i32, i32, i32
  }
  func.func @transform_2(%arg0: i32, %arg1: i32) -> (i32, i32) {
    %c0_i32 = arith.constant 0 : i32
    %c0_i32_0 = arith.constant 0 : i32
    %c0_i32_1 = arith.constant 0 : i32
    return %c0_i32, %c0_i32_0 : i32, i32
  }
  func.func @transform_3(%arg0: i32, %arg1: i32) -> (i32, i32) {
    %c0_i32 = arith.constant 0 : i32
    %c0_i32_0 = arith.constant 0 : i32
    %c0_i32_1 = arith.constant 0 : i32
    return %c0_i32, %c0_i32_0 : i32, i32
  }
  func.func @transform_4(%arg0: i32, %arg1: i32) -> (i32, i32, i32, i32) {
    %c0_i32 = arith.constant 0 : i32
    %c0_i32_0 = arith.constant 0 : i32
    %c0_i32_1 = arith.constant 0 : i32
    return %arg0, %arg1, %c0_i32, %c0_i32_0 : i32, i32, i32, i32
  }
}

module attributes {stable_mosaic.version = 11 : i64} {
  func.func @_convt_row_kernel(%arg0: i32, %arg1: i32, %arg2: memref<1x1x5x32xbf16, #tpu.memory_space<vmem>>, %arg3: memref<1x1x5x32xbf16, #tpu.memory_space<vmem>>, %arg4: memref<128x64xbf16, #tpu.memory_space<vmem>>, %arg5: memref<1x64xf32, #tpu.memory_space<vmem>>, %arg6: memref<1x1x4x64xbf16, #tpu.memory_space<vmem>>) attributes {dimension_semantics = [#tpu.dimension_semantics<parallel>, #tpu.dimension_semantics<parallel>], iteration_bounds = array<i64: 2, 4>, scalar_prefetch = 0 : i64, scratch_operands = 0 : i64, tpu.core_type = #tpu.core_type<tc>, window_params = [{transform_indices = @transform_0, window_bounds = array<i64: 1, 1, 5, 32>}, {transform_indices = @transform_1, window_bounds = array<i64: 1, 1, 5, 32>}, {pipeline_mode = #tpu.pipeline_mode<synchronous>, transform_indices = @transform_2, window_bounds = array<i64: 128, 64>}, {pipeline_mode = #tpu.pipeline_mode<synchronous>, transform_indices = @transform_3, window_bounds = array<i64: 1, 64>}, {transform_indices = @transform_4, window_bounds = array<i64: 1, 1, 4, 64>}]} {
    %c0 = arith.constant 0 : index
    %c0_0 = arith.constant 0 : index
    %c0_1 = arith.constant 0 : index
    %c0_2 = arith.constant 0 : index
    %0 = vector.load %arg2[%c0, %c0_0, %c0_1, %c0_2] : memref<1x1x5x32xbf16, #tpu.memory_space<vmem>>, vector<1x1x5x32xbf16>
    %1 = vector.shape_cast %0 : vector<1x1x5x32xbf16> to vector<5x32xbf16>
    %c0_3 = arith.constant 0 : index
    %c0_4 = arith.constant 0 : index
    %c0_5 = arith.constant 0 : index
    %c0_6 = arith.constant 0 : index
    %2 = vector.load %arg3[%c0_3, %c0_4, %c0_5, %c0_6] : memref<1x1x5x32xbf16, #tpu.memory_space<vmem>>, vector<1x1x5x32xbf16>
    %3 = vector.shape_cast %2 : vector<1x1x5x32xbf16> to vector<5x32xbf16>
    %4 = vector.extract_strided_slice %1 {offsets = [0, 0], sizes = [4, 32], strides = [1, 1]} : vector<5x32xbf16> to vector<4x32xbf16>
    %5 = vector.extract_strided_slice %1 {offsets = [1, 0], sizes = [4, 32], strides = [1, 1]} : vector<5x32xbf16> to vector<4x32xbf16>
    %6 = vector.extract_strided_slice %3 {offsets = [0, 0], sizes = [4, 32], strides = [1, 1]} : vector<5x32xbf16> to vector<4x32xbf16>
    %7 = vector.extract_strided_slice %3 {offsets = [1, 0], sizes = [4, 32], strides = [1, 1]} : vector<5x32xbf16> to vector<4x32xbf16>
    %c0_7 = arith.constant 0 : index
    %c0_8 = arith.constant 0 : index
    %8 = vector.load %arg4[%c0_7, %c0_8] : memref<128x64xbf16, #tpu.memory_space<vmem>>, vector<32x64xbf16>
    %cst = arith.constant dense<0.000000e+00> : vector<4x64xf32>
    %9 = tpu.matmul %4, %8, %cst {dimension_numbers = #tpu.dot_dimension_numbers<[1], [0], [0], [1], [0, 0, 1, 1], [], []>} : vector<4x32xbf16>, vector<32x64xbf16>, vector<4x64xf32> -> vector<4x64xf32>
    %c32 = arith.constant 32 : index
    %c0_9 = arith.constant 0 : index
    %10 = vector.load %arg4[%c32, %c0_9] : memref<128x64xbf16, #tpu.memory_space<vmem>>, vector<32x64xbf16>
    %cst_10 = arith.constant dense<0.000000e+00> : vector<4x64xf32>
    %11 = tpu.matmul %5, %10, %cst_10 {dimension_numbers = #tpu.dot_dimension_numbers<[1], [0], [0], [1], [0, 0, 1, 1], [], []>} : vector<4x32xbf16>, vector<32x64xbf16>, vector<4x64xf32> -> vector<4x64xf32>
    %12 = arith.addf %9, %11 : vector<4x64xf32>
    %c64 = arith.constant 64 : index
    %c0_11 = arith.constant 0 : index
    %13 = vector.load %arg4[%c64, %c0_11] : memref<128x64xbf16, #tpu.memory_space<vmem>>, vector<32x64xbf16>
    %cst_12 = arith.constant dense<0.000000e+00> : vector<4x64xf32>
    %14 = tpu.matmul %6, %13, %cst_12 {dimension_numbers = #tpu.dot_dimension_numbers<[1], [0], [0], [1], [0, 0, 1, 1], [], []>} : vector<4x32xbf16>, vector<32x64xbf16>, vector<4x64xf32> -> vector<4x64xf32>
    %15 = arith.addf %12, %14 : vector<4x64xf32>
    %c96 = arith.constant 96 : index
    %c0_13 = arith.constant 0 : index
    %16 = vector.load %arg4[%c96, %c0_13] : memref<128x64xbf16, #tpu.memory_space<vmem>>, vector<32x64xbf16>
    %cst_14 = arith.constant dense<0.000000e+00> : vector<4x64xf32>
    %17 = tpu.matmul %7, %16, %cst_14 {dimension_numbers = #tpu.dot_dimension_numbers<[1], [0], [0], [1], [0, 0, 1, 1], [], []>} : vector<4x32xbf16>, vector<32x64xbf16>, vector<4x64xf32> -> vector<4x64xf32>
    %18 = arith.addf %15, %17 : vector<4x64xf32>
    %c0_15 = arith.constant 0 : index
    %c0_16 = arith.constant 0 : index
    %19 = vector.load %arg5[%c0_15, %c0_16] : memref<1x64xf32, #tpu.memory_space<vmem>>, vector<1x64xf32>
    %20 = vector.broadcast %19 : vector<1x64xf32> to vector<4x64xf32>
    %21 = arith.addf %18, %20 : vector<4x64xf32>
    %cst_17 = arith.constant 0.000000e+00 : f32
    %22 = vector.broadcast %cst_17 : f32 to vector<4x64xf32>
    %23 = arith.maximumf %21, %22 : vector<4x64xf32>
    %24 = arith.truncf %23 : vector<4x64xf32> to vector<4x64xbf16>
    %c0_18 = arith.constant 0 : index
    %c0_19 = arith.constant 0 : index
    %c0_20 = arith.constant 0 : index
    %c0_21 = arith.constant 0 : index
    %25 = vector.load %arg6[%c0_18, %c0_19, %c0_20, %c0_21] : memref<1x1x4x64xbf16, #tpu.memory_space<vmem>>, vector<1x1x4x64xbf16>
    %26 = vector.shape_cast %25 : vector<1x1x4x64xbf16> to vector<4x64xbf16>
    %27 = vector.shape_cast %24 : vector<4x64xbf16> to vector<1x1x4x64xbf16>
    tpu.vector_store %arg6[%c0_18, %c0_19, %c0_20, %c0_21], %27 {strides = array<i32>} : memref<1x1x4x64xbf16, #tpu.memory_space<vmem>>, vector<1x1x4x64xbf16>,
    return
  }
  func.func @transform_0(%arg0: i32, %arg1: i32) -> (i32, i32, i32, i32) {
    %c0_i32 = arith.constant 0 : i32
    %c0_i32_0 = arith.constant 0 : i32
    %c0_i32_1 = arith.constant 0 : i32
    return %arg0, %arg1, %c0_i32, %c0_i32_0 : i32, i32, i32, i32
  }
  func.func @transform_1(%arg0: i32, %arg1: i32) -> (i32, i32, i32, i32) {
    %c1_i32 = arith.constant 1 : i32
    %0 = arith.addi %arg1, %c1_i32 : i32
    %c0_i32 = arith.constant 0 : i32
    %c0_i32_0 = arith.constant 0 : i32
    %c0_i32_1 = arith.constant 0 : i32
    return %arg0, %0, %c0_i32, %c0_i32_0 : i32, i32, i32, i32
  }
  func.func @transform_2(%arg0: i32, %arg1: i32) -> (i32, i32) {
    %c0_i32 = arith.constant 0 : i32
    %c0_i32_0 = arith.constant 0 : i32
    %c0_i32_1 = arith.constant 0 : i32
    return %c0_i32, %c0_i32_0 : i32, i32
  }
  func.func @transform_3(%arg0: i32, %arg1: i32) -> (i32, i32) {
    %c0_i32 = arith.constant 0 : i32
    %c0_i32_0 = arith.constant 0 : i32
    %c0_i32_1 = arith.constant 0 : i32
    return %c0_i32, %c0_i32_0 : i32, i32
  }
  func.func @transform_4(%arg0: i32, %arg1: i32) -> (i32, i32, i32, i32) {
    %c0_i32 = arith.constant 0 : i32
    %c0_i32_0 = arith.constant 0 : i32
    %c0_i32_1 = arith.constant 0 : i32
    return %arg0, %arg1, %c0_i32, %c0_i32_0 : i32, i32, i32, i32
  }
}

module attributes {stable_mosaic.version = 11 : i64} {
  func.func @_convt_row_kernel(%arg0: i32, %arg1: i32, %arg2: memref<1x1x9x16xbf16, #tpu.memory_space<vmem>>, %arg3: memref<1x1x9x16xbf16, #tpu.memory_space<vmem>>, %arg4: memref<64x64xbf16, #tpu.memory_space<vmem>>, %arg5: memref<1x64xf32, #tpu.memory_space<vmem>>, %arg6: memref<1x1x8x64xbf16, #tpu.memory_space<vmem>>) attributes {dimension_semantics = [#tpu.dimension_semantics<parallel>, #tpu.dimension_semantics<parallel>], iteration_bounds = array<i64: 2, 8>, scalar_prefetch = 0 : i64, scratch_operands = 0 : i64, tpu.core_type = #tpu.core_type<tc>, window_params = [{transform_indices = @transform_0, window_bounds = array<i64: 1, 1, 9, 16>}, {transform_indices = @transform_1, window_bounds = array<i64: 1, 1, 9, 16>}, {pipeline_mode = #tpu.pipeline_mode<synchronous>, transform_indices = @transform_2, window_bounds = array<i64: 64, 64>}, {pipeline_mode = #tpu.pipeline_mode<synchronous>, transform_indices = @transform_3, window_bounds = array<i64: 1, 64>}, {transform_indices = @transform_4, window_bounds = array<i64: 1, 1, 8, 64>}]} {
    %c0 = arith.constant 0 : index
    %c0_0 = arith.constant 0 : index
    %c0_1 = arith.constant 0 : index
    %c0_2 = arith.constant 0 : index
    %0 = vector.load %arg2[%c0, %c0_0, %c0_1, %c0_2] : memref<1x1x9x16xbf16, #tpu.memory_space<vmem>>, vector<1x1x9x16xbf16>
    %1 = vector.shape_cast %0 : vector<1x1x9x16xbf16> to vector<9x16xbf16>
    %c0_3 = arith.constant 0 : index
    %c0_4 = arith.constant 0 : index
    %c0_5 = arith.constant 0 : index
    %c0_6 = arith.constant 0 : index
    %2 = vector.load %arg3[%c0_3, %c0_4, %c0_5, %c0_6] : memref<1x1x9x16xbf16, #tpu.memory_space<vmem>>, vector<1x1x9x16xbf16>
    %3 = vector.shape_cast %2 : vector<1x1x9x16xbf16> to vector<9x16xbf16>
    %4 = vector.extract_strided_slice %1 {offsets = [0, 0], sizes = [8, 16], strides = [1, 1]} : vector<9x16xbf16> to vector<8x16xbf16>
    %5 = vector.extract_strided_slice %1 {offsets = [1, 0], sizes = [8, 16], strides = [1, 1]} : vector<9x16xbf16> to vector<8x16xbf16>
    %6 = vector.extract_strided_slice %3 {offsets = [0, 0], sizes = [8, 16], strides = [1, 1]} : vector<9x16xbf16> to vector<8x16xbf16>
    %7 = vector.extract_strided_slice %3 {offsets = [1, 0], sizes = [8, 16], strides = [1, 1]} : vector<9x16xbf16> to vector<8x16xbf16>
    %c0_7 = arith.constant 0 : index
    %c0_8 = arith.constant 0 : index
    %8 = vector.load %arg4[%c0_7, %c0_8] : memref<64x64xbf16, #tpu.memory_space<vmem>>, vector<16x64xbf16>
    %cst = arith.constant dense<0.000000e+00> : vector<8x64xf32>
    %9 = tpu.matmul %4, %8, %cst {dimension_numbers = #tpu.dot_dimension_numbers<[1], [0], [0], [1], [0, 0, 1, 1], [], []>} : vector<8x16xbf16>, vector<16x64xbf16>, vector<8x64xf32> -> vector<8x64xf32>
    %c16 = arith.constant 16 : index
    %c0_9 = arith.constant 0 : index
    %10 = vector.load %arg4[%c16, %c0_9] : memref<64x64xbf16, #tpu.memory_space<vmem>>, vector<16x64xbf16>
    %cst_10 = arith.constant dense<0.000000e+00> : vector<8x64xf32>
    %11 = tpu.matmul %5, %10, %cst_10 {dimension_numbers = #tpu.dot_dimension_numbers<[1], [0], [0], [1], [0, 0, 1, 1], [], []>} : vector<8x16xbf16>, vector<16x64xbf16>, vector<8x64xf32> -> vector<8x64xf32>
    %12 = arith.addf %9, %11 : vector<8x64xf32>
    %c32 = arith.constant 32 : index
    %c0_11 = arith.constant 0 : index
    %13 = vector.load %arg4[%c32, %c0_11] : memref<64x64xbf16, #tpu.memory_space<vmem>>, vector<16x64xbf16>
    %cst_12 = arith.constant dense<0.000000e+00> : vector<8x64xf32>
    %14 = tpu.matmul %6, %13, %cst_12 {dimension_numbers = #tpu.dot_dimension_numbers<[1], [0], [0], [1], [0, 0, 1, 1], [], []>} : vector<8x16xbf16>, vector<16x64xbf16>, vector<8x64xf32> -> vector<8x64xf32>
    %15 = arith.addf %12, %14 : vector<8x64xf32>
    %c48 = arith.constant 48 : index
    %c0_13 = arith.constant 0 : index
    %16 = vector.load %arg4[%c48, %c0_13] : memref<64x64xbf16, #tpu.memory_space<vmem>>, vector<16x64xbf16>
    %cst_14 = arith.constant dense<0.000000e+00> : vector<8x64xf32>
    %17 = tpu.matmul %7, %16, %cst_14 {dimension_numbers = #tpu.dot_dimension_numbers<[1], [0], [0], [1], [0, 0, 1, 1], [], []>} : vector<8x16xbf16>, vector<16x64xbf16>, vector<8x64xf32> -> vector<8x64xf32>
    %18 = arith.addf %15, %17 : vector<8x64xf32>
    %c0_15 = arith.constant 0 : index
    %c0_16 = arith.constant 0 : index
    %19 = vector.load %arg5[%c0_15, %c0_16] : memref<1x64xf32, #tpu.memory_space<vmem>>, vector<1x64xf32>
    %20 = vector.broadcast %19 : vector<1x64xf32> to vector<8x64xf32>
    %21 = arith.addf %18, %20 : vector<8x64xf32>
    %cst_17 = arith.constant 0.000000e+00 : f32
    %22 = vector.broadcast %cst_17 : f32 to vector<8x64xf32>
    %23 = arith.maximumf %21, %22 : vector<8x64xf32>
    %24 = arith.truncf %23 : vector<8x64xf32> to vector<8x64xbf16>
    %c0_18 = arith.constant 0 : index
    %c0_19 = arith.constant 0 : index
    %c0_20 = arith.constant 0 : index
    %c0_21 = arith.constant 0 : index
    %25 = vector.load %arg6[%c0_18, %c0_19, %c0_20, %c0_21] : memref<1x1x8x64xbf16, #tpu.memory_space<vmem>>, vector<1x1x8x64xbf16>
    %26 = vector.shape_cast %25 : vector<1x1x8x64xbf16> to vector<8x64xbf16>
    %27 = vector.shape_cast %24 : vector<8x64xbf16> to vector<1x1x8x64xbf16>
    tpu.vector_store %arg6[%c0_18, %c0_19, %c0_20, %c0_21], %27 {strides = array<i32>} : memref<1x1x8x64xbf16, #tpu.memory_space<vmem>>, vector<1x1x8x64xbf16>,
    return
  }
  func.func @transform_0(%arg0: i32, %arg1: i32) -> (i32, i32, i32, i32) {
    %c0_i32 = arith.constant 0 : i32
    %c0_i32_0 = arith.constant 0 : i32
    %c0_i32_1 = arith.constant 0 : i32
    return %arg0, %arg1, %c0_i32, %c0_i32_0 : i32, i32, i32, i32
  }
  func.func @transform_1(%arg0: i32, %arg1: i32) -> (i32, i32, i32, i32) {
    %c1_i32 = arith.constant 1 : i32
    %0 = arith.addi %arg1, %c1_i32 : i32
    %c0_i32 = arith.constant 0 : i32
    %c0_i32_0 = arith.constant 0 : i32
    %c0_i32_1 = arith.constant 0 : i32
    return %arg0, %0, %c0_i32, %c0_i32_0 : i32, i32, i32, i32
  }
  func.func @transform_2(%arg0: i32, %arg1: i32) -> (i32, i32) {
    %c0_i32 = arith.constant 0 : i32
    %c0_i32_0 = arith.constant 0 : i32
    %c0_i32_1 = arith.constant 0 : i32
    return %c0_i32, %c0_i32_0 : i32, i32
  }
  func.func @transform_3(%arg0: i32, %arg1: i32) -> (i32, i32) {
    %c0_i32 = arith.constant 0 : i32
    %c0_i32_0 = arith.constant 0 : i32
    %c0_i32_1 = arith.constant 0 : i32
    return %c0_i32, %c0_i32_0 : i32, i32
  }
  func.func @transform_4(%arg0: i32, %arg1: i32) -> (i32, i32, i32, i32) {
    %c0_i32 = arith.constant 0 : i32
    %c0_i32_0 = arith.constant 0 : i32
    %c0_i32_1 = arith.constant 0 : i32
    return %arg0, %arg1, %c0_i32, %c0_i32_0 : i32, i32, i32, i32
  }
}

module attributes {stable_mosaic.version = 11 : i64} {
  func.func @_matmul_bias_kernel(%arg0: i32, %arg1: memref<128x64xbf16, #tpu.memory_space<vmem>>, %arg2: memref<64x12xbf16, #tpu.memory_space<vmem>>, %arg3: memref<1x12xf32, #tpu.memory_space<vmem>>, %arg4: memref<128x12xf32, #tpu.memory_space<vmem>>) attributes {dimension_semantics = [#tpu.dimension_semantics<parallel>], iteration_bounds = array<i64: 1>, scalar_prefetch = 0 : i64, scratch_operands = 0 : i64, tpu.core_type = #tpu.core_type<tc>, window_params = [{transform_indices = @transform_0, window_bounds = array<i64: 128, 64>}, {pipeline_mode = #tpu.pipeline_mode<synchronous>, transform_indices = @transform_1, window_bounds = array<i64: 64, 12>}, {pipeline_mode = #tpu.pipeline_mode<synchronous>, transform_indices = @transform_2, window_bounds = array<i64: 1, 12>}, {transform_indices = @transform_3, window_bounds = array<i64: 128, 12>}]} {
    %c0 = arith.constant 0 : index
    %c0_0 = arith.constant 0 : index
    %0 = vector.load %arg1[%c0, %c0_0] : memref<128x64xbf16, #tpu.memory_space<vmem>>, vector<128x64xbf16>
    %c0_1 = arith.constant 0 : index
    %c0_2 = arith.constant 0 : index
    %1 = vector.load %arg2[%c0_1, %c0_2] : memref<64x12xbf16, #tpu.memory_space<vmem>>, vector<64x12xbf16>
    %cst = arith.constant dense<0.000000e+00> : vector<128x12xf32>
    %2 = tpu.matmul %0, %1, %cst {dimension_numbers = #tpu.dot_dimension_numbers<[1], [0], [0], [1], [0, 0, 1, 1], [], []>} : vector<128x64xbf16>, vector<64x12xbf16>, vector<128x12xf32> -> vector<128x12xf32>
    %c0_3 = arith.constant 0 : index
    %c0_4 = arith.constant 0 : index
    %3 = vector.load %arg3[%c0_3, %c0_4] : memref<1x12xf32, #tpu.memory_space<vmem>>, vector<1x12xf32>
    %4 = vector.broadcast %3 : vector<1x12xf32> to vector<128x12xf32>
    %5 = arith.addf %2, %4 : vector<128x12xf32>
    %c0_5 = arith.constant 0 : index
    %c0_6 = arith.constant 0 : index
    %6 = vector.load %arg4[%c0_5, %c0_6] : memref<128x12xf32, #tpu.memory_space<vmem>>, vector<128x12xf32>
    tpu.vector_store %arg4[%c0_5, %c0_6], %5 {strides = array<i32>} : memref<128x12xf32, #tpu.memory_space<vmem>>, vector<128x12xf32>,
    return
  }
  func.func @transform_0(%arg0: i32) -> (i32, i32) {
    %c0_i32 = arith.constant 0 : i32
    %c0_i32_0 = arith.constant 0 : i32
    return %arg0, %c0_i32 : i32, i32
  }
  func.func @transform_1(%arg0: i32) -> (i32, i32) {
    %c0_i32 = arith.constant 0 : i32
    %c0_i32_0 = arith.constant 0 : i32
    %c0_i32_1 = arith.constant 0 : i32
    return %c0_i32, %c0_i32_0 : i32, i32
  }
  func.func @transform_2(%arg0: i32) -> (i32, i32) {
    %c0_i32 = arith.constant 0 : i32
    %c0_i32_0 = arith.constant 0 : i32
    %c0_i32_1 = arith.constant 0 : i32
    return %c0_i32, %c0_i32_0 : i32, i32
  }
  func.func @transform_3(%arg0: i32) -> (i32, i32) {
    %c0_i32 = arith.constant 0 : i32
    %c0_i32_0 = arith.constant 0 : i32
    return %arg0, %c0_i32 : i32, i32
  }
}

</mosaic_0001>

<llo_original>
// kernel: tile.43
$region0: #{tile.43}
  #allocation0 [shape = 's32[1]{0}', space=sflag, size = 0x4, scoped, tag = 'scoped memory for tile.43']
  %s0 = inlined_call_operand.vmem [shape: f32[16], index: 0, kind: input, shape index: {}]
  %s1 = inlined_call_operand.vmem [shape: f32[8,16], index: 1, kind: output, shape index: {}]
  // Predicated region
  $region2: #{tile.43} parent=0 // pred_check
    _
  $region3: #{tile.43} parent=0 // pred_check_branch
    %3 = sbr.rel (0) target = $region5
  $region4: #{tile.43} parent=0 // pred_region
    _
  $region5: #{tile.43} parent=0 // pred_fallthru
    _
  %v4 = vld [vmem:[%s0] ss:$0 sm:$0xff]
  %5 = vst [vmem:[%s1] sm:$0xff] %v4

// kernel: tile.44
$region0: #{tile.44}
  %s0 = inlined_call_operand.vmem [shape: f32[8,16], index: 0, kind: input, shape index: {}]
  %s1 = inlined_call_operand.vmem [shape: f32[1,128], index: 1, kind: output, shape index: {}]
  $region1: #{tile.44} parent=0
    #allocation0 [shape = 'u8[4096]{0}', space=vmem, size = 0x1000, scoped, tag = 'scoped mem for output reshape']
    %v2 = vld [vmem:[%s0] sm:$0x1]
    %vm3 = vcmask 130048
    %4 = vst.msk [vmem:[#allocation0] sm:$0x1] %vm3, %v2
    %s5 = scalar_lea.vmem %s0, 7
    %v6 = vld [vmem:[%s5] sm:$0x1]
    %7 = vrot.lane.b32.xlu0 %v6, 112
    %v8 = vpop.permute.xlu0 %7
    %vm9 = vcmask 1048448
    %10 = vst.msk [vmem:[#allocation0] sm:$0x1] %vm9, %v8
    %s11 = scalar_lea.vmem %s0, 6
    %v12 = vld [vmem:[%s11] sm:$0x1]
    %13 = vrot.lane.b32.xlu0 %v12, 96
    %v14 = vpop.permute.xlu0 %13
    %vm15 = vcmask 917248
    %16 = vst.msk [vmem:[#allocation0] sm:$0x1] %vm15, %v14
    %s17 = scalar_lea.vmem %s0, 5
    %v18 = vld [vmem:[%s17] sm:$0x1]
    %19 = vrot.lane.b32.xlu0 %v18, 80
    %v20 = vpop.permute.xlu0 %19
    %vm21 = vcmask 786048
    %22 = vst.msk [vmem:[#allocation0] sm:$0x1] %vm21, %v20
    %s23 = scalar_lea.vmem %s0, 4
    %v24 = vld [vmem:[%s23] sm:$0x1]
    %25 = vrot.lane.b32.xlu0 %v24, 64
    %v26 = vpop.permute.xlu0 %25
    %vm27 = vcmask 654848
    %28 = vst.msk [vmem:[#allocation0] sm:$0x1] %vm27, %v26
    %s29 = scalar_lea.vmem %s0, 3
    %v30 = vld [vmem:[%s29] sm:$0x1]
    %31 = vrot.lane.b32.xlu0 %v30, 48
    %v32 = vpop.permute.xlu0 %31
    %vm33 = vcmask 523648
    %34 = vst.msk [vmem:[#allocation0] sm:$0x1] %vm33, %v32
    %s35 = scalar_lea.vmem %s0, 2
    %v36 = vld [vmem:[%s35] sm:$0x1]
    %37 = vrot.lane.b32.xlu0 %v36, 32
    %v38 = vpop.permute.xlu0 %37
    %vm39 = vcmask 392448
    %40 = vst.msk [vmem:[#allocation0] sm:$0x1] %vm39, %v38
    %s41 = scalar_lea.vmem %s0, 1
    %v42 = vld [vmem:[%s41] sm:$0x1]
    %43 = vrot.lane.b32.xlu0 %v42, 16
    %v44 = vpop.permute.xlu0 %43
    %vm45 = vcmask 261248
    %46 = vst.msk [vmem:[#allocation0] sm:$0x1] %vm45, %v44
    %s48 = sshllo.u32 0, 1
    %v50 = vld [vmem:[#allocation0] sm:%s48]
    %s51 = sshllo.u32 0, 1
    %52 = vst [vmem:[%s1] sm:%s51] %v50

// kernel: unet_forward.13
$region0: #{unet_forward.13}
  #allocation0 [shape = 'u32[]', space=smem, size = 0x4, offset = 0x4, fixed_abs, tag = 'smem constant byte address 0x4 - core index']
  #allocation1 [shape = 'u32[144,128]{1,0:T(1,128)}', space=vmem, size = 0x12000, scoped, tag = 'internal scratch']
  %s0 = inlined_call_operand.vmem [shape: bf16[16,216], index: 0, kind: input, shape index: {}]
  %s1 = inlined_call_operand.vmem [shape: bf16[216,128], index: 1, kind: input, shape index: {}]
  %s2 = inlined_call_operand.vmem [shape: f32[1,128], index: 2, kind: input, shape index: {}]
  %s3 = inlined_call_operand.vmem [shape: bf16[16,128], index: 3, kind: output, shape index: {}]
  %s4 = sld [smem:[#allocation0]]
  $region22: #{unet_forward.13} parent=0
    _
  %s6 = ssub.s32 1, %s4
  %s7 = scalar_select 0, %s6, %s4
  // Predicated region
  $region2: #{unet_forward.13} parent=0 // pred_check
    _
  $region3: #{unet_forward.13} parent=0 // pred_check_branch
    %9 = sbr.rel (0) target = $region5
  $region4: #{unet_forward.13} parent=0 // pred_region
    _
  $region5: #{unet_forward.13} parent=0 // pred_fallthru
    _
  // Predicated region
  $region6: #{unet_forward.13} parent=0 // pred_check
    _
  $region7: #{unet_forward.13} parent=0 // pred_check_branch
    %11 = sbr.rel (0) target = $region9
  $region8: #{unet_forward.13} parent=0 // pred_region
    _
  $region9: #{unet_forward.13} parent=0 // pred_fallthru
    _
  // Predicated region
  $region10: #{unet_forward.13} parent=0 // pred_check
    _
  $region11: #{unet_forward.13} parent=0 // pred_check_branch
    %13 = sbr.rel (0) target = $region13
  $region12: #{unet_forward.13} parent=0 // pred_region
    _
  $region13: #{unet_forward.13} parent=0 // pred_fallthru
    _
  %v15 = vld [vmem:[%s0] sm:$0xff]
  %v16 = vld [vmem:[%s0 + $0x8] sm:$0xff]
  %v17 = vld [vmem:[%s1] sm:$0xf]
  %v18 = vld [vmem:[%s1 + $0x4] sm:$0xf]
  %v19 = vld [vmem:[%s1 + $0x8] sm:$0xf]
  %v20 = vld [vmem:[%s1 + $0xc] sm:$0xf]
  %v21 = vld [vmem:[%s1 + $0x10] sm:$0xf]
  %v22 = vld [vmem:[%s1 + $0x14] sm:$0xf]
  %v23 = vld [vmem:[%s1 + $0x18] sm:$0xf]
  %v24 = vld [vmem:[%s1 + $0x1c] sm:$0xf]
  %v25 = vld [vmem:[%s1 + $0x20] sm:$0xf]
  %v26 = vld [vmem:[%s1 + $0x24] sm:$0xf]
  %v27 = vld [vmem:[%s1 + $0x28] sm:$0xf]
  %v28 = vld [vmem:[%s1 + $0x2c] sm:$0xf]
  %v29 = vld [vmem:[%s1 + $0x30] sm:$0xf]
  %v30 = vld [vmem:[%s1 + $0x34] sm:$0xf]
  %v31 = vld [vmem:[%s1 + $0x38] sm:$0xf]
  %v32 = vld [vmem:[%s1 + $0x3c] sm:$0xf]
  %v33 = vld [vmem:[%s1 + $0x40] sm:$0xf]
  %v34 = vld [vmem:[%s1 + $0x44] sm:$0xf]
  %v35 = vld [vmem:[%s1 + $0x48] sm:$0xf]
  %v36 = vld [vmem:[%s1 + $0x4c] sm:$0xf]
  %v37 = vld [vmem:[%s1 + $0x50] sm:$0xf]
  %v38 = vld [vmem:[%s1 + $0x54] sm:$0xf]
  %v39 = vld [vmem:[%s1 + $0x58] sm:$0xf]
  %v40 = vld [vmem:[%s1 + $0x5c] sm:$0xf]
  %v41 = vld [vmem:[%s1 + $0x60] sm:$0xf]
  %v42 = vld [vmem:[%s1 + $0x64] sm:$0xf]
  %v43 = vld [vmem:[%s1 + $0x68] sm:$0xf]
  %v44 = vld [vmem:[%s2] sm:$0x1]
  %v46 = vlaneseq
  %v47 = vshrl.u32 %v46, 7
  %v48 = vsub.s32 0, %v47
  %v49 = vrot.slane %v44, %v48
  %v53 = vunpack.c.l.b16 %v15
  %v54 = vunpack.c.h.b16 %v15
  %v55 = vunpack.c.l.b16 %v16
  %v56 = vunpack.c.h.b16 %v16
  %v57 = vpack.c.b16 %v55, %v53
  %v58 = vpack.c.b16 %v56, %v54
  %v87 = vunpack.c.l.b16 %v17
  %v88 = vunpack.c.l.b16 %v18
  %v89 = vunpack.c.l.b16 %v19
  %v90 = vunpack.c.l.b16 %v20
  %v91 = vunpack.c.l.b16 %v21
  %v92 = vunpack.c.l.b16 %v22
  %v93 = vunpack.c.l.b16 %v23
  %v94 = vunpack.c.l.b16 %v24
  %v95 = vunpack.c.l.b16 %v25
  %v96 = vunpack.c.l.b16 %v26
  %v97 = vunpack.c.l.b16 %v27
  %v98 = vunpack.c.l.b16 %v28
  %v99 = vunpack.c.l.b16 %v29
  %v100 = vunpack.c.l.b16 %v30
  %v101 = vunpack.c.l.b16 %v31
  %v102 = vunpack.c.l.b16 %v32
  %v103 = vunpack.c.l.b16 %v33
  %v104 = vunpack.c.l.b16 %v34
  %v105 = vunpack.c.l.b16 %v35
  %v106 = vunpack.c.l.b16 %v36
  %v107 = vunpack.c.l.b16 %v37
  %v108 = vunpack.c.l.b16 %v38
  %v109 = vunpack.c.l.b16 %v39
  %v110 = vunpack.c.l.b16 %v40
  %v111 = vunpack.c.l.b16 %v41
  %v112 = vunpack.c.l.b16 %v42
  %v113 = vunpack.c.l.b16 %v43
  %v114 = vpack.c.b16 %v88, %v87
  %v115 = vpack.c.b16 %v90, %v89
  %v116 = vpack.c.b16 %v92, %v91
  %v117 = vpack.c.b16 %v94, %v93
  %v118 = vpack.c.b16 %v96, %v95
  %v119 = vpack.c.b16 %v98, %v97
  %v120 = vpack.c.b16 %v100, %v99
  %v121 = vpack.c.b16 %v102, %v101
  %v122 = vpack.c.b16 %v104, %v103
  %v123 = vpack.c.b16 %v106, %v105
  %v124 = vpack.c.b16 %v108, %v107
  %v125 = vpack.c.b16 %v110, %v109
  %v126 = vpack.c.b16 %v112, %v111
  %v127 = vpack.c.b16 %v113, %v113
  %vm141 = vcmask 719872
  %v143 = vsel %vm141, %v58, 0
  %vm145 = vcmask 1043456
  %v147 = vsel %vm145, %v127, 0
  %149 = vmatprep.subr.bf16.mxu0 0
  %150 = vmatpush1.bf16.msra.mxu0 %v114
  %151 = vmatprep.subr.bf16.mxu0 0
  %152 = vmatpush1.bf16.msra.mxu0 %v115
  %153 = vmatprep.subr.bf16.mxu0 0
  %154 = vmatpush1.bf16.msra.mxu0 %v116
  %155 = vmatprep.subr.bf16.mxu0 0
  %156 = vmatpush1.bf16.msra.mxu0 %v117
  %157 = vmatprep.subr.bf16.mxu0 0
  %158 = vmatpush1.bf16.msra.mxu0 %v118
  %159 = vmatprep.subr.bf16.mxu0 0
  %160 = vmatpush1.bf16.msra.mxu0 %v119
  %161 = vmatprep.subr.bf16.mxu0 0
  %162 = vmatpush1.bf16.msra.mxu0 %v120
  %163 = vmatprep.subr.bf16.mxu0 0
  %164 = vmatpush1.bf16.msra.mxu0 %v121
  %165 = vmatprep.subr.bf16.mxu0 0
  %166 = vmatpush1.bf16.msra.mxu0 %v122
  %167 = vmatprep.subr.bf16.mxu0 0
  %168 = vmatpush1.bf16.msra.mxu0 %v123
  %169 = vmatprep.subr.bf16.mxu0 0
  %170 = vmatpush1.bf16.msra.mxu0 %v124
  %171 = vmatprep.subr.bf16.mxu0 0
  %172 = vmatpush1.bf16.msra.mxu0 %v125
  %173 = vmatprep.subr.bf16.mxu0 0
  %174 = vmatpush1.bf16.msra.mxu0 %v126
  %175 = vmatprep.subr.bf16.mxu0 0
  %176 = vmatpush1.bf16.msra.mxu0 %v147
  %177 = vmatprep.subr.bf16.mxu0 0
  %178 = vmatpush1.bf16.msra.mxu0 0
  %179 = vmatprep.subr.bf16.mxu0 0
  %180 = vmatpush1.bf16.msra.mxu0 0
  %181 = vmatprep.mubr.bf16.mxu0 %v143
  %182 = vmatmul.mubr.bf16.gmra.mrb[0].mxu0 %v57
  %v183 = vpop.f32.mrb[0].mxu0
  %v184 = vadd.f32 %v49, %v183
  %v185 = vpop.f32.mrb[0].mxu0
  %v186 = vpop.f32.mrb[0].mxu0
  %v187 = vadd.f32 %v49, %v186
  %v188 = vpop.f32.mrb[0].mxu0
  %189 = vdwg.mxu0
  %v190 = vmax.f32 %v184, 0.0
  %v191 = vmax.f32 %v187, 0.0
  %v192 = vpack.c.bf16 %v191, %v190
  %v194 = vunpack.c.l.b16 %v192
  %v195 = vunpack.c.h.b16 %v192
  %v196 = vpack.c.b16 %v194, %v194
  %v197 = vpack.c.b16 %v195, %v195
  %200 = vst [vmem:[%s3] sm:$0xf] %v196
  %201 = vst [vmem:[%s3 + $0x4] sm:$0xf] %v197
  // Predicated region
  $region14: #{unet_forward.13} parent=0 // pred_check
    _
  $region15: #{unet_forward.13} parent=0 // pred_check_branch
    %203 = sbr.rel (0) target = $region17
  $region16: #{unet_forward.13} parent=0 // pred_region
    _
  $region17: #{unet_forward.13} parent=0 // pred_fallthru
    _
  // Predicated region
  $region18: #{unet_forward.13} parent=0 // pred_check
    _
  $region19: #{unet_forward.13} parent=0 // pred_check_branch
    %205 = sbr.rel (0) target = $region21
  $region20: #{unet_forward.13} parent=0 // pred_region
    _
  $region21: #{unet_forward.13} parent=0 // pred_fallthru
    _

// kernel: unet_forward.14
$region0: #{unet_forward.14}
  #allocation0 [shape = 'u32[]', space=smem, size = 0x4, offset = 0x4, fixed_abs, tag = 'smem constant byte address 0x4 - core index']
  #allocation1 [shape = 'u32[144,128]{1,0:T(1,128)}', space=vmem, size = 0x12000, scoped, tag = 'internal scratch']
  %s0 = inlined_call_operand.vmem [shape: bf16[2,10,10,16], index: 0, kind: input, shape index: {}, may-alias: {0,1,2}]
  %s1 = inlined_call_operand.vmem [shape: bf16[2,10,10,16], index: 1, kind: input, shape index: {}, may-alias: {0,1,2}]
  %s2 = inlined_call_operand.vmem [shape: bf16[2,10,10,16], index: 2, kind: input, shape index: {}, may-alias: {0,1,2}]
  %s3 = inlined_call_operand.vmem [shape: bf16[144,16], index: 3, kind: input, shape index: {}]
  %s4 = inlined_call_operand.vmem [shape: f32[1,16], index: 4, kind: input, shape index: {}]
  %s5 = inlined_call_operand.vmem [shape: bf16[2,8,8,16], index: 5, kind: output, shape index: {}]
  %s6 = sld [smem:[#allocation0]]
  $region53: #{unet_forward.14} parent=0
    _
  %s8 = ssub.s32 1, %s6
  %s9 = scalar_select 0, %s8, %s6
  loop: start=0, step=1, limit=18
  $region2: #{unet_forward.14} parent=0 // loop_pre_header
    _
  $region3: #{unet_forward.14} parent=0 // loop_header
    %s11 = sphi 0, %s15
    %p12 = scmp.ge.s32.totalorder %s11, 18
    %s18 = sphi 0, %s30
    %s19 = sphi 0, %s26
    %s20 = sphi 0, %s18
    %s21 = sphi 0, %s19
    %s22 = sphi 0, %s20
    %s23 = sphi 0, %s21
    %s35 = sphi 0, %s37
    %s38 = sphi 0, %s35
    %s39 = sphi 0, %s38
    %s55 = sphi 0, %s39
    %s65 = sphi 0, %s67
    %s68 = sphi 0, %s65
    %s69 = sphi 0, %s68
    %s85 = sphi 0, %s69
    %s95 = sphi 0, %s97
    %s98 = sphi 0, %s95
    %s99 = sphi 0, %s98
    %s115 = sphi 0, %s99
    %s119 = sphi 0, %s119
    %s121 = sphi 0, %s119
    %s122 = sphi 0, %s121
    %s136 = sphi 0, %s122
    %s140 = sphi 0, %s140
    %s142 = sphi 0, %s140
    %s143 = sphi 0, %s142
    %s157 = sphi 0, %s143
    %s165 = sphi 0, %s167
    %s168 = sphi 0, %s165
    %s169 = sphi 0, %s168
    %s185 = sphi 0, %s169
  $region4: #{unet_forward.14} parent=0 // loop_header_branch
    %14 = sbr.rel (%p12) target = $region8
  $region5: #{unet_forward.14} parent=0 // loop_body
    %s16 = ssub.s32 %s11, 1
    %s17 = ssub.s32 %s11, 2
    %s24 = sadd.s32 1, %s19
    %p25 = scmp.ge.s32.totalorder %s24, 8
    %s26 = scalar_select %p25, 0, %s24
    %s27 = sadd.s32 1, %s18
    %s28 = scalar_select %p25, %s27, %s18
    %p29 = scmp.ge.s32.totalorder %s28, 2
    %s30 = scalar_select %p29, 0, %s28
    %s31 = ssub.s32 %s18, %s30
    %s32 = ssub.s32 %s19, %s26
    %s33 = sor.u32 %s31, %s32
    %p34 = scmp.eq.s32.totalorder %s33, 0
    %s36 = sadd.s32 %s35, 1
    %s37 = scalar_select %p34, %s35, %s36
    %p40 = pneg %p34
    %p41 = scmp.eq.s32.totalorder %s11, 15
    %p42 = por %p40, %p41
    %p43 = scmp.ne.s32.totalorder %s35, %s38
    %p44 = scmp.eq.s32.totalorder %s11, 0
    %p45 = por %p43, %p44
    %p46 = scmp.ne.s32.totalorder %s35, %s38
    %p47 = scmp.eq.s32.totalorder %s16, 15
    %p48 = por %p46, %p47
    %p49 = scmp.ne.s32.totalorder %s38, %s39
    %p50 = scmp.eq.s32.totalorder %s16, 0
    %p51 = por %p49, %p50
    %p52 = scmp.ne.s32.totalorder %s38, %s39
    %p53 = scmp.eq.s32.totalorder %s17, 15
    %p54 = por %p52, %p53
    %p56 = scmp.ne.s32.totalorder %s39, %s55
    %p57 = scmp.eq.s32.totalorder %s17, 0
    %p58 = por %p56, %p57
    %s59 = sadd.s32 %s19, 1
    %s60 = sadd.s32 %s26, 1
    %s61 = ssub.s32 %s18, %s30
    %s62 = ssub.s32 %s59, %s60
    %s63 = sor.u32 %s61, %s62
    %p64 = scmp.eq.s32.totalorder %s63, 0
    %s66 = sadd.s32 %s65, 1
    %s67 = scalar_select %p64, %s65, %s66
    %p70 = pneg %p64
    %p71 = scmp.eq.s32.totalorder %s11, 15
    %p72 = por %p70, %p71
    %p73 = scmp.ne.s32.totalorder %s65, %s68
    %p74 = scmp.eq.s32.totalorder %s11, 0
    %p75 = por %p73, %p74
    %p76 = scmp.ne.s32.totalorder %s65, %s68
    %p77 = scmp.eq.s32.totalorder %s16, 15
    %p78 = por %p76, %p77
    %p79 = scmp.ne.s32.totalorder %s68, %s69
    %p80 = scmp.eq.s32.totalorder %s16, 0
    %p81 = por %p79, %p80
    %p82 = scmp.ne.s32.totalorder %s68, %s69
    %p83 = scmp.eq.s32.totalorder %s17, 15
    %p84 = por %p82, %p83
    %p86 = scmp.ne.s32.totalorder %s69, %s85
    %p87 = scmp.eq.s32.totalorder %s17, 0
    %p88 = por %p86, %p87
    %s89 = sadd.s32 %s19, 2
    %s90 = sadd.s32 %s26, 2
    %s91 = ssub.s32 %s18, %s30
    %s92 = ssub.s32 %s89, %s90
    %s93 = sor.u32 %s91, %s92
    %p94 = scmp.eq.s32.totalorder %s93, 0
    %s96 = sadd.s32 %s95, 1
    %s97 = scalar_select %p94, %s95, %s96
    %p100 = pneg %p94
    %p101 = scmp.eq.s32.totalorder %s11, 15
    %p102 = por %p100, %p101
    %p103 = scmp.ne.s32.totalorder %s95, %s98
    %p104 = scmp.eq.s32.totalorder %s11, 0
    %p105 = por %p103, %p104
    %p106 = scmp.ne.s32.totalorder %s95, %s98
    %p107 = scmp.eq.s32.totalorder %s16, 15
    %p108 = por %p106, %p107
    %p109 = scmp.ne.s32.totalorder %s98, %s99
    %p110 = scmp.eq.s32.totalorder %s16, 0
    %p111 = por %p109, %p110
    %p112 = scmp.ne.s32.totalorder %s98, %s99
    %p113 = scmp.eq.s32.totalorder %s17, 15
    %p114 = por %p112, %p113
    %p116 = scmp.ne.s32.totalorder %s99, %s115
    %p117 = scmp.eq.s32.totalorder %s17, 0
    %p118 = por %p116, %p117
    %s120 = sadd.s32 %s119, 1
    %p123 = scmp.eq.s32.totalorder %s11, 15
    %p124 = scmp.ne.s32.totalorder %s119, %s121
    %p125 = scmp.eq.s32.totalorder %s11, 0
    %p126 = por %p124, %p125
    %p127 = scmp.ne.s32.totalorder %s119, %s121
    %p128 = scmp.eq.s32.totalorder %s16, 15
    %p129 = por %p127, %p128
    %p130 = scmp.ne.s32.totalorder %s121, %s122
    %p131 = scmp.eq.s32.totalorder %s16, 0
    %p132 = por %p130, %p131
    %p133 = scmp.ne.s32.totalorder %s121, %s122
    %p134 = scmp.eq.s32.totalorder %s17, 15
    %p135 = por %p133, %p134
    %p137 = scmp.ne.s32.totalorder %s122, %s136
    %p138 = scmp.eq.s32.totalorder %s17, 0
    %p139 = por %p137, %p138
    %s141 = sadd.s32 %s140, 1
    %p144 = scmp.eq.s32.totalorder %s11, 15
    %p145 = scmp.ne.s32.totalorder %s140, %s142
    %p146 = scmp.eq.s32.totalorder %s11, 0
    %p147 = por %p145, %p146
    %p148 = scmp.ne.s32.totalorder %s140, %s142
    %p149 = scmp.eq.s32.totalorder %s16, 15
    %p150 = por %p148, %p149
    %p151 = scmp.ne.s32.totalorder %s142, %s143
    %p152 = scmp.eq.s32.totalorder %s16, 0
    %p153 = por %p151, %p152
    %p154 = scmp.ne.s32.totalorder %s142, %s143
    %p155 = scmp.eq.s32.totalorder %s17, 15
    %p156 = por %p154, %p155
    %p158 = scmp.ne.s32.totalorder %s143, %s157
    %p159 = scmp.eq.s32.totalorder %s17, 0
    %p160 = por %p158, %p159
    %s161 = ssub.s32 %s18, %s30
    %s162 = ssub.s32 %s19, %s26
    %s163 = sor.u32 %s161, %s162
    %p164 = scmp.eq.s32.totalorder %s163, 0
    %s166 = sadd.s32 %s165, 1
    %s167 = scalar_select %p164, %s165, %s166
    %p170 = pneg %p164
    %p171 = scmp.eq.s32.totalorder %s11, 15
    %p172 = por %p170, %p171
    %p173 = scmp.ne.s32.totalorder %s165, %s168
    %p174 = scmp.eq.s32.totalorder %s11, 0
    %p175 = por %p173, %p174
    %p176 = scmp.ne.s32.totalorder %s165, %s168
    %p177 = scmp.eq.s32.totalorder %s16, 15
    %p178 = por %p176, %p177
    %p179 = scmp.ne.s32.totalorder %s168, %s169
    %p180 = scmp.eq.s32.totalorder %s16, 0
    %p181 = por %p179, %p180
    %p182 = scmp.ne.s32.totalorder %s168, %s169
    %p183 = scmp.eq.s32.totalorder %s17, 15
    %p184 = por %p182, %p183
    %p186 = scmp.ne.s32.totalorder %s169, %s185
    %p187 = scmp.eq.s32.totalorder %s17, 0
    %p188 = por %p186, %p187
    %p189 = scmp.le.s32.totalorder 1, %s11
    %p190 = scmp.lt.s32.totalorder %s11, 17
    %p191 = pnand %p189, %p190
    %p192 = pneg %p191
    // Predicated region
    $region9: #{unet_forward.14} parent=5 // pred_check
      _
    $region10: #{unet_forward.14} parent=5 // pred_check_branch
      %194 = sbr.rel (%p191) target = $region12
    $region11: #{unet_forward.14} parent=5 // pred_region
      %s195 = ssub.s32 %s11, 1
      // Predicated region
      $region13: #{unet_forward.14} parent=11 // pred_check
        %p196 = pneg %p132
      $region14: #{unet_forward.14} parent=11 // pred_check_branch
        %198 = sbr.rel (%p196) target = $region16
      $region15: #{unet_forward.14} parent=11 // pred_region
        _
      $region16: #{unet_forward.14} parent=11 // pred_fallthru
        _
      // Predicated region
      $region17: #{unet_forward.14} parent=11 // pred_check
        %p199 = pneg %p153
      $region18: #{unet_forward.14} parent=11 // pred_check_branch
        %201 = sbr.rel (%p199) target = $region20
      $region19: #{unet_forward.14} parent=11 // pred_region
        _
      $region20: #{unet_forward.14} parent=11 // pred_fallthru
        _
    $region12: #{unet_forward.14} parent=5 // pred_fallthru
      _
    %p202 = scmp.lt.s32.totalorder %s11, 16
    // Predicated region
    $region21: #{unet_forward.14} parent=5 // pred_check
      %p203 = pneg %p202
    $region22: #{unet_forward.14} parent=5 // pred_check_branch
      %205 = sbr.rel (%p203) target = $region24
    $region23: #{unet_forward.14} parent=5 // pred_region
      // Predicated region
      $region25: #{unet_forward.14} parent=23 // pred_check
        %p206 = pneg %p45
      $region26: #{unet_forward.14} parent=23 // pred_check_branch
        %208 = sbr.rel (%p206) target = $region28
      $region27: #{unet_forward.14} parent=23 // pred_region
        %p209 = scmp.lt.s32.totalorder %s18, 1
        %s210 = scalar_select %p209, %s18, 1
        %p211 = scmp.lt.s32.totalorder %s19, 9
        %s212 = scalar_select %p211, %s19, 9
        %s213 = smul.addr %s212, 2
        %s214 = smul.addr %s210, 20
        %s215 = sadd.s32 %s213, %s214
        %s216 = smul.addr %s215, 4
        %s217 = scalar_lea.vmem %s0, %s216
      $region28: #{unet_forward.14} parent=23 // pred_fallthru
        _
      // Predicated region
      $region29: #{unet_forward.14} parent=23 // pred_check
        %p218 = pneg %p75
      $region30: #{unet_forward.14} parent=23 // pred_check_branch
        %220 = sbr.rel (%p218) target = $region32
      $region31: #{unet_forward.14} parent=23 // pred_region
        %s221 = sadd.s32 %s19, 1
        %p222 = scmp.lt.s32.totalorder %s18, 1
        %s223 = scalar_select %p222, %s18, 1
        %p224 = scmp.lt.s32.totalorder %s221, 9
        %s225 = scalar_select %p224, %s221, 9
        %s226 = smul.addr %s225, 2
        %s227 = smul.addr %s223, 20
        %s228 = sadd.s32 %s226, %s227
        %s229 = smul.addr %s228, 4
        %s230 = scalar_lea.vmem %s1, %s229
        %s231 = sadd.s32 %s19, 1
      $region32: #{unet_forward.14} parent=23 // pred_fallthru
        _
      // Predicated region
      $region33: #{unet_forward.14} parent=23 // pred_check
        %p232 = pneg %p105
      $region34: #{unet_forward.14} parent=23 // pred_check_branch
        %234 = sbr.rel (%p232) target = $region36
      $region35: #{unet_forward.14} parent=23 // pred_region
        %s235 = sadd.s32 %s19, 2
        %p236 = scmp.lt.s32.totalorder %s18, 1
        %s237 = scalar_select %p236, %s18, 1
        %p238 = scmp.lt.s32.totalorder %s235, 9
        %s239 = scalar_select %p238, %s235, 9
        %s240 = smul.addr %s239, 2
        %s241 = smul.addr %s237, 20
        %s242 = sadd.s32 %s240, %s241
        %s243 = smul.addr %s242, 4
        %s244 = scalar_lea.vmem %s2, %s243
        %s245 = sadd.s32 %s19, 2
      $region36: #{unet_forward.14} parent=23 // pred_fallthru
        _
    $region24: #{unet_forward.14} parent=5 // pred_fallthru
      _
    %p246 = scmp.le.s32.totalorder 1, %s11
    %p247 = scmp.lt.s32.totalorder %s11, 17
    %p248 = pnand %p246, %p247
    %p249 = pneg %p248
    // Predicated region
    $region37: #{unet_forward.14} parent=5 // pred_check
      _
    $region38: #{unet_forward.14} parent=5 // pred_check_branch
      %251 = sbr.rel (%p248) target = $region40
    $region39: #{unet_forward.14} parent=5 // pred_region
      %s252 = ssub.s32 %s11, 1
      %p253 = scmp.lt.s32.totalorder %s20, 1
      %s254 = scalar_select %p253, %s20, 1
      %p255 = scmp.lt.s32.totalorder %s21, 9
      %s256 = scalar_select %p255, %s21, 9
      %s257 = smul.addr %s256, 2
      %s258 = smul.addr %s254, 20
      %s259 = sadd.s32 %s257, %s258
      %s260 = smul.addr %s259, 4
      %s261 = scalar_lea.vmem %s0, %s260
      %p262 = pneg %p51
      %p263 = pneg %p48
      %s264 = sadd.s32 %s21, 1
      %p265 = scmp.lt.s32.totalorder %s20, 1
      %s266 = scalar_select %p265, %s20, 1
      %p267 = scmp.lt.s32.totalorder %s264, 9
      %s268 = scalar_select %p267, %s264, 9
      %s269 = smul.addr %s268, 2
      %s270 = smul.addr %s266, 20
      %s271 = sadd.s32 %s269, %s270
      %s272 = smul.addr %s271, 4
      %s273 = scalar_lea.vmem %s1, %s272
      %p274 = pneg %p81
      %p275 = pneg %p78
      %s276 = sadd.s32 %s21, 2
      %p277 = scmp.lt.s32.totalorder %s20, 1
      %s278 = scalar_select %p277, %s20, 1
      %p279 = scmp.lt.s32.totalorder %s276, 9
      %s280 = scalar_select %p279, %s276, 9
      %s281 = smul.addr %s280, 2
      %s282 = smul.addr %s278, 20
      %s283 = sadd.s32 %s281, %s282
      %s284 = smul.addr %s283, 4
      %s285 = scalar_lea.vmem %s2, %s284
      %p286 = pneg %p111
      %p287 = pneg %p108
      %p288 = pneg %p132
      %p289 = pneg %p129
      %p290 = pneg %p153
      %p291 = pneg %p150
      %p292 = pneg %p181
      %p293 = pneg %p178
      %p294 = scmp.lt.s32.totalorder %s20, 1
      %s295 = scalar_select %p294, %s20, 1
      %p296 = scmp.lt.s32.totalorder %s21, 7
      %s297 = scalar_select %p296, %s21, 7
      %s298 = smul.addr %s295, 8
      %s299 = sadd.s32 %s297, %s298
      %s300 = smul.addr %s299, 4
      %s301 = scalar_lea.vmem %s5, %s300
      %p302 = scmp.lt.s32.totalorder %s20, 1
      %s303 = scalar_select %p302, %s20, 1
      %p304 = scmp.lt.s32.totalorder %s21, 9
      %s305 = scalar_select %p304, %s21, 9
      %s306 = smul.addr %s305, 2
      %s307 = smul.addr %s303, 20
      %s308 = sadd.s32 %s306, %s307
      %s309 = smul.addr %s308, 4
      %s310 = scalar_lea.vmem %s0, %s309
      %s311 = sadd.s32 %s21, 1
      %p312 = scmp.lt.s32.totalorder %s20, 1
      %s313 = scalar_select %p312, %s20, 1
      %p314 = scmp.lt.s32.totalorder %s311, 9
      %s315 = scalar_select %p314, %s311, 9
      %s316 = smul.addr %s315, 2
      %s317 = smul.addr %s313, 20
      %s318 = sadd.s32 %s316, %s317
      %s319 = smul.addr %s318, 4
      %s320 = scalar_lea.vmem %s1, %s319
      %s321 = sadd.s32 %s21, 1
      %s322 = sadd.s32 %s21, 2
      %p323 = scmp.lt.s32.totalorder %s20, 1
      %s324 = scalar_select %p323, %s20, 1
      %p325 = scmp.lt.s32.totalorder %s322, 9
      %s326 = scalar_select %p325, %s322, 9
      %s327 = smul.addr %s326, 2
      %s328 = smul.addr %s324, 20
      %s329 = sadd.s32 %s327, %s328
      %s330 = smul.addr %s329, 4
      %s331 = scalar_lea.vmem %s2, %s330
      %s332 = sadd.s32 %s21, 2
      %p333 = scmp.lt.s32.totalorder %s20, 1
      %s334 = scalar_select %p333, %s20, 1
      %p335 = scmp.lt.s32.totalorder %s21, 7
      %s336 = scalar_select %p335, %s21, 7
      %s337 = smul.addr %s334, 8
      %s338 = sadd.s32 %s336, %s337
      %s339 = smul.addr %s338, 4
      %s340 = scalar_lea.vmem %s5, %s339
      %v342 = vld [vmem:[%s310] sm:$0xf]
      %v343 = vld [vmem:[%s310 + $0x4] sm:$0x1]
      %v344 = vld [vmem:[%s320] sm:$0xf]
      %v345 = vld [vmem:[%s320 + $0x4] sm:$0x1]
      %v346 = vld [vmem:[%s331] sm:$0xf]
      %v347 = vld [vmem:[%s331 + $0x4] sm:$0x1]
      %v348 = vld [vmem:[%s3] sm:$0xf]
      %v349 = vld [vmem:[%s3 + $0x4] sm:$0xf]
      %v350 = vld [vmem:[%s3 + $0x8] sm:$0xf]
      %v351 = vld [vmem:[%s3 + $0xc] sm:$0xf]
      %v354 = vunpack.c.l.b16 %v342
      %v355 = vunpack.c.l.b16 %v343
      %v356 = vpack.c.b16 %v355, %v354
      %v358 = vshrl.u32 %v356, 16
      %v360 = vshll.u32 %v356, 16
      %v362 = vrot.slane %v360, 1
      %v363 = vor.u32 %v358, %v362
      %v366 = vunpack.c.l.b16 %v350
      %v367 = vunpack.c.l.b16 %v351
      %v368 = vpack.c.b16 %v367, %v366
      %vm370 = vcmask 130048
      %v372 = vsel %vm370, %v363, 0
      %374 = vmatprep.subr.bf16.mxu0 0
      %375 = vmatpush1.bf16.msra.mxu0 %v368
      %376 = vmatprep.subr.bf16.mxu0 0
      %377 = vmatpush1.bf16.msra.mxu0 0
      %378 = vmatprep.subr.bf16.mxu0 0
      %379 = vmatpush1.bf16.msra.mxu0 0
      %380 = vmatprep.subr.bf16.mxu0 0
      %381 = vmatpush1.bf16.msra.mxu0 0
      %382 = vmatprep.subr.bf16.mxu0 0
      %383 = vmatpush1.bf16.msra.mxu0 0
      %384 = vmatprep.subr.bf16.mxu0 0
      %385 = vmatpush1.bf16.msra.mxu0 0
      %386 = vmatprep.subr.bf16.mxu0 0
      %387 = vmatpush1.bf16.msra.mxu0 0
      %388 = vmatprep.subr.bf16.mxu0 0
      %389 = vmatpush1.bf16.msra.mxu0 0
      %390 = vmatprep.subr.bf16.mxu0 0
      %391 = vmatpush1.bf16.msra.mxu0 0
      %392 = vmatprep.subr.bf16.mxu0 0
      %393 = vmatpush1.bf16.msra.mxu0 0
      %394 = vmatprep.subr.bf16.mxu0 0
      %395 = vmatpush1.bf16.msra.mxu0 0
      %396 = vmatprep.subr.bf16.mxu0 0
      %397 = vmatpush1.bf16.msra.mxu0 0
      %398 = vmatprep.subr.bf16.mxu0 0
      %399 = vmatpush1.bf16.msra.mxu0 0
      %400 = vmatprep.subr.bf16.mxu0 0
      %401 = vmatpush1.bf16.msra.mxu0 0
      %402 = vmatprep.subr.bf16.mxu0 0
      %403 = vmatpush1.bf16.msra.mxu0 0
      %404 = vmatprep.subr.bf16.mxu0 0
      %405 = vmatpush1.bf16.msra.mxu0 0
      %406 = vmatprep.mubr.bf16.mxu0 0
      %407 = vmatmul.mubr.bf16.gmra.mrb[0].mxu0 %v372
      %v408 = vpop.f32.mrb[0].mxu0
      %v409 = vadd.f32 0.0, %v408
      %v410 = vpop.f32.mrb[0].mxu0
      %v411 = vpop.f32.mrb[0].mxu0
      %v412 = vpop.f32.mrb[0].mxu0
      %413 = vdwg.mxu0
      %v416 = vunpack.c.l.b16 %v348
      %v417 = vunpack.c.l.b16 %v349
      %v418 = vpack.c.b16 %v417, %v416
      %v421 = vsel %vm370, %v342, 0
      %423 = vmatprep.subr.bf16.mxu0 0
      %424 = vmatpush1.bf16.msra.mxu0 %v418
      %425 = vmatprep.subr.bf16.mxu0 0
      %426 = vmatpush1.bf16.msra.mxu0 0
      %427 = vmatprep.subr.bf16.mxu0 0
      %428 = vmatpush1.bf16.msra.mxu0 0
      %429 = vmatprep.subr.bf16.mxu0 0
      %430 = vmatpush1.bf16.msra.mxu0 0
      %431 = vmatprep.subr.bf16.mxu0 0
      %432 = vmatpush1.bf16.msra.mxu0 0
      %433 = vmatprep.subr.bf16.mxu0 0
      %434 = vmatpush1.bf16.msra.mxu0 0
      %435 = vmatprep.subr.bf16.mxu0 0
      %436 = vmatpush1.bf16.msra.mxu0 0
      %437 = vmatprep.subr.bf16.mxu0 0
      %438 = vmatpush1.bf16.msra.mxu0 0
      %439 = vmatprep.subr.bf16.mxu0 0
      %440 = vmatpush1.bf16.msra.mxu0 0
      %441 = vmatprep.subr.bf16.mxu0 0
      %442 = vmatpush1.bf16.msra.mxu0 0
      %443 = vmatprep.subr.bf16.mxu0 0
      %444 = vmatpush1.bf16.msra.mxu0 0
      %445 = vmatprep.subr.bf16.mxu0 0
      %446 = vmatpush1.bf16.msra.mxu0 0
      %447 = vmatprep.subr.bf16.mxu0 0
      %448 = vmatpush1.bf16.msra.mxu0 0
      %449 = vmatprep.subr.bf16.mxu0 0
      %450 = vmatpush1.bf16.msra.mxu0 0
      %451 = vmatprep.subr.bf16.mxu0 0
      %452 = vmatpush1.bf16.msra.mxu0 0
      %453 = vmatprep.subr.bf16.mxu0 0
      %454 = vmatpush1.bf16.msra.mxu0 0
      %455 = vmatprep.mubr.bf16.mxu0 0
      %456 = vmatmul.mubr.bf16.gmra.mrb[0].mxu0 %v421
      %v457 = vpop.f32.mrb[0].mxu0
      %v458 = vadd.f32 %v409, %v457
      %v459 = vpop.f32.mrb[0].mxu0
      %v460 = vpop.f32.mrb[0].mxu0
      %v461 = vpop.f32.mrb[0].mxu0
      %462 = vdwg.mxu0
      %v463 = vld [vmem:[%s3 + $0x10] sm:$0xf]
      %v464 = vld [vmem:[%s3 + $0x14] sm:$0xf]
      %v465 = vrot.slane %v356, 1
      %v468 = vunpack.c.l.b16 %v463
      %v469 = vunpack.c.l.b16 %v464
      %v470 = vpack.c.b16 %v469, %v468
      %v473 = vsel %vm370, %v465, 0
      %475 = vmatprep.subr.bf16.mxu0 0
      %476 = vmatpush1.bf16.msra.mxu0 %v470
      %477 = vmatprep.subr.bf16.mxu0 0
      %478 = vmatpush1.bf16.msra.mxu0 0
      %479 = vmatprep.subr.bf16.mxu0 0
      %480 = vmatpush1.bf16.msra.mxu0 0
      %481 = vmatprep.subr.bf16.mxu0 0
      %482 = vmatpush1.bf16.msra.mxu0 0
      %483 = vmatprep.subr.bf16.mxu0 0
      %484 = vmatpush1.bf16.msra.mxu0 0
      %485 = vmatprep.subr.bf16.mxu0 0
      %486 = vmatpush1.bf16.msra.mxu0 0
      %487 = vmatprep.subr.bf16.mxu0 0
      %488 = vmatpush1.bf16.msra.mxu0 0
      %489 = vmatprep.subr.bf16.mxu0 0
      %490 = vmatpush1.bf16.msra.mxu0 0
      %491 = vmatprep.subr.bf16.mxu0 0
      %492 = vmatpush1.bf16.msra.mxu0 0
      %493 = vmatprep.subr.bf16.mxu0 0
      %494 = vmatpush1.bf16.msra.mxu0 0
      %495 = vmatprep.subr.bf16.mxu0 0
      %496 = vmatpush1.bf16.msra.mxu0 0
      %497 = vmatprep.subr.bf16.mxu0 0
      %498 = vmatpush1.bf16.msra.mxu0 0
      %499 = vmatprep.subr.bf16.mxu0 0
      %500 = vmatpush1.bf16.msra.mxu0 0
      %501 = vmatprep.subr.bf16.mxu0 0
      %502 = vmatpush1.bf16.msra.mxu0 0
      %503 = vmatprep.subr.bf16.mxu0 0
      %504 = vmatpush1.bf16.msra.mxu0 0
      %505 = vmatprep.subr.bf16.mxu0 0
      %506 = vmatpush1.bf16.msra.mxu0 0
      %507 = vmatprep.mubr.bf16.mxu0 0
      %508 = vmatmul.mubr.bf16.gmra.mrb[0].mxu0 %v473
      %v509 = vpop.f32.mrb[0].mxu0
      %v510 = vadd.f32 0.0, %v509
      %v511 = vpop.f32.mrb[0].mxu0
      %v512 = vpop.f32.mrb[0].mxu0
      %v513 = vpop.f32.mrb[0].mxu0
      %514 = vdwg.mxu0
      %v515 = vadd.f32 %v458, %v510
      %v516 = vld [vmem:[%s3 + $0x18] sm:$0xf]
      %v517 = vld [vmem:[%s3 + $0x1c] sm:$0xf]
      %v520 = vunpack.c.l.b16 %v516
      %v521 = vunpack.c.l.b16 %v517
      %v522 = vpack.c.b16 %v521, %v520
      %v525 = vsel %vm370, %v344, 0
      %527 = vmatprep.subr.bf16.mxu0 0
      %528 = vmatpush1.bf16.msra.mxu0 %v522
      %529 = vmatprep.subr.bf16.mxu0 0
      %530 = vmatpush1.bf16.msra.mxu0 0
      %531 = vmatprep.subr.bf16.mxu0 0
      %532 = vmatpush1.bf16.msra.mxu0 0
      %533 = vmatprep.subr.bf16.mxu0 0
      %534 = vmatpush1.bf16.msra.mxu0 0
      %535 = vmatprep.subr.bf16.mxu0 0
      %536 = vmatpush1.bf16.msra.mxu0 0
      %537 = vmatprep.subr.bf16.mxu0 0
      %538 = vmatpush1.bf16.msra.mxu0 0
      %539 = vmatprep.subr.bf16.mxu0 0
      %540 = vmatpush1.bf16.msra.mxu0 0
      %541 = vmatprep.subr.bf16.mxu0 0
      %542 = vmatpush1.bf16.msra.mxu0 0
      %543 = vmatprep.subr.bf16.mxu0 0
      %544 = vmatpush1.bf16.msra.mxu0 0
      %545 = vmatprep.subr.bf16.mxu0 0
      %546 = vmatpush1.bf16.msra.mxu0 0
      %547 = vmatprep.subr.bf16.mxu0 0
      %548 = vmatpush1.bf16.msra.mxu0 0
      %549 = vmatprep.subr.bf16.mxu0 0
      %550 = vmatpush1.bf16.msra.mxu0 0
      %551 = vmatprep.subr.bf16.mxu0 0
      %552 = vmatpush1.bf16.msra.mxu0 0
      %553 = vmatprep.subr.bf16.mxu0 0
      %554 = vmatpush1.bf16.msra.mxu0 0
      %555 = vmatprep.subr.bf16.mxu0 0
      %556 = vmatpush1.bf16.msra.mxu0 0
      %557 = vmatprep.subr.bf16.mxu0 0
      %558 = vmatpush1.bf16.msra.mxu0 0
      %559 = vmatprep.mubr.bf16.mxu0 0
      %560 = vmatmul.mubr.bf16.gmra.mrb[0].mxu0 %v525
      %v561 = vpop.f32.mrb[0].mxu0
      %v562 = vadd.f32 0.0, %v561
      %v563 = vpop.f32.mrb[0].mxu0
      %v564 = vpop.f32.mrb[0].mxu0
      %v565 = vpop.f32.mrb[0].mxu0
      %566 = vdwg.mxu0
      %v567 = vadd.f32 %v515, %v562
      %v568 = vld [vmem:[%s3 + $0x20] sm:$0xf]
      %v569 = vld [vmem:[%s3 + $0x24] sm:$0xf]
      %v572 = vunpack.c.l.b16 %v344
      %v573 = vunpack.c.l.b16 %v345
      %v574 = vpack.c.b16 %v573, %v572
      %v576 = vshrl.u32 %v574, 16
      %v578 = vshll.u32 %v574, 16
      %v580 = vrot.slane %v578, 1
      %v581 = vor.u32 %v576, %v580
      %v584 = vunpack.c.l.b16 %v568
      %v585 = vunpack.c.l.b16 %v569
      %v586 = vpack.c.b16 %v585, %v584
      %v589 = vsel %vm370, %v581, 0
      %591 = vmatprep.subr.bf16.mxu0 0
      %592 = vmatpush1.bf16.msra.mxu0 %v586
      %593 = vmatprep.subr.bf16.mxu0 0
      %594 = vmatpush1.bf16.msra.mxu0 0
      %595 = vmatprep.subr.bf16.mxu0 0
      %596 = vmatpush1.bf16.msra.mxu0 0
      %597 = vmatprep.subr.bf16.mxu0 0
      %598 = vmatpush1.bf16.msra.mxu0 0
      %599 = vmatprep.subr.bf16.mxu0 0
      %600 = vmatpush1.bf16.msra.mxu0 0
      %601 = vmatprep.subr.bf16.mxu0 0
      %602 = vmatpush1.bf16.msra.mxu0 0
      %603 = vmatprep.subr.bf16.mxu0 0
      %604 = vmatpush1.bf16.msra.mxu0 0
      %605 = vmatprep.subr.bf16.mxu0 0
      %606 = vmatpush1.bf16.msra.mxu0 0
      %607 = vmatprep.subr.bf16.mxu0 0
      %608 = vmatpush1.bf16.msra.mxu0 0
      %609 = vmatprep.subr.bf16.mxu0 0
      %610 = vmatpush1.bf16.msra.mxu0 0
      %611 = vmatprep.subr.bf16.mxu0 0
      %612 = vmatpush1.bf16.msra.mxu0 0
      %613 = vmatprep.subr.bf16.mxu0 0
      %614 = vmatpush1.bf16.msra.mxu0 0
      %615 = vmatprep.subr.bf16.mxu0 0
      %616 = vmatpush1.bf16.msra.mxu0 0
      %617 = vmatprep.subr.bf16.mxu0 0
      %618 = vmatpush1.bf16.msra.mxu0 0
      %619 = vmatprep.subr.bf16.mxu0 0
      %620 = vmatpush1.bf16.msra.mxu0 0
      %621 = vmatprep.subr.bf16.mxu0 0
      %622 = vmatpush1.bf16.msra.mxu0 0
      %623 = vmatprep.mubr.bf16.mxu0 0
      %624 = vmatmul.mubr.bf16.gmra.mrb[0].mxu0 %v589
      %v625 = vpop.f32.mrb[0].mxu0
      %v626 = vadd.f32 0.0, %v625
      %v627 = vpop.f32.mrb[0].mxu0
      %v628 = vpop.f32.mrb[0].mxu0
      %v629 = vpop.f32.mrb[0].mxu0
      %630 = vdwg.mxu0
      %v631 = vadd.f32 %v567, %v626
      %v632 = vld [vmem:[%s3 + $0x28] sm:$0xf]
      %v633 = vld [vmem:[%s3 + $0x2c] sm:$0xf]
      %v634 = vrot.slane %v574, 1
      %v637 = vunpack.c.l.b16 %v632
      %v638 = vunpack.c.l.b16 %v633
      %v639 = vpack.c.b16 %v638, %v637
      %v642 = vsel %vm370, %v634, 0
      %644 = vmatprep.subr.bf16.mxu0 0
      %645 = vmatpush1.bf16.msra.mxu0 %v639
      %646 = vmatprep.subr.bf16.mxu0 0
      %647 = vmatpush1.bf16.msra.mxu0 0
      %648 = vmatprep.subr.bf16.mxu0 0
      %649 = vmatpush1.bf16.msra.mxu0 0
      %650 = vmatprep.subr.bf16.mxu0 0
      %651 = vmatpush1.bf16.msra.mxu0 0
      %652 = vmatprep.subr.bf16.mxu0 0
      %653 = vmatpush1.bf16.msra.mxu0 0
      %654 = vmatprep.subr.bf16.mxu0 0
      %655 = vmatpush1.bf16.msra.mxu0 0
      %656 = vmatprep.subr.bf16.mxu0 0
      %657 = vmatpush1.bf16.msra.mxu0 0
      %658 = vmatprep.subr.bf16.mxu0 0
      %659 = vmatpush1.bf16.msra.mxu0 0
      %660 = vmatprep.subr.bf16.mxu0 0
      %661 = vmatpush1.bf16.msra.mxu0 0
      %662 = vmatprep.subr.bf16.mxu0 0
      %663 = vmatpush1.bf16.msra.mxu0 0
      %664 = vmatprep.subr.bf16.mxu0 0
      %665 = vmatpush1.bf16.msra.mxu0 0
      %666 = vmatprep.subr.bf16.mxu0 0
      %667 = vmatpush1.bf16.msra.mxu0 0
      %668 = vmatprep.subr.bf16.mxu0 0
      %669 = vmatpush1.bf16.msra.mxu0 0
      %670 = vmatprep.subr.bf16.mxu0 0
      %671 = vmatpush1.bf16.msra.mxu0 0
      %672 = vmatprep.subr.bf16.mxu0 0
      %673 = vmatpush1.bf16.msra.mxu0 0
      %674 = vmatprep.subr.bf16.mxu0 0
      %675 = vmatpush1.bf16.msra.mxu0 0
      %676 = vmatprep.mubr.bf16.mxu0 0
      %677 = vmatmul.mubr.bf16.gmra.mrb[0].mxu0 %v642
      %v678 = vpop.f32.mrb[0].mxu0
      %v679 = vadd.f32 0.0, %v678
      %v680 = vpop.f32.mrb[0].mxu0
      %v681 = vpop.f32.mrb[0].mxu0
      %v682 = vpop.f32.mrb[0].mxu0
      %683 = vdwg.mxu0
      %v684 = vadd.f32 %v631, %v679
      %v685 = vld [vmem:[%s3 + $0x30] sm:$0xf]
      %v686 = vld [vmem:[%s3 + $0x34] sm:$0xf]
      %v689 = vunpack.c.l.b16 %v685
      %v690 = vunpack.c.l.b16 %v686
      %v691 = vpack.c.b16 %v690, %v689
      %v694 = vsel %vm370, %v346, 0
      %696 = vmatprep.subr.bf16.mxu0 0
      %697 = vmatpush1.bf16.msra.mxu0 %v691
      %698 = vmatprep.subr.bf16.mxu0 0
      %699 = vmatpush1.bf16.msra.mxu0 0
      %700 = vmatprep.subr.bf16.mxu0 0
      %701 = vmatpush1.bf16.msra.mxu0 0
      %702 = vmatprep.subr.bf16.mxu0 0
      %703 = vmatpush1.bf16.msra.mxu0 0
      %704 = vmatprep.subr.bf16.mxu0 0
      %705 = vmatpush1.bf16.msra.mxu0 0
      %706 = vmatprep.subr.bf16.mxu0 0
      %707 = vmatpush1.bf16.msra.mxu0 0
      %708 = vmatprep.subr.bf16.mxu0 0
      %709 = vmatpush1.bf16.msra.mxu0 0
      %710 = vmatprep.subr.bf16.mxu0 0
      %711 = vmatpush1.bf16.msra.mxu0 0
      %712 = vmatprep.subr.bf16.mxu0 0
      %713 = vmatpush1.bf16.msra.mxu0 0
      %714 = vmatprep.subr.bf16.mxu0 0
      %715 = vmatpush1.bf16.msra.mxu0 0
      %716 = vmatprep.subr.bf16.mxu0 0
      %717 = vmatpush1.bf16.msra.mxu0 0
      %718 = vmatprep.subr.bf16.mxu0 0
      %719 = vmatpush1.bf16.msra.mxu0 0
      %720 = vmatprep.subr.bf16.mxu0 0
      %721 = vmatpush1.bf16.msra.mxu0 0
      %722 = vmatprep.subr.bf16.mxu0 0
      %723 = vmatpush1.bf16.msra.mxu0 0
      %724 = vmatprep.subr.bf16.mxu0 0
      %725 = vmatpush1.bf16.msra.mxu0 0
      %726 = vmatprep.subr.bf16.mxu0 0
      %727 = vmatpush1.bf16.msra.mxu0 0
      %728 = vmatprep.mubr.bf16.mxu0 0
      %729 = vmatmul.mubr.bf16.gmra.mrb[0].mxu0 %v694
      %v730 = vpop.f32.mrb[0].mxu0
      %v731 = vadd.f32 0.0, %v730
      %v732 = vpop.f32.mrb[0].mxu0
      %v733 = vpop.f32.mrb[0].mxu0
      %v734 = vpop.f32.mrb[0].mxu0
      %735 = vdwg.mxu0
      %v736 = vadd.f32 %v684, %v731
      %v737 = vld [vmem:[%s3 + $0x38] sm:$0xf]
      %v738 = vld [vmem:[%s3 + $0x3c] sm:$0xf]
      %v741 = vunpack.c.l.b16 %v346
      %v742 = vunpack.c.l.b16 %v347
      %v743 = vpack.c.b16 %v742, %v741
      %v745 = vshrl.u32 %v743, 16
      %v747 = vshll.u32 %v743, 16
      %v749 = vrot.slane %v747, 1
      %v750 = vor.u32 %v745, %v749
      %v753 = vunpack.c.l.b16 %v737
      %v754 = vunpack.c.l.b16 %v738
      %v755 = vpack.c.b16 %v754, %v753
      %v758 = vsel %vm370, %v750, 0
      %760 = vmatprep.subr.bf16.mxu0 0
      %761 = vmatpush1.bf16.msra.mxu0 %v755
      %762 = vmatprep.subr.bf16.mxu0 0
      %763 = vmatpush1.bf16.msra.mxu0 0
      %764 = vmatprep.subr.bf16.mxu0 0
      %765 = vmatpush1.bf16.msra.mxu0 0
      %766 = vmatprep.subr.bf16.mxu0 0
      %767 = vmatpush1.bf16.msra.mxu0 0
      %768 = vmatprep.subr.bf16.mxu0 0
      %769 = vmatpush1.bf16.msra.mxu0 0
      %770 = vmatprep.subr.bf16.mxu0 0
      %771 = vmatpush1.bf16.msra.mxu0 0
      %772 = vmatprep.subr.bf16.mxu0 0
      %773 = vmatpush1.bf16.msra.mxu0 0
      %774 = vmatprep.subr.bf16.mxu0 0
      %775 = vmatpush1.bf16.msra.mxu0 0
      %776 = vmatprep.subr.bf16.mxu0 0
      %777 = vmatpush1.bf16.msra.mxu0 0
      %778 = vmatprep.subr.bf16.mxu0 0
      %779 = vmatpush1.bf16.msra.mxu0 0
      %780 = vmatprep.subr.bf16.mxu0 0
      %781 = vmatpush1.bf16.msra.mxu0 0
      %782 = vmatprep.subr.bf16.mxu0 0
      %783 = vmatpush1.bf16.msra.mxu0 0
      %784 = vmatprep.subr.bf16.mxu0 0
      %785 = vmatpush1.bf16.msra.mxu0 0
      %786 = vmatprep.subr.bf16.mxu0 0
      %787 = vmatpush1.bf16.msra.mxu0 0
      %788 = vmatprep.subr.bf16.mxu0 0
      %789 = vmatpush1.bf16.msra.mxu0 0
      %790 = vmatprep.subr.bf16.mxu0 0
      %791 = vmatpush1.bf16.msra.mxu0 0
      %792 = vmatprep.mubr.bf16.mxu0 0
      %793 = vmatmul.mubr.bf16.gmra.mrb[0].mxu0 %v758
      %v794 = vpop.f32.mrb[0].mxu0
      %v795 = vadd.f32 0.0, %v794
      %v796 = vpop.f32.mrb[0].mxu0
      %v797 = vpop.f32.mrb[0].mxu0
      %v798 = vpop.f32.mrb[0].mxu0
      %799 = vdwg.mxu0
      %v800 = vadd.f32 %v736, %v795
      %v801 = vld [vmem:[%s3 + $0x40] sm:$0xf]
      %v802 = vld [vmem:[%s3 + $0x44] sm:$0xf]
      %v803 = vrot.slane %v743, 1
      %v806 = vunpack.c.l.b16 %v801
      %v807 = vunpack.c.l.b16 %v802
      %v808 = vpack.c.b16 %v807, %v806
      %v811 = vsel %vm370, %v803, 0
      %813 = vmatprep.subr.bf16.mxu0 0
      %814 = vmatpush1.bf16.msra.mxu0 %v808
      %815 = vmatprep.subr.bf16.mxu0 0
      %816 = vmatpush1.bf16.msra.mxu0 0
      %817 = vmatprep.subr.bf16.mxu0 0
      %818 = vmatpush1.bf16.msra.mxu0 0
      %819 = vmatprep.subr.bf16.mxu0 0
      %820 = vmatpush1.bf16.msra.mxu0 0
      %821 = vmatprep.subr.bf16.mxu0 0
      %822 = vmatpush1.bf16.msra.mxu0 0
      %823 = vmatprep.subr.bf16.mxu0 0
      %824 = vmatpush1.bf16.msra.mxu0 0
      %825 = vmatprep.subr.bf16.mxu0 0
      %826 = vmatpush1.bf16.msra.mxu0 0
      %827 = vmatprep.subr.bf16.mxu0 0
      %828 = vmatpush1.bf16.msra.mxu0 0
      %829 = vmatprep.subr.bf16.mxu0 0
      %830 = vmatpush1.bf16.msra.mxu0 0
      %831 = vmatprep.subr.bf16.mxu0 0
      %832 = vmatpush1.bf16.msra.mxu0 0
      %833 = vmatprep.subr.bf16.mxu0 0
      %834 = vmatpush1.bf16.msra.mxu0 0
      %835 = vmatprep.subr.bf16.mxu0 0
      %836 = vmatpush1.bf16.msra.mxu0 0
      %837 = vmatprep.subr.bf16.mxu0 0
      %838 = vmatpush1.bf16.msra.mxu0 0
      %839 = vmatprep.subr.bf16.mxu0 0
      %840 = vmatpush1.bf16.msra.mxu0 0
      %841 = vmatprep.subr.bf16.mxu0 0
      %842 = vmatpush1.bf16.msra.mxu0 0
      %843 = vmatprep.subr.bf16.mxu0 0
      %844 = vmatpush1.bf16.msra.mxu0 0
      %845 = vmatprep.mubr.bf16.mxu0 0
      %846 = vmatmul.mubr.bf16.gmra.mrb[0].mxu0 %v811
      %v847 = vpop.f32.mrb[0].mxu0
      %v848 = vadd.f32 0.0, %v847
      %v849 = vpop.f32.mrb[0].mxu0
      %v850 = vpop.f32.mrb[0].mxu0
      %v851 = vpop.f32.mrb[0].mxu0
      %852 = vdwg.mxu0
      %v853 = vadd.f32 %v800, %v848
      %v854 = vld [vmem:[%s4] sm:$0x1]
      %v856 = vlaneseq
      %v857 = vshrl.u32 %v856, 7
      %v858 = vsub.s32 0, %v857
      %v859 = vrot.slane %v854, %v858
      %v861 = vadd.f32 %v853, %v859
      %v862 = vmax.f32 %v861, 0.0
      %v863 = vpack.c.bf16 %v862, %v862
      %vm864 = vcmask 125952
      %865 = vst.msk [vmem:[%s340] sm:$0xf] %vm864, %v863
      %p866 = scmp.lt.s32.totalorder %s20, 1
      %s867 = scalar_select %p866, %s20, 1
      %p868 = scmp.lt.s32.totalorder %s21, 7
      %s869 = scalar_select %p868, %s21, 7
      %s870 = smul.addr %s867, 8
      %s871 = sadd.s32 %s869, %s870
      %s872 = smul.addr %s871, 4
      %s873 = scalar_lea.vmem %s5, %s872
      // Predicated region
      $region41: #{unet_forward.14} parent=39 // pred_check
        %p874 = pneg %p178
      $region42: #{unet_forward.14} parent=39 // pred_check_branch
        %876 = sbr.rel (%p874) target = $region44
      $region43: #{unet_forward.14} parent=39 // pred_region
        _
      $region44: #{unet_forward.14} parent=39 // pred_fallthru
        _
    $region40: #{unet_forward.14} parent=5 // pred_fallthru
      _
    %p877 = scmp.le.s32.totalorder 2, %s11
    // Predicated region
    $region45: #{unet_forward.14} parent=5 // pred_check
      %p878 = pneg %p877
    $region46: #{unet_forward.14} parent=5 // pred_check_branch
      %880 = sbr.rel (%p878) target = $region48
    $region47: #{unet_forward.14} parent=5 // pred_region
      %s881 = ssub.s32 %s11, 2
      // Predicated region
      $region49: #{unet_forward.14} parent=47 // pred_check
        %p882 = pneg %p184
      $region50: #{unet_forward.14} parent=47 // pred_check_branch
        %884 = sbr.rel (%p882) target = $region52
      $region51: #{unet_forward.14} parent=47 // pred_region
        %p885 = scmp.lt.s32.totalorder %s22, 1
        %s886 = scalar_select %p885, %s22, 1
        %p887 = scmp.lt.s32.totalorder %s23, 7
        %s888 = scalar_select %p887, %s23, 7
        %s889 = smul.addr %s886, 8
        %s890 = sadd.s32 %s888, %s889
        %s891 = smul.addr %s890, 4
        %s892 = scalar_lea.vmem %s5, %s891
      $region52: #{unet_forward.14} parent=47 // pred_fallthru
        _
    $region48: #{unet_forward.14} parent=5 // pred_fallthru
      _
  $region6: #{unet_forward.14} parent=0 // loop_footer
    %s15 = sadd.s32 1, %s11
  $region7: #{unet_forward.14} parent=0 // loop_footer_branch
    %10 = sbr.rel target = $region3
  $region8: #{unet_forward.14} parent=0 // loop_exit
    _

// kernel: tile.48
$region0: #{tile.48}
  #allocation0 [shape = 's32[1]{0}', space=sflag, size = 0x4, scoped, tag = 'scoped memory for tile.48']
  %s0 = inlined_call_operand.vmem [shape: f32[32], index: 0, kind: input, shape index: {}]
  %s1 = inlined_call_operand.vmem [shape: f32[4,32], index: 1, kind: output, shape index: {}]
  // Predicated region
  $region2: #{tile.48} parent=0 // pred_check
    _
  $region3: #{tile.48} parent=0 // pred_check_branch
    %3 = sbr.rel (0) target = $region5
  $region4: #{tile.48} parent=0 // pred_region
    _
  $region5: #{tile.48} parent=0 // pred_fallthru
    _
  %v4 = vld [vmem:[%s0] ss:$0 sm:$0xff]
  %5 = vst [vmem:[%s1] sm:$0xf] %v4

// kernel: tile.49
$region0: #{tile.49}
  %s0 = inlined_call_operand.vmem [shape: f32[4,32], index: 0, kind: input, shape index: {}]
  %s1 = inlined_call_operand.vmem [shape: f32[1,128], index: 1, kind: output, shape index: {}]
  $region1: #{tile.49} parent=0
    #allocation0 [shape = 'u8[4096]{0}', space=vmem, size = 0x1000, scoped, tag = 'scoped mem for output reshape']
    #allocation1 [shape = 'u8[4096]{0}', space=vmem, size = 0x1000, scoped, tag = 'scoped mem for input reshape']
    %s3 = sshllo.u32 0, 4
    %v4 = vld [vmem:[%s0] sm:%s3]
    %5 = vst [vmem:[#allocation1] sm:%s3] %v4
    %v6 = vld [vmem:[#allocation1] sm:$0x1]
    %vm7 = vcmask 261120
    %8 = vst.msk [vmem:[#allocation0] sm:$0x1] %vm7, %v6
    %s9 = scalar_lea.vmem [#allocation1], 3
    %v10 = vld [vmem:[%s9] sm:$0x1]
    %11 = vrot.lane.b32.xlu0 %v10, 96
    %v12 = vpop.permute.xlu0 %11
    %vm13 = vcmask 1048320
    %14 = vst.msk [vmem:[#allocation0] sm:$0x1] %vm13, %v12
    %s15 = scalar_lea.vmem [#allocation1], 2
    %v16 = vld [vmem:[%s15] sm:$0x1]
    %17 = vrot.lane.b32.xlu0 %v16, 64
    %v18 = vpop.permute.xlu0 %17
    %vm19 = vcmask 785920
    %20 = vst.msk [vmem:[#allocation0] sm:$0x1] %vm19, %v18
    %s21 = scalar_lea.vmem [#allocation1], 1
    %v22 = vld [vmem:[%s21] sm:$0x1]
    %23 = vrot.lane.b32.xlu0 %v22, 32
    %v24 = vpop.permute.xlu0 %23
    %vm25 = vcmask 523520
    %26 = vst.msk [vmem:[#allocation0] sm:$0x1] %vm25, %v24
    %s28 = sshllo.u32 0, 1
    %v30 = vld [vmem:[#allocation0] sm:%s28]
    %s31 = sshllo.u32 0, 1
    %32 = vst [vmem:[%s1] sm:%s31] %v30

// kernel: unet_forward.15
$region0: #{unet_forward.15}
  #allocation0 [shape = 'u32[]', space=smem, size = 0x4, offset = 0x4, fixed_abs, tag = 'smem constant byte address 0x4 - core index']
  #allocation1 [shape = 'u32[144,128]{1,0:T(1,128)}', space=vmem, size = 0x12000, scoped, tag = 'internal scratch']
  %s0 = inlined_call_operand.vmem [shape: bf16[8,576], index: 0, kind: input, shape index: {}]
  %s1 = inlined_call_operand.vmem [shape: bf16[576,128], index: 1, kind: input, shape index: {}]
  %s2 = inlined_call_operand.vmem [shape: f32[1,128], index: 2, kind: input, shape index: {}]
  %s3 = inlined_call_operand.vmem [shape: bf16[8,128], index: 3, kind: output, shape index: {}]
  %s4 = sld [smem:[#allocation0]]
  $region22: #{unet_forward.15} parent=0
    _
  %s6 = ssub.s32 1, %s4
  %s7 = scalar_select 0, %s6, %s4
  // Predicated region
  $region2: #{unet_forward.15} parent=0 // pred_check
    _
  $region3: #{unet_forward.15} parent=0 // pred_check_branch
    %9 = sbr.rel (0) target = $region5
  $region4: #{unet_forward.15} parent=0 // pred_region
    _
  $region5: #{unet_forward.15} parent=0 // pred_fallthru
    _
  // Predicated region
  $region6: #{unet_forward.15} parent=0 // pred_check
    _
  $region7: #{unet_forward.15} parent=0 // pred_check_branch
    %11 = sbr.rel (0) target = $region9
  $region8: #{unet_forward.15} parent=0 // pred_region
    _
  $region9: #{unet_forward.15} parent=0 // pred_fallthru
    _
  // Predicated region
  $region10: #{unet_forward.15} parent=0 // pred_check
    _
  $region11: #{unet_forward.15} parent=0 // pred_check_branch
    %13 = sbr.rel (0) target = $region13
  $region12: #{unet_forward.15} parent=0 // pred_region
    _
  $region13: #{unet_forward.15} parent=0 // pred_fallthru
    _
  %v15 = vld [vmem:[%s0] sm:$0xff]
  %v16 = vld [vmem:[%s0 + $0x8] sm:$0xff]
  %v17 = vld [vmem:[%s0 + $0x10] sm:$0xf]
  %v18 = vld [vmem:[%s1] sm:$0xf]
  %v19 = vld [vmem:[%s1 + $0x4] sm:$0xf]
  %v20 = vld [vmem:[%s1 + $0x8] sm:$0xf]
  %v21 = vld [vmem:[%s1 + $0xc] sm:$0xf]
  %v22 = vld [vmem:[%s1 + $0x10] sm:$0xf]
  %v23 = vld [vmem:[%s1 + $0x14] sm:$0xf]
  %v24 = vld [vmem:[%s1 + $0x18] sm:$0xf]
  %v25 = vld [vmem:[%s1 + $0x1c] sm:$0xf]
  %v26 = vld [vmem:[%s1 + $0x20] sm:$0xf]
  %v27 = vld [vmem:[%s1 + $0x24] sm:$0xf]
  %v28 = vld [vmem:[%s1 + $0x28] sm:$0xf]
  %v29 = vld [vmem:[%s1 + $0x2c] sm:$0xf]
  %v30 = vld [vmem:[%s1 + $0x30] sm:$0xf]
  %v31 = vld [vmem:[%s1 + $0x34] sm:$0xf]
  %v32 = vld [vmem:[%s1 + $0x38] sm:$0xf]
  %v33 = vld [vmem:[%s1 + $0x3c] sm:$0xf]
  %v34 = vld [vmem:[%s1 + $0x40] sm:$0xf]
  %v35 = vld [vmem:[%s1 + $0x44] sm:$0xf]
  %v36 = vld [vmem:[%s1 + $0x48] sm:$0xf]
  %v37 = vld [vmem:[%s1 + $0x4c] sm:$0xf]
  %v38 = vld [vmem:[%s1 + $0x50] sm:$0xf]
  %v39 = vld [vmem:[%s1 + $0x54] sm:$0xf]
  %v40 = vld [vmem:[%s1 + $0x58] sm:$0xf]
  %v41 = vld [vmem:[%s1 + $0x5c] sm:$0xf]
  %v42 = vld [vmem:[%s1 + $0x60] sm:$0xf]
  %v43 = vld [vmem:[%s1 + $0x64] sm:$0xf]
  %v44 = vld [vmem:[%s1 + $0x68] sm:$0xf]
  %v45 = vld [vmem:[%s1 + $0x6c] sm:$0xf]
  %v46 = vld [vmem:[%s1 + $0x70] sm:$0xf]
  %v47 = vld [vmem:[%s1 + $0x74] sm:$0xf]
  %v48 = vld [vmem:[%s1 + $0x78] sm:$0xf]
  %v49 = vld [vmem:[%s1 + $0x7c] sm:$0xf]
  %v50 = vld [vmem:[%s1 + $0x80] sm:$0xf]
  %v51 = vld [vmem:[%s1 + $0x84] sm:$0xf]
  %v52 = vld [vmem:[%s1 + $0x88] sm:$0xf]
  %v53 = vld [vmem:[%s1 + $0x8c] sm:$0xf]
  %v54 = vld [vmem:[%s1 + $0x90] sm:$0xf]
  %v55 = vld [vmem:[%s1 + $0x94] sm:$0xf]
  %v56 = vld [vmem:[%s1 + $0x98] sm:$0xf]
  %v57 = vld [vmem:[%s1 + $0x9c] sm:$0xf]
  %v58 = vld [vmem:[%s1 + $0xa0] sm:$0xf]
  %v59 = vld [vmem:[%s1 + $0xa4] sm:$0xf]
  %v60 = vld [vmem:[%s1 + $0xa8] sm:$0xf]
  %v61 = vld [vmem:[%s1 + $0xac] sm:$0xf]
  %v62 = vld [vmem:[%s1 + $0xb0] sm:$0xf]
  %v63 = vld [vmem:[%s1 + $0xb4] sm:$0xf]
  %v64 = vld [vmem:[%s1 + $0xb8] sm:$0xf]
  %v65 = vld [vmem:[%s1 + $0xbc] sm:$0xf]
  %v66 = vld [vmem:[%s1 + $0xc0] sm:$0xf]
  %v67 = vld [vmem:[%s1 + $0xc4] sm:$0xf]
  %v68 = vld [vmem:[%s1 + $0xc8] sm:$0xf]
  %v69 = vld [vmem:[%s1 + $0xcc] sm:$0xf]
  %v70 = vld [vmem:[%s1 + $0xd0] sm:$0xf]
  %v71 = vld [vmem:[%s1 + $0xd4] sm:$0xf]
  %v72 = vld [vmem:[%s1 + $0xd8] sm:$0xf]
  %v73 = vld [vmem:[%s1 + $0xdc] sm:$0xf]
  %v74 = vld [vmem:[%s1 + $0xe0] sm:$0xf]
  %v75 = vld [vmem:[%s1 + $0xe4] sm:$0xf]
  %v76 = vld [vmem:[%s1 + $0xe8] sm:$0xf]
  %v77 = vld [vmem:[%s1 + $0xec] sm:$0xf]
  %v78 = vld [vmem:[%s1 + $0xf0] sm:$0xf]
  %v79 = vld [vmem:[%s1 + $0xf4] sm:$0xf]
  %v80 = vld [vmem:[%s1 + $0xf8] sm:$0xf]
  %v81 = vld [vmem:[%s1 + $0xfc] sm:$0xf]
  %v82 = vld [vmem:[%s1 + $0x100] sm:$0xf]
  %v83 = vld [vmem:[%s1 + $0x104] sm:$0xf]
  %v84 = vld [vmem:[%s1 + $0x108] sm:$0xf]
  %v85 = vld [vmem:[%s1 + $0x10c] sm:$0xf]
  %v86 = vld [vmem:[%s1 + $0x110] sm:$0xf]
  %v87 = vld [vmem:[%s1 + $0x114] sm:$0xf]
  %v88 = vld [vmem:[%s1 + $0x118] sm:$0xf]
  %v89 = vld [vmem:[%s1 + $0x11c] sm:$0xf]
  %v90 = vld [vmem:[%s2] sm:$0x1]
  %v92 = vlaneseq
  %v93 = vshrl.u32 %v92, 7
  %v94 = vsub.s32 0, %v93
  %v95 = vrot.slane %v90, %v94
  %v100 = vunpack.c.l.b16 %v15
  %v101 = vunpack.c.h.b16 %v15
  %v102 = vunpack.c.l.b16 %v16
  %v103 = vunpack.c.h.b16 %v16
  %v104 = vunpack.c.l.b16 %v17
  %v105 = vpack.c.b16 %v100, %v100
  %v106 = vpack.c.b16 %v101, %v101
  %v107 = vpack.c.b16 %v102, %v102
  %v108 = vpack.c.b16 %v103, %v103
  %v109 = vpack.c.b16 %v104, %v104
  %v186 = vunpack.c.l.b16 %v18
  %v187 = vunpack.c.l.b16 %v19
  %v188 = vunpack.c.l.b16 %v20
  %v189 = vunpack.c.l.b16 %v21
  %v190 = vunpack.c.l.b16 %v22
  %v191 = vunpack.c.l.b16 %v23
  %v192 = vunpack.c.l.b16 %v24
  %v193 = vunpack.c.l.b16 %v25
  %v194 = vunpack.c.l.b16 %v26
  %v195 = vunpack.c.l.b16 %v27
  %v196 = vunpack.c.l.b16 %v28
  %v197 = vunpack.c.l.b16 %v29
  %v198 = vunpack.c.l.b16 %v30
  %v199 = vunpack.c.l.b16 %v31
  %v200 = vunpack.c.l.b16 %v32
  %v201 = vunpack.c.l.b16 %v33
  %v202 = vunpack.c.l.b16 %v34
  %v203 = vunpack.c.l.b16 %v35
  %v204 = vunpack.c.l.b16 %v36
  %v205 = vunpack.c.l.b16 %v37
  %v206 = vunpack.c.l.b16 %v38
  %v207 = vunpack.c.l.b16 %v39
  %v208 = vunpack.c.l.b16 %v40
  %v209 = vunpack.c.l.b16 %v41
  %v210 = vunpack.c.l.b16 %v42
  %v211 = vunpack.c.l.b16 %v43
  %v212 = vunpack.c.l.b16 %v44
  %v213 = vunpack.c.l.b16 %v45
  %v214 = vunpack.c.l.b16 %v46
  %v215 = vunpack.c.l.b16 %v47
  %v216 = vunpack.c.l.b16 %v48
  %v217 = vunpack.c.l.b16 %v49
  %v218 = vunpack.c.l.b16 %v50
  %v219 = vunpack.c.l.b16 %v51
  %v220 = vunpack.c.l.b16 %v52
  %v221 = vunpack.c.l.b16 %v53
  %v222 = vunpack.c.l.b16 %v54
  %v223 = vunpack.c.l.b16 %v55
  %v224 = vunpack.c.l.b16 %v56
  %v225 = vunpack.c.l.b16 %v57
  %v226 = vunpack.c.l.b16 %v58
  %v227 = vunpack.c.l.b16 %v59
  %v228 = vunpack.c.l.b16 %v60
  %v229 = vunpack.c.l.b16 %v61
  %v230 = vunpack.c.l.b16 %v62
  %v231 = vunpack.c.l.b16 %v63
  %v232 = vunpack.c.l.b16 %v64
  %v233 = vunpack.c.l.b16 %v65
  %v234 = vunpack.c.l.b16 %v66
  %v235 = vunpack.c.l.b16 %v67
  %v236 = vunpack.c.l.b16 %v68
  %v237 = vunpack.c.l.b16 %v69
  %v238 = vunpack.c.l.b16 %v70
  %v239 = vunpack.c.l.b16 %v71
  %v240 = vunpack.c.l.b16 %v72
  %v241 = vunpack.c.l.b16 %v73
  %v242 = vunpack.c.l.b16 %v74
  %v243 = vunpack.c.l.b16 %v75
  %v244 = vunpack.c.l.b16 %v76
  %v245 = vunpack.c.l.b16 %v77
  %v246 = vunpack.c.l.b16 %v78
  %v247 = vunpack.c.l.b16 %v79
  %v248 = vunpack.c.l.b16 %v80
  %v249 = vunpack.c.l.b16 %v81
  %v250 = vunpack.c.l.b16 %v82
  %v251 = vunpack.c.l.b16 %v83
  %v252 = vunpack.c.l.b16 %v84
  %v253 = vunpack.c.l.b16 %v85
  %v254 = vunpack.c.l.b16 %v86
  %v255 = vunpack.c.l.b16 %v87
  %v256 = vunpack.c.l.b16 %v88
  %v257 = vunpack.c.l.b16 %v89
  %v258 = vpack.c.b16 %v187, %v186
  %v259 = vpack.c.b16 %v189, %v188
  %v260 = vpack.c.b16 %v191, %v190
  %v261 = vpack.c.b16 %v193, %v192
  %v262 = vpack.c.b16 %v195, %v194
  %v263 = vpack.c.b16 %v197, %v196
  %v264 = vpack.c.b16 %v199, %v198
  %v265 = vpack.c.b16 %v201, %v200
  %v266 = vpack.c.b16 %v203, %v202
  %v267 = vpack.c.b16 %v205, %v204
  %v268 = vpack.c.b16 %v207, %v206
  %v269 = vpack.c.b16 %v209, %v208
  %v270 = vpack.c.b16 %v211, %v210
  %v271 = vpack.c.b16 %v213, %v212
  %v272 = vpack.c.b16 %v215, %v214
  %v273 = vpack.c.b16 %v217, %v216
  %v274 = vpack.c.b16 %v219, %v218
  %v275 = vpack.c.b16 %v221, %v220
  %v276 = vpack.c.b16 %v223, %v222
  %v277 = vpack.c.b16 %v225, %v224
  %v278 = vpack.c.b16 %v227, %v226
  %v279 = vpack.c.b16 %v229, %v228
  %v280 = vpack.c.b16 %v231, %v230
  %v281 = vpack.c.b16 %v233, %v232
  %v282 = vpack.c.b16 %v235, %v234
  %v283 = vpack.c.b16 %v237, %v236
  %v284 = vpack.c.b16 %v239, %v238
  %v285 = vpack.c.b16 %v241, %v240
  %v286 = vpack.c.b16 %v243, %v242
  %v287 = vpack.c.b16 %v245, %v244
  %v288 = vpack.c.b16 %v247, %v246
  %v289 = vpack.c.b16 %v249, %v248
  %v290 = vpack.c.b16 %v251, %v250
  %v291 = vpack.c.b16 %v253, %v252
  %v292 = vpack.c.b16 %v255, %v254
  %v293 = vpack.c.b16 %v257, %v256
  %vm330 = vcmask 523264
  %v332 = vsel %vm330, %v109, 0
  %334 = vmatprep.subr.bf16.mxu0 0
  %335 = vmatpush1.bf16.msra.mxu0 %v258
  %336 = vmatprep.subr.bf16.mxu0 0
  %337 = vmatpush1.bf16.msra.mxu0 %v259
  %338 = vmatprep.subr.bf16.mxu0 0
  %339 = vmatpush1.bf16.msra.mxu0 %v260
  %340 = vmatprep.subr.bf16.mxu0 0
  %341 = vmatpush1.bf16.msra.mxu0 %v261
  %342 = vmatprep.subr.bf16.mxu0 0
  %343 = vmatpush1.bf16.msra.mxu0 %v262
  %344 = vmatprep.subr.bf16.mxu0 0
  %345 = vmatpush1.bf16.msra.mxu0 %v263
  %346 = vmatprep.subr.bf16.mxu0 0
  %347 = vmatpush1.bf16.msra.mxu0 %v264
  %348 = vmatprep.subr.bf16.mxu0 0
  %349 = vmatpush1.bf16.msra.mxu0 %v265
  %350 = vmatprep.subr.bf16.mxu0 0
  %351 = vmatpush1.bf16.msra.mxu0 %v266
  %352 = vmatprep.subr.bf16.mxu0 0
  %353 = vmatpush1.bf16.msra.mxu0 %v267
  %354 = vmatprep.subr.bf16.mxu0 0
  %355 = vmatpush1.bf16.msra.mxu0 %v268
  %356 = vmatprep.subr.bf16.mxu0 0
  %357 = vmatpush1.bf16.msra.mxu0 %v269
  %358 = vmatprep.subr.bf16.mxu0 0
  %359 = vmatpush1.bf16.msra.mxu0 %v270
  %360 = vmatprep.subr.bf16.mxu0 0
  %361 = vmatpush1.bf16.msra.mxu0 %v271
  %362 = vmatprep.subr.bf16.mxu0 0
  %363 = vmatpush1.bf16.msra.mxu0 %v272
  %364 = vmatprep.subr.bf16.mxu0 0
  %365 = vmatpush1.bf16.msra.mxu0 %v273
  %366 = vmatprep.mubr.bf16.mxu0 %v106
  %367 = vmatmul.mubr.bf16.gmra.mrb[0].mxu0 %v105
  %v368 = vpop.f32.mrb[0].mxu0
  %v369 = vadd.f32 %v95, %v368
  %v370 = vpop.f32.mrb[0].mxu0
  %v371 = vpop.f32.mrb[0].mxu0
  %v372 = vpop.f32.mrb[0].mxu0
  %373 = vdwg.mxu0
  %374 = vmatprep.subr.bf16.mxu0 0
  %375 = vmatpush1.bf16.msra.mxu0 %v274
  %376 = vmatprep.subr.bf16.mxu0 0
  %377 = vmatpush1.bf16.msra.mxu0 %v275
  %378 = vmatprep.subr.bf16.mxu0 0
  %379 = vmatpush1.bf16.msra.mxu0 %v276
  %380 = vmatprep.subr.bf16.mxu0 0
  %381 = vmatpush1.bf16.msra.mxu0 %v277
  %382 = vmatprep.subr.bf16.mxu0 0
  %383 = vmatpush1.bf16.msra.mxu0 %v278
  %384 = vmatprep.subr.bf16.mxu0 0
  %385 = vmatpush1.bf16.msra.mxu0 %v279
  %386 = vmatprep.subr.bf16.mxu0 0
  %387 = vmatpush1.bf16.msra.mxu0 %v280
  %388 = vmatprep.subr.bf16.mxu0 0
  %389 = vmatpush1.bf16.msra.mxu0 %v281
  %390 = vmatprep.subr.bf16.mxu0 0
  %391 = vmatpush1.bf16.msra.mxu0 %v282
  %392 = vmatprep.subr.bf16.mxu0 0
  %393 = vmatpush1.bf16.msra.mxu0 %v283
  %394 = vmatprep.subr.bf16.mxu0 0
  %395 = vmatpush1.bf16.msra.mxu0 %v284
  %396 = vmatprep.subr.bf16.mxu0 0
  %397 = vmatpush1.bf16.msra.mxu0 %v285
  %398 = vmatprep.subr.bf16.mxu0 0
  %399 = vmatpush1.bf16.msra.mxu0 %v286
  %400 = vmatprep.subr.bf16.mxu0 0
  %401 = vmatpush1.bf16.msra.mxu0 %v287
  %402 = vmatprep.subr.bf16.mxu0 0
  %403 = vmatpush1.bf16.msra.mxu0 %v288
  %404 = vmatprep.subr.bf16.mxu0 0
  %405 = vmatpush1.bf16.msra.mxu0 %v289
  %406 = vmatprep.mubr.bf16.mxu0 %v108
  %407 = vmatmul.mubr.bf16.gmra.mrb[0].mxu0 %v107
  %v408 = vpop.f32.mrb[0].mxu0
  %v409 = vadd.f32 %v369, %v408
  %v410 = vpop.f32.mrb[0].mxu0
  %v411 = vpop.f32.mrb[0].mxu0
  %v412 = vpop.f32.mrb[0].mxu0
  %413 = vdwg.mxu0
  %414 = vmatprep.subr.bf16.mxu0 0
  %415 = vmatpush1.bf16.msra.mxu0 %v290
  %416 = vmatprep.subr.bf16.mxu0 0
  %417 = vmatpush1.bf16.msra.mxu0 %v291
  %418 = vmatprep.subr.bf16.mxu0 0
  %419 = vmatpush1.bf16.msra.mxu0 %v292
  %420 = vmatprep.subr.bf16.mxu0 0
  %421 = vmatpush1.bf16.msra.mxu0 %v293
  %422 = vmatprep.subr.bf16.mxu0 0
  %423 = vmatpush1.bf16.msra.mxu0 0
  %424 = vmatprep.subr.bf16.mxu0 0
  %425 = vmatpush1.bf16.msra.mxu0 0
  %426 = vmatprep.subr.bf16.mxu0 0
  %427 = vmatpush1.bf16.msra.mxu0 0
  %428 = vmatprep.subr.bf16.mxu0 0
  %429 = vmatpush1.bf16.msra.mxu0 0
  %430 = vmatprep.subr.bf16.mxu0 0
  %431 = vmatpush1.bf16.msra.mxu0 0
  %432 = vmatprep.subr.bf16.mxu0 0
  %433 = vmatpush1.bf16.msra.mxu0 0
  %434 = vmatprep.subr.bf16.mxu0 0
  %435 = vmatpush1.bf16.msra.mxu0 0
  %436 = vmatprep.subr.bf16.mxu0 0
  %437 = vmatpush1.bf16.msra.mxu0 0
  %438 = vmatprep.subr.bf16.mxu0 0
  %439 = vmatpush1.bf16.msra.mxu0 0
  %440 = vmatprep.subr.bf16.mxu0 0
  %441 = vmatpush1.bf16.msra.mxu0 0
  %442 = vmatprep.subr.bf16.mxu0 0
  %443 = vmatpush1.bf16.msra.mxu0 0
  %444 = vmatprep.subr.bf16.mxu0 0
  %445 = vmatpush1.bf16.msra.mxu0 0
  %446 = vmatprep.mubr.bf16.mxu0 0
  %447 = vmatmul.mubr.bf16.gmra.mrb[0].mxu0 %v332
  %v448 = vpop.f32.mrb[0].mxu0
  %v449 = vadd.f32 %v409, %v448
  %v450 = vpop.f32.mrb[0].mxu0
  %v451 = vpop.f32.mrb[0].mxu0
  %v452 = vpop.f32.mrb[0].mxu0
  %453 = vdwg.mxu0
  %v454 = vmax.f32 %v449, 0.0
  %v455 = vpack.c.bf16 %v454, %v454
  %456 = vst [vmem:[%s3] sm:$0xf] %v455
  // Predicated region
  $region14: #{unet_forward.15} parent=0 // pred_check
    _
  $region15: #{unet_forward.15} parent=0 // pred_check_branch
    %458 = sbr.rel (0) target = $region17
  $region16: #{unet_forward.15} parent=0 // pred_region
    _
  $region17: #{unet_forward.15} parent=0 // pred_fallthru
    _
  // Predicated region
  $region18: #{unet_forward.15} parent=0 // pred_check
    _
  $region19: #{unet_forward.15} parent=0 // pred_check_branch
    %460 = sbr.rel (0) target = $region21
  $region20: #{unet_forward.15} parent=0 // pred_region
    _
  $region21: #{unet_forward.15} parent=0 // pred_fallthru
    _

// kernel: unet_forward.16
$region0: #{unet_forward.16}
  #allocation0 [shape = 'u32[]', space=smem, size = 0x4, offset = 0x4, fixed_abs, tag = 'smem constant byte address 0x4 - core index']
  #allocation1 [shape = 'u32[144,128]{1,0:T(1,128)}', space=vmem, size = 0x12000, scoped, tag = 'internal scratch']
  %s0 = inlined_call_operand.vmem [shape: bf16[2,6,6,32], index: 0, kind: input, shape index: {}, may-alias: {0,1,2}]
  %s1 = inlined_call_operand.vmem [shape: bf16[2,6,6,32], index: 1, kind: input, shape index: {}, may-alias: {0,1,2}]
  %s2 = inlined_call_operand.vmem [shape: bf16[2,6,6,32], index: 2, kind: input, shape index: {}, may-alias: {0,1,2}]
  %s3 = inlined_call_operand.vmem [shape: bf16[288,32], index: 3, kind: input, shape index: {}]
  %s4 = inlined_call_operand.vmem [shape: f32[1,32], index: 4, kind: input, shape index: {}]
  %s5 = inlined_call_operand.vmem [shape: bf16[2,4,4,32], index: 5, kind: output, shape index: {}]
  %s6 = sld [smem:[#allocation0]]
  $region53: #{unet_forward.16} parent=0
    _
  %s8 = ssub.s32 1, %s6
  %s9 = scalar_select 0, %s8, %s6
  loop: start=0, step=1, limit=10
  $region2: #{unet_forward.16} parent=0 // loop_pre_header
    _
  $region3: #{unet_forward.16} parent=0 // loop_header
    %s11 = sphi 0, %s15
    %p12 = scmp.ge.s32.totalorder %s11, 10
    %s18 = sphi 0, %s30
    %s19 = sphi 0, %s26
    %s20 = sphi 0, %s18
    %s21 = sphi 0, %s19
    %s22 = sphi 0, %s20
    %s23 = sphi 0, %s21
    %s35 = sphi 0, %s37
    %s38 = sphi 0, %s35
    %s39 = sphi 0, %s38
    %s55 = sphi 0, %s39
    %s65 = sphi 0, %s67
    %s68 = sphi 0, %s65
    %s69 = sphi 0, %s68
    %s85 = sphi 0, %s69
    %s95 = sphi 0, %s97
    %s98 = sphi 0, %s95
    %s99 = sphi 0, %s98
    %s115 = sphi 0, %s99
    %s119 = sphi 0, %s119
    %s121 = sphi 0, %s119
    %s122 = sphi 0, %s121
    %s136 = sphi 0, %s122
    %s140 = sphi 0, %s140
    %s142 = sphi 0, %s140
    %s143 = sphi 0, %s142
    %s157 = sphi 0, %s143
    %s165 = sphi 0, %s167
    %s168 = sphi 0, %s165
    %s169 = sphi 0, %s168
    %s185 = sphi 0, %s169
  $region4: #{unet_forward.16} parent=0 // loop_header_branch
    %14 = sbr.rel (%p12) target = $region8
  $region5: #{unet_forward.16} parent=0 // loop_body
    %s16 = ssub.s32 %s11, 1
    %s17 = ssub.s32 %s11, 2
    %s24 = sadd.s32 1, %s19
    %p25 = scmp.ge.s32.totalorder %s24, 4
    %s26 = scalar_select %p25, 0, %s24
    %s27 = sadd.s32 1, %s18
    %s28 = scalar_select %p25, %s27, %s18
    %p29 = scmp.ge.s32.totalorder %s28, 2
    %s30 = scalar_select %p29, 0, %s28
    %s31 = ssub.s32 %s18, %s30
    %s32 = ssub.s32 %s19, %s26
    %s33 = sor.u32 %s31, %s32
    %p34 = scmp.eq.s32.totalorder %s33, 0
    %s36 = sadd.s32 %s35, 1
    %s37 = scalar_select %p34, %s35, %s36
    %p40 = pneg %p34
    %p41 = scmp.eq.s32.totalorder %s11, 7
    %p42 = por %p40, %p41
    %p43 = scmp.ne.s32.totalorder %s35, %s38
    %p44 = scmp.eq.s32.totalorder %s11, 0
    %p45 = por %p43, %p44
    %p46 = scmp.ne.s32.totalorder %s35, %s38
    %p47 = scmp.eq.s32.totalorder %s16, 7
    %p48 = por %p46, %p47
    %p49 = scmp.ne.s32.totalorder %s38, %s39
    %p50 = scmp.eq.s32.totalorder %s16, 0
    %p51 = por %p49, %p50
    %p52 = scmp.ne.s32.totalorder %s38, %s39
    %p53 = scmp.eq.s32.totalorder %s17, 7
    %p54 = por %p52, %p53
    %p56 = scmp.ne.s32.totalorder %s39, %s55
    %p57 = scmp.eq.s32.totalorder %s17, 0
    %p58 = por %p56, %p57
    %s59 = sadd.s32 %s19, 1
    %s60 = sadd.s32 %s26, 1
    %s61 = ssub.s32 %s18, %s30
    %s62 = ssub.s32 %s59, %s60
    %s63 = sor.u32 %s61, %s62
    %p64 = scmp.eq.s32.totalorder %s63, 0
    %s66 = sadd.s32 %s65, 1
    %s67 = scalar_select %p64, %s65, %s66
    %p70 = pneg %p64
    %p71 = scmp.eq.s32.totalorder %s11, 7
    %p72 = por %p70, %p71
    %p73 = scmp.ne.s32.totalorder %s65, %s68
    %p74 = scmp.eq.s32.totalorder %s11, 0
    %p75 = por %p73, %p74
    %p76 = scmp.ne.s32.totalorder %s65, %s68
    %p77 = scmp.eq.s32.totalorder %s16, 7
    %p78 = por %p76, %p77
    %p79 = scmp.ne.s32.totalorder %s68, %s69
    %p80 = scmp.eq.s32.totalorder %s16, 0
    %p81 = por %p79, %p80
    %p82 = scmp.ne.s32.totalorder %s68, %s69
    %p83 = scmp.eq.s32.totalorder %s17, 7
    %p84 = por %p82, %p83
    %p86 = scmp.ne.s32.totalorder %s69, %s85
    %p87 = scmp.eq.s32.totalorder %s17, 0
    %p88 = por %p86, %p87
    %s89 = sadd.s32 %s19, 2
    %s90 = sadd.s32 %s26, 2
    %s91 = ssub.s32 %s18, %s30
    %s92 = ssub.s32 %s89, %s90
    %s93 = sor.u32 %s91, %s92
    %p94 = scmp.eq.s32.totalorder %s93, 0
    %s96 = sadd.s32 %s95, 1
    %s97 = scalar_select %p94, %s95, %s96
    %p100 = pneg %p94
    %p101 = scmp.eq.s32.totalorder %s11, 7
    %p102 = por %p100, %p101
    %p103 = scmp.ne.s32.totalorder %s95, %s98
    %p104 = scmp.eq.s32.totalorder %s11, 0
    %p105 = por %p103, %p104
    %p106 = scmp.ne.s32.totalorder %s95, %s98
    %p107 = scmp.eq.s32.totalorder %s16, 7
    %p108 = por %p106, %p107
    %p109 = scmp.ne.s32.totalorder %s98, %s99
    %p110 = scmp.eq.s32.totalorder %s16, 0
    %p111 = por %p109, %p110
    %p112 = scmp.ne.s32.totalorder %s98, %s99
    %p113 = scmp.eq.s32.totalorder %s17, 7
    %p114 = por %p112, %p113
    %p116 = scmp.ne.s32.totalorder %s99, %s115
    %p117 = scmp.eq.s32.totalorder %s17, 0
    %p118 = por %p116, %p117
    %s120 = sadd.s32 %s119, 1
    %p123 = scmp.eq.s32.totalorder %s11, 7
    %p124 = scmp.ne.s32.totalorder %s119, %s121
    %p125 = scmp.eq.s32.totalorder %s11, 0
    %p126 = por %p124, %p125
    %p127 = scmp.ne.s32.totalorder %s119, %s121
    %p128 = scmp.eq.s32.totalorder %s16, 7
    %p129 = por %p127, %p128
    %p130 = scmp.ne.s32.totalorder %s121, %s122
    %p131 = scmp.eq.s32.totalorder %s16, 0
    %p132 = por %p130, %p131
    %p133 = scmp.ne.s32.totalorder %s121, %s122
    %p134 = scmp.eq.s32.totalorder %s17, 7
    %p135 = por %p133, %p134
    %p137 = scmp.ne.s32.totalorder %s122, %s136
    %p138 = scmp.eq.s32.totalorder %s17, 0
    %p139 = por %p137, %p138
    %s141 = sadd.s32 %s140, 1
    %p144 = scmp.eq.s32.totalorder %s11, 7
    %p145 = scmp.ne.s32.totalorder %s140, %s142
    %p146 = scmp.eq.s32.totalorder %s11, 0
    %p147 = por %p145, %p146
    %p148 = scmp.ne.s32.totalorder %s140, %s142
    %p149 = scmp.eq.s32.totalorder %s16, 7
    %p150 = por %p148, %p149
    %p151 = scmp.ne.s32.totalorder %s142, %s143
    %p152 = scmp.eq.s32.totalorder %s16, 0
    %p153 = por %p151, %p152
    %p154 = scmp.ne.s32.totalorder %s142, %s143
    %p155 = scmp.eq.s32.totalorder %s17, 7
    %p156 = por %p154, %p155
    %p158 = scmp.ne.s32.totalorder %s143, %s157
    %p159 = scmp.eq.s32.totalorder %s17, 0
    %p160 = por %p158, %p159
    %s161 = ssub.s32 %s18, %s30
    %s162 = ssub.s32 %s19, %s26
    %s163 = sor.u32 %s161, %s162
    %p164 = scmp.eq.s32.totalorder %s163, 0
    %s166 = sadd.s32 %s165, 1
    %s167 = scalar_select %p164, %s165, %s166
    %p170 = pneg %p164
    %p171 = scmp.eq.s32.totalorder %s11, 7
    %p172 = por %p170, %p171
    %p173 = scmp.ne.s32.totalorder %s165, %s168
    %p174 = scmp.eq.s32.totalorder %s11, 0
    %p175 = por %p173, %p174
    %p176 = scmp.ne.s32.totalorder %s165, %s168
    %p177 = scmp.eq.s32.totalorder %s16, 7
    %p178 = por %p176, %p177
    %p179 = scmp.ne.s32.totalorder %s168, %s169
    %p180 = scmp.eq.s32.totalorder %s16, 0
    %p181 = por %p179, %p180
    %p182 = scmp.ne.s32.totalorder %s168, %s169
    %p183 = scmp.eq.s32.totalorder %s17, 7
    %p184 = por %p182, %p183
    %p186 = scmp.ne.s32.totalorder %s169, %s185
    %p187 = scmp.eq.s32.totalorder %s17, 0
    %p188 = por %p186, %p187
    %p189 = scmp.le.s32.totalorder 1, %s11
    %p190 = scmp.lt.s32.totalorder %s11, 9
    %p191 = pnand %p189, %p190
    %p192 = pneg %p191
    // Predicated region
    $region9: #{unet_forward.16} parent=5 // pred_check
      _
    $region10: #{unet_forward.16} parent=5 // pred_check_branch
      %194 = sbr.rel (%p191) target = $region12
    $region11: #{unet_forward.16} parent=5 // pred_region
      %s195 = ssub.s32 %s11, 1
      // Predicated region
      $region13: #{unet_forward.16} parent=11 // pred_check
        %p196 = pneg %p132
      $region14: #{unet_forward.16} parent=11 // pred_check_branch
        %198 = sbr.rel (%p196) target = $region16
      $region15: #{unet_forward.16} parent=11 // pred_region
        _
      $region16: #{unet_forward.16} parent=11 // pred_fallthru
        _
      // Predicated region
      $region17: #{unet_forward.16} parent=11 // pred_check
        %p199 = pneg %p153
      $region18: #{unet_forward.16} parent=11 // pred_check_branch
        %201 = sbr.rel (%p199) target = $region20
      $region19: #{unet_forward.16} parent=11 // pred_region
        _
      $region20: #{unet_forward.16} parent=11 // pred_fallthru
        _
    $region12: #{unet_forward.16} parent=5 // pred_fallthru
      _
    %p202 = scmp.lt.s32.totalorder %s11, 8
    // Predicated region
    $region21: #{unet_forward.16} parent=5 // pred_check
      %p203 = pneg %p202
    $region22: #{unet_forward.16} parent=5 // pred_check_branch
      %205 = sbr.rel (%p203) target = $region24
    $region23: #{unet_forward.16} parent=5 // pred_region
      // Predicated region
      $region25: #{unet_forward.16} parent=23 // pred_check
        %p206 = pneg %p45
      $region26: #{unet_forward.16} parent=23 // pred_check_branch
        %208 = sbr.rel (%p206) target = $region28
      $region27: #{unet_forward.16} parent=23 // pred_region
        %p209 = scmp.lt.s32.totalorder %s18, 1
        %s210 = scalar_select %p209, %s18, 1
        %p211 = scmp.lt.s32.totalorder %s19, 5
        %s212 = scalar_select %p211, %s19, 5
        %s213 = smul.addr %s210, 6
        %s214 = sadd.s32 %s212, %s213
        %s215 = smul.addr %s214, 4
        %s216 = scalar_lea.vmem %s0, %s215
      $region28: #{unet_forward.16} parent=23 // pred_fallthru
        _
      // Predicated region
      $region29: #{unet_forward.16} parent=23 // pred_check
        %p217 = pneg %p75
      $region30: #{unet_forward.16} parent=23 // pred_check_branch
        %219 = sbr.rel (%p217) target = $region32
      $region31: #{unet_forward.16} parent=23 // pred_region
        %s220 = sadd.s32 %s19, 1
        %p221 = scmp.lt.s32.totalorder %s18, 1
        %s222 = scalar_select %p221, %s18, 1
        %p223 = scmp.lt.s32.totalorder %s220, 5
        %s224 = scalar_select %p223, %s220, 5
        %s225 = smul.addr %s222, 6
        %s226 = sadd.s32 %s224, %s225
        %s227 = smul.addr %s226, 4
        %s228 = scalar_lea.vmem %s1, %s227
        %s229 = sadd.s32 %s19, 1
      $region32: #{unet_forward.16} parent=23 // pred_fallthru
        _
      // Predicated region
      $region33: #{unet_forward.16} parent=23 // pred_check
        %p230 = pneg %p105
      $region34: #{unet_forward.16} parent=23 // pred_check_branch
        %232 = sbr.rel (%p230) target = $region36
      $region35: #{unet_forward.16} parent=23 // pred_region
        %s233 = sadd.s32 %s19, 2
        %p234 = scmp.lt.s32.totalorder %s18, 1
        %s235 = scalar_select %p234, %s18, 1
        %p236 = scmp.lt.s32.totalorder %s233, 5
        %s237 = scalar_select %p236, %s233, 5
        %s238 = smul.addr %s235, 6
        %s239 = sadd.s32 %s237, %s238
        %s240 = smul.addr %s239, 4
        %s241 = scalar_lea.vmem %s2, %s240
        %s242 = sadd.s32 %s19, 2
      $region36: #{unet_forward.16} parent=23 // pred_fallthru
        _
    $region24: #{unet_forward.16} parent=5 // pred_fallthru
      _
    %p243 = scmp.le.s32.totalorder 1, %s11
    %p244 = scmp.lt.s32.totalorder %s11, 9
    %p245 = pnand %p243, %p244
    %p246 = pneg %p245
    // Predicated region
    $region37: #{unet_forward.16} parent=5 // pred_check
      _
    $region38: #{unet_forward.16} parent=5 // pred_check_branch
      %248 = sbr.rel (%p245) target = $region40
    $region39: #{unet_forward.16} parent=5 // pred_region
      %s249 = ssub.s32 %s11, 1
      %p250 = scmp.lt.s32.totalorder %s20, 1
      %s251 = scalar_select %p250, %s20, 1
      %p252 = scmp.lt.s32.totalorder %s21, 5
      %s253 = scalar_select %p252, %s21, 5
      %s254 = smul.addr %s251, 6
      %s255 = sadd.s32 %s253, %s254
      %s256 = smul.addr %s255, 4
      %s257 = scalar_lea.vmem %s0, %s256
      %p258 = pneg %p51
      %p259 = pneg %p48
      %s260 = sadd.s32 %s21, 1
      %p261 = scmp.lt.s32.totalorder %s20, 1
      %s262 = scalar_select %p261, %s20, 1
      %p263 = scmp.lt.s32.totalorder %s260, 5
      %s264 = scalar_select %p263, %s260, 5
      %s265 = smul.addr %s262, 6
      %s266 = sadd.s32 %s264, %s265
      %s267 = smul.addr %s266, 4
      %s268 = scalar_lea.vmem %s1, %s267
      %p269 = pneg %p81
      %p270 = pneg %p78
      %s271 = sadd.s32 %s21, 2
      %p272 = scmp.lt.s32.totalorder %s20, 1
      %s273 = scalar_select %p272, %s20, 1
      %p274 = scmp.lt.s32.totalorder %s271, 5
      %s275 = scalar_select %p274, %s271, 5
      %s276 = smul.addr %s273, 6
      %s277 = sadd.s32 %s275, %s276
      %s278 = smul.addr %s277, 4
      %s279 = scalar_lea.vmem %s2, %s278
      %p280 = pneg %p111
      %p281 = pneg %p108
      %p282 = pneg %p132
      %p283 = pneg %p129
      %p284 = pneg %p153
      %p285 = pneg %p150
      %p286 = pneg %p181
      %p287 = pneg %p178
      %p288 = scmp.lt.s32.totalorder %s20, 1
      %s289 = scalar_select %p288, %s20, 1
      %p290 = scmp.lt.s32.totalorder %s21, 3
      %s291 = scalar_select %p290, %s21, 3
      %s292 = smul.addr %s289, 4
      %s293 = sadd.s32 %s291, %s292
      %s294 = smul.addr %s293, 2
      %s295 = scalar_lea.vmem %s5, %s294
      %p296 = scmp.lt.s32.totalorder %s20, 1
      %s297 = scalar_select %p296, %s20, 1
      %p298 = scmp.lt.s32.totalorder %s21, 5
      %s299 = scalar_select %p298, %s21, 5
      %s300 = smul.addr %s297, 6
      %s301 = sadd.s32 %s299, %s300
      %s302 = smul.addr %s301, 4
      %s303 = scalar_lea.vmem %s0, %s302
      %s304 = sadd.s32 %s21, 1
      %p305 = scmp.lt.s32.totalorder %s20, 1
      %s306 = scalar_select %p305, %s20, 1
      %p307 = scmp.lt.s32.totalorder %s304, 5
      %s308 = scalar_select %p307, %s304, 5
      %s309 = smul.addr %s306, 6
      %s310 = sadd.s32 %s308, %s309
      %s311 = smul.addr %s310, 4
      %s312 = scalar_lea.vmem %s1, %s311
      %s313 = sadd.s32 %s21, 1
      %s314 = sadd.s32 %s21, 2
      %p315 = scmp.lt.s32.totalorder %s20, 1
      %s316 = scalar_select %p315, %s20, 1
      %p317 = scmp.lt.s32.totalorder %s314, 5
      %s318 = scalar_select %p317, %s314, 5
      %s319 = smul.addr %s316, 6
      %s320 = sadd.s32 %s318, %s319
      %s321 = smul.addr %s320, 4
      %s322 = scalar_lea.vmem %s2, %s321
      %s323 = sadd.s32 %s21, 2
      %p324 = scmp.lt.s32.totalorder %s20, 1
      %s325 = scalar_select %p324, %s20, 1
      %p326 = scmp.lt.s32.totalorder %s21, 3
      %s327 = scalar_select %p326, %s21, 3
      %s328 = smul.addr %s325, 4
      %s329 = sadd.s32 %s327, %s328
      %s330 = smul.addr %s329, 2
      %s331 = scalar_lea.vmem %s5, %s330
      %v333 = vld [vmem:[%s303] sm:$0x7]
      %v334 = vld [vmem:[%s312] sm:$0x7]
      %v335 = vld [vmem:[%s322] sm:$0x7]
      %v336 = vld [vmem:[%s3] sm:$0xf]
      %v337 = vld [vmem:[%s3 + $0x4] sm:$0xf]
      %v338 = vld [vmem:[%s3 + $0x8] sm:$0xf]
      %v339 = vld [vmem:[%s3 + $0xc] sm:$0xf]
      %v340 = vld [vmem:[%s3 + $0x10] sm:$0xf]
      %v341 = vld [vmem:[%s3 + $0x14] sm:$0xf]
      %v342 = vld [vmem:[%s3 + $0x18] sm:$0xf]
      %v343 = vld [vmem:[%s3 + $0x1c] sm:$0xf]
      %v345 = vunpack.c.l.b16 %v333
      %v346 = vpack.c.b16 %v345, %v345
      %v348 = vshrl.u32 %v346, 16
      %v350 = vshll.u32 %v346, 16
      %v352 = vrot.slane %v350, 1
      %v353 = vor.u32 %v348, %v352
      %v358 = vunpack.c.l.b16 %v340
      %v359 = vunpack.c.l.b16 %v341
      %v360 = vunpack.c.l.b16 %v342
      %v361 = vunpack.c.l.b16 %v343
      %v362 = vpack.c.b16 %v359, %v358
      %v363 = vpack.c.b16 %v361, %v360
      %vm366 = vcmask 261120
      %v368 = vsel %vm366, %v353, 0
      %370 = vmatprep.subr.bf16.mxu0 0
      %371 = vmatpush1.bf16.msra.mxu0 %v362
      %372 = vmatprep.subr.bf16.mxu0 0
      %373 = vmatpush1.bf16.msra.mxu0 %v363
      %374 = vmatprep.subr.bf16.mxu0 0
      %375 = vmatpush1.bf16.msra.mxu0 0
      %376 = vmatprep.subr.bf16.mxu0 0
      %377 = vmatpush1.bf16.msra.mxu0 0
      %378 = vmatprep.subr.bf16.mxu0 0
      %379 = vmatpush1.bf16.msra.mxu0 0
      %380 = vmatprep.subr.bf16.mxu0 0
      %381 = vmatpush1.bf16.msra.mxu0 0
      %382 = vmatprep.subr.bf16.mxu0 0
      %383 = vmatpush1.bf16.msra.mxu0 0
      %384 = vmatprep.subr.bf16.mxu0 0
      %385 = vmatpush1.bf16.msra.mxu0 0
      %386 = vmatprep.subr.bf16.mxu0 0
      %387 = vmatpush1.bf16.msra.mxu0 0
      %388 = vmatprep.subr.bf16.mxu0 0
      %389 = vmatpush1.bf16.msra.mxu0 0
      %390 = vmatprep.subr.bf16.mxu0 0
      %391 = vmatpush1.bf16.msra.mxu0 0
      %392 = vmatprep.subr.bf16.mxu0 0
      %393 = vmatpush1.bf16.msra.mxu0 0
      %394 = vmatprep.subr.bf16.mxu0 0
      %395 = vmatpush1.bf16.msra.mxu0 0
      %396 = vmatprep.subr.bf16.mxu0 0
      %397 = vmatpush1.bf16.msra.mxu0 0
      %398 = vmatprep.subr.bf16.mxu0 0
      %399 = vmatpush1.bf16.msra.mxu0 0
      %400 = vmatprep.subr.bf16.mxu0 0
      %401 = vmatpush1.bf16.msra.mxu0 0
      %402 = vmatprep.mubr.bf16.mxu0 0
      %403 = vmatmul.mubr.bf16.gmra.mrb[0].mxu0 %v368
      %v404 = vpop.f32.mrb[0].mxu0
      %v405 = vadd.f32 0.0, %v404
      %v406 = vpop.f32.mrb[0].mxu0
      %v407 = vpop.f32.mrb[0].mxu0
      %v408 = vpop.f32.mrb[0].mxu0
      %409 = vdwg.mxu0
      %v414 = vunpack.c.l.b16 %v336
      %v415 = vunpack.c.l.b16 %v337
      %v416 = vunpack.c.l.b16 %v338
      %v417 = vunpack.c.l.b16 %v339
      %v418 = vpack.c.b16 %v415, %v414
      %v419 = vpack.c.b16 %v417, %v416
      %v423 = vsel %vm366, %v333, 0
      %425 = vmatprep.subr.bf16.mxu0 0
      %426 = vmatpush1.bf16.msra.mxu0 %v418
      %427 = vmatprep.subr.bf16.mxu0 0
      %428 = vmatpush1.bf16.msra.mxu0 %v419
      %429 = vmatprep.subr.bf16.mxu0 0
      %430 = vmatpush1.bf16.msra.mxu0 0
      %431 = vmatprep.subr.bf16.mxu0 0
      %432 = vmatpush1.bf16.msra.mxu0 0
      %433 = vmatprep.subr.bf16.mxu0 0
      %434 = vmatpush1.bf16.msra.mxu0 0
      %435 = vmatprep.subr.bf16.mxu0 0
      %436 = vmatpush1.bf16.msra.mxu0 0
      %437 = vmatprep.subr.bf16.mxu0 0
      %438 = vmatpush1.bf16.msra.mxu0 0
      %439 = vmatprep.subr.bf16.mxu0 0
      %440 = vmatpush1.bf16.msra.mxu0 0
      %441 = vmatprep.subr.bf16.mxu0 0
      %442 = vmatpush1.bf16.msra.mxu0 0
      %443 = vmatprep.subr.bf16.mxu0 0
      %444 = vmatpush1.bf16.msra.mxu0 0
      %445 = vmatprep.subr.bf16.mxu0 0
      %446 = vmatpush1.bf16.msra.mxu0 0
      %447 = vmatprep.subr.bf16.mxu0 0
      %448 = vmatpush1.bf16.msra.mxu0 0
      %449 = vmatprep.subr.bf16.mxu0 0
      %450 = vmatpush1.bf16.msra.mxu0 0
      %451 = vmatprep.subr.bf16.mxu0 0
      %452 = vmatpush1.bf16.msra.mxu0 0
      %453 = vmatprep.subr.bf16.mxu0 0
      %454 = vmatpush1.bf16.msra.mxu0 0
      %455 = vmatprep.subr.bf16.mxu0 0
      %456 = vmatpush1.bf16.msra.mxu0 0
      %457 = vmatprep.mubr.bf16.mxu0 0
      %458 = vmatmul.mubr.bf16.gmra.mrb[0].mxu0 %v423
      %v459 = vpop.f32.mrb[0].mxu0
      %v460 = vadd.f32 %v405, %v459
      %v461 = vpop.f32.mrb[0].mxu0
      %v462 = vpop.f32.mrb[0].mxu0
      %v463 = vpop.f32.mrb[0].mxu0
      %464 = vdwg.mxu0
      %v465 = vld [vmem:[%s3 + $0x20] sm:$0xf]
      %v466 = vld [vmem:[%s3 + $0x24] sm:$0xf]
      %v467 = vld [vmem:[%s3 + $0x28] sm:$0xf]
      %v468 = vld [vmem:[%s3 + $0x2c] sm:$0xf]
      %v469 = vrot.slane %v346, 1
      %v474 = vunpack.c.l.b16 %v465
      %v475 = vunpack.c.l.b16 %v466
      %v476 = vunpack.c.l.b16 %v467
      %v477 = vunpack.c.l.b16 %v468
      %v478 = vpack.c.b16 %v475, %v474
      %v479 = vpack.c.b16 %v477, %v476
      %v483 = vsel %vm366, %v469, 0
      %485 = vmatprep.subr.bf16.mxu0 0
      %486 = vmatpush1.bf16.msra.mxu0 %v478
      %487 = vmatprep.subr.bf16.mxu0 0
      %488 = vmatpush1.bf16.msra.mxu0 %v479
      %489 = vmatprep.subr.bf16.mxu0 0
      %490 = vmatpush1.bf16.msra.mxu0 0
      %491 = vmatprep.subr.bf16.mxu0 0
      %492 = vmatpush1.bf16.msra.mxu0 0
      %493 = vmatprep.subr.bf16.mxu0 0
      %494 = vmatpush1.bf16.msra.mxu0 0
      %495 = vmatprep.subr.bf16.mxu0 0
      %496 = vmatpush1.bf16.msra.mxu0 0
      %497 = vmatprep.subr.bf16.mxu0 0
      %498 = vmatpush1.bf16.msra.mxu0 0
      %499 = vmatprep.subr.bf16.mxu0 0
      %500 = vmatpush1.bf16.msra.mxu0 0
      %501 = vmatprep.subr.bf16.mxu0 0
      %502 = vmatpush1.bf16.msra.mxu0 0
      %503 = vmatprep.subr.bf16.mxu0 0
      %504 = vmatpush1.bf16.msra.mxu0 0
      %505 = vmatprep.subr.bf16.mxu0 0
      %506 = vmatpush1.bf16.msra.mxu0 0
      %507 = vmatprep.subr.bf16.mxu0 0
      %508 = vmatpush1.bf16.msra.mxu0 0
      %509 = vmatprep.subr.bf16.mxu0 0
      %510 = vmatpush1.bf16.msra.mxu0 0
      %511 = vmatprep.subr.bf16.mxu0 0
      %512 = vmatpush1.bf16.msra.mxu0 0
      %513 = vmatprep.subr.bf16.mxu0 0
      %514 = vmatpush1.bf16.msra.mxu0 0
      %515 = vmatprep.subr.bf16.mxu0 0
      %516 = vmatpush1.bf16.msra.mxu0 0
      %517 = vmatprep.mubr.bf16.mxu0 0
      %518 = vmatmul.mubr.bf16.gmra.mrb[0].mxu0 %v483
      %v519 = vpop.f32.mrb[0].mxu0
      %v520 = vadd.f32 0.0, %v519
      %v521 = vpop.f32.mrb[0].mxu0
      %v522 = vpop.f32.mrb[0].mxu0
      %v523 = vpop.f32.mrb[0].mxu0
      %524 = vdwg.mxu0
      %v525 = vadd.f32 %v460, %v520
      %v526 = vld [vmem:[%s3 + $0x30] sm:$0xf]
      %v527 = vld [vmem:[%s3 + $0x34] sm:$0xf]
      %v528 = vld [vmem:[%s3 + $0x38] sm:$0xf]
      %v529 = vld [vmem:[%s3 + $0x3c] sm:$0xf]
      %v534 = vunpack.c.l.b16 %v526
      %v535 = vunpack.c.l.b16 %v527
      %v536 = vunpack.c.l.b16 %v528
      %v537 = vunpack.c.l.b16 %v529
      %v538 = vpack.c.b16 %v535, %v534
      %v539 = vpack.c.b16 %v537, %v536
      %v543 = vsel %vm366, %v334, 0
      %545 = vmatprep.subr.bf16.mxu0 0
      %546 = vmatpush1.bf16.msra.mxu0 %v538
      %547 = vmatprep.subr.bf16.mxu0 0
      %548 = vmatpush1.bf16.msra.mxu0 %v539
      %549 = vmatprep.subr.bf16.mxu0 0
      %550 = vmatpush1.bf16.msra.mxu0 0
      %551 = vmatprep.subr.bf16.mxu0 0
      %552 = vmatpush1.bf16.msra.mxu0 0
      %553 = vmatprep.subr.bf16.mxu0 0
      %554 = vmatpush1.bf16.msra.mxu0 0
      %555 = vmatprep.subr.bf16.mxu0 0
      %556 = vmatpush1.bf16.msra.mxu0 0
      %557 = vmatprep.subr.bf16.mxu0 0
      %558 = vmatpush1.bf16.msra.mxu0 0
      %559 = vmatprep.subr.bf16.mxu0 0
      %560 = vmatpush1.bf16.msra.mxu0 0
      %561 = vmatprep.subr.bf16.mxu0 0
      %562 = vmatpush1.bf16.msra.mxu0 0
      %563 = vmatprep.subr.bf16.mxu0 0
      %564 = vmatpush1.bf16.msra.mxu0 0
      %565 = vmatprep.subr.bf16.mxu0 0
      %566 = vmatpush1.bf16.msra.mxu0 0
      %567 = vmatprep.subr.bf16.mxu0 0
      %568 = vmatpush1.bf16.msra.mxu0 0
      %569 = vmatprep.subr.bf16.mxu0 0
      %570 = vmatpush1.bf16.msra.mxu0 0
      %571 = vmatprep.subr.bf16.mxu0 0
      %572 = vmatpush1.bf16.msra.mxu0 0
      %573 = vmatprep.subr.bf16.mxu0 0
      %574 = vmatpush1.bf16.msra.mxu0 0
      %575 = vmatprep.subr.bf16.mxu0 0
      %576 = vmatpush1.bf16.msra.mxu0 0
      %577 = vmatprep.mubr.bf16.mxu0 0
      %578 = vmatmul.mubr.bf16.gmra.mrb[0].mxu0 %v543
      %v579 = vpop.f32.mrb[0].mxu0
      %v580 = vadd.f32 0.0, %v579
      %v581 = vpop.f32.mrb[0].mxu0
      %v582 = vpop.f32.mrb[0].mxu0
      %v583 = vpop.f32.mrb[0].mxu0
      %584 = vdwg.mxu0
      %v585 = vadd.f32 %v525, %v580
      %v586 = vld [vmem:[%s3 + $0x40] sm:$0xf]
      %v587 = vld [vmem:[%s3 + $0x44] sm:$0xf]
      %v588 = vld [vmem:[%s3 + $0x48] sm:$0xf]
      %v589 = vld [vmem:[%s3 + $0x4c] sm:$0xf]
      %v591 = vunpack.c.l.b16 %v334
      %v592 = vpack.c.b16 %v591, %v591
      %v594 = vshrl.u32 %v592, 16
      %v596 = vshll.u32 %v592, 16
      %v598 = vrot.slane %v596, 1
      %v599 = vor.u32 %v594, %v598
      %v604 = vunpack.c.l.b16 %v586
      %v605 = vunpack.c.l.b16 %v587
      %v606 = vunpack.c.l.b16 %v588
      %v607 = vunpack.c.l.b16 %v589
      %v608 = vpack.c.b16 %v605, %v604
      %v609 = vpack.c.b16 %v607, %v606
      %v613 = vsel %vm366, %v599, 0
      %615 = vmatprep.subr.bf16.mxu0 0
      %616 = vmatpush1.bf16.msra.mxu0 %v608
      %617 = vmatprep.subr.bf16.mxu0 0
      %618 = vmatpush1.bf16.msra.mxu0 %v609
      %619 = vmatprep.subr.bf16.mxu0 0
      %620 = vmatpush1.bf16.msra.mxu0 0
      %621 = vmatprep.subr.bf16.mxu0 0
      %622 = vmatpush1.bf16.msra.mxu0 0
      %623 = vmatprep.subr.bf16.mxu0 0
      %624 = vmatpush1.bf16.msra.mxu0 0
      %625 = vmatprep.subr.bf16.mxu0 0
      %626 = vmatpush1.bf16.msra.mxu0 0
      %627 = vmatprep.subr.bf16.mxu0 0
      %628 = vmatpush1.bf16.msra.mxu0 0
      %629 = vmatprep.subr.bf16.mxu0 0
      %630 = vmatpush1.bf16.msra.mxu0 0
      %631 = vmatprep.subr.bf16.mxu0 0
      %632 = vmatpush1.bf16.msra.mxu0 0
      %633 = vmatprep.subr.bf16.mxu0 0
      %634 = vmatpush1.bf16.msra.mxu0 0
      %635 = vmatprep.subr.bf16.mxu0 0
      %636 = vmatpush1.bf16.msra.mxu0 0
      %637 = vmatprep.subr.bf16.mxu0 0
      %638 = vmatpush1.bf16.msra.mxu0 0
      %639 = vmatprep.subr.bf16.mxu0 0
      %640 = vmatpush1.bf16.msra.mxu0 0
      %641 = vmatprep.subr.bf16.mxu0 0
      %642 = vmatpush1.bf16.msra.mxu0 0
      %643 = vmatprep.subr.bf16.mxu0 0
      %644 = vmatpush1.bf16.msra.mxu0 0
      %645 = vmatprep.subr.bf16.mxu0 0
      %646 = vmatpush1.bf16.msra.mxu0 0
      %647 = vmatprep.mubr.bf16.mxu0 0
      %648 = vmatmul.mubr.bf16.gmra.mrb[0].mxu0 %v613
      %v649 = vpop.f32.mrb[0].mxu0
      %v650 = vadd.f32 0.0, %v649
      %v651 = vpop.f32.mrb[0].mxu0
      %v652 = vpop.f32.mrb[0].mxu0
      %v653 = vpop.f32.mrb[0].mxu0
      %654 = vdwg.mxu0
      %v655 = vadd.f32 %v585, %v650
      %v656 = vld [vmem:[%s3 + $0x50] sm:$0xf]
      %v657 = vld [vmem:[%s3 + $0x54] sm:$0xf]
      %v658 = vld [vmem:[%s3 + $0x58] sm:$0xf]
      %v659 = vld [vmem:[%s3 + $0x5c] sm:$0xf]
      %v660 = vrot.slane %v592, 1
      %v665 = vunpack.c.l.b16 %v656
      %v666 = vunpack.c.l.b16 %v657
      %v667 = vunpack.c.l.b16 %v658
      %v668 = vunpack.c.l.b16 %v659
      %v669 = vpack.c.b16 %v666, %v665
      %v670 = vpack.c.b16 %v668, %v667
      %v674 = vsel %vm366, %v660, 0
      %676 = vmatprep.subr.bf16.mxu0 0
      %677 = vmatpush1.bf16.msra.mxu0 %v669
      %678 = vmatprep.subr.bf16.mxu0 0
      %679 = vmatpush1.bf16.msra.mxu0 %v670
      %680 = vmatprep.subr.bf16.mxu0 0
      %681 = vmatpush1.bf16.msra.mxu0 0
      %682 = vmatprep.subr.bf16.mxu0 0
      %683 = vmatpush1.bf16.msra.mxu0 0
      %684 = vmatprep.subr.bf16.mxu0 0
      %685 = vmatpush1.bf16.msra.mxu0 0
      %686 = vmatprep.subr.bf16.mxu0 0
      %687 = vmatpush1.bf16.msra.mxu0 0
      %688 = vmatprep.subr.bf16.mxu0 0
      %689 = vmatpush1.bf16.msra.mxu0 0
      %690 = vmatprep.subr.bf16.mxu0 0
      %691 = vmatpush1.bf16.msra.mxu0 0
      %692 = vmatprep.subr.bf16.mxu0 0
      %693 = vmatpush1.bf16.msra.mxu0 0
      %694 = vmatprep.subr.bf16.mxu0 0
      %695 = vmatpush1.bf16.msra.mxu0 0
      %696 = vmatprep.subr.bf16.mxu0 0
      %697 = vmatpush1.bf16.msra.mxu0 0
      %698 = vmatprep.subr.bf16.mxu0 0
      %699 = vmatpush1.bf16.msra.mxu0 0
      %700 = vmatprep.subr.bf16.mxu0 0
      %701 = vmatpush1.bf16.msra.mxu0 0
      %702 = vmatprep.subr.bf16.mxu0 0
      %703 = vmatpush1.bf16.msra.mxu0 0
      %704 = vmatprep.subr.bf16.mxu0 0
      %705 = vmatpush1.bf16.msra.mxu0 0
      %706 = vmatprep.subr.bf16.mxu0 0
      %707 = vmatpush1.bf16.msra.mxu0 0
      %708 = vmatprep.mubr.bf16.mxu0 0
      %709 = vmatmul.mubr.bf16.gmra.mrb[0].mxu0 %v674
      %v710 = vpop.f32.mrb[0].mxu0
      %v711 = vadd.f32 0.0, %v710
      %v712 = vpop.f32.mrb[0].mxu0
      %v713 = vpop.f32.mrb[0].mxu0
      %v714 = vpop.f32.mrb[0].mxu0
      %715 = vdwg.mxu0
      %v716 = vadd.f32 %v655, %v711
      %v717 = vld [vmem:[%s3 + $0x60] sm:$0xf]
      %v718 = vld [vmem:[%s3 + $0x64] sm:$0xf]
      %v719 = vld [vmem:[%s3 + $0x68] sm:$0xf]
      %v720 = vld [vmem:[%s3 + $0x6c] sm:$0xf]
      %v725 = vunpack.c.l.b16 %v717
      %v726 = vunpack.c.l.b16 %v718
      %v727 = vunpack.c.l.b16 %v719
      %v728 = vunpack.c.l.b16 %v720
      %v729 = vpack.c.b16 %v726, %v725
      %v730 = vpack.c.b16 %v728, %v727
      %v734 = vsel %vm366, %v335, 0
      %736 = vmatprep.subr.bf16.mxu0 0
      %737 = vmatpush1.bf16.msra.mxu0 %v729
      %738 = vmatprep.subr.bf16.mxu0 0
      %739 = vmatpush1.bf16.msra.mxu0 %v730
      %740 = vmatprep.subr.bf16.mxu0 0
      %741 = vmatpush1.bf16.msra.mxu0 0
      %742 = vmatprep.subr.bf16.mxu0 0
      %743 = vmatpush1.bf16.msra.mxu0 0
      %744 = vmatprep.subr.bf16.mxu0 0
      %745 = vmatpush1.bf16.msra.mxu0 0
      %746 = vmatprep.subr.bf16.mxu0 0
      %747 = vmatpush1.bf16.msra.mxu0 0
      %748 = vmatprep.subr.bf16.mxu0 0
      %749 = vmatpush1.bf16.msra.mxu0 0
      %750 = vmatprep.subr.bf16.mxu0 0
      %751 = vmatpush1.bf16.msra.mxu0 0
      %752 = vmatprep.subr.bf16.mxu0 0
      %753 = vmatpush1.bf16.msra.mxu0 0
      %754 = vmatprep.subr.bf16.mxu0 0
      %755 = vmatpush1.bf16.msra.mxu0 0
      %756 = vmatprep.subr.bf16.mxu0 0
      %757 = vmatpush1.bf16.msra.mxu0 0
      %758 = vmatprep.subr.bf16.mxu0 0
      %759 = vmatpush1.bf16.msra.mxu0 0
      %760 = vmatprep.subr.bf16.mxu0 0
      %761 = vmatpush1.bf16.msra.mxu0 0
      %762 = vmatprep.subr.bf16.mxu0 0
      %763 = vmatpush1.bf16.msra.mxu0 0
      %764 = vmatprep.subr.bf16.mxu0 0
      %765 = vmatpush1.bf16.msra.mxu0 0
      %766 = vmatprep.subr.bf16.mxu0 0
      %767 = vmatpush1.bf16.msra.mxu0 0
      %768 = vmatprep.mubr.bf16.mxu0 0
      %769 = vmatmul.mubr.bf16.gmra.mrb[0].mxu0 %v734
      %v770 = vpop.f32.mrb[0].mxu0
      %v771 = vadd.f32 0.0, %v770
      %v772 = vpop.f32.mrb[0].mxu0
      %v773 = vpop.f32.mrb[0].mxu0
      %v774 = vpop.f32.mrb[0].mxu0
      %775 = vdwg.mxu0
      %v776 = vadd.f32 %v716, %v771
      %v777 = vld [vmem:[%s3 + $0x70] sm:$0xf]
      %v778 = vld [vmem:[%s3 + $0x74] sm:$0xf]
      %v779 = vld [vmem:[%s3 + $0x78] sm:$0xf]
      %v780 = vld [vmem:[%s3 + $0x7c] sm:$0xf]
      %v782 = vunpack.c.l.b16 %v335
      %v783 = vpack.c.b16 %v782, %v782
      %v785 = vshrl.u32 %v783, 16
      %v787 = vshll.u32 %v783, 16
      %v789 = vrot.slane %v787, 1
      %v790 = vor.u32 %v785, %v789
      %v795 = vunpack.c.l.b16 %v777
      %v796 = vunpack.c.l.b16 %v778
      %v797 = vunpack.c.l.b16 %v779
      %v798 = vunpack.c.l.b16 %v780
      %v799 = vpack.c.b16 %v796, %v795
      %v800 = vpack.c.b16 %v798, %v797
      %v804 = vsel %vm366, %v790, 0
      %806 = vmatprep.subr.bf16.mxu0 0
      %807 = vmatpush1.bf16.msra.mxu0 %v799
      %808 = vmatprep.subr.bf16.mxu0 0
      %809 = vmatpush1.bf16.msra.mxu0 %v800
      %810 = vmatprep.subr.bf16.mxu0 0
      %811 = vmatpush1.bf16.msra.mxu0 0
      %812 = vmatprep.subr.bf16.mxu0 0
      %813 = vmatpush1.bf16.msra.mxu0 0
      %814 = vmatprep.subr.bf16.mxu0 0
      %815 = vmatpush1.bf16.msra.mxu0 0
      %816 = vmatprep.subr.bf16.mxu0 0
      %817 = vmatpush1.bf16.msra.mxu0 0
      %818 = vmatprep.subr.bf16.mxu0 0
      %819 = vmatpush1.bf16.msra.mxu0 0
      %820 = vmatprep.subr.bf16.mxu0 0
      %821 = vmatpush1.bf16.msra.mxu0 0
      %822 = vmatprep.subr.bf16.mxu0 0
      %823 = vmatpush1.bf16.msra.mxu0 0
      %824 = vmatprep.subr.bf16.mxu0 0
      %825 = vmatpush1.bf16.msra.mxu0 0
      %826 = vmatprep.subr.bf16.mxu0 0
      %827 = vmatpush1.bf16.msra.mxu0 0
      %828 = vmatprep.subr.bf16.mxu0 0
      %829 = vmatpush1.bf16.msra.mxu0 0
      %830 = vmatprep.subr.bf16.mxu0 0
      %831 = vmatpush1.bf16.msra.mxu0 0
      %832 = vmatprep.subr.bf16.mxu0 0
      %833 = vmatpush1.bf16.msra.mxu0 0
      %834 = vmatprep.subr.bf16.mxu0 0
      %835 = vmatpush1.bf16.msra.mxu0 0
      %836 = vmatprep.subr.bf16.mxu0 0
      %837 = vmatpush1.bf16.msra.mxu0 0
      %838 = vmatprep.mubr.bf16.mxu0 0
      %839 = vmatmul.mubr.bf16.gmra.mrb[0].mxu0 %v804
      %v840 = vpop.f32.mrb[0].mxu0
      %v841 = vadd.f32 0.0, %v840
      %v842 = vpop.f32.mrb[0].mxu0
      %v843 = vpop.f32.mrb[0].mxu0
      %v844 = vpop.f32.mrb[0].mxu0
      %845 = vdwg.mxu0
      %v846 = vadd.f32 %v776, %v841
      %v847 = vld [vmem:[%s3 + $0x80] sm:$0xf]
      %v848 = vld [vmem:[%s3 + $0x84] sm:$0xf]
      %v849 = vld [vmem:[%s3 + $0x88] sm:$0xf]
      %v850 = vld [vmem:[%s3 + $0x8c] sm:$0xf]
      %v851 = vrot.slane %v783, 1
      %v856 = vunpack.c.l.b16 %v847
      %v857 = vunpack.c.l.b16 %v848
      %v858 = vunpack.c.l.b16 %v849
      %v859 = vunpack.c.l.b16 %v850
      %v860 = vpack.c.b16 %v857, %v856
      %v861 = vpack.c.b16 %v859, %v858
      %v865 = vsel %vm366, %v851, 0
      %867 = vmatprep.subr.bf16.mxu0 0
      %868 = vmatpush1.bf16.msra.mxu0 %v860
      %869 = vmatprep.subr.bf16.mxu0 0
      %870 = vmatpush1.bf16.msra.mxu0 %v861
      %871 = vmatprep.subr.bf16.mxu0 0
      %872 = vmatpush1.bf16.msra.mxu0 0
      %873 = vmatprep.subr.bf16.mxu0 0
      %874 = vmatpush1.bf16.msra.mxu0 0
      %875 = vmatprep.subr.bf16.mxu0 0
      %876 = vmatpush1.bf16.msra.mxu0 0
      %877 = vmatprep.subr.bf16.mxu0 0
      %878 = vmatpush1.bf16.msra.mxu0 0
      %879 = vmatprep.subr.bf16.mxu0 0
      %880 = vmatpush1.bf16.msra.mxu0 0
      %881 = vmatprep.subr.bf16.mxu0 0
      %882 = vmatpush1.bf16.msra.mxu0 0
      %883 = vmatprep.subr.bf16.mxu0 0
      %884 = vmatpush1.bf16.msra.mxu0 0
      %885 = vmatprep.subr.bf16.mxu0 0
      %886 = vmatpush1.bf16.msra.mxu0 0
      %887 = vmatprep.subr.bf16.mxu0 0
      %888 = vmatpush1.bf16.msra.mxu0 0
      %889 = vmatprep.subr.bf16.mxu0 0
      %890 = vmatpush1.bf16.msra.mxu0 0
      %891 = vmatprep.subr.bf16.mxu0 0
      %892 = vmatpush1.bf16.msra.mxu0 0
      %893 = vmatprep.subr.bf16.mxu0 0
      %894 = vmatpush1.bf16.msra.mxu0 0
      %895 = vmatprep.subr.bf16.mxu0 0
      %896 = vmatpush1.bf16.msra.mxu0 0
      %897 = vmatprep.subr.bf16.mxu0 0
      %898 = vmatpush1.bf16.msra.mxu0 0
      %899 = vmatprep.mubr.bf16.mxu0 0
      %900 = vmatmul.mubr.bf16.gmra.mrb[0].mxu0 %v865
      %v901 = vpop.f32.mrb[0].mxu0
      %v902 = vadd.f32 0.0, %v901
      %v903 = vpop.f32.mrb[0].mxu0
      %v904 = vpop.f32.mrb[0].mxu0
      %v905 = vpop.f32.mrb[0].mxu0
      %906 = vdwg.mxu0
      %v907 = vadd.f32 %v846, %v902
      %v908 = vld [vmem:[%s4] sm:$0x1]
      %v910 = vlaneseq
      %v911 = vshrl.u32 %v910, 7
      %v912 = vsub.s32 0, %v911
      %v913 = vrot.slane %v908, %v912
      %v915 = vadd.f32 %v907, %v913
      %v916 = vmax.f32 %v915, 0.0
      %v917 = vpack.c.bf16 %v916, %v916
      %vm918 = vcmask 254976
      %919 = vst.msk [vmem:[%s331] sm:$0x3] %vm918, %v917
      %p920 = scmp.lt.s32.totalorder %s20, 1
      %s921 = scalar_select %p920, %s20, 1
      %p922 = scmp.lt.s32.totalorder %s21, 3
      %s923 = scalar_select %p922, %s21, 3
      %s924 = smul.addr %s921, 4
      %s925 = sadd.s32 %s923, %s924
      %s926 = smul.addr %s925, 2
      %s927 = scalar_lea.vmem %s5, %s926
      // Predicated region
      $region41: #{unet_forward.16} parent=39 // pred_check
        %p928 = pneg %p178
      $region42: #{unet_forward.16} parent=39 // pred_check_branch
        %930 = sbr.rel (%p928) target = $region44
      $region43: #{unet_forward.16} parent=39 // pred_region
        _
      $region44: #{unet_forward.16} parent=39 // pred_fallthru
        _
    $region40: #{unet_forward.16} parent=5 // pred_fallthru
      _
    %p931 = scmp.le.s32.totalorder 2, %s11
    // Predicated region
    $region45: #{unet_forward.16} parent=5 // pred_check
      %p932 = pneg %p931
    $region46: #{unet_forward.16} parent=5 // pred_check_branch
      %934 = sbr.rel (%p932) target = $region48
    $region47: #{unet_forward.16} parent=5 // pred_region
      %s935 = ssub.s32 %s11, 2
      // Predicated region
      $region49: #{unet_forward.16} parent=47 // pred_check
        %p936 = pneg %p184
      $region50: #{unet_forward.16} parent=47 // pred_check_branch
        %938 = sbr.rel (%p936) target = $region52
      $region51: #{unet_forward.16} parent=47 // pred_region
        %p939 = scmp.lt.s32.totalorder %s22, 1
        %s940 = scalar_select %p939, %s22, 1
        %p941 = scmp.lt.s32.totalorder %s23, 3
        %s942 = scalar_select %p941, %s23, 3
        %s943 = smul.addr %s940, 4
        %s944 = sadd.s32 %s942, %s943
        %s945 = smul.addr %s944, 2
        %s946 = scalar_lea.vmem %s5, %s945
      $region52: #{unet_forward.16} parent=47 // pred_fallthru
        _
    $region48: #{unet_forward.16} parent=5 // pred_fallthru
      _
  $region6: #{unet_forward.16} parent=0 // loop_footer
    %s15 = sadd.s32 1, %s11
  $region7: #{unet_forward.16} parent=0 // loop_footer_branch
    %10 = sbr.rel target = $region3
  $region8: #{unet_forward.16} parent=0 // loop_exit
    _

// kernel: tile.53
$region0: #{tile.53}
  #allocation0 [shape = 's32[1]{0}', space=sflag, size = 0x4, scoped, tag = 'scoped memory for tile.53']
  %s0 = inlined_call_operand.vmem [shape: f32[64], index: 0, kind: input, shape index: {}]
  %s1 = inlined_call_operand.vmem [shape: f32[2,64], index: 1, kind: output, shape index: {}]
  // Predicated region
  $region2: #{tile.53} parent=0 // pred_check
    _
  $region3: #{tile.53} parent=0 // pred_check_branch
    %3 = sbr.rel (0) target = $region5
  $region4: #{tile.53} parent=0 // pred_region
    _
  $region5: #{tile.53} parent=0 // pred_fallthru
    _
  %v4 = vld [vmem:[%s0] ss:$0 sm:$0xff]
  %5 = vst [vmem:[%s1] sm:$0x3] %v4

// kernel: tile.54
$region0: #{tile.54}
  %s0 = inlined_call_operand.vmem [shape: f32[2,64], index: 0, kind: input, shape index: {}]
  %s1 = inlined_call_operand.vmem [shape: f32[1,128], index: 1, kind: output, shape index: {}]
  $region1: #{tile.54} parent=0
    #allocation0 [shape = 'u8[4096]{0}', space=vmem, size = 0x1000, scoped, tag = 'scoped mem for output reshape']
    #allocation1 [shape = 'u8[4096]{0}', space=vmem, size = 0x1000, scoped, tag = 'scoped mem for input reshape']
    %s3 = sshllo.u32 0, 2
    %v4 = vld [vmem:[%s0] sm:%s3]
    %5 = vst [vmem:[#allocation1] sm:%s3] %v4
    %v6 = vld [vmem:[#allocation1] sm:$0x1]
    %vm7 = vcmask 523264
    %8 = vst.msk [vmem:[#allocation0] sm:$0x1] %vm7, %v6
    %s9 = scalar_lea.vmem [#allocation1], 1
    %v10 = vld [vmem:[%s9] sm:$0x1]
    %11 = vrot.lane.b32.xlu0 %v10, 64
    %v12 = vpop.permute.xlu0 %11
    %vm13 = vcmask 1048064
    %14 = vst.msk [vmem:[#allocation0] sm:$0x1] %vm13, %v12
    %s16 = sshllo.u32 0, 1
    %v18 = vld [vmem:[#allocation0] sm:%s16]
    %s19 = sshllo.u32 0, 1
    %20 = vst [vmem:[%s1] sm:%s19] %v18

// kernel: unet_forward.18
$region0: #{unet_forward.18}
  #allocation0 [shape = 'u32[]', space=smem, size = 0x4, offset = 0x4, fixed_abs, tag = 'smem constant byte address 0x4 - core index']
  #allocation1 [shape = 'u32[144,128]{1,0:T(1,128)}', space=vmem, size = 0x12000, scoped, tag = 'internal scratch']
  %s0 = inlined_call_operand.vmem [shape: bf16[2,4,4,64], index: 0, kind: input, shape index: {}, may-alias: {0,1,2}]
  %s1 = inlined_call_operand.vmem [shape: bf16[2,4,4,64], index: 1, kind: input, shape index: {}, may-alias: {0,1,2}]
  %s2 = inlined_call_operand.vmem [shape: bf16[2,4,4,64], index: 2, kind: input, shape index: {}, may-alias: {0,1,2}]
  %s3 = inlined_call_operand.vmem [shape: bf16[576,64], index: 3, kind: input, shape index: {}]
  %s4 = inlined_call_operand.vmem [shape: f32[1,64], index: 4, kind: input, shape index: {}]
  %s5 = inlined_call_operand.vmem [shape: bf16[2,2,2,64], index: 5, kind: output, shape index: {}]
  %s6 = sld [smem:[#allocation0]]
  $region53: #{unet_forward.18} parent=0
    _
  %s8 = ssub.s32 1, %s6
  %s9 = scalar_select 0, %s8, %s6
  loop: start=0, step=1, limit=6
  $region2: #{unet_forward.18} parent=0 // loop_pre_header
    _
  $region3: #{unet_forward.18} parent=0 // loop_header
    %s11 = sphi 0, %s15
    %p12 = scmp.ge.s32.totalorder %s11, 6
    %s18 = sphi 0, %s30
    %s19 = sphi 0, %s26
    %s20 = sphi 0, %s18
    %s21 = sphi 0, %s19
    %s22 = sphi 0, %s20
    %s23 = sphi 0, %s21
    %s35 = sphi 0, %s37
    %s38 = sphi 0, %s35
    %s39 = sphi 0, %s38
    %s55 = sphi 0, %s39
    %s65 = sphi 0, %s67
    %s68 = sphi 0, %s65
    %s69 = sphi 0, %s68
    %s85 = sphi 0, %s69
    %s95 = sphi 0, %s97
    %s98 = sphi 0, %s95
    %s99 = sphi 0, %s98
    %s115 = sphi 0, %s99
    %s119 = sphi 0, %s119
    %s121 = sphi 0, %s119
    %s122 = sphi 0, %s121
    %s136 = sphi 0, %s122
    %s140 = sphi 0, %s140
    %s142 = sphi 0, %s140
    %s143 = sphi 0, %s142
    %s157 = sphi 0, %s143
    %s165 = sphi 0, %s167
    %s168 = sphi 0, %s165
    %s169 = sphi 0, %s168
    %s185 = sphi 0, %s169
  $region4: #{unet_forward.18} parent=0 // loop_header_branch
    %14 = sbr.rel (%p12) target = $region8
  $region5: #{unet_forward.18} parent=0 // loop_body
    %s16 = ssub.s32 %s11, 1
    %s17 = ssub.s32 %s11, 2
    %s24 = sadd.s32 1, %s19
    %p25 = scmp.ge.s32.totalorder %s24, 2
    %s26 = scalar_select %p25, 0, %s24
    %s27 = sadd.s32 1, %s18
    %s28 = scalar_select %p25, %s27, %s18
    %p29 = scmp.ge.s32.totalorder %s28, 2
    %s30 = scalar_select %p29, 0, %s28
    %s31 = ssub.s32 %s18, %s30
    %s32 = ssub.s32 %s19, %s26
    %s33 = sor.u32 %s31, %s32
    %p34 = scmp.eq.s32.totalorder %s33, 0
    %s36 = sadd.s32 %s35, 1
    %s37 = scalar_select %p34, %s35, %s36
    %p40 = pneg %p34
    %p41 = scmp.eq.s32.totalorder %s11, 3
    %p42 = por %p40, %p41
    %p43 = scmp.ne.s32.totalorder %s35, %s38
    %p44 = scmp.eq.s32.totalorder %s11, 0
    %p45 = por %p43, %p44
    %p46 = scmp.ne.s32.totalorder %s35, %s38
    %p47 = scmp.eq.s32.totalorder %s16, 3
    %p48 = por %p46, %p47
    %p49 = scmp.ne.s32.totalorder %s38, %s39
    %p50 = scmp.eq.s32.totalorder %s16, 0
    %p51 = por %p49, %p50
    %p52 = scmp.ne.s32.totalorder %s38, %s39
    %p53 = scmp.eq.s32.totalorder %s17, 3
    %p54 = por %p52, %p53
    %p56 = scmp.ne.s32.totalorder %s39, %s55
    %p57 = scmp.eq.s32.totalorder %s17, 0
    %p58 = por %p56, %p57
    %s59 = sadd.s32 %s19, 1
    %s60 = sadd.s32 %s26, 1
    %s61 = ssub.s32 %s18, %s30
    %s62 = ssub.s32 %s59, %s60
    %s63 = sor.u32 %s61, %s62
    %p64 = scmp.eq.s32.totalorder %s63, 0
    %s66 = sadd.s32 %s65, 1
    %s67 = scalar_select %p64, %s65, %s66
    %p70 = pneg %p64
    %p71 = scmp.eq.s32.totalorder %s11, 3
    %p72 = por %p70, %p71
    %p73 = scmp.ne.s32.totalorder %s65, %s68
    %p74 = scmp.eq.s32.totalorder %s11, 0
    %p75 = por %p73, %p74
    %p76 = scmp.ne.s32.totalorder %s65, %s68
    %p77 = scmp.eq.s32.totalorder %s16, 3
    %p78 = por %p76, %p77
    %p79 = scmp.ne.s32.totalorder %s68, %s69
    %p80 = scmp.eq.s32.totalorder %s16, 0
    %p81 = por %p79, %p80
    %p82 = scmp.ne.s32.totalorder %s68, %s69
    %p83 = scmp.eq.s32.totalorder %s17, 3
    %p84 = por %p82, %p83
    %p86 = scmp.ne.s32.totalorder %s69, %s85
    %p87 = scmp.eq.s32.totalorder %s17, 0
    %p88 = por %p86, %p87
    %s89 = sadd.s32 %s19, 2
    %s90 = sadd.s32 %s26, 2
    %s91 = ssub.s32 %s18, %s30
    %s92 = ssub.s32 %s89, %s90
    %s93 = sor.u32 %s91, %s92
    %p94 = scmp.eq.s32.totalorder %s93, 0
    %s96 = sadd.s32 %s95, 1
    %s97 = scalar_select %p94, %s95, %s96
    %p100 = pneg %p94
    %p101 = scmp.eq.s32.totalorder %s11, 3
    %p102 = por %p100, %p101
    %p103 = scmp.ne.s32.totalorder %s95, %s98
    %p104 = scmp.eq.s32.totalorder %s11, 0
    %p105 = por %p103, %p104
    %p106 = scmp.ne.s32.totalorder %s95, %s98
    %p107 = scmp.eq.s32.totalorder %s16, 3
    %p108 = por %p106, %p107
    %p109 = scmp.ne.s32.totalorder %s98, %s99
    %p110 = scmp.eq.s32.totalorder %s16, 0
    %p111 = por %p109, %p110
    %p112 = scmp.ne.s32.totalorder %s98, %s99
    %p113 = scmp.eq.s32.totalorder %s17, 3
    %p114 = por %p112, %p113
    %p116 = scmp.ne.s32.totalorder %s99, %s115
    %p117 = scmp.eq.s32.totalorder %s17, 0
    %p118 = por %p116, %p117
    %s120 = sadd.s32 %s119, 1
    %p123 = scmp.eq.s32.totalorder %s11, 3
    %p124 = scmp.ne.s32.totalorder %s119, %s121
    %p125 = scmp.eq.s32.totalorder %s11, 0
    %p126 = por %p124, %p125
    %p127 = scmp.ne.s32.totalorder %s119, %s121
    %p128 = scmp.eq.s32.totalorder %s16, 3
    %p129 = por %p127, %p128
    %p130 = scmp.ne.s32.totalorder %s121, %s122
    %p131 = scmp.eq.s32.totalorder %s16, 0
    %p132 = por %p130, %p131
    %p133 = scmp.ne.s32.totalorder %s121, %s122
    %p134 = scmp.eq.s32.totalorder %s17, 3
    %p135 = por %p133, %p134
    %p137 = scmp.ne.s32.totalorder %s122, %s136
    %p138 = scmp.eq.s32.totalorder %s17, 0
    %p139 = por %p137, %p138
    %s141 = sadd.s32 %s140, 1
    %p144 = scmp.eq.s32.totalorder %s11, 3
    %p145 = scmp.ne.s32.totalorder %s140, %s142
    %p146 = scmp.eq.s32.totalorder %s11, 0
    %p147 = por %p145, %p146
    %p148 = scmp.ne.s32.totalorder %s140, %s142
    %p149 = scmp.eq.s32.totalorder %s16, 3
    %p150 = por %p148, %p149
    %p151 = scmp.ne.s32.totalorder %s142, %s143
    %p152 = scmp.eq.s32.totalorder %s16, 0
    %p153 = por %p151, %p152
    %p154 = scmp.ne.s32.totalorder %s142, %s143
    %p155 = scmp.eq.s32.totalorder %s17, 3
    %p156 = por %p154, %p155
    %p158 = scmp.ne.s32.totalorder %s143, %s157
    %p159 = scmp.eq.s32.totalorder %s17, 0
    %p160 = por %p158, %p159
    %s161 = ssub.s32 %s18, %s30
    %s162 = ssub.s32 %s19, %s26
    %s163 = sor.u32 %s161, %s162
    %p164 = scmp.eq.s32.totalorder %s163, 0
    %s166 = sadd.s32 %s165, 1
    %s167 = scalar_select %p164, %s165, %s166
    %p170 = pneg %p164
    %p171 = scmp.eq.s32.totalorder %s11, 3
    %p172 = por %p170, %p171
    %p173 = scmp.ne.s32.totalorder %s165, %s168
    %p174 = scmp.eq.s32.totalorder %s11, 0
    %p175 = por %p173, %p174
    %p176 = scmp.ne.s32.totalorder %s165, %s168
    %p177 = scmp.eq.s32.totalorder %s16, 3
    %p178 = por %p176, %p177
    %p179 = scmp.ne.s32.totalorder %s168, %s169
    %p180 = scmp.eq.s32.totalorder %s16, 0
    %p181 = por %p179, %p180
    %p182 = scmp.ne.s32.totalorder %s168, %s169
    %p183 = scmp.eq.s32.totalorder %s17, 3
    %p184 = por %p182, %p183
    %p186 = scmp.ne.s32.totalorder %s169, %s185
    %p187 = scmp.eq.s32.totalorder %s17, 0
    %p188 = por %p186, %p187
    %p189 = scmp.le.s32.totalorder 1, %s11
    %p190 = scmp.lt.s32.totalorder %s11, 5
    %p191 = pnand %p189, %p190
    %p192 = pneg %p191
    // Predicated region
    $region9: #{unet_forward.18} parent=5 // pred_check
      _
    $region10: #{unet_forward.18} parent=5 // pred_check_branch
      %194 = sbr.rel (%p191) target = $region12
    $region11: #{unet_forward.18} parent=5 // pred_region
      %s195 = ssub.s32 %s11, 1
      // Predicated region
      $region13: #{unet_forward.18} parent=11 // pred_check
        %p196 = pneg %p132
      $region14: #{unet_forward.18} parent=11 // pred_check_branch
        %198 = sbr.rel (%p196) target = $region16
      $region15: #{unet_forward.18} parent=11 // pred_region
        _
      $region16: #{unet_forward.18} parent=11 // pred_fallthru
        _
      // Predicated region
      $region17: #{unet_forward.18} parent=11 // pred_check
        %p199 = pneg %p153
      $region18: #{unet_forward.18} parent=11 // pred_check_branch
        %201 = sbr.rel (%p199) target = $region20
      $region19: #{unet_forward.18} parent=11 // pred_region
        _
      $region20: #{unet_forward.18} parent=11 // pred_fallthru
        _
    $region12: #{unet_forward.18} parent=5 // pred_fallthru
      _
    %p202 = scmp.lt.s32.totalorder %s11, 4
    // Predicated region
    $region21: #{unet_forward.18} parent=5 // pred_check
      %p203 = pneg %p202
    $region22: #{unet_forward.18} parent=5 // pred_check_branch
      %205 = sbr.rel (%p203) target = $region24
    $region23: #{unet_forward.18} parent=5 // pred_region
      // Predicated region
      $region25: #{unet_forward.18} parent=23 // pred_check
        %p206 = pneg %p45
      $region26: #{unet_forward.18} parent=23 // pred_check_branch
        %208 = sbr.rel (%p206) target = $region28
      $region27: #{unet_forward.18} parent=23 // pred_region
        %p209 = scmp.lt.s32.totalorder %s18, 1
        %s210 = scalar_select %p209, %s18, 1
        %p211 = scmp.lt.s32.totalorder %s19, 3
        %s212 = scalar_select %p211, %s19, 3
        %s213 = smul.addr %s210, 4
        %s214 = sadd.s32 %s212, %s213
        %s215 = smul.addr %s214, 2
        %s216 = scalar_lea.vmem %s0, %s215
      $region28: #{unet_forward.18} parent=23 // pred_fallthru
        _
      // Predicated region
      $region29: #{unet_forward.18} parent=23 // pred_check
        %p217 = pneg %p75
      $region30: #{unet_forward.18} parent=23 // pred_check_branch
        %219 = sbr.rel (%p217) target = $region32
      $region31: #{unet_forward.18} parent=23 // pred_region
        %s220 = sadd.s32 %s19, 1
        %p221 = scmp.lt.s32.totalorder %s18, 1
        %s222 = scalar_select %p221, %s18, 1
        %p223 = scmp.lt.s32.totalorder %s220, 3
        %s224 = scalar_select %p223, %s220, 3
        %s225 = smul.addr %s222, 4
        %s226 = sadd.s32 %s224, %s225
        %s227 = smul.addr %s226, 2
        %s228 = scalar_lea.vmem %s1, %s227
        %s229 = sadd.s32 %s19, 1
      $region32: #{unet_forward.18} parent=23 // pred_fallthru
        _
      // Predicated region
      $region33: #{unet_forward.18} parent=23 // pred_check
        %p230 = pneg %p105
      $region34: #{unet_forward.18} parent=23 // pred_check_branch
        %232 = sbr.rel (%p230) target = $region36
      $region35: #{unet_forward.18} parent=23 // pred_region
        %s233 = sadd.s32 %s19, 2
        %p234 = scmp.lt.s32.totalorder %s18, 1
        %s235 = scalar_select %p234, %s18, 1
        %p236 = scmp.lt.s32.totalorder %s233, 3
        %s237 = scalar_select %p236, %s233, 3
        %s238 = smul.addr %s235, 4
        %s239 = sadd.s32 %s237, %s238
        %s240 = smul.addr %s239, 2
        %s241 = scalar_lea.vmem %s2, %s240
        %s242 = sadd.s32 %s19, 2
      $region36: #{unet_forward.18} parent=23 // pred_fallthru
        _
    $region24: #{unet_forward.18} parent=5 // pred_fallthru
      _
    %p243 = scmp.le.s32.totalorder 1, %s11
    %p244 = scmp.lt.s32.totalorder %s11, 5
    %p245 = pnand %p243, %p244
    %p246 = pneg %p245
    // Predicated region
    $region37: #{unet_forward.18} parent=5 // pred_check
      _
    $region38: #{unet_forward.18} parent=5 // pred_check_branch
      %248 = sbr.rel (%p245) target = $region40
    $region39: #{unet_forward.18} parent=5 // pred_region
      %s249 = ssub.s32 %s11, 1
      %p250 = scmp.lt.s32.totalorder %s20, 1
      %s251 = scalar_select %p250, %s20, 1
      %p252 = scmp.lt.s32.totalorder %s21, 3
      %s253 = scalar_select %p252, %s21, 3
      %s254 = smul.addr %s251, 4
      %s255 = sadd.s32 %s253, %s254
      %s256 = smul.addr %s255, 2
      %s257 = scalar_lea.vmem %s0, %s256
      %p258 = pneg %p51
      %p259 = pneg %p48
      %s260 = sadd.s32 %s21, 1
      %p261 = scmp.lt.s32.totalorder %s20, 1
      %s262 = scalar_select %p261, %s20, 1
      %p263 = scmp.lt.s32.totalorder %s260, 3
      %s264 = scalar_select %p263, %s260, 3
      %s265 = smul.addr %s262, 4
      %s266 = sadd.s32 %s264, %s265
      %s267 = smul.addr %s266, 2
      %s268 = scalar_lea.vmem %s1, %s267
      %p269 = pneg %p81
      %p270 = pneg %p78
      %s271 = sadd.s32 %s21, 2
      %p272 = scmp.lt.s32.totalorder %s20, 1
      %s273 = scalar_select %p272, %s20, 1
      %p274 = scmp.lt.s32.totalorder %s271, 3
      %s275 = scalar_select %p274, %s271, 3
      %s276 = smul.addr %s273, 4
      %s277 = sadd.s32 %s275, %s276
      %s278 = smul.addr %s277, 2
      %s279 = scalar_lea.vmem %s2, %s278
      %p280 = pneg %p111
      %p281 = pneg %p108
      %p282 = pneg %p132
      %p283 = pneg %p129
      %p284 = pneg %p153
      %p285 = pneg %p150
      %p286 = pneg %p181
      %p287 = pneg %p178
      %p288 = scmp.lt.s32.totalorder %s20, 1
      %s289 = scalar_select %p288, %s20, 1
      %p290 = scmp.lt.s32.totalorder %s21, 1
      %s291 = scalar_select %p290, %s21, 1
      %s292 = smul.addr %s289, 2
      %s293 = sadd.s32 %s291, %s292
      %s294 = scalar_lea.vmem %s5, %s293
      %p295 = scmp.lt.s32.totalorder %s20, 1
      %s296 = scalar_select %p295, %s20, 1
      %p297 = scmp.lt.s32.totalorder %s21, 3
      %s298 = scalar_select %p297, %s21, 3
      %s299 = smul.addr %s296, 4
      %s300 = sadd.s32 %s298, %s299
      %s301 = smul.addr %s300, 2
      %s302 = scalar_lea.vmem %s0, %s301
      %s303 = sadd.s32 %s21, 1
      %p304 = scmp.lt.s32.totalorder %s20, 1
      %s305 = scalar_select %p304, %s20, 1
      %p306 = scmp.lt.s32.totalorder %s303, 3
      %s307 = scalar_select %p306, %s303, 3
      %s308 = smul.addr %s305, 4
      %s309 = sadd.s32 %s307, %s308
      %s310 = smul.addr %s309, 2
      %s311 = scalar_lea.vmem %s1, %s310
      %s312 = sadd.s32 %s21, 1
      %s313 = sadd.s32 %s21, 2
      %p314 = scmp.lt.s32.totalorder %s20, 1
      %s315 = scalar_select %p314, %s20, 1
      %p316 = scmp.lt.s32.totalorder %s313, 3
      %s317 = scalar_select %p316, %s313, 3
      %s318 = smul.addr %s315, 4
      %s319 = sadd.s32 %s317, %s318
      %s320 = smul.addr %s319, 2
      %s321 = scalar_lea.vmem %s2, %s320
      %s322 = sadd.s32 %s21, 2
      %p323 = scmp.lt.s32.totalorder %s20, 1
      %s324 = scalar_select %p323, %s20, 1
      %p325 = scmp.lt.s32.totalorder %s21, 1
      %s326 = scalar_select %p325, %s21, 1
      %s327 = smul.addr %s324, 2
      %s328 = sadd.s32 %s326, %s327
      %s329 = scalar_lea.vmem %s5, %s328
      %v331 = vld [vmem:[%s302] sm:$0x3]
      %v332 = vld [vmem:[%s311] sm:$0x3]
      %v333 = vld [vmem:[%s321] sm:$0x3]
      %v334 = vld [vmem:[%s3] sm:$0xf]
      %v335 = vld [vmem:[%s3 + $0x4] sm:$0xf]
      %v336 = vld [vmem:[%s3 + $0x8] sm:$0xf]
      %v337 = vld [vmem:[%s3 + $0xc] sm:$0xf]
      %v338 = vld [vmem:[%s3 + $0x10] sm:$0xf]
      %v339 = vld [vmem:[%s3 + $0x14] sm:$0xf]
      %v340 = vld [vmem:[%s3 + $0x18] sm:$0xf]
      %v341 = vld [vmem:[%s3 + $0x1c] sm:$0xf]
      %v342 = vld [vmem:[%s3 + $0x20] sm:$0xf]
      %v343 = vld [vmem:[%s3 + $0x24] sm:$0xf]
      %v344 = vld [vmem:[%s3 + $0x28] sm:$0xf]
      %v345 = vld [vmem:[%s3 + $0x2c] sm:$0xf]
      %v346 = vld [vmem:[%s3 + $0x30] sm:$0xf]
      %v347 = vld [vmem:[%s3 + $0x34] sm:$0xf]
      %v348 = vld [vmem:[%s3 + $0x38] sm:$0xf]
      %v349 = vld [vmem:[%s3 + $0x3c] sm:$0xf]
      %v352 = vunpack.c.l.s4 1983009808
      %v353 = vunpack.c.0.s8 %v352
      %v354 = vlaneseq
      %v355 = vshrl.u32 %v354, 7
      %v356 = vsub.s32 %v353, %v355
      %v357 = vrot.slane %v331, %v356
      %v359 = vshrl.u32 %v357, 16
      %v361 = vshll.u32 %v357, 16
      %v363 = vrot.slane %v361, 1
      %v364 = vor.u32 %v359, %v363
      %v373 = vunpack.c.l.b16 %v342
      %v374 = vunpack.c.l.b16 %v343
      %v375 = vunpack.c.l.b16 %v344
      %v376 = vunpack.c.l.b16 %v345
      %v377 = vunpack.c.l.b16 %v346
      %v378 = vunpack.c.l.b16 %v347
      %v379 = vunpack.c.l.b16 %v348
      %v380 = vunpack.c.l.b16 %v349
      %v381 = vpack.c.b16 %v374, %v373
      %v382 = vpack.c.b16 %v376, %v375
      %v383 = vpack.c.b16 %v378, %v377
      %v384 = vpack.c.b16 %v380, %v379
      %vm389 = vcmask 523264
      %v391 = vsel %vm389, %v364, 0
      %393 = vmatprep.subr.bf16.mxu0 0
      %394 = vmatpush1.bf16.msra.mxu0 %v381
      %395 = vmatprep.subr.bf16.mxu0 0
      %396 = vmatpush1.bf16.msra.mxu0 %v382
      %397 = vmatprep.subr.bf16.mxu0 0
      %398 = vmatpush1.bf16.msra.mxu0 %v383
      %399 = vmatprep.subr.bf16.mxu0 0
      %400 = vmatpush1.bf16.msra.mxu0 %v384
      %401 = vmatprep.subr.bf16.mxu0 0
      %402 = vmatpush1.bf16.msra.mxu0 0
      %403 = vmatprep.subr.bf16.mxu0 0
      %404 = vmatpush1.bf16.msra.mxu0 0
      %405 = vmatprep.subr.bf16.mxu0 0
      %406 = vmatpush1.bf16.msra.mxu0 0
      %407 = vmatprep.subr.bf16.mxu0 0
      %408 = vmatpush1.bf16.msra.mxu0 0
      %409 = vmatprep.subr.bf16.mxu0 0
      %410 = vmatpush1.bf16.msra.mxu0 0
      %411 = vmatprep.subr.bf16.mxu0 0
      %412 = vmatpush1.bf16.msra.mxu0 0
      %413 = vmatprep.subr.bf16.mxu0 0
      %414 = vmatpush1.bf16.msra.mxu0 0
      %415 = vmatprep.subr.bf16.mxu0 0
      %416 = vmatpush1.bf16.msra.mxu0 0
      %417 = vmatprep.subr.bf16.mxu0 0
      %418 = vmatpush1.bf16.msra.mxu0 0
      %419 = vmatprep.subr.bf16.mxu0 0
      %420 = vmatpush1.bf16.msra.mxu0 0
      %421 = vmatprep.subr.bf16.mxu0 0
      %422 = vmatpush1.bf16.msra.mxu0 0
      %423 = vmatprep.subr.bf16.mxu0 0
      %424 = vmatpush1.bf16.msra.mxu0 0
      %425 = vmatprep.mubr.bf16.mxu0 0
      %426 = vmatmul.mubr.bf16.gmra.mrb[0].mxu0 %v391
      %v427 = vpop.f32.mrb[0].mxu0
      %v428 = vadd.f32 0.0, %v427
      %v429 = vpop.f32.mrb[0].mxu0
      %v430 = vpop.f32.mrb[0].mxu0
      %v431 = vpop.f32.mrb[0].mxu0
      %432 = vdwg.mxu0
      %v441 = vunpack.c.l.b16 %v334
      %v442 = vunpack.c.l.b16 %v335
      %v443 = vunpack.c.l.b16 %v336
      %v444 = vunpack.c.l.b16 %v337
      %v445 = vunpack.c.l.b16 %v338
      %v446 = vunpack.c.l.b16 %v339
      %v447 = vunpack.c.l.b16 %v340
      %v448 = vunpack.c.l.b16 %v341
      %v449 = vpack.c.b16 %v442, %v441
      %v450 = vpack.c.b16 %v444, %v443
      %v451 = vpack.c.b16 %v446, %v445
      %v452 = vpack.c.b16 %v448, %v447
      %v458 = vsel %vm389, %v331, 0
      %460 = vmatprep.subr.bf16.mxu0 0
      %461 = vmatpush1.bf16.msra.mxu0 %v449
      %462 = vmatprep.subr.bf16.mxu0 0
      %463 = vmatpush1.bf16.msra.mxu0 %v450
      %464 = vmatprep.subr.bf16.mxu0 0
      %465 = vmatpush1.bf16.msra.mxu0 %v451
      %466 = vmatprep.subr.bf16.mxu0 0
      %467 = vmatpush1.bf16.msra.mxu0 %v452
      %468 = vmatprep.subr.bf16.mxu0 0
      %469 = vmatpush1.bf16.msra.mxu0 0
      %470 = vmatprep.subr.bf16.mxu0 0
      %471 = vmatpush1.bf16.msra.mxu0 0
      %472 = vmatprep.subr.bf16.mxu0 0
      %473 = vmatpush1.bf16.msra.mxu0 0
      %474 = vmatprep.subr.bf16.mxu0 0
      %475 = vmatpush1.bf16.msra.mxu0 0
      %476 = vmatprep.subr.bf16.mxu0 0
      %477 = vmatpush1.bf16.msra.mxu0 0
      %478 = vmatprep.subr.bf16.mxu0 0
      %479 = vmatpush1.bf16.msra.mxu0 0
      %480 = vmatprep.subr.bf16.mxu0 0
      %481 = vmatpush1.bf16.msra.mxu0 0
      %482 = vmatprep.subr.bf16.mxu0 0
      %483 = vmatpush1.bf16.msra.mxu0 0
      %484 = vmatprep.subr.bf16.mxu0 0
      %485 = vmatpush1.bf16.msra.mxu0 0
      %486 = vmatprep.subr.bf16.mxu0 0
      %487 = vmatpush1.bf16.msra.mxu0 0
      %488 = vmatprep.subr.bf16.mxu0 0
      %489 = vmatpush1.bf16.msra.mxu0 0
      %490 = vmatprep.subr.bf16.mxu0 0
      %491 = vmatpush1.bf16.msra.mxu0 0
      %492 = vmatprep.mubr.bf16.mxu0 0
      %493 = vmatmul.mubr.bf16.gmra.mrb[0].mxu0 %v458
      %v494 = vpop.f32.mrb[0].mxu0
      %v495 = vadd.f32 %v428, %v494
      %v496 = vpop.f32.mrb[0].mxu0
      %v497 = vpop.f32.mrb[0].mxu0
      %v498 = vpop.f32.mrb[0].mxu0
      %499 = vdwg.mxu0
      %v500 = vld [vmem:[%s3 + $0x40] sm:$0xf]
      %v501 = vld [vmem:[%s3 + $0x44] sm:$0xf]
      %v502 = vld [vmem:[%s3 + $0x48] sm:$0xf]
      %v503 = vld [vmem:[%s3 + $0x4c] sm:$0xf]
      %v504 = vld [vmem:[%s3 + $0x50] sm:$0xf]
      %v505 = vld [vmem:[%s3 + $0x54] sm:$0xf]
      %v506 = vld [vmem:[%s3 + $0x58] sm:$0xf]
      %v507 = vld [vmem:[%s3 + $0x5c] sm:$0xf]
      %v508 = vrot.slane %v357, 1
      %v517 = vunpack.c.l.b16 %v500
      %v518 = vunpack.c.l.b16 %v501
      %v519 = vunpack.c.l.b16 %v502
      %v520 = vunpack.c.l.b16 %v503
      %v521 = vunpack.c.l.b16 %v504
      %v522 = vunpack.c.l.b16 %v505
      %v523 = vunpack.c.l.b16 %v506
      %v524 = vunpack.c.l.b16 %v507
      %v525 = vpack.c.b16 %v518, %v517
      %v526 = vpack.c.b16 %v520, %v519
      %v527 = vpack.c.b16 %v522, %v521
      %v528 = vpack.c.b16 %v524, %v523
      %v534 = vsel %vm389, %v508, 0
      %536 = vmatprep.subr.bf16.mxu0 0
      %537 = vmatpush1.bf16.msra.mxu0 %v525
      %538 = vmatprep.subr.bf16.mxu0 0
      %539 = vmatpush1.bf16.msra.mxu0 %v526
      %540 = vmatprep.subr.bf16.mxu0 0
      %541 = vmatpush1.bf16.msra.mxu0 %v527
      %542 = vmatprep.subr.bf16.mxu0 0
      %543 = vmatpush1.bf16.msra.mxu0 %v528
      %544 = vmatprep.subr.bf16.mxu0 0
      %545 = vmatpush1.bf16.msra.mxu0 0
      %546 = vmatprep.subr.bf16.mxu0 0
      %547 = vmatpush1.bf16.msra.mxu0 0
      %548 = vmatprep.subr.bf16.mxu0 0
      %549 = vmatpush1.bf16.msra.mxu0 0
      %550 = vmatprep.subr.bf16.mxu0 0
      %551 = vmatpush1.bf16.msra.mxu0 0
      %552 = vmatprep.subr.bf16.mxu0 0
      %553 = vmatpush1.bf16.msra.mxu0 0
      %554 = vmatprep.subr.bf16.mxu0 0
      %555 = vmatpush1.bf16.msra.mxu0 0
      %556 = vmatprep.subr.bf16.mxu0 0
      %557 = vmatpush1.bf16.msra.mxu0 0
      %558 = vmatprep.subr.bf16.mxu0 0
      %559 = vmatpush1.bf16.msra.mxu0 0
      %560 = vmatprep.subr.bf16.mxu0 0
      %561 = vmatpush1.bf16.msra.mxu0 0
      %562 = vmatprep.subr.bf16.mxu0 0
      %563 = vmatpush1.bf16.msra.mxu0 0
      %564 = vmatprep.subr.bf16.mxu0 0
      %565 = vmatpush1.bf16.msra.mxu0 0
      %566 = vmatprep.subr.bf16.mxu0 0
      %567 = vmatpush1.bf16.msra.mxu0 0
      %568 = vmatprep.mubr.bf16.mxu0 0
      %569 = vmatmul.mubr.bf16.gmra.mrb[0].mxu0 %v534
      %v570 = vpop.f32.mrb[0].mxu0
      %v571 = vadd.f32 0.0, %v570
      %v572 = vpop.f32.mrb[0].mxu0
      %v573 = vpop.f32.mrb[0].mxu0
      %v574 = vpop.f32.mrb[0].mxu0
      %575 = vdwg.mxu0
      %v576 = vadd.f32 %v495, %v571
      %v577 = vld [vmem:[%s3 + $0x60] sm:$0xf]
      %v578 = vld [vmem:[%s3 + $0x64] sm:$0xf]
      %v579 = vld [vmem:[%s3 + $0x68] sm:$0xf]
      %v580 = vld [vmem:[%s3 + $0x6c] sm:$0xf]
      %v581 = vld [vmem:[%s3 + $0x70] sm:$0xf]
      %v582 = vld [vmem:[%s3 + $0x74] sm:$0xf]
      %v583 = vld [vmem:[%s3 + $0x78] sm:$0xf]
      %v584 = vld [vmem:[%s3 + $0x7c] sm:$0xf]
      %v593 = vunpack.c.l.b16 %v577
      %v594 = vunpack.c.l.b16 %v578
      %v595 = vunpack.c.l.b16 %v579
      %v596 = vunpack.c.l.b16 %v580
      %v597 = vunpack.c.l.b16 %v581
      %v598 = vunpack.c.l.b16 %v582
      %v599 = vunpack.c.l.b16 %v583
      %v600 = vunpack.c.l.b16 %v584
      %v601 = vpack.c.b16 %v594, %v593
      %v602 = vpack.c.b16 %v596, %v595
      %v603 = vpack.c.b16 %v598, %v597
      %v604 = vpack.c.b16 %v600, %v599
      %v610 = vsel %vm389, %v332, 0
      %612 = vmatprep.subr.bf16.mxu0 0
      %613 = vmatpush1.bf16.msra.mxu0 %v601
      %614 = vmatprep.subr.bf16.mxu0 0
      %615 = vmatpush1.bf16.msra.mxu0 %v602
      %616 = vmatprep.subr.bf16.mxu0 0
      %617 = vmatpush1.bf16.msra.mxu0 %v603
      %618 = vmatprep.subr.bf16.mxu0 0
      %619 = vmatpush1.bf16.msra.mxu0 %v604
      %620 = vmatprep.subr.bf16.mxu0 0
      %621 = vmatpush1.bf16.msra.mxu0 0
      %622 = vmatprep.subr.bf16.mxu0 0
      %623 = vmatpush1.bf16.msra.mxu0 0
      %624 = vmatprep.subr.bf16.mxu0 0
      %625 = vmatpush1.bf16.msra.mxu0 0
      %626 = vmatprep.subr.bf16.mxu0 0
      %627 = vmatpush1.bf16.msra.mxu0 0
      %628 = vmatprep.subr.bf16.mxu0 0
      %629 = vmatpush1.bf16.msra.mxu0 0
      %630 = vmatprep.subr.bf16.mxu0 0
      %631 = vmatpush1.bf16.msra.mxu0 0
      %632 = vmatprep.subr.bf16.mxu0 0
      %633 = vmatpush1.bf16.msra.mxu0 0
      %634 = vmatprep.subr.bf16.mxu0 0
      %635 = vmatpush1.bf16.msra.mxu0 0
      %636 = vmatprep.subr.bf16.mxu0 0
      %637 = vmatpush1.bf16.msra.mxu0 0
      %638 = vmatprep.subr.bf16.mxu0 0
      %639 = vmatpush1.bf16.msra.mxu0 0
      %640 = vmatprep.subr.bf16.mxu0 0
      %641 = vmatpush1.bf16.msra.mxu0 0
      %642 = vmatprep.subr.bf16.mxu0 0
      %643 = vmatpush1.bf16.msra.mxu0 0
      %644 = vmatprep.mubr.bf16.mxu0 0
      %645 = vmatmul.mubr.bf16.gmra.mrb[0].mxu0 %v610
      %v646 = vpop.f32.mrb[0].mxu0
      %v647 = vadd.f32 0.0, %v646
      %v648 = vpop.f32.mrb[0].mxu0
      %v649 = vpop.f32.mrb[0].mxu0
      %v650 = vpop.f32.mrb[0].mxu0
      %651 = vdwg.mxu0
      %v652 = vadd.f32 %v576, %v647
      %v653 = vld [vmem:[%s3 + $0x80] sm:$0xf]
      %v654 = vld [vmem:[%s3 + $0x84] sm:$0xf]
      %v655 = vld [vmem:[%s3 + $0x88] sm:$0xf]
      %v656 = vld [vmem:[%s3 + $0x8c] sm:$0xf]
      %v657 = vld [vmem:[%s3 + $0x90] sm:$0xf]
      %v658 = vld [vmem:[%s3 + $0x94] sm:$0xf]
      %v659 = vld [vmem:[%s3 + $0x98] sm:$0xf]
      %v660 = vld [vmem:[%s3 + $0x9c] sm:$0xf]
      %v663 = vunpack.c.l.s4 1983009808
      %v664 = vunpack.c.0.s8 %v663
      %v665 = vlaneseq
      %v666 = vshrl.u32 %v665, 7
      %v667 = vsub.s32 %v664, %v666
      %v668 = vrot.slane %v332, %v667
      %v670 = vshrl.u32 %v668, 16
      %v672 = vshll.u32 %v668, 16
      %v674 = vrot.slane %v672, 1
      %v675 = vor.u32 %v670, %v674
      %v684 = vunpack.c.l.b16 %v653
      %v685 = vunpack.c.l.b16 %v654
      %v686 = vunpack.c.l.b16 %v655
      %v687 = vunpack.c.l.b16 %v656
      %v688 = vunpack.c.l.b16 %v657
      %v689 = vunpack.c.l.b16 %v658
      %v690 = vunpack.c.l.b16 %v659
      %v691 = vunpack.c.l.b16 %v660
      %v692 = vpack.c.b16 %v685, %v684
      %v693 = vpack.c.b16 %v687, %v686
      %v694 = vpack.c.b16 %v689, %v688
      %v695 = vpack.c.b16 %v691, %v690
      %v701 = vsel %vm389, %v675, 0
      %703 = vmatprep.subr.bf16.mxu0 0
      %704 = vmatpush1.bf16.msra.mxu0 %v692
      %705 = vmatprep.subr.bf16.mxu0 0
      %706 = vmatpush1.bf16.msra.mxu0 %v693
      %707 = vmatprep.subr.bf16.mxu0 0
      %708 = vmatpush1.bf16.msra.mxu0 %v694
      %709 = vmatprep.subr.bf16.mxu0 0
      %710 = vmatpush1.bf16.msra.mxu0 %v695
      %711 = vmatprep.subr.bf16.mxu0 0
      %712 = vmatpush1.bf16.msra.mxu0 0
      %713 = vmatprep.subr.bf16.mxu0 0
      %714 = vmatpush1.bf16.msra.mxu0 0
      %715 = vmatprep.subr.bf16.mxu0 0
      %716 = vmatpush1.bf16.msra.mxu0 0
      %717 = vmatprep.subr.bf16.mxu0 0
      %718 = vmatpush1.bf16.msra.mxu0 0
      %719 = vmatprep.subr.bf16.mxu0 0
      %720 = vmatpush1.bf16.msra.mxu0 0
      %721 = vmatprep.subr.bf16.mxu0 0
      %722 = vmatpush1.bf16.msra.mxu0 0
      %723 = vmatprep.subr.bf16.mxu0 0
      %724 = vmatpush1.bf16.msra.mxu0 0
      %725 = vmatprep.subr.bf16.mxu0 0
      %726 = vmatpush1.bf16.msra.mxu0 0
      %727 = vmatprep.subr.bf16.mxu0 0
      %728 = vmatpush1.bf16.msra.mxu0 0
      %729 = vmatprep.subr.bf16.mxu0 0
      %730 = vmatpush1.bf16.msra.mxu0 0
      %731 = vmatprep.subr.bf16.mxu0 0
      %732 = vmatpush1.bf16.msra.mxu0 0
      %733 = vmatprep.subr.bf16.mxu0 0
      %734 = vmatpush1.bf16.msra.mxu0 0
      %735 = vmatprep.mubr.bf16.mxu0 0
      %736 = vmatmul.mubr.bf16.gmra.mrb[0].mxu0 %v701
      %v737 = vpop.f32.mrb[0].mxu0
      %v738 = vadd.f32 0.0, %v737
      %v739 = vpop.f32.mrb[0].mxu0
      %v740 = vpop.f32.mrb[0].mxu0
      %v741 = vpop.f32.mrb[0].mxu0
      %742 = vdwg.mxu0
      %v743 = vadd.f32 %v652, %v738
      %v744 = vld [vmem:[%s3 + $0xa0] sm:$0xf]
      %v745 = vld [vmem:[%s3 + $0xa4] sm:$0xf]
      %v746 = vld [vmem:[%s3 + $0xa8] sm:$0xf]
      %v747 = vld [vmem:[%s3 + $0xac] sm:$0xf]
      %v748 = vld [vmem:[%s3 + $0xb0] sm:$0xf]
      %v749 = vld [vmem:[%s3 + $0xb4] sm:$0xf]
      %v750 = vld [vmem:[%s3 + $0xb8] sm:$0xf]
      %v751 = vld [vmem:[%s3 + $0xbc] sm:$0xf]
      %v752 = vrot.slane %v668, 1
      %v761 = vunpack.c.l.b16 %v744
      %v762 = vunpack.c.l.b16 %v745
      %v763 = vunpack.c.l.b16 %v746
      %v764 = vunpack.c.l.b16 %v747
      %v765 = vunpack.c.l.b16 %v748
      %v766 = vunpack.c.l.b16 %v749
      %v767 = vunpack.c.l.b16 %v750
      %v768 = vunpack.c.l.b16 %v751
      %v769 = vpack.c.b16 %v762, %v761
      %v770 = vpack.c.b16 %v764, %v763
      %v771 = vpack.c.b16 %v766, %v765
      %v772 = vpack.c.b16 %v768, %v767
      %v778 = vsel %vm389, %v752, 0
      %780 = vmatprep.subr.bf16.mxu0 0
      %781 = vmatpush1.bf16.msra.mxu0 %v769
      %782 = vmatprep.subr.bf16.mxu0 0
      %783 = vmatpush1.bf16.msra.mxu0 %v770
      %784 = vmatprep.subr.bf16.mxu0 0
      %785 = vmatpush1.bf16.msra.mxu0 %v771
      %786 = vmatprep.subr.bf16.mxu0 0
      %787 = vmatpush1.bf16.msra.mxu0 %v772
      %788 = vmatprep.subr.bf16.mxu0 0
      %789 = vmatpush1.bf16.msra.mxu0 0
      %790 = vmatprep.subr.bf16.mxu0 0
      %791 = vmatpush1.bf16.msra.mxu0 0
      %792 = vmatprep.subr.bf16.mxu0 0
      %793 = vmatpush1.bf16.msra.mxu0 0
      %794 = vmatprep.subr.bf16.mxu0 0
      %795 = vmatpush1.bf16.msra.mxu0 0
      %796 = vmatprep.subr.bf16.mxu0 0
      %797 = vmatpush1.bf16.msra.mxu0 0
      %798 = vmatprep.subr.bf16.mxu0 0
      %799 = vmatpush1.bf16.msra.mxu0 0
      %800 = vmatprep.subr.bf16.mxu0 0
      %801 = vmatpush1.bf16.msra.mxu0 0
      %802 = vmatprep.subr.bf16.mxu0 0
      %803 = vmatpush1.bf16.msra.mxu0 0
      %804 = vmatprep.subr.bf16.mxu0 0
      %805 = vmatpush1.bf16.msra.mxu0 0
      %806 = vmatprep.subr.bf16.mxu0 0
      %807 = vmatpush1.bf16.msra.mxu0 0
      %808 = vmatprep.subr.bf16.mxu0 0
      %809 = vmatpush1.bf16.msra.mxu0 0
      %810 = vmatprep.subr.bf16.mxu0 0
      %811 = vmatpush1.bf16.msra.mxu0 0
      %812 = vmatprep.mubr.bf16.mxu0 0
      %813 = vmatmul.mubr.bf16.gmra.mrb[0].mxu0 %v778
      %v814 = vpop.f32.mrb[0].mxu0
      %v815 = vadd.f32 0.0, %v814
      %v816 = vpop.f32.mrb[0].mxu0
      %v817 = vpop.f32.mrb[0].mxu0
      %v818 = vpop.f32.mrb[0].mxu0
      %819 = vdwg.mxu0
      %v820 = vadd.f32 %v743, %v815
      %v821 = vld [vmem:[%s3 + $0xc0] sm:$0xf]
      %v822 = vld [vmem:[%s3 + $0xc4] sm:$0xf]
      %v823 = vld [vmem:[%s3 + $0xc8] sm:$0xf]
      %v824 = vld [vmem:[%s3 + $0xcc] sm:$0xf]
      %v825 = vld [vmem:[%s3 + $0xd0] sm:$0xf]
      %v826 = vld [vmem:[%s3 + $0xd4] sm:$0xf]
      %v827 = vld [vmem:[%s3 + $0xd8] sm:$0xf]
      %v828 = vld [vmem:[%s3 + $0xdc] sm:$0xf]
      %v837 = vunpack.c.l.b16 %v821
      %v838 = vunpack.c.l.b16 %v822
      %v839 = vunpack.c.l.b16 %v823
      %v840 = vunpack.c.l.b16 %v824
      %v841 = vunpack.c.l.b16 %v825
      %v842 = vunpack.c.l.b16 %v826
      %v843 = vunpack.c.l.b16 %v827
      %v844 = vunpack.c.l.b16 %v828
      %v845 = vpack.c.b16 %v838, %v837
      %v846 = vpack.c.b16 %v840, %v839
      %v847 = vpack.c.b16 %v842, %v841
      %v848 = vpack.c.b16 %v844, %v843
      %v854 = vsel %vm389, %v333, 0
      %856 = vmatprep.subr.bf16.mxu0 0
      %857 = vmatpush1.bf16.msra.mxu0 %v845
      %858 = vmatprep.subr.bf16.mxu0 0
      %859 = vmatpush1.bf16.msra.mxu0 %v846
      %860 = vmatprep.subr.bf16.mxu0 0
      %861 = vmatpush1.bf16.msra.mxu0 %v847
      %862 = vmatprep.subr.bf16.mxu0 0
      %863 = vmatpush1.bf16.msra.mxu0 %v848
      %864 = vmatprep.subr.bf16.mxu0 0
      %865 = vmatpush1.bf16.msra.mxu0 0
      %866 = vmatprep.subr.bf16.mxu0 0
      %867 = vmatpush1.bf16.msra.mxu0 0
      %868 = vmatprep.subr.bf16.mxu0 0
      %869 = vmatpush1.bf16.msra.mxu0 0
      %870 = vmatprep.subr.bf16.mxu0 0
      %871 = vmatpush1.bf16.msra.mxu0 0
      %872 = vmatprep.subr.bf16.mxu0 0
      %873 = vmatpush1.bf16.msra.mxu0 0
      %874 = vmatprep.subr.bf16.mxu0 0
      %875 = vmatpush1.bf16.msra.mxu0 0
      %876 = vmatprep.subr.bf16.mxu0 0
      %877 = vmatpush1.bf16.msra.mxu0 0
      %878 = vmatprep.subr.bf16.mxu0 0
      %879 = vmatpush1.bf16.msra.mxu0 0
      %880 = vmatprep.subr.bf16.mxu0 0
      %881 = vmatpush1.bf16.msra.mxu0 0
      %882 = vmatprep.subr.bf16.mxu0 0
      %883 = vmatpush1.bf16.msra.mxu0 0
      %884 = vmatprep.subr.bf16.mxu0 0
      %885 = vmatpush1.bf16.msra.mxu0 0
      %886 = vmatprep.subr.bf16.mxu0 0
      %887 = vmatpush1.bf16.msra.mxu0 0
      %888 = vmatprep.mubr.bf16.mxu0 0
      %889 = vmatmul.mubr.bf16.gmra.mrb[0].mxu0 %v854
      %v890 = vpop.f32.mrb[0].mxu0
      %v891 = vadd.f32 0.0, %v890
      %v892 = vpop.f32.mrb[0].mxu0
      %v893 = vpop.f32.mrb[0].mxu0
      %v894 = vpop.f32.mrb[0].mxu0
      %895 = vdwg.mxu0
      %v896 = vadd.f32 %v820, %v891
      %v897 = vld [vmem:[%s3 + $0xe0] sm:$0xf]
      %v898 = vld [vmem:[%s3 + $0xe4] sm:$0xf]
      %v899 = vld [vmem:[%s3 + $0xe8] sm:$0xf]
      %v900 = vld [vmem:[%s3 + $0xec] sm:$0xf]
      %v901 = vld [vmem:[%s3 + $0xf0] sm:$0xf]
      %v902 = vld [vmem:[%s3 + $0xf4] sm:$0xf]
      %v903 = vld [vmem:[%s3 + $0xf8] sm:$0xf]
      %v904 = vld [vmem:[%s3 + $0xfc] sm:$0xf]
      %v907 = vunpack.c.l.s4 1983009808
      %v908 = vunpack.c.0.s8 %v907
      %v909 = vlaneseq
      %v910 = vshrl.u32 %v909, 7
      %v911 = vsub.s32 %v908, %v910
      %v912 = vrot.slane %v333, %v911
      %v914 = vshrl.u32 %v912, 16
      %v916 = vshll.u32 %v912, 16
      %v918 = vrot.slane %v916, 1
      %v919 = vor.u32 %v914, %v918
      %v928 = vunpack.c.l.b16 %v897
      %v929 = vunpack.c.l.b16 %v898
      %v930 = vunpack.c.l.b16 %v899
      %v931 = vunpack.c.l.b16 %v900
      %v932 = vunpack.c.l.b16 %v901
      %v933 = vunpack.c.l.b16 %v902
      %v934 = vunpack.c.l.b16 %v903
      %v935 = vunpack.c.l.b16 %v904
      %v936 = vpack.c.b16 %v929, %v928
      %v937 = vpack.c.b16 %v931, %v930
      %v938 = vpack.c.b16 %v933, %v932
      %v939 = vpack.c.b16 %v935, %v934
      %v945 = vsel %vm389, %v919, 0
      %947 = vmatprep.subr.bf16.mxu0 0
      %948 = vmatpush1.bf16.msra.mxu0 %v936
      %949 = vmatprep.subr.bf16.mxu0 0
      %950 = vmatpush1.bf16.msra.mxu0 %v937
      %951 = vmatprep.subr.bf16.mxu0 0
      %952 = vmatpush1.bf16.msra.mxu0 %v938
      %953 = vmatprep.subr.bf16.mxu0 0
      %954 = vmatpush1.bf16.msra.mxu0 %v939
      %955 = vmatprep.subr.bf16.mxu0 0
      %956 = vmatpush1.bf16.msra.mxu0 0
      %957 = vmatprep.subr.bf16.mxu0 0
      %958 = vmatpush1.bf16.msra.mxu0 0
      %959 = vmatprep.subr.bf16.mxu0 0
      %960 = vmatpush1.bf16.msra.mxu0 0
      %961 = vmatprep.subr.bf16.mxu0 0
      %962 = vmatpush1.bf16.msra.mxu0 0
      %963 = vmatprep.subr.bf16.mxu0 0
      %964 = vmatpush1.bf16.msra.mxu0 0
      %965 = vmatprep.subr.bf16.mxu0 0
      %966 = vmatpush1.bf16.msra.mxu0 0
      %967 = vmatprep.subr.bf16.mxu0 0
      %968 = vmatpush1.bf16.msra.mxu0 0
      %969 = vmatprep.subr.bf16.mxu0 0
      %970 = vmatpush1.bf16.msra.mxu0 0
      %971 = vmatprep.subr.bf16.mxu0 0
      %972 = vmatpush1.bf16.msra.mxu0 0
      %973 = vmatprep.subr.bf16.mxu0 0
      %974 = vmatpush1.bf16.msra.mxu0 0
      %975 = vmatprep.subr.bf16.mxu0 0
      %976 = vmatpush1.bf16.msra.mxu0 0
      %977 = vmatprep.subr.bf16.mxu0 0
      %978 = vmatpush1.bf16.msra.mxu0 0
      %979 = vmatprep.mubr.bf16.mxu0 0
      %980 = vmatmul.mubr.bf16.gmra.mrb[0].mxu0 %v945
      %v981 = vpop.f32.mrb[0].mxu0
      %v982 = vadd.f32 0.0, %v981
      %v983 = vpop.f32.mrb[0].mxu0
      %v984 = vpop.f32.mrb[0].mxu0
      %v985 = vpop.f32.mrb[0].mxu0
      %986 = vdwg.mxu0
      %v987 = vadd.f32 %v896, %v982
      %v988 = vld [vmem:[%s3 + $0x100] sm:$0xf]
      %v989 = vld [vmem:[%s3 + $0x104] sm:$0xf]
      %v990 = vld [vmem:[%s3 + $0x108] sm:$0xf]
      %v991 = vld [vmem:[%s3 + $0x10c] sm:$0xf]
      %v992 = vld [vmem:[%s3 + $0x110] sm:$0xf]
      %v993 = vld [vmem:[%s3 + $0x114] sm:$0xf]
      %v994 = vld [vmem:[%s3 + $0x118] sm:$0xf]
      %v995 = vld [vmem:[%s3 + $0x11c] sm:$0xf]
      %v996 = vrot.slane %v912, 1
      %v1005 = vunpack.c.l.b16 %v988
      %v1006 = vunpack.c.l.b16 %v989
      %v1007 = vunpack.c.l.b16 %v990
      %v1008 = vunpack.c.l.b16 %v991
      %v1009 = vunpack.c.l.b16 %v992
      %v1010 = vunpack.c.l.b16 %v993
      %v1011 = vunpack.c.l.b16 %v994
      %v1012 = vunpack.c.l.b16 %v995
      %v1013 = vpack.c.b16 %v1006, %v1005
      %v1014 = vpack.c.b16 %v1008, %v1007
      %v1015 = vpack.c.b16 %v1010, %v1009
      %v1016 = vpack.c.b16 %v1012, %v1011
      %v1022 = vsel %vm389, %v996, 0
      %1024 = vmatprep.subr.bf16.mxu0 0
      %1025 = vmatpush1.bf16.msra.mxu0 %v1013
      %1026 = vmatprep.subr.bf16.mxu0 0
      %1027 = vmatpush1.bf16.msra.mxu0 %v1014
      %1028 = vmatprep.subr.bf16.mxu0 0
      %1029 = vmatpush1.bf16.msra.mxu0 %v1015
      %1030 = vmatprep.subr.bf16.mxu0 0
      %1031 = vmatpush1.bf16.msra.mxu0 %v1016
      %1032 = vmatprep.subr.bf16.mxu0 0
      %1033 = vmatpush1.bf16.msra.mxu0 0
      %1034 = vmatprep.subr.bf16.mxu0 0
      %1035 = vmatpush1.bf16.msra.mxu0 0
      %1036 = vmatprep.subr.bf16.mxu0 0
      %1037 = vmatpush1.bf16.msra.mxu0 0
      %1038 = vmatprep.subr.bf16.mxu0 0
      %1039 = vmatpush1.bf16.msra.mxu0 0
      %1040 = vmatprep.subr.bf16.mxu0 0
      %1041 = vmatpush1.bf16.msra.mxu0 0
      %1042 = vmatprep.subr.bf16.mxu0 0
      %1043 = vmatpush1.bf16.msra.mxu0 0
      %1044 = vmatprep.subr.bf16.mxu0 0
      %1045 = vmatpush1.bf16.msra.mxu0 0
      %1046 = vmatprep.subr.bf16.mxu0 0
      %1047 = vmatpush1.bf16.msra.mxu0 0
      %1048 = vmatprep.subr.bf16.mxu0 0
      %1049 = vmatpush1.bf16.msra.mxu0 0
      %1050 = vmatprep.subr.bf16.mxu0 0
      %1051 = vmatpush1.bf16.msra.mxu0 0
      %1052 = vmatprep.subr.bf16.mxu0 0
      %1053 = vmatpush1.bf16.msra.mxu0 0
      %1054 = vmatprep.subr.bf16.mxu0 0
      %1055 = vmatpush1.bf16.msra.mxu0 0
      %1056 = vmatprep.mubr.bf16.mxu0 0
      %1057 = vmatmul.mubr.bf16.gmra.mrb[0].mxu0 %v1022
      %v1058 = vpop.f32.mrb[0].mxu0
      %v1059 = vadd.f32 0.0, %v1058
      %v1060 = vpop.f32.mrb[0].mxu0
      %v1061 = vpop.f32.mrb[0].mxu0
      %v1062 = vpop.f32.mrb[0].mxu0
      %1063 = vdwg.mxu0
      %v1064 = vadd.f32 %v987, %v1059
      %v1065 = vld [vmem:[%s4] sm:$0x1]
      %v1067 = vlaneseq
      %v1068 = vshrl.u32 %v1067, 7
      %v1069 = vsub.s32 0, %v1068
      %v1070 = vrot.slane %v1065, %v1069
      %v1072 = vadd.f32 %v1064, %v1070
      %v1073 = vmax.f32 %v1072, 0.0
      %v1074 = vpack.c.bf16 %v1073, %v1073
      %vm1075 = vcmask 516096
      %1076 = vst.msk [vmem:[%s329] sm:$0x1] %vm1075, %v1074
      %p1077 = scmp.lt.s32.totalorder %s20, 1
      %s1078 = scalar_select %p1077, %s20, 1
      %p1079 = scmp.lt.s32.totalorder %s21, 1
      %s1080 = scalar_select %p1079, %s21, 1
      %s1081 = smul.addr %s1078, 2
      %s1082 = sadd.s32 %s1080, %s1081
      %s1083 = scalar_lea.vmem %s5, %s1082
      // Predicated region
      $region41: #{unet_forward.18} parent=39 // pred_check
        %p1084 = pneg %p178
      $region42: #{unet_forward.18} parent=39 // pred_check_branch
        %1086 = sbr.rel (%p1084) target = $region44
      $region43: #{unet_forward.18} parent=39 // pred_region
        _
      $region44: #{unet_forward.18} parent=39 // pred_fallthru
        _
    $region40: #{unet_forward.18} parent=5 // pred_fallthru
      _
    %p1087 = scmp.le.s32.totalorder 2, %s11
    // Predicated region
    $region45: #{unet_forward.18} parent=5 // pred_check
      %p1088 = pneg %p1087
    $region46: #{unet_forward.18} parent=5 // pred_check_branch
      %1090 = sbr.rel (%p1088) target = $region48
    $region47: #{unet_forward.18} parent=5 // pred_region
      %s1091 = ssub.s32 %s11, 2
      // Predicated region
      $region49: #{unet_forward.18} parent=47 // pred_check
        %p1092 = pneg %p184
      $region50: #{unet_forward.18} parent=47 // pred_check_branch
        %1094 = sbr.rel (%p1092) target = $region52
      $region51: #{unet_forward.18} parent=47 // pred_region
        %p1095 = scmp.lt.s32.totalorder %s22, 1
        %s1096 = scalar_select %p1095, %s22, 1
        %p1097 = scmp.lt.s32.totalorder %s23, 1
        %s1098 = scalar_select %p1097, %s23, 1
        %s1099 = smul.addr %s1096, 2
        %s1100 = sadd.s32 %s1098, %s1099
        %s1101 = scalar_lea.vmem %s5, %s1100
      $region52: #{unet_forward.18} parent=47 // pred_fallthru
        _
    $region48: #{unet_forward.18} parent=5 // pred_fallthru
      _
  $region6: #{unet_forward.18} parent=0 // loop_footer
    %s15 = sadd.s32 1, %s11
  $region7: #{unet_forward.18} parent=0 // loop_footer_branch
    %10 = sbr.rel target = $region3
  $region8: #{unet_forward.18} parent=0 // loop_exit
    _

// kernel: tile.58
$region0: #{tile.58}
  #allocation0 [shape = 's32[1]{0}', space=sflag, size = 0x4, scoped, tag = 'scoped memory for tile.58']
  %s0 = inlined_call_operand.vmem [shape: f32[64], index: 0, kind: input, shape index: {}]
  %s1 = inlined_call_operand.vmem [shape: f32[4,64], index: 1, kind: output, shape index: {}]
  // Predicated region
  $region2: #{tile.58} parent=0 // pred_check
    _
  $region3: #{tile.58} parent=0 // pred_check_branch
    %3 = sbr.rel (0) target = $region5
  $region4: #{tile.58} parent=0 // pred_region
    _
  $region5: #{tile.58} parent=0 // pred_fallthru
    _
  %v4 = vld [vmem:[%s0] ss:$0 sm:$0xff]
  %5 = vst [vmem:[%s1] sm:$0xf] %v4

// kernel: tile.59
$region0: #{tile.59}
  %s0 = inlined_call_operand.vmem [shape: f32[4,64], index: 0, kind: input, shape index: {}]
  %s1 = inlined_call_operand.vmem [shape: f32[1,256], index: 1, kind: output, shape index: {}]
  $region1: #{tile.59} parent=0
    #allocation0 [shape = 'u8[8192]{0}', space=vmem, size = 0x2000, scoped, tag = 'scoped mem for output reshape']
    #allocation1 [shape = 'u8[4096]{0}', space=vmem, size = 0x1000, scoped, tag = 'scoped mem for input reshape']
    %s3 = sshllo.u32 0, 4
    %v4 = vld [vmem:[%s0] sm:%s3]
    %5 = vst [vmem:[#allocation1] sm:%s3] %v4
    %s6 = smov 3
    %v7 = vld [vmem:[#allocation1] ss:$2 sm:%s6]
    %vm8 = vcmask 523264
    %9 = vst.msk [vmem:[#allocation0] ss:$8 sm:$0x3] %vm8, %v7
    %s10 = scalar_lea.vmem [#allocation1], 1
    %s11 = smov 3
    %v12 = vld [vmem:[%s10] ss:$2 sm:%s11]
    %13 = vrot.lane.b32.xlu0 %v12, 64
    %v14 = vpop.permute.xlu0 %13
    %vm15 = vcmask 1048064
    %16 = vst.msk [vmem:[#allocation0] ss:$8 sm:$0x3] %vm15, %v14
    %s18 = sshllo.u32 0, 1
    %v20 = vld [vmem:[#allocation0] sm:%s18]
    %s21 = sshllo.u32 0, 1
    %22 = vst [vmem:[%s1] sm:%s21] %v20
    %s23 = scalar_lea.vmem [#allocation0], 8
    %v24 = vld [vmem:[%s23] sm:%s18]
    %s25 = sshllo.u32 0, 1
    %s26 = scalar_lea.vmem %s1, 1
    %27 = vst [vmem:[%s26] sm:%s25] %v24

// kernel: unet_forward.20
$region0: #{unet_forward.20}
  #allocation0 [shape = 'u32[]', space=smem, size = 0x4, offset = 0x4, fixed_abs, tag = 'smem constant byte address 0x4 - core index']
  #allocation1 [shape = 'u32[144,128]{1,0:T(1,128)}', space=vmem, size = 0x12000, scoped, tag = 'internal scratch']
  %s0 = inlined_call_operand.vmem [shape: bf16[2,3,3,128], index: 0, kind: input, shape index: {}, may-alias: {0,1,2}]
  %s1 = inlined_call_operand.vmem [shape: bf16[2,3,3,128], index: 1, kind: input, shape index: {}, may-alias: {0,1,2}]
  %s2 = inlined_call_operand.vmem [shape: bf16[2,3,3,128], index: 2, kind: input, shape index: {}, may-alias: {0,1,2}]
  %s3 = inlined_call_operand.vmem [shape: bf16[1152,128], index: 3, kind: input, shape index: {}]
  %s4 = inlined_call_operand.vmem [shape: f32[1,128], index: 4, kind: input, shape index: {}]
  %s5 = inlined_call_operand.vmem [shape: bf16[2,1,1,128], index: 5, kind: output, shape index: {}]
  %s6 = sld [smem:[#allocation0]]
  $region53: #{unet_forward.20} parent=0
    _
  %s8 = ssub.s32 1, %s6
  %s9 = scalar_select 0, %s8, %s6
  loop: start=0, step=1, limit=4
  $region2: #{unet_forward.20} parent=0 // loop_pre_header
    _
  $region3: #{unet_forward.20} parent=0 // loop_header
    %s11 = sphi 0, %s15
    %p12 = scmp.ge.s32.totalorder %s11, 4
    %s18 = sphi 0, %s30
    %s19 = sphi 0, %s26
    %s20 = sphi 0, %s18
    %s21 = sphi 0, %s19
    %s22 = sphi 0, %s20
    %s23 = sphi 0, %s21
    %s35 = sphi 0, %s37
    %s38 = sphi 0, %s35
    %s39 = sphi 0, %s38
    %s55 = sphi 0, %s39
    %s65 = sphi 0, %s67
    %s68 = sphi 0, %s65
    %s69 = sphi 0, %s68
    %s85 = sphi 0, %s69
    %s95 = sphi 0, %s97
    %s98 = sphi 0, %s95
    %s99 = sphi 0, %s98
    %s115 = sphi 0, %s99
    %s119 = sphi 0, %s119
    %s121 = sphi 0, %s119
    %s122 = sphi 0, %s121
    %s136 = sphi 0, %s122
    %s140 = sphi 0, %s140
    %s142 = sphi 0, %s140
    %s143 = sphi 0, %s142
    %s157 = sphi 0, %s143
    %s165 = sphi 0, %s167
    %s168 = sphi 0, %s165
    %s169 = sphi 0, %s168
    %s185 = sphi 0, %s169
  $region4: #{unet_forward.20} parent=0 // loop_header_branch
    %14 = sbr.rel (%p12) target = $region8
  $region5: #{unet_forward.20} parent=0 // loop_body
    %s16 = ssub.s32 %s11, 1
    %s17 = ssub.s32 %s11, 2
    %s24 = sadd.s32 1, %s19
    %p25 = scmp.ge.s32.totalorder %s24, 1
    %s26 = scalar_select %p25, 0, %s24
    %s27 = sadd.s32 1, %s18
    %s28 = scalar_select %p25, %s27, %s18
    %p29 = scmp.ge.s32.totalorder %s28, 2
    %s30 = scalar_select %p29, 0, %s28
    %s31 = ssub.s32 %s18, %s30
    %s32 = ssub.s32 %s19, %s26
    %s33 = sor.u32 %s31, %s32
    %p34 = scmp.eq.s32.totalorder %s33, 0
    %s36 = sadd.s32 %s35, 1
    %s37 = scalar_select %p34, %s35, %s36
    %p40 = pneg %p34
    %p41 = scmp.eq.s32.totalorder %s11, 1
    %p42 = por %p40, %p41
    %p43 = scmp.ne.s32.totalorder %s35, %s38
    %p44 = scmp.eq.s32.totalorder %s11, 0
    %p45 = por %p43, %p44
    %p46 = scmp.ne.s32.totalorder %s35, %s38
    %p47 = scmp.eq.s32.totalorder %s16, 1
    %p48 = por %p46, %p47
    %p49 = scmp.ne.s32.totalorder %s38, %s39
    %p50 = scmp.eq.s32.totalorder %s16, 0
    %p51 = por %p49, %p50
    %p52 = scmp.ne.s32.totalorder %s38, %s39
    %p53 = scmp.eq.s32.totalorder %s17, 1
    %p54 = por %p52, %p53
    %p56 = scmp.ne.s32.totalorder %s39, %s55
    %p57 = scmp.eq.s32.totalorder %s17, 0
    %p58 = por %p56, %p57
    %s59 = sadd.s32 %s19, 1
    %s60 = sadd.s32 %s26, 1
    %s61 = ssub.s32 %s18, %s30
    %s62 = ssub.s32 %s59, %s60
    %s63 = sor.u32 %s61, %s62
    %p64 = scmp.eq.s32.totalorder %s63, 0
    %s66 = sadd.s32 %s65, 1
    %s67 = scalar_select %p64, %s65, %s66
    %p70 = pneg %p64
    %p71 = scmp.eq.s32.totalorder %s11, 1
    %p72 = por %p70, %p71
    %p73 = scmp.ne.s32.totalorder %s65, %s68
    %p74 = scmp.eq.s32.totalorder %s11, 0
    %p75 = por %p73, %p74
    %p76 = scmp.ne.s32.totalorder %s65, %s68
    %p77 = scmp.eq.s32.totalorder %s16, 1
    %p78 = por %p76, %p77
    %p79 = scmp.ne.s32.totalorder %s68, %s69
    %p80 = scmp.eq.s32.totalorder %s16, 0
    %p81 = por %p79, %p80
    %p82 = scmp.ne.s32.totalorder %s68, %s69
    %p83 = scmp.eq.s32.totalorder %s17, 1
    %p84 = por %p82, %p83
    %p86 = scmp.ne.s32.totalorder %s69, %s85
    %p87 = scmp.eq.s32.totalorder %s17, 0
    %p88 = por %p86, %p87
    %s89 = sadd.s32 %s19, 2
    %s90 = sadd.s32 %s26, 2
    %s91 = ssub.s32 %s18, %s30
    %s92 = ssub.s32 %s89, %s90
    %s93 = sor.u32 %s91, %s92
    %p94 = scmp.eq.s32.totalorder %s93, 0
    %s96 = sadd.s32 %s95, 1
    %s97 = scalar_select %p94, %s95, %s96
    %p100 = pneg %p94
    %p101 = scmp.eq.s32.totalorder %s11, 1
    %p102 = por %p100, %p101
    %p103 = scmp.ne.s32.totalorder %s95, %s98
    %p104 = scmp.eq.s32.totalorder %s11, 0
    %p105 = por %p103, %p104
    %p106 = scmp.ne.s32.totalorder %s95, %s98
    %p107 = scmp.eq.s32.totalorder %s16, 1
    %p108 = por %p106, %p107
    %p109 = scmp.ne.s32.totalorder %s98, %s99
    %p110 = scmp.eq.s32.totalorder %s16, 0
    %p111 = por %p109, %p110
    %p112 = scmp.ne.s32.totalorder %s98, %s99
    %p113 = scmp.eq.s32.totalorder %s17, 1
    %p114 = por %p112, %p113
    %p116 = scmp.ne.s32.totalorder %s99, %s115
    %p117 = scmp.eq.s32.totalorder %s17, 0
    %p118 = por %p116, %p117
    %s120 = sadd.s32 %s119, 1
    %p123 = scmp.eq.s32.totalorder %s11, 1
    %p124 = scmp.ne.s32.totalorder %s119, %s121
    %p125 = scmp.eq.s32.totalorder %s11, 0
    %p126 = por %p124, %p125
    %p127 = scmp.ne.s32.totalorder %s119, %s121
    %p128 = scmp.eq.s32.totalorder %s16, 1
    %p129 = por %p127, %p128
    %p130 = scmp.ne.s32.totalorder %s121, %s122
    %p131 = scmp.eq.s32.totalorder %s16, 0
    %p132 = por %p130, %p131
    %p133 = scmp.ne.s32.totalorder %s121, %s122
    %p134 = scmp.eq.s32.totalorder %s17, 1
    %p135 = por %p133, %p134
    %p137 = scmp.ne.s32.totalorder %s122, %s136
    %p138 = scmp.eq.s32.totalorder %s17, 0
    %p139 = por %p137, %p138
    %s141 = sadd.s32 %s140, 1
    %p144 = scmp.eq.s32.totalorder %s11, 1
    %p145 = scmp.ne.s32.totalorder %s140, %s142
    %p146 = scmp.eq.s32.totalorder %s11, 0
    %p147 = por %p145, %p146
    %p148 = scmp.ne.s32.totalorder %s140, %s142
    %p149 = scmp.eq.s32.totalorder %s16, 1
    %p150 = por %p148, %p149
    %p151 = scmp.ne.s32.totalorder %s142, %s143
    %p152 = scmp.eq.s32.totalorder %s16, 0
    %p153 = por %p151, %p152
    %p154 = scmp.ne.s32.totalorder %s142, %s143
    %p155 = scmp.eq.s32.totalorder %s17, 1
    %p156 = por %p154, %p155
    %p158 = scmp.ne.s32.totalorder %s143, %s157
    %p159 = scmp.eq.s32.totalorder %s17, 0
    %p160 = por %p158, %p159
    %s161 = ssub.s32 %s18, %s30
    %s162 = ssub.s32 %s19, %s26
    %s163 = sor.u32 %s161, %s162
    %p164 = scmp.eq.s32.totalorder %s163, 0
    %s166 = sadd.s32 %s165, 1
    %s167 = scalar_select %p164, %s165, %s166
    %p170 = pneg %p164
    %p171 = scmp.eq.s32.totalorder %s11, 1
    %p172 = por %p170, %p171
    %p173 = scmp.ne.s32.totalorder %s165, %s168
    %p174 = scmp.eq.s32.totalorder %s11, 0
    %p175 = por %p173, %p174
    %p176 = scmp.ne.s32.totalorder %s165, %s168
    %p177 = scmp.eq.s32.totalorder %s16, 1
    %p178 = por %p176, %p177
    %p179 = scmp.ne.s32.totalorder %s168, %s169
    %p180 = scmp.eq.s32.totalorder %s16, 0
    %p181 = por %p179, %p180
    %p182 = scmp.ne.s32.totalorder %s168, %s169
    %p183 = scmp.eq.s32.totalorder %s17, 1
    %p184 = por %p182, %p183
    %p186 = scmp.ne.s32.totalorder %s169, %s185
    %p187 = scmp.eq.s32.totalorder %s17, 0
    %p188 = por %p186, %p187
    %p189 = scmp.le.s32.totalorder 1, %s11
    %p190 = scmp.lt.s32.totalorder %s11, 3
    %p191 = pnand %p189, %p190
    %p192 = pneg %p191
    // Predicated region
    $region9: #{unet_forward.20} parent=5 // pred_check
      _
    $region10: #{unet_forward.20} parent=5 // pred_check_branch
      %194 = sbr.rel (%p191) target = $region12
    $region11: #{unet_forward.20} parent=5 // pred_region
      %s195 = ssub.s32 %s11, 1
      // Predicated region
      $region13: #{unet_forward.20} parent=11 // pred_check
        %p196 = pneg %p132
      $region14: #{unet_forward.20} parent=11 // pred_check_branch
        %198 = sbr.rel (%p196) target = $region16
      $region15: #{unet_forward.20} parent=11 // pred_region
        _
      $region16: #{unet_forward.20} parent=11 // pred_fallthru
        _
      // Predicated region
      $region17: #{unet_forward.20} parent=11 // pred_check
        %p199 = pneg %p153
      $region18: #{unet_forward.20} parent=11 // pred_check_branch
        %201 = sbr.rel (%p199) target = $region20
      $region19: #{unet_forward.20} parent=11 // pred_region
        _
      $region20: #{unet_forward.20} parent=11 // pred_fallthru
        _
    $region12: #{unet_forward.20} parent=5 // pred_fallthru
      _
    %p202 = scmp.lt.s32.totalorder %s11, 2
    // Predicated region
    $region21: #{unet_forward.20} parent=5 // pred_check
      %p203 = pneg %p202
    $region22: #{unet_forward.20} parent=5 // pred_check_branch
      %205 = sbr.rel (%p203) target = $region24
    $region23: #{unet_forward.20} parent=5 // pred_region
      // Predicated region
      $region25: #{unet_forward.20} parent=23 // pred_check
        %p206 = pneg %p45
      $region26: #{unet_forward.20} parent=23 // pred_check_branch
        %208 = sbr.rel (%p206) target = $region28
      $region27: #{unet_forward.20} parent=23 // pred_region
        %p209 = scmp.lt.s32.totalorder %s18, 1
        %s210 = scalar_select %p209, %s18, 1
        %p211 = scmp.lt.s32.totalorder %s19, 2
        %s212 = scalar_select %p211, %s19, 2
        %s213 = smul.addr %s210, 3
        %s214 = sadd.s32 %s212, %s213
        %s215 = smul.addr %s214, 2
        %s216 = scalar_lea.vmem %s0, %s215
      $region28: #{unet_forward.20} parent=23 // pred_fallthru
        _
      // Predicated region
      $region29: #{unet_forward.20} parent=23 // pred_check
        %p217 = pneg %p75
      $region30: #{unet_forward.20} parent=23 // pred_check_branch
        %219 = sbr.rel (%p217) target = $region32
      $region31: #{unet_forward.20} parent=23 // pred_region
        %s220 = sadd.s32 %s19, 1
        %p221 = scmp.lt.s32.totalorder %s18, 1
        %s222 = scalar_select %p221, %s18, 1
        %p223 = scmp.lt.s32.totalorder %s220, 2
        %s224 = scalar_select %p223, %s220, 2
        %s225 = smul.addr %s222, 3
        %s226 = sadd.s32 %s224, %s225
        %s227 = smul.addr %s226, 2
        %s228 = scalar_lea.vmem %s1, %s227
        %s229 = sadd.s32 %s19, 1
      $region32: #{unet_forward.20} parent=23 // pred_fallthru
        _
      // Predicated region
      $region33: #{unet_forward.20} parent=23 // pred_check
        %p230 = pneg %p105
      $region34: #{unet_forward.20} parent=23 // pred_check_branch
        %232 = sbr.rel (%p230) target = $region36
      $region35: #{unet_forward.20} parent=23 // pred_region
        %s233 = sadd.s32 %s19, 2
        %p234 = scmp.lt.s32.totalorder %s18, 1
        %s235 = scalar_select %p234, %s18, 1
        %p236 = scmp.lt.s32.totalorder %s233, 2
        %s237 = scalar_select %p236, %s233, 2
        %s238 = smul.addr %s235, 3
        %s239 = sadd.s32 %s237, %s238
        %s240 = smul.addr %s239, 2
        %s241 = scalar_lea.vmem %s2, %s240
        %s242 = sadd.s32 %s19, 2
      $region36: #{unet_forward.20} parent=23 // pred_fallthru
        _
    $region24: #{unet_forward.20} parent=5 // pred_fallthru
      _
    %p243 = scmp.le.s32.totalorder 1, %s11
    %p244 = scmp.lt.s32.totalorder %s11, 3
    %p245 = pnand %p243, %p244
    %p246 = pneg %p245
    // Predicated region
    $region37: #{unet_forward.20} parent=5 // pred_check
      _
    $region38: #{unet_forward.20} parent=5 // pred_check_branch
      %248 = sbr.rel (%p245) target = $region40
    $region39: #{unet_forward.20} parent=5 // pred_region
      %s249 = ssub.s32 %s11, 1
      %p250 = scmp.lt.s32.totalorder %s20, 1
      %s251 = scalar_select %p250, %s20, 1
      %p252 = scmp.lt.s32.totalorder %s21, 2
      %s253 = scalar_select %p252, %s21, 2
      %s254 = smul.addr %s251, 3
      %s255 = sadd.s32 %s253, %s254
      %s256 = smul.addr %s255, 2
      %s257 = scalar_lea.vmem %s0, %s256
      %p258 = pneg %p51
      %p259 = pneg %p48
      %s260 = sadd.s32 %s21, 1
      %p261 = scmp.lt.s32.totalorder %s20, 1
      %s262 = scalar_select %p261, %s20, 1
      %p263 = scmp.lt.s32.totalorder %s260, 2
      %s264 = scalar_select %p263, %s260, 2
      %s265 = smul.addr %s262, 3
      %s266 = sadd.s32 %s264, %s265
      %s267 = smul.addr %s266, 2
      %s268 = scalar_lea.vmem %s1, %s267
      %p269 = pneg %p81
      %p270 = pneg %p78
      %s271 = sadd.s32 %s21, 2
      %p272 = scmp.lt.s32.totalorder %s20, 1
      %s273 = scalar_select %p272, %s20, 1
      %p274 = scmp.lt.s32.totalorder %s271, 2
      %s275 = scalar_select %p274, %s271, 2
      %s276 = smul.addr %s273, 3
      %s277 = sadd.s32 %s275, %s276
      %s278 = smul.addr %s277, 2
      %s279 = scalar_lea.vmem %s2, %s278
      %p280 = pneg %p111
      %p281 = pneg %p108
      %p282 = pneg %p132
      %p283 = pneg %p129
      %p284 = pneg %p153
      %p285 = pneg %p150
      %p286 = pneg %p181
      %p287 = pneg %p178
      %p288 = scmp.lt.s32.totalorder %s20, 1
      %s289 = scalar_select %p288, %s20, 1
      %p290 = scmp.lt.s32.totalorder %s21, 0
      %s291 = scalar_select %p290, %s21, 0
      %s292 = sadd.s32 %s291, %s289
      %s293 = scalar_lea.vmem %s5, %s292
      %p294 = scmp.lt.s32.totalorder %s20, 1
      %s295 = scalar_select %p294, %s20, 1
      %p296 = scmp.lt.s32.totalorder %s21, 2
      %s297 = scalar_select %p296, %s21, 2
      %s298 = smul.addr %s295, 3
      %s299 = sadd.s32 %s297, %s298
      %s300 = smul.addr %s299, 2
      %s301 = scalar_lea.vmem %s0, %s300
      %s302 = sadd.s32 %s21, 1
      %p303 = scmp.lt.s32.totalorder %s20, 1
      %s304 = scalar_select %p303, %s20, 1
      %p305 = scmp.lt.s32.totalorder %s302, 2
      %s306 = scalar_select %p305, %s302, 2
      %s307 = smul.addr %s304, 3
      %s308 = sadd.s32 %s306, %s307
      %s309 = smul.addr %s308, 2
      %s310 = scalar_lea.vmem %s1, %s309
      %s311 = sadd.s32 %s21, 1
      %s312 = sadd.s32 %s21, 2
      %p313 = scmp.lt.s32.totalorder %s20, 1
      %s314 = scalar_select %p313, %s20, 1
      %p315 = scmp.lt.s32.totalorder %s312, 2
      %s316 = scalar_select %p315, %s312, 2
      %s317 = smul.addr %s314, 3
      %s318 = sadd.s32 %s316, %s317
      %s319 = smul.addr %s318, 2
      %s320 = scalar_lea.vmem %s2, %s319
      %s321 = sadd.s32 %s21, 2
      %p322 = scmp.lt.s32.totalorder %s20, 1
      %s323 = scalar_select %p322, %s20, 1
      %p324 = scmp.lt.s32.totalorder %s21, 0
      %s325 = scalar_select %p324, %s21, 0
      %s326 = sadd.s32 %s325, %s323
      %s327 = scalar_lea.vmem %s5, %s326
      %v329 = vld [vmem:[%s301] sm:$0x3]
      %v330 = vld [vmem:[%s310] sm:$0x3]
      %v331 = vld [vmem:[%s320] sm:$0x3]
      %v332 = vld [vmem:[%s3] sm:$0xf]
      %v333 = vld [vmem:[%s3 + $0x4] sm:$0xf]
      %v334 = vld [vmem:[%s3 + $0x8] sm:$0xf]
      %v335 = vld [vmem:[%s3 + $0xc] sm:$0xf]
      %v336 = vld [vmem:[%s3 + $0x10] sm:$0xf]
      %v337 = vld [vmem:[%s3 + $0x14] sm:$0xf]
      %v338 = vld [vmem:[%s3 + $0x18] sm:$0xf]
      %v339 = vld [vmem:[%s3 + $0x1c] sm:$0xf]
      %v340 = vld [vmem:[%s3 + $0x20] sm:$0xf]
      %v341 = vld [vmem:[%s3 + $0x24] sm:$0xf]
      %v342 = vld [vmem:[%s3 + $0x28] sm:$0xf]
      %v343 = vld [vmem:[%s3 + $0x2c] sm:$0xf]
      %v344 = vld [vmem:[%s3 + $0x30] sm:$0xf]
      %v345 = vld [vmem:[%s3 + $0x34] sm:$0xf]
      %v346 = vld [vmem:[%s3 + $0x38] sm:$0xf]
      %v347 = vld [vmem:[%s3 + $0x3c] sm:$0xf]
      %v348 = vld [vmem:[%s3 + $0x40] sm:$0xf]
      %v349 = vld [vmem:[%s3 + $0x44] sm:$0xf]
      %v350 = vld [vmem:[%s3 + $0x48] sm:$0xf]
      %v351 = vld [vmem:[%s3 + $0x4c] sm:$0xf]
      %v352 = vld [vmem:[%s3 + $0x50] sm:$0xf]
      %v353 = vld [vmem:[%s3 + $0x54] sm:$0xf]
      %v354 = vld [vmem:[%s3 + $0x58] sm:$0xf]
      %v355 = vld [vmem:[%s3 + $0x5c] sm:$0xf]
      %v356 = vld [vmem:[%s3 + $0x60] sm:$0xf]
      %v357 = vld [vmem:[%s3 + $0x64] sm:$0xf]
      %v358 = vld [vmem:[%s3 + $0x68] sm:$0xf]
      %v359 = vld [vmem:[%s3 + $0x6c] sm:$0xf]
      %v360 = vld [vmem:[%s3 + $0x70] sm:$0xf]
      %v361 = vld [vmem:[%s3 + $0x74] sm:$0xf]
      %v362 = vld [vmem:[%s3 + $0x78] sm:$0xf]
      %v363 = vld [vmem:[%s3 + $0x7c] sm:$0xf]
      %v366 = vunpack.c.l.s4 1983009808
      %v367 = vunpack.c.0.s8 %v366
      %v368 = vlaneseq
      %v369 = vshrl.u32 %v368, 7
      %v370 = vsub.s32 %v367, %v369
      %v371 = vrot.slane %v329, %v370
      %v373 = vshrl.u32 %v371, 16
      %v392 = vunpack.c.l.b16 %v348
      %v393 = vunpack.c.l.b16 %v349
      %v394 = vunpack.c.l.b16 %v350
      %v395 = vunpack.c.l.b16 %v351
      %v396 = vunpack.c.l.b16 %v352
      %v397 = vunpack.c.l.b16 %v353
      %v398 = vunpack.c.l.b16 %v354
      %v399 = vunpack.c.l.b16 %v355
      %v400 = vunpack.c.l.b16 %v356
      %v401 = vunpack.c.l.b16 %v357
      %v402 = vunpack.c.l.b16 %v358
      %v403 = vunpack.c.l.b16 %v359
      %v404 = vunpack.c.l.b16 %v360
      %v405 = vunpack.c.l.b16 %v361
      %v406 = vunpack.c.l.b16 %v362
      %v407 = vunpack.c.l.b16 %v363
      %v408 = vpack.c.b16 %v393, %v392
      %v409 = vpack.c.b16 %v395, %v394
      %v410 = vpack.c.b16 %v397, %v396
      %v411 = vpack.c.b16 %v399, %v398
      %v412 = vpack.c.b16 %v401, %v400
      %v413 = vpack.c.b16 %v403, %v402
      %v414 = vpack.c.b16 %v405, %v404
      %v415 = vpack.c.b16 %v407, %v406
      %424 = vmatprep.subr.bf16.mxu0 0
      %425 = vmatpush1.bf16.msra.mxu0 %v408
      %426 = vmatprep.subr.bf16.mxu0 0
      %427 = vmatpush1.bf16.msra.mxu0 %v409
      %428 = vmatprep.subr.bf16.mxu0 0
      %429 = vmatpush1.bf16.msra.mxu0 %v410
      %430 = vmatprep.subr.bf16.mxu0 0
      %431 = vmatpush1.bf16.msra.mxu0 %v411
      %432 = vmatprep.subr.bf16.mxu0 0
      %433 = vmatpush1.bf16.msra.mxu0 %v412
      %434 = vmatprep.subr.bf16.mxu0 0
      %435 = vmatpush1.bf16.msra.mxu0 %v413
      %436 = vmatprep.subr.bf16.mxu0 0
      %437 = vmatpush1.bf16.msra.mxu0 %v414
      %438 = vmatprep.subr.bf16.mxu0 0
      %439 = vmatpush1.bf16.msra.mxu0 %v415
      %440 = vmatprep.subr.bf16.mxu0 0
      %441 = vmatpush1.bf16.msra.mxu0 0
      %442 = vmatprep.subr.bf16.mxu0 0
      %443 = vmatpush1.bf16.msra.mxu0 0
      %444 = vmatprep.subr.bf16.mxu0 0
      %445 = vmatpush1.bf16.msra.mxu0 0
      %446 = vmatprep.subr.bf16.mxu0 0
      %447 = vmatpush1.bf16.msra.mxu0 0
      %448 = vmatprep.subr.bf16.mxu0 0
      %449 = vmatpush1.bf16.msra.mxu0 0
      %450 = vmatprep.subr.bf16.mxu0 0
      %451 = vmatpush1.bf16.msra.mxu0 0
      %452 = vmatprep.subr.bf16.mxu0 0
      %453 = vmatpush1.bf16.msra.mxu0 0
      %454 = vmatprep.subr.bf16.mxu0 0
      %455 = vmatpush1.bf16.msra.mxu0 0
      %456 = vmatprep.mubr.bf16.mxu0 0
      %457 = vmatmul.mubr.bf16.gmra.mrb[0].mxu0 %v373
      %v458 = vpop.f32.mrb[0].mxu0
      %v459 = vadd.f32 0.0, %v458
      %v460 = vpop.f32.mrb[0].mxu0
      %v461 = vpop.f32.mrb[0].mxu0
      %v462 = vpop.f32.mrb[0].mxu0
      %463 = vdwg.mxu0
      %v480 = vunpack.c.l.b16 %v332
      %v481 = vunpack.c.l.b16 %v333
      %v482 = vunpack.c.l.b16 %v334
      %v483 = vunpack.c.l.b16 %v335
      %v484 = vunpack.c.l.b16 %v336
      %v485 = vunpack.c.l.b16 %v337
      %v486 = vunpack.c.l.b16 %v338
      %v487 = vunpack.c.l.b16 %v339
      %v488 = vunpack.c.l.b16 %v340
      %v489 = vunpack.c.l.b16 %v341
      %v490 = vunpack.c.l.b16 %v342
      %v491 = vunpack.c.l.b16 %v343
      %v492 = vunpack.c.l.b16 %v344
      %v493 = vunpack.c.l.b16 %v345
      %v494 = vunpack.c.l.b16 %v346
      %v495 = vunpack.c.l.b16 %v347
      %v496 = vpack.c.b16 %v481, %v480
      %v497 = vpack.c.b16 %v483, %v482
      %v498 = vpack.c.b16 %v485, %v484
      %v499 = vpack.c.b16 %v487, %v486
      %v500 = vpack.c.b16 %v489, %v488
      %v501 = vpack.c.b16 %v491, %v490
      %v502 = vpack.c.b16 %v493, %v492
      %v503 = vpack.c.b16 %v495, %v494
      %512 = vmatprep.subr.bf16.mxu0 0
      %513 = vmatpush1.bf16.msra.mxu0 %v496
      %514 = vmatprep.subr.bf16.mxu0 0
      %515 = vmatpush1.bf16.msra.mxu0 %v497
      %516 = vmatprep.subr.bf16.mxu0 0
      %517 = vmatpush1.bf16.msra.mxu0 %v498
      %518 = vmatprep.subr.bf16.mxu0 0
      %519 = vmatpush1.bf16.msra.mxu0 %v499
      %520 = vmatprep.subr.bf16.mxu0 0
      %521 = vmatpush1.bf16.msra.mxu0 %v500
      %522 = vmatprep.subr.bf16.mxu0 0
      %523 = vmatpush1.bf16.msra.mxu0 %v501
      %524 = vmatprep.subr.bf16.mxu0 0
      %525 = vmatpush1.bf16.msra.mxu0 %v502
      %526 = vmatprep.subr.bf16.mxu0 0
      %527 = vmatpush1.bf16.msra.mxu0 %v503
      %528 = vmatprep.subr.bf16.mxu0 0
      %529 = vmatpush1.bf16.msra.mxu0 0
      %530 = vmatprep.subr.bf16.mxu0 0
      %531 = vmatpush1.bf16.msra.mxu0 0
      %532 = vmatprep.subr.bf16.mxu0 0
      %533 = vmatpush1.bf16.msra.mxu0 0
      %534 = vmatprep.subr.bf16.mxu0 0
      %535 = vmatpush1.bf16.msra.mxu0 0
      %536 = vmatprep.subr.bf16.mxu0 0
      %537 = vmatpush1.bf16.msra.mxu0 0
      %538 = vmatprep.subr.bf16.mxu0 0
      %539 = vmatpush1.bf16.msra.mxu0 0
      %540 = vmatprep.subr.bf16.mxu0 0
      %541 = vmatpush1.bf16.msra.mxu0 0
      %542 = vmatprep.subr.bf16.mxu0 0
      %543 = vmatpush1.bf16.msra.mxu0 0
      %544 = vmatprep.mubr.bf16.mxu0 0
      %545 = vmatmul.mubr.bf16.gmra.mrb[0].mxu0 %v329
      %v546 = vpop.f32.mrb[0].mxu0
      %v547 = vadd.f32 %v459, %v546
      %v548 = vpop.f32.mrb[0].mxu0
      %v549 = vpop.f32.mrb[0].mxu0
      %v550 = vpop.f32.mrb[0].mxu0
      %551 = vdwg.mxu0
      %v552 = vld [vmem:[%s3 + $0x80] sm:$0xf]
      %v553 = vld [vmem:[%s3 + $0x84] sm:$0xf]
      %v554 = vld [vmem:[%s3 + $0x88] sm:$0xf]
      %v555 = vld [vmem:[%s3 + $0x8c] sm:$0xf]
      %v556 = vld [vmem:[%s3 + $0x90] sm:$0xf]
      %v557 = vld [vmem:[%s3 + $0x94] sm:$0xf]
      %v558 = vld [vmem:[%s3 + $0x98] sm:$0xf]
      %v559 = vld [vmem:[%s3 + $0x9c] sm:$0xf]
      %v560 = vld [vmem:[%s3 + $0xa0] sm:$0xf]
      %v561 = vld [vmem:[%s3 + $0xa4] sm:$0xf]
      %v562 = vld [vmem:[%s3 + $0xa8] sm:$0xf]
      %v563 = vld [vmem:[%s3 + $0xac] sm:$0xf]
      %v564 = vld [vmem:[%s3 + $0xb0] sm:$0xf]
      %v565 = vld [vmem:[%s3 + $0xb4] sm:$0xf]
      %v566 = vld [vmem:[%s3 + $0xb8] sm:$0xf]
      %v567 = vld [vmem:[%s3 + $0xbc] sm:$0xf]
      %v568 = vrot.slane %v371, 1
      %v586 = vunpack.c.l.b16 %v552
      %v587 = vunpack.c.l.b16 %v553
      %v588 = vunpack.c.l.b16 %v554
      %v589 = vunpack.c.l.b16 %v555
      %v590 = vunpack.c.l.b16 %v556
      %v591 = vunpack.c.l.b16 %v557
      %v592 = vunpack.c.l.b16 %v558
      %v593 = vunpack.c.l.b16 %v559
      %v594 = vunpack.c.l.b16 %v560
      %v595 = vunpack.c.l.b16 %v561
      %v596 = vunpack.c.l.b16 %v562
      %v597 = vunpack.c.l.b16 %v563
      %v598 = vunpack.c.l.b16 %v564
      %v599 = vunpack.c.l.b16 %v565
      %v600 = vunpack.c.l.b16 %v566
      %v601 = vunpack.c.l.b16 %v567
      %v602 = vpack.c.b16 %v587, %v586
      %v603 = vpack.c.b16 %v589, %v588
      %v604 = vpack.c.b16 %v591, %v590
      %v605 = vpack.c.b16 %v593, %v592
      %v606 = vpack.c.b16 %v595, %v594
      %v607 = vpack.c.b16 %v597, %v596
      %v608 = vpack.c.b16 %v599, %v598
      %v609 = vpack.c.b16 %v601, %v600
      %618 = vmatprep.subr.bf16.mxu0 0
      %619 = vmatpush1.bf16.msra.mxu0 %v602
      %620 = vmatprep.subr.bf16.mxu0 0
      %621 = vmatpush1.bf16.msra.mxu0 %v603
      %622 = vmatprep.subr.bf16.mxu0 0
      %623 = vmatpush1.bf16.msra.mxu0 %v604
      %624 = vmatprep.subr.bf16.mxu0 0
      %625 = vmatpush1.bf16.msra.mxu0 %v605
      %626 = vmatprep.subr.bf16.mxu0 0
      %627 = vmatpush1.bf16.msra.mxu0 %v606
      %628 = vmatprep.subr.bf16.mxu0 0
      %629 = vmatpush1.bf16.msra.mxu0 %v607
      %630 = vmatprep.subr.bf16.mxu0 0
      %631 = vmatpush1.bf16.msra.mxu0 %v608
      %632 = vmatprep.subr.bf16.mxu0 0
      %633 = vmatpush1.bf16.msra.mxu0 %v609
      %634 = vmatprep.subr.bf16.mxu0 0
      %635 = vmatpush1.bf16.msra.mxu0 0
      %636 = vmatprep.subr.bf16.mxu0 0
      %637 = vmatpush1.bf16.msra.mxu0 0
      %638 = vmatprep.subr.bf16.mxu0 0
      %639 = vmatpush1.bf16.msra.mxu0 0
      %640 = vmatprep.subr.bf16.mxu0 0
      %641 = vmatpush1.bf16.msra.mxu0 0
      %642 = vmatprep.subr.bf16.mxu0 0
      %643 = vmatpush1.bf16.msra.mxu0 0
      %644 = vmatprep.subr.bf16.mxu0 0
      %645 = vmatpush1.bf16.msra.mxu0 0
      %646 = vmatprep.subr.bf16.mxu0 0
      %647 = vmatpush1.bf16.msra.mxu0 0
      %648 = vmatprep.subr.bf16.mxu0 0
      %649 = vmatpush1.bf16.msra.mxu0 0
      %650 = vmatprep.mubr.bf16.mxu0 0
      %651 = vmatmul.mubr.bf16.gmra.mrb[0].mxu0 %v568
      %v652 = vpop.f32.mrb[0].mxu0
      %v653 = vadd.f32 0.0, %v652
      %v654 = vpop.f32.mrb[0].mxu0
      %v655 = vpop.f32.mrb[0].mxu0
      %v656 = vpop.f32.mrb[0].mxu0
      %657 = vdwg.mxu0
      %v658 = vadd.f32 %v547, %v653
      %v659 = vld [vmem:[%s3 + $0xc0] sm:$0xf]
      %v660 = vld [vmem:[%s3 + $0xc4] sm:$0xf]
      %v661 = vld [vmem:[%s3 + $0xc8] sm:$0xf]
      %v662 = vld [vmem:[%s3 + $0xcc] sm:$0xf]
      %v663 = vld [vmem:[%s3 + $0xd0] sm:$0xf]
      %v664 = vld [vmem:[%s3 + $0xd4] sm:$0xf]
      %v665 = vld [vmem:[%s3 + $0xd8] sm:$0xf]
      %v666 = vld [vmem:[%s3 + $0xdc] sm:$0xf]
      %v667 = vld [vmem:[%s3 + $0xe0] sm:$0xf]
      %v668 = vld [vmem:[%s3 + $0xe4] sm:$0xf]
      %v669 = vld [vmem:[%s3 + $0xe8] sm:$0xf]
      %v670 = vld [vmem:[%s3 + $0xec] sm:$0xf]
      %v671 = vld [vmem:[%s3 + $0xf0] sm:$0xf]
      %v672 = vld [vmem:[%s3 + $0xf4] sm:$0xf]
      %v673 = vld [vmem:[%s3 + $0xf8] sm:$0xf]
      %v674 = vld [vmem:[%s3 + $0xfc] sm:$0xf]
      %v691 = vunpack.c.l.b16 %v659
      %v692 = vunpack.c.l.b16 %v660
      %v693 = vunpack.c.l.b16 %v661
      %v694 = vunpack.c.l.b16 %v662
      %v695 = vunpack.c.l.b16 %v663
      %v696 = vunpack.c.l.b16 %v664
      %v697 = vunpack.c.l.b16 %v665
      %v698 = vunpack.c.l.b16 %v666
      %v699 = vunpack.c.l.b16 %v667
      %v700 = vunpack.c.l.b16 %v668
      %v701 = vunpack.c.l.b16 %v669
      %v702 = vunpack.c.l.b16 %v670
      %v703 = vunpack.c.l.b16 %v671
      %v704 = vunpack.c.l.b16 %v672
      %v705 = vunpack.c.l.b16 %v673
      %v706 = vunpack.c.l.b16 %v674
      %v707 = vpack.c.b16 %v692, %v691
      %v708 = vpack.c.b16 %v694, %v693
      %v709 = vpack.c.b16 %v696, %v695
      %v710 = vpack.c.b16 %v698, %v697
      %v711 = vpack.c.b16 %v700, %v699
      %v712 = vpack.c.b16 %v702, %v701
      %v713 = vpack.c.b16 %v704, %v703
      %v714 = vpack.c.b16 %v706, %v705
      %723 = vmatprep.subr.bf16.mxu0 0
      %724 = vmatpush1.bf16.msra.mxu0 %v707
      %725 = vmatprep.subr.bf16.mxu0 0
      %726 = vmatpush1.bf16.msra.mxu0 %v708
      %727 = vmatprep.subr.bf16.mxu0 0
      %728 = vmatpush1.bf16.msra.mxu0 %v709
      %729 = vmatprep.subr.bf16.mxu0 0
      %730 = vmatpush1.bf16.msra.mxu0 %v710
      %731 = vmatprep.subr.bf16.mxu0 0
      %732 = vmatpush1.bf16.msra.mxu0 %v711
      %733 = vmatprep.subr.bf16.mxu0 0
      %734 = vmatpush1.bf16.msra.mxu0 %v712
      %735 = vmatprep.subr.bf16.mxu0 0
      %736 = vmatpush1.bf16.msra.mxu0 %v713
      %737 = vmatprep.subr.bf16.mxu0 0
      %738 = vmatpush1.bf16.msra.mxu0 %v714
      %739 = vmatprep.subr.bf16.mxu0 0
      %740 = vmatpush1.bf16.msra.mxu0 0
      %741 = vmatprep.subr.bf16.mxu0 0
      %742 = vmatpush1.bf16.msra.mxu0 0
      %743 = vmatprep.subr.bf16.mxu0 0
      %744 = vmatpush1.bf16.msra.mxu0 0
      %745 = vmatprep.subr.bf16.mxu0 0
      %746 = vmatpush1.bf16.msra.mxu0 0
      %747 = vmatprep.subr.bf16.mxu0 0
      %748 = vmatpush1.bf16.msra.mxu0 0
      %749 = vmatprep.subr.bf16.mxu0 0
      %750 = vmatpush1.bf16.msra.mxu0 0
      %751 = vmatprep.subr.bf16.mxu0 0
      %752 = vmatpush1.bf16.msra.mxu0 0
      %753 = vmatprep.subr.bf16.mxu0 0
      %754 = vmatpush1.bf16.msra.mxu0 0
      %755 = vmatprep.mubr.bf16.mxu0 0
      %756 = vmatmul.mubr.bf16.gmra.mrb[0].mxu0 %v330
      %v757 = vpop.f32.mrb[0].mxu0
      %v758 = vadd.f32 0.0, %v757
      %v759 = vpop.f32.mrb[0].mxu0
      %v760 = vpop.f32.mrb[0].mxu0
      %v761 = vpop.f32.mrb[0].mxu0
      %762 = vdwg.mxu0
      %v763 = vadd.f32 %v658, %v758
      %v764 = vld [vmem:[%s3 + $0x100] sm:$0xf]
      %v765 = vld [vmem:[%s3 + $0x104] sm:$0xf]
      %v766 = vld [vmem:[%s3 + $0x108] sm:$0xf]
      %v767 = vld [vmem:[%s3 + $0x10c] sm:$0xf]
      %v768 = vld [vmem:[%s3 + $0x110] sm:$0xf]
      %v769 = vld [vmem:[%s3 + $0x114] sm:$0xf]
      %v770 = vld [vmem:[%s3 + $0x118] sm:$0xf]
      %v771 = vld [vmem:[%s3 + $0x11c] sm:$0xf]
      %v772 = vld [vmem:[%s3 + $0x120] sm:$0xf]
      %v773 = vld [vmem:[%s3 + $0x124] sm:$0xf]
      %v774 = vld [vmem:[%s3 + $0x128] sm:$0xf]
      %v775 = vld [vmem:[%s3 + $0x12c] sm:$0xf]
      %v776 = vld [vmem:[%s3 + $0x130] sm:$0xf]
      %v777 = vld [vmem:[%s3 + $0x134] sm:$0xf]
      %v778 = vld [vmem:[%s3 + $0x138] sm:$0xf]
      %v779 = vld [vmem:[%s3 + $0x13c] sm:$0xf]
      %v782 = vunpack.c.l.s4 1983009808
      %v783 = vunpack.c.0.s8 %v782
      %v784 = vlaneseq
      %v785 = vshrl.u32 %v784, 7
      %v786 = vsub.s32 %v783, %v785
      %v787 = vrot.slane %v330, %v786
      %v789 = vshrl.u32 %v787, 16
      %v808 = vunpack.c.l.b16 %v764
      %v809 = vunpack.c.l.b16 %v765
      %v810 = vunpack.c.l.b16 %v766
      %v811 = vunpack.c.l.b16 %v767
      %v812 = vunpack.c.l.b16 %v768
      %v813 = vunpack.c.l.b16 %v769
      %v814 = vunpack.c.l.b16 %v770
      %v815 = vunpack.c.l.b16 %v771
      %v816 = vunpack.c.l.b16 %v772
      %v817 = vunpack.c.l.b16 %v773
      %v818 = vunpack.c.l.b16 %v774
      %v819 = vunpack.c.l.b16 %v775
      %v820 = vunpack.c.l.b16 %v776
      %v821 = vunpack.c.l.b16 %v777
      %v822 = vunpack.c.l.b16 %v778
      %v823 = vunpack.c.l.b16 %v779
      %v824 = vpack.c.b16 %v809, %v808
      %v825 = vpack.c.b16 %v811, %v810
      %v826 = vpack.c.b16 %v813, %v812
      %v827 = vpack.c.b16 %v815, %v814
      %v828 = vpack.c.b16 %v817, %v816
      %v829 = vpack.c.b16 %v819, %v818
      %v830 = vpack.c.b16 %v821, %v820
      %v831 = vpack.c.b16 %v823, %v822
      %840 = vmatprep.subr.bf16.mxu0 0
      %841 = vmatpush1.bf16.msra.mxu0 %v824
      %842 = vmatprep.subr.bf16.mxu0 0
      %843 = vmatpush1.bf16.msra.mxu0 %v825
      %844 = vmatprep.subr.bf16.mxu0 0
      %845 = vmatpush1.bf16.msra.mxu0 %v826
      %846 = vmatprep.subr.bf16.mxu0 0
      %847 = vmatpush1.bf16.msra.mxu0 %v827
      %848 = vmatprep.subr.bf16.mxu0 0
      %849 = vmatpush1.bf16.msra.mxu0 %v828
      %850 = vmatprep.subr.bf16.mxu0 0
      %851 = vmatpush1.bf16.msra.mxu0 %v829
      %852 = vmatprep.subr.bf16.mxu0 0
      %853 = vmatpush1.bf16.msra.mxu0 %v830
      %854 = vmatprep.subr.bf16.mxu0 0
      %855 = vmatpush1.bf16.msra.mxu0 %v831
      %856 = vmatprep.subr.bf16.mxu0 0
      %857 = vmatpush1.bf16.msra.mxu0 0
      %858 = vmatprep.subr.bf16.mxu0 0
      %859 = vmatpush1.bf16.msra.mxu0 0
      %860 = vmatprep.subr.bf16.mxu0 0
      %861 = vmatpush1.bf16.msra.mxu0 0
      %862 = vmatprep.subr.bf16.mxu0 0
      %863 = vmatpush1.bf16.msra.mxu0 0
      %864 = vmatprep.subr.bf16.mxu0 0
      %865 = vmatpush1.bf16.msra.mxu0 0
      %866 = vmatprep.subr.bf16.mxu0 0
      %867 = vmatpush1.bf16.msra.mxu0 0
      %868 = vmatprep.subr.bf16.mxu0 0
      %869 = vmatpush1.bf16.msra.mxu0 0
      %870 = vmatprep.subr.bf16.mxu0 0
      %871 = vmatpush1.bf16.msra.mxu0 0
      %872 = vmatprep.mubr.bf16.mxu0 0
      %873 = vmatmul.mubr.bf16.gmra.mrb[0].mxu0 %v789
      %v874 = vpop.f32.mrb[0].mxu0
      %v875 = vadd.f32 0.0, %v874
      %v876 = vpop.f32.mrb[0].mxu0
      %v877 = vpop.f32.mrb[0].mxu0
      %v878 = vpop.f32.mrb[0].mxu0
      %879 = vdwg.mxu0
      %v880 = vadd.f32 %v763, %v875
      %v881 = vld [vmem:[%s3 + $0x140] sm:$0xf]
      %v882 = vld [vmem:[%s3 + $0x144] sm:$0xf]
      %v883 = vld [vmem:[%s3 + $0x148] sm:$0xf]
      %v884 = vld [vmem:[%s3 + $0x14c] sm:$0xf]
      %v885 = vld [vmem:[%s3 + $0x150] sm:$0xf]
      %v886 = vld [vmem:[%s3 + $0x154] sm:$0xf]
      %v887 = vld [vmem:[%s3 + $0x158] sm:$0xf]
      %v888 = vld [vmem:[%s3 + $0x15c] sm:$0xf]
      %v889 = vld [vmem:[%s3 + $0x160] sm:$0xf]
      %v890 = vld [vmem:[%s3 + $0x164] sm:$0xf]
      %v891 = vld [vmem:[%s3 + $0x168] sm:$0xf]
      %v892 = vld [vmem:[%s3 + $0x16c] sm:$0xf]
      %v893 = vld [vmem:[%s3 + $0x170] sm:$0xf]
      %v894 = vld [vmem:[%s3 + $0x174] sm:$0xf]
      %v895 = vld [vmem:[%s3 + $0x178] sm:$0xf]
      %v896 = vld [vmem:[%s3 + $0x17c] sm:$0xf]
      %v897 = vrot.slane %v787, 1
      %v915 = vunpack.c.l.b16 %v881
      %v916 = vunpack.c.l.b16 %v882
      %v917 = vunpack.c.l.b16 %v883
      %v918 = vunpack.c.l.b16 %v884
      %v919 = vunpack.c.l.b16 %v885
      %v920 = vunpack.c.l.b16 %v886
      %v921 = vunpack.c.l.b16 %v887
      %v922 = vunpack.c.l.b16 %v888
      %v923 = vunpack.c.l.b16 %v889
      %v924 = vunpack.c.l.b16 %v890
      %v925 = vunpack.c.l.b16 %v891
      %v926 = vunpack.c.l.b16 %v892
      %v927 = vunpack.c.l.b16 %v893
      %v928 = vunpack.c.l.b16 %v894
      %v929 = vunpack.c.l.b16 %v895
      %v930 = vunpack.c.l.b16 %v896
      %v931 = vpack.c.b16 %v916, %v915
      %v932 = vpack.c.b16 %v918, %v917
      %v933 = vpack.c.b16 %v920, %v919
      %v934 = vpack.c.b16 %v922, %v921
      %v935 = vpack.c.b16 %v924, %v923
      %v936 = vpack.c.b16 %v926, %v925
      %v937 = vpack.c.b16 %v928, %v927
      %v938 = vpack.c.b16 %v930, %v929
      %947 = vmatprep.subr.bf16.mxu0 0
      %948 = vmatpush1.bf16.msra.mxu0 %v931
      %949 = vmatprep.subr.bf16.mxu0 0
      %950 = vmatpush1.bf16.msra.mxu0 %v932
      %951 = vmatprep.subr.bf16.mxu0 0
      %952 = vmatpush1.bf16.msra.mxu0 %v933
      %953 = vmatprep.subr.bf16.mxu0 0
      %954 = vmatpush1.bf16.msra.mxu0 %v934
      %955 = vmatprep.subr.bf16.mxu0 0
      %956 = vmatpush1.bf16.msra.mxu0 %v935
      %957 = vmatprep.subr.bf16.mxu0 0
      %958 = vmatpush1.bf16.msra.mxu0 %v936
      %959 = vmatprep.subr.bf16.mxu0 0
      %960 = vmatpush1.bf16.msra.mxu0 %v937
      %961 = vmatprep.subr.bf16.mxu0 0
      %962 = vmatpush1.bf16.msra.mxu0 %v938
      %963 = vmatprep.subr.bf16.mxu0 0
      %964 = vmatpush1.bf16.msra.mxu0 0
      %965 = vmatprep.subr.bf16.mxu0 0
      %966 = vmatpush1.bf16.msra.mxu0 0
      %967 = vmatprep.subr.bf16.mxu0 0
      %968 = vmatpush1.bf16.msra.mxu0 0
      %969 = vmatprep.subr.bf16.mxu0 0
      %970 = vmatpush1.bf16.msra.mxu0 0
      %971 = vmatprep.subr.bf16.mxu0 0
      %972 = vmatpush1.bf16.msra.mxu0 0
      %973 = vmatprep.subr.bf16.mxu0 0
      %974 = vmatpush1.bf16.msra.mxu0 0
      %975 = vmatprep.subr.bf16.mxu0 0
      %976 = vmatpush1.bf16.msra.mxu0 0
      %977 = vmatprep.subr.bf16.mxu0 0
      %978 = vmatpush1.bf16.msra.mxu0 0
      %979 = vmatprep.mubr.bf16.mxu0 0
      %980 = vmatmul.mubr.bf16.gmra.mrb[0].mxu0 %v897
      %v981 = vpop.f32.mrb[0].mxu0
      %v982 = vadd.f32 0.0, %v981
      %v983 = vpop.f32.mrb[0].mxu0
      %v984 = vpop.f32.mrb[0].mxu0
      %v985 = vpop.f32.mrb[0].mxu0
      %986 = vdwg.mxu0
      %v987 = vadd.f32 %v880, %v982
      %v988 = vld [vmem:[%s3 + $0x180] sm:$0xf]
      %v989 = vld [vmem:[%s3 + $0x184] sm:$0xf]
      %v990 = vld [vmem:[%s3 + $0x188] sm:$0xf]
      %v991 = vld [vmem:[%s3 + $0x18c] sm:$0xf]
      %v992 = vld [vmem:[%s3 + $0x190] sm:$0xf]
      %v993 = vld [vmem:[%s3 + $0x194] sm:$0xf]
      %v994 = vld [vmem:[%s3 + $0x198] sm:$0xf]
      %v995 = vld [vmem:[%s3 + $0x19c] sm:$0xf]
      %v996 = vld [vmem:[%s3 + $0x1a0] sm:$0xf]
      %v997 = vld [vmem:[%s3 + $0x1a4] sm:$0xf]
      %v998 = vld [vmem:[%s3 + $0x1a8] sm:$0xf]
      %v999 = vld [vmem:[%s3 + $0x1ac] sm:$0xf]
      %v1000 = vld [vmem:[%s3 + $0x1b0] sm:$0xf]
      %v1001 = vld [vmem:[%s3 + $0x1b4] sm:$0xf]
      %v1002 = vld [vmem:[%s3 + $0x1b8] sm:$0xf]
      %v1003 = vld [vmem:[%s3 + $0x1bc] sm:$0xf]
      %v1020 = vunpack.c.l.b16 %v988
      %v1021 = vunpack.c.l.b16 %v989
      %v1022 = vunpack.c.l.b16 %v990
      %v1023 = vunpack.c.l.b16 %v991
      %v1024 = vunpack.c.l.b16 %v992
      %v1025 = vunpack.c.l.b16 %v993
      %v1026 = vunpack.c.l.b16 %v994
      %v1027 = vunpack.c.l.b16 %v995
      %v1028 = vunpack.c.l.b16 %v996
      %v1029 = vunpack.c.l.b16 %v997
      %v1030 = vunpack.c.l.b16 %v998
      %v1031 = vunpack.c.l.b16 %v999
      %v1032 = vunpack.c.l.b16 %v1000
      %v1033 = vunpack.c.l.b16 %v1001
      %v1034 = vunpack.c.l.b16 %v1002
      %v1035 = vunpack.c.l.b16 %v1003
      %v1036 = vpack.c.b16 %v1021, %v1020
      %v1037 = vpack.c.b16 %v1023, %v1022
      %v1038 = vpack.c.b16 %v1025, %v1024
      %v1039 = vpack.c.b16 %v1027, %v1026
      %v1040 = vpack.c.b16 %v1029, %v1028
      %v1041 = vpack.c.b16 %v1031, %v1030
      %v1042 = vpack.c.b16 %v1033, %v1032
      %v1043 = vpack.c.b16 %v1035, %v1034
      %1052 = vmatprep.subr.bf16.mxu0 0
      %1053 = vmatpush1.bf16.msra.mxu0 %v1036
      %1054 = vmatprep.subr.bf16.mxu0 0
      %1055 = vmatpush1.bf16.msra.mxu0 %v1037
      %1056 = vmatprep.subr.bf16.mxu0 0
      %1057 = vmatpush1.bf16.msra.mxu0 %v1038
      %1058 = vmatprep.subr.bf16.mxu0 0
      %1059 = vmatpush1.bf16.msra.mxu0 %v1039
      %1060 = vmatprep.subr.bf16.mxu0 0
      %1061 = vmatpush1.bf16.msra.mxu0 %v1040
      %1062 = vmatprep.subr.bf16.mxu0 0
      %1063 = vmatpush1.bf16.msra.mxu0 %v1041
      %1064 = vmatprep.subr.bf16.mxu0 0
      %1065 = vmatpush1.bf16.msra.mxu0 %v1042
      %1066 = vmatprep.subr.bf16.mxu0 0
      %1067 = vmatpush1.bf16.msra.mxu0 %v1043
      %1068 = vmatprep.subr.bf16.mxu0 0
      %1069 = vmatpush1.bf16.msra.mxu0 0
      %1070 = vmatprep.subr.bf16.mxu0 0
      %1071 = vmatpush1.bf16.msra.mxu0 0
      %1072 = vmatprep.subr.bf16.mxu0 0
      %1073 = vmatpush1.bf16.msra.mxu0 0
      %1074 = vmatprep.subr.bf16.mxu0 0
      %1075 = vmatpush1.bf16.msra.mxu0 0
      %1076 = vmatprep.subr.bf16.mxu0 0
      %1077 = vmatpush1.bf16.msra.mxu0 0
      %1078 = vmatprep.subr.bf16.mxu0 0
      %1079 = vmatpush1.bf16.msra.mxu0 0
      %1080 = vmatprep.subr.bf16.mxu0 0
      %1081 = vmatpush1.bf16.msra.mxu0 0
      %1082 = vmatprep.subr.bf16.mxu0 0
      %1083 = vmatpush1.bf16.msra.mxu0 0
      %1084 = vmatprep.mubr.bf16.mxu0 0
      %1085 = vmatmul.mubr.bf16.gmra.mrb[0].mxu0 %v331
      %v1086 = vpop.f32.mrb[0].mxu0
      %v1087 = vadd.f32 0.0, %v1086
      %v1088 = vpop.f32.mrb[0].mxu0
      %v1089 = vpop.f32.mrb[0].mxu0
      %v1090 = vpop.f32.mrb[0].mxu0
      %1091 = vdwg.mxu0
      %v1092 = vadd.f32 %v987, %v1087
      %v1093 = vld [vmem:[%s3 + $0x1c0] sm:$0xf]
      %v1094 = vld [vmem:[%s3 + $0x1c4] sm:$0xf]
      %v1095 = vld [vmem:[%s3 + $0x1c8] sm:$0xf]
      %v1096 = vld [vmem:[%s3 + $0x1cc] sm:$0xf]
      %v1097 = vld [vmem:[%s3 + $0x1d0] sm:$0xf]
      %v1098 = vld [vmem:[%s3 + $0x1d4] sm:$0xf]
      %v1099 = vld [vmem:[%s3 + $0x1d8] sm:$0xf]
      %v1100 = vld [vmem:[%s3 + $0x1dc] sm:$0xf]
      %v1101 = vld [vmem:[%s3 + $0x1e0] sm:$0xf]
      %v1102 = vld [vmem:[%s3 + $0x1e4] sm:$0xf]
      %v1103 = vld [vmem:[%s3 + $0x1e8] sm:$0xf]
      %v1104 = vld [vmem:[%s3 + $0x1ec] sm:$0xf]
      %v1105 = vld [vmem:[%s3 + $0x1f0] sm:$0xf]
      %v1106 = vld [vmem:[%s3 + $0x1f4] sm:$0xf]
      %v1107 = vld [vmem:[%s3 + $0x1f8] sm:$0xf]
      %v1108 = vld [vmem:[%s3 + $0x1fc] sm:$0xf]
      %v1111 = vunpack.c.l.s4 1983009808
      %v1112 = vunpack.c.0.s8 %v1111
      %v1113 = vlaneseq
      %v1114 = vshrl.u32 %v1113, 7
      %v1115 = vsub.s32 %v1112, %v1114
      %v1116 = vrot.slane %v331, %v1115
      %v1118 = vshrl.u32 %v1116, 16
      %v1137 = vunpack.c.l.b16 %v1093
      %v1138 = vunpack.c.l.b16 %v1094
      %v1139 = vunpack.c.l.b16 %v1095
      %v1140 = vunpack.c.l.b16 %v1096
      %v1141 = vunpack.c.l.b16 %v1097
      %v1142 = vunpack.c.l.b16 %v1098
      %v1143 = vunpack.c.l.b16 %v1099
      %v1144 = vunpack.c.l.b16 %v1100
      %v1145 = vunpack.c.l.b16 %v1101
      %v1146 = vunpack.c.l.b16 %v1102
      %v1147 = vunpack.c.l.b16 %v1103
      %v1148 = vunpack.c.l.b16 %v1104
      %v1149 = vunpack.c.l.b16 %v1105
      %v1150 = vunpack.c.l.b16 %v1106
      %v1151 = vunpack.c.l.b16 %v1107
      %v1152 = vunpack.c.l.b16 %v1108
      %v1153 = vpack.c.b16 %v1138, %v1137
      %v1154 = vpack.c.b16 %v1140, %v1139
      %v1155 = vpack.c.b16 %v1142, %v1141
      %v1156 = vpack.c.b16 %v1144, %v1143
      %v1157 = vpack.c.b16 %v1146, %v1145
      %v1158 = vpack.c.b16 %v1148, %v1147
      %v1159 = vpack.c.b16 %v1150, %v1149
      %v1160 = vpack.c.b16 %v1152, %v1151
      %1169 = vmatprep.subr.bf16.mxu0 0
      %1170 = vmatpush1.bf16.msra.mxu0 %v1153
      %1171 = vmatprep.subr.bf16.mxu0 0
      %1172 = vmatpush1.bf16.msra.mxu0 %v1154
      %1173 = vmatprep.subr.bf16.mxu0 0
      %1174 = vmatpush1.bf16.msra.mxu0 %v1155
      %1175 = vmatprep.subr.bf16.mxu0 0
      %1176 = vmatpush1.bf16.msra.mxu0 %v1156
      %1177 = vmatprep.subr.bf16.mxu0 0
      %1178 = vmatpush1.bf16.msra.mxu0 %v1157
      %1179 = vmatprep.subr.bf16.mxu0 0
      %1180 = vmatpush1.bf16.msra.mxu0 %v1158
      %1181 = vmatprep.subr.bf16.mxu0 0
      %1182 = vmatpush1.bf16.msra.mxu0 %v1159
      %1183 = vmatprep.subr.bf16.mxu0 0
      %1184 = vmatpush1.bf16.msra.mxu0 %v1160
      %1185 = vmatprep.subr.bf16.mxu0 0
      %1186 = vmatpush1.bf16.msra.mxu0 0
      %1187 = vmatprep.subr.bf16.mxu0 0
      %1188 = vmatpush1.bf16.msra.mxu0 0
      %1189 = vmatprep.subr.bf16.mxu0 0
      %1190 = vmatpush1.bf16.msra.mxu0 0
      %1191 = vmatprep.subr.bf16.mxu0 0
      %1192 = vmatpush1.bf16.msra.mxu0 0
      %1193 = vmatprep.subr.bf16.mxu0 0
      %1194 = vmatpush1.bf16.msra.mxu0 0
      %1195 = vmatprep.subr.bf16.mxu0 0
      %1196 = vmatpush1.bf16.msra.mxu0 0
      %1197 = vmatprep.subr.bf16.mxu0 0
      %1198 = vmatpush1.bf16.msra.mxu0 0
      %1199 = vmatprep.subr.bf16.mxu0 0
      %1200 = vmatpush1.bf16.msra.mxu0 0
      %1201 = vmatprep.mubr.bf16.mxu0 0
      %1202 = vmatmul.mubr.bf16.gmra.mrb[0].mxu0 %v1118
      %v1203 = vpop.f32.mrb[0].mxu0
      %v1204 = vadd.f32 0.0, %v1203
      %v1205 = vpop.f32.mrb[0].mxu0
      %v1206 = vpop.f32.mrb[0].mxu0
      %v1207 = vpop.f32.mrb[0].mxu0
      %1208 = vdwg.mxu0
      %v1209 = vadd.f32 %v1092, %v1204
      %v1210 = vld [vmem:[%s3 + $0x200] sm:$0xf]
      %v1211 = vld [vmem:[%s3 + $0x204] sm:$0xf]
      %v1212 = vld [vmem:[%s3 + $0x208] sm:$0xf]
      %v1213 = vld [vmem:[%s3 + $0x20c] sm:$0xf]
      %v1214 = vld [vmem:[%s3 + $0x210] sm:$0xf]
      %v1215 = vld [vmem:[%s3 + $0x214] sm:$0xf]
      %v1216 = vld [vmem:[%s3 + $0x218] sm:$0xf]
      %v1217 = vld [vmem:[%s3 + $0x21c] sm:$0xf]
      %v1218 = vld [vmem:[%s3 + $0x220] sm:$0xf]
      %v1219 = vld [vmem:[%s3 + $0x224] sm:$0xf]
      %v1220 = vld [vmem:[%s3 + $0x228] sm:$0xf]
      %v1221 = vld [vmem:[%s3 + $0x22c] sm:$0xf]
      %v1222 = vld [vmem:[%s3 + $0x230] sm:$0xf]
      %v1223 = vld [vmem:[%s3 + $0x234] sm:$0xf]
      %v1224 = vld [vmem:[%s3 + $0x238] sm:$0xf]
      %v1225 = vld [vmem:[%s3 + $0x23c] sm:$0xf]
      %v1226 = vrot.slane %v1116, 1
      %v1244 = vunpack.c.l.b16 %v1210
      %v1245 = vunpack.c.l.b16 %v1211
      %v1246 = vunpack.c.l.b16 %v1212
      %v1247 = vunpack.c.l.b16 %v1213
      %v1248 = vunpack.c.l.b16 %v1214
      %v1249 = vunpack.c.l.b16 %v1215
      %v1250 = vunpack.c.l.b16 %v1216
      %v1251 = vunpack.c.l.b16 %v1217
      %v1252 = vunpack.c.l.b16 %v1218
      %v1253 = vunpack.c.l.b16 %v1219
      %v1254 = vunpack.c.l.b16 %v1220
      %v1255 = vunpack.c.l.b16 %v1221
      %v1256 = vunpack.c.l.b16 %v1222
      %v1257 = vunpack.c.l.b16 %v1223
      %v1258 = vunpack.c.l.b16 %v1224
      %v1259 = vunpack.c.l.b16 %v1225
      %v1260 = vpack.c.b16 %v1245, %v1244
      %v1261 = vpack.c.b16 %v1247, %v1246
      %v1262 = vpack.c.b16 %v1249, %v1248
      %v1263 = vpack.c.b16 %v1251, %v1250
      %v1264 = vpack.c.b16 %v1253, %v1252
      %v1265 = vpack.c.b16 %v1255, %v1254
      %v1266 = vpack.c.b16 %v1257, %v1256
      %v1267 = vpack.c.b16 %v1259, %v1258
      %1276 = vmatprep.subr.bf16.mxu0 0
      %1277 = vmatpush1.bf16.msra.mxu0 %v1260
      %1278 = vmatprep.subr.bf16.mxu0 0
      %1279 = vmatpush1.bf16.msra.mxu0 %v1261
      %1280 = vmatprep.subr.bf16.mxu0 0
      %1281 = vmatpush1.bf16.msra.mxu0 %v1262
      %1282 = vmatprep.subr.bf16.mxu0 0
      %1283 = vmatpush1.bf16.msra.mxu0 %v1263
      %1284 = vmatprep.subr.bf16.mxu0 0
      %1285 = vmatpush1.bf16.msra.mxu0 %v1264
      %1286 = vmatprep.subr.bf16.mxu0 0
      %1287 = vmatpush1.bf16.msra.mxu0 %v1265
      %1288 = vmatprep.subr.bf16.mxu0 0
      %1289 = vmatpush1.bf16.msra.mxu0 %v1266
      %1290 = vmatprep.subr.bf16.mxu0 0
      %1291 = vmatpush1.bf16.msra.mxu0 %v1267
      %1292 = vmatprep.subr.bf16.mxu0 0
      %1293 = vmatpush1.bf16.msra.mxu0 0
      %1294 = vmatprep.subr.bf16.mxu0 0
      %1295 = vmatpush1.bf16.msra.mxu0 0
      %1296 = vmatprep.subr.bf16.mxu0 0
      %1297 = vmatpush1.bf16.msra.mxu0 0
      %1298 = vmatprep.subr.bf16.mxu0 0
      %1299 = vmatpush1.bf16.msra.mxu0 0
      %1300 = vmatprep.subr.bf16.mxu0 0
      %1301 = vmatpush1.bf16.msra.mxu0 0
      %1302 = vmatprep.subr.bf16.mxu0 0
      %1303 = vmatpush1.bf16.msra.mxu0 0
      %1304 = vmatprep.subr.bf16.mxu0 0
      %1305 = vmatpush1.bf16.msra.mxu0 0
      %1306 = vmatprep.subr.bf16.mxu0 0
      %1307 = vmatpush1.bf16.msra.mxu0 0
      %1308 = vmatprep.mubr.bf16.mxu0 0
      %1309 = vmatmul.mubr.bf16.gmra.mrb[0].mxu0 %v1226
      %v1310 = vpop.f32.mrb[0].mxu0
      %v1311 = vadd.f32 0.0, %v1310
      %v1312 = vpop.f32.mrb[0].mxu0
      %v1313 = vpop.f32.mrb[0].mxu0
      %v1314 = vpop.f32.mrb[0].mxu0
      %1315 = vdwg.mxu0
      %v1316 = vadd.f32 %v1209, %v1311
      %v1317 = vld [vmem:[%s4] sm:$0x1]
      %v1318 = vadd.f32 %v1316, %v1317
      %v1319 = vmax.f32 %v1318, 0.0
      %v1320 = vpack.c.bf16 %v1319, %v1319
      %vm1321 = vcmask 1040384
      %vm1322 = vsmask.f32 256
      %vm1323 = vmand %vm1321, %vm1322
      %v1324 = vld [vmem:[%s327] sm:$0x1]
      %v1325 = vsel %vm1323, %v1320, %v1324
      %1326 = vst [vmem:[%s327] sm:$0x1] %v1325
      %p1327 = scmp.lt.s32.totalorder %s20, 1
      %s1328 = scalar_select %p1327, %s20, 1
      %p1329 = scmp.lt.s32.totalorder %s21, 0
      %s1330 = scalar_select %p1329, %s21, 0
      %s1331 = sadd.s32 %s1330, %s1328
      %s1332 = scalar_lea.vmem %s5, %s1331
      // Predicated region
      $region41: #{unet_forward.20} parent=39 // pred_check
        %p1333 = pneg %p178
      $region42: #{unet_forward.20} parent=39 // pred_check_branch
        %1335 = sbr.rel (%p1333) target = $region44
      $region43: #{unet_forward.20} parent=39 // pred_region
        _
      $region44: #{unet_forward.20} parent=39 // pred_fallthru
        _
    $region40: #{unet_forward.20} parent=5 // pred_fallthru
      _
    %p1336 = scmp.le.s32.totalorder 2, %s11
    // Predicated region
    $region45: #{unet_forward.20} parent=5 // pred_check
      %p1337 = pneg %p1336
    $region46: #{unet_forward.20} parent=5 // pred_check_branch
      %1339 = sbr.rel (%p1337) target = $region48
    $region47: #{unet_forward.20} parent=5 // pred_region
      %s1340 = ssub.s32 %s11, 2
      // Predicated region
      $region49: #{unet_forward.20} parent=47 // pred_check
        %p1341 = pneg %p184
      $region50: #{unet_forward.20} parent=47 // pred_check_branch
        %1343 = sbr.rel (%p1341) target = $region52
      $region51: #{unet_forward.20} parent=47 // pred_region
        %p1344 = scmp.lt.s32.totalorder %s22, 1
        %s1345 = scalar_select %p1344, %s22, 1
        %p1346 = scmp.lt.s32.totalorder %s23, 0
        %s1347 = scalar_select %p1346, %s23, 0
        %s1348 = sadd.s32 %s1347, %s1345
        %s1349 = scalar_lea.vmem %s5, %s1348
      $region52: #{unet_forward.20} parent=47 // pred_fallthru
        _
    $region48: #{unet_forward.20} parent=5 // pred_fallthru
      _
  $region6: #{unet_forward.20} parent=0 // loop_footer
    %s15 = sadd.s32 1, %s11
  $region7: #{unet_forward.20} parent=0 // loop_footer_branch
    %10 = sbr.rel target = $region3
  $region8: #{unet_forward.20} parent=0 // loop_exit
    _

// kernel: unet_forward.21
$region0: #{unet_forward.21}
  #allocation0 [shape = 'u32[]', space=smem, size = 0x4, offset = 0x4, fixed_abs, tag = 'smem constant byte address 0x4 - core index']
  #allocation1 [shape = 'u32[144,128]{1,0:T(1,128)}', space=vmem, size = 0x12000, scoped, tag = 'internal scratch']
  %s0 = inlined_call_operand.vmem [shape: bf16[2,2,2,128], index: 0, kind: input, shape index: {}, may-alias: {0,1}]
  %s1 = inlined_call_operand.vmem [shape: bf16[2,2,2,128], index: 1, kind: input, shape index: {}, may-alias: {0,1}]
  %s2 = inlined_call_operand.vmem [shape: bf16[512,256], index: 2, kind: input, shape index: {}]
  %s3 = inlined_call_operand.vmem [shape: f32[1,256], index: 3, kind: input, shape index: {}]
  %s4 = inlined_call_operand.vmem [shape: bf16[2,1,1,256], index: 4, kind: output, shape index: {}]
  %s5 = sld [smem:[#allocation0]]
  $region49: #{unet_forward.21} parent=0
    _
  %s7 = ssub.s32 1, %s5
  %s8 = scalar_select 0, %s7, %s5
  loop: start=0, step=1, limit=4
  $region2: #{unet_forward.21} parent=0 // loop_pre_header
    _
  $region3: #{unet_forward.21} parent=0 // loop_header
    %s10 = sphi 0, %s14
    %p11 = scmp.ge.s32.totalorder %s10, 4
    %s17 = sphi 0, %s29
    %s18 = sphi 0, %s25
    %s19 = sphi 0, %s17
    %s20 = sphi 0, %s18
    %s21 = sphi 0, %s19
    %s22 = sphi 0, %s20
    %s34 = sphi 0, %s36
    %s37 = sphi 0, %s34
    %s38 = sphi 0, %s37
    %s54 = sphi 0, %s38
    %s64 = sphi 0, %s66
    %s67 = sphi 0, %s64
    %s68 = sphi 0, %s67
    %s84 = sphi 0, %s68
    %s88 = sphi 0, %s88
    %s90 = sphi 0, %s88
    %s91 = sphi 0, %s90
    %s105 = sphi 0, %s91
    %s109 = sphi 0, %s109
    %s111 = sphi 0, %s109
    %s112 = sphi 0, %s111
    %s126 = sphi 0, %s112
    %s134 = sphi 0, %s136
    %s137 = sphi 0, %s134
    %s138 = sphi 0, %s137
    %s154 = sphi 0, %s138
  $region4: #{unet_forward.21} parent=0 // loop_header_branch
    %13 = sbr.rel (%p11) target = $region8
  $region5: #{unet_forward.21} parent=0 // loop_body
    %s15 = ssub.s32 %s10, 1
    %s16 = ssub.s32 %s10, 2
    %s23 = sadd.s32 1, %s18
    %p24 = scmp.ge.s32.totalorder %s23, 1
    %s25 = scalar_select %p24, 0, %s23
    %s26 = sadd.s32 1, %s17
    %s27 = scalar_select %p24, %s26, %s17
    %p28 = scmp.ge.s32.totalorder %s27, 2
    %s29 = scalar_select %p28, 0, %s27
    %s30 = ssub.s32 %s17, %s29
    %s31 = ssub.s32 %s18, %s25
    %s32 = sor.u32 %s30, %s31
    %p33 = scmp.eq.s32.totalorder %s32, 0
    %s35 = sadd.s32 %s34, 1
    %s36 = scalar_select %p33, %s34, %s35
    %p39 = pneg %p33
    %p40 = scmp.eq.s32.totalorder %s10, 1
    %p41 = por %p39, %p40
    %p42 = scmp.ne.s32.totalorder %s34, %s37
    %p43 = scmp.eq.s32.totalorder %s10, 0
    %p44 = por %p42, %p43
    %p45 = scmp.ne.s32.totalorder %s34, %s37
    %p46 = scmp.eq.s32.totalorder %s15, 1
    %p47 = por %p45, %p46
    %p48 = scmp.ne.s32.totalorder %s37, %s38
    %p49 = scmp.eq.s32.totalorder %s15, 0
    %p50 = por %p48, %p49
    %p51 = scmp.ne.s32.totalorder %s37, %s38
    %p52 = scmp.eq.s32.totalorder %s16, 1
    %p53 = por %p51, %p52
    %p55 = scmp.ne.s32.totalorder %s38, %s54
    %p56 = scmp.eq.s32.totalorder %s16, 0
    %p57 = por %p55, %p56
    %s58 = sadd.s32 %s18, 1
    %s59 = sadd.s32 %s25, 1
    %s60 = ssub.s32 %s17, %s29
    %s61 = ssub.s32 %s58, %s59
    %s62 = sor.u32 %s60, %s61
    %p63 = scmp.eq.s32.totalorder %s62, 0
    %s65 = sadd.s32 %s64, 1
    %s66 = scalar_select %p63, %s64, %s65
    %p69 = pneg %p63
    %p70 = scmp.eq.s32.totalorder %s10, 1
    %p71 = por %p69, %p70
    %p72 = scmp.ne.s32.totalorder %s64, %s67
    %p73 = scmp.eq.s32.totalorder %s10, 0
    %p74 = por %p72, %p73
    %p75 = scmp.ne.s32.totalorder %s64, %s67
    %p76 = scmp.eq.s32.totalorder %s15, 1
    %p77 = por %p75, %p76
    %p78 = scmp.ne.s32.totalorder %s67, %s68
    %p79 = scmp.eq.s32.totalorder %s15, 0
    %p80 = por %p78, %p79
    %p81 = scmp.ne.s32.totalorder %s67, %s68
    %p82 = scmp.eq.s32.totalorder %s16, 1
    %p83 = por %p81, %p82
    %p85 = scmp.ne.s32.totalorder %s68, %s84
    %p86 = scmp.eq.s32.totalorder %s16, 0
    %p87 = por %p85, %p86
    %s89 = sadd.s32 %s88, 1
    %p92 = scmp.eq.s32.totalorder %s10, 1
    %p93 = scmp.ne.s32.totalorder %s88, %s90
    %p94 = scmp.eq.s32.totalorder %s10, 0
    %p95 = por %p93, %p94
    %p96 = scmp.ne.s32.totalorder %s88, %s90
    %p97 = scmp.eq.s32.totalorder %s15, 1
    %p98 = por %p96, %p97
    %p99 = scmp.ne.s32.totalorder %s90, %s91
    %p100 = scmp.eq.s32.totalorder %s15, 0
    %p101 = por %p99, %p100
    %p102 = scmp.ne.s32.totalorder %s90, %s91
    %p103 = scmp.eq.s32.totalorder %s16, 1
    %p104 = por %p102, %p103
    %p106 = scmp.ne.s32.totalorder %s91, %s105
    %p107 = scmp.eq.s32.totalorder %s16, 0
    %p108 = por %p106, %p107
    %s110 = sadd.s32 %s109, 1
    %p113 = scmp.eq.s32.totalorder %s10, 1
    %p114 = scmp.ne.s32.totalorder %s109, %s111
    %p115 = scmp.eq.s32.totalorder %s10, 0
    %p116 = por %p114, %p115
    %p117 = scmp.ne.s32.totalorder %s109, %s111
    %p118 = scmp.eq.s32.totalorder %s15, 1
    %p119 = por %p117, %p118
    %p120 = scmp.ne.s32.totalorder %s111, %s112
    %p121 = scmp.eq.s32.totalorder %s15, 0
    %p122 = por %p120, %p121
    %p123 = scmp.ne.s32.totalorder %s111, %s112
    %p124 = scmp.eq.s32.totalorder %s16, 1
    %p125 = por %p123, %p124
    %p127 = scmp.ne.s32.totalorder %s112, %s126
    %p128 = scmp.eq.s32.totalorder %s16, 0
    %p129 = por %p127, %p128
    %s130 = ssub.s32 %s17, %s29
    %s131 = ssub.s32 %s18, %s25
    %s132 = sor.u32 %s130, %s131
    %p133 = scmp.eq.s32.totalorder %s132, 0
    %s135 = sadd.s32 %s134, 1
    %s136 = scalar_select %p133, %s134, %s135
    %p139 = pneg %p133
    %p140 = scmp.eq.s32.totalorder %s10, 1
    %p141 = por %p139, %p140
    %p142 = scmp.ne.s32.totalorder %s134, %s137
    %p143 = scmp.eq.s32.totalorder %s10, 0
    %p144 = por %p142, %p143
    %p145 = scmp.ne.s32.totalorder %s134, %s137
    %p146 = scmp.eq.s32.totalorder %s15, 1
    %p147 = por %p145, %p146
    %p148 = scmp.ne.s32.totalorder %s137, %s138
    %p149 = scmp.eq.s32.totalorder %s15, 0
    %p150 = por %p148, %p149
    %p151 = scmp.ne.s32.totalorder %s137, %s138
    %p152 = scmp.eq.s32.totalorder %s16, 1
    %p153 = por %p151, %p152
    %p155 = scmp.ne.s32.totalorder %s138, %s154
    %p156 = scmp.eq.s32.totalorder %s16, 0
    %p157 = por %p155, %p156
    %p158 = scmp.le.s32.totalorder 1, %s10
    %p159 = scmp.lt.s32.totalorder %s10, 3
    %p160 = pnand %p158, %p159
    %p161 = pneg %p160
    // Predicated region
    $region9: #{unet_forward.21} parent=5 // pred_check
      _
    $region10: #{unet_forward.21} parent=5 // pred_check_branch
      %163 = sbr.rel (%p160) target = $region12
    $region11: #{unet_forward.21} parent=5 // pred_region
      %s164 = ssub.s32 %s10, 1
      // Predicated region
      $region13: #{unet_forward.21} parent=11 // pred_check
        %p165 = pneg %p101
      $region14: #{unet_forward.21} parent=11 // pred_check_branch
        %167 = sbr.rel (%p165) target = $region16
      $region15: #{unet_forward.21} parent=11 // pred_region
        _
      $region16: #{unet_forward.21} parent=11 // pred_fallthru
        _
      // Predicated region
      $region17: #{unet_forward.21} parent=11 // pred_check
        %p168 = pneg %p122
      $region18: #{unet_forward.21} parent=11 // pred_check_branch
        %170 = sbr.rel (%p168) target = $region20
      $region19: #{unet_forward.21} parent=11 // pred_region
        _
      $region20: #{unet_forward.21} parent=11 // pred_fallthru
        _
    $region12: #{unet_forward.21} parent=5 // pred_fallthru
      _
    %p171 = scmp.lt.s32.totalorder %s10, 2
    // Predicated region
    $region21: #{unet_forward.21} parent=5 // pred_check
      %p172 = pneg %p171
    $region22: #{unet_forward.21} parent=5 // pred_check_branch
      %174 = sbr.rel (%p172) target = $region24
    $region23: #{unet_forward.21} parent=5 // pred_region
      // Predicated region
      $region25: #{unet_forward.21} parent=23 // pred_check
        %p175 = pneg %p44
      $region26: #{unet_forward.21} parent=23 // pred_check_branch
        %177 = sbr.rel (%p175) target = $region28
      $region27: #{unet_forward.21} parent=23 // pred_region
        %p178 = scmp.lt.s32.totalorder %s17, 1
        %s179 = scalar_select %p178, %s17, 1
        %p180 = scmp.lt.s32.totalorder %s18, 1
        %s181 = scalar_select %p180, %s18, 1
        %s182 = smul.addr %s179, 2
        %s183 = sadd.s32 %s181, %s182
        %s184 = scalar_lea.vmem %s0, %s183
      $region28: #{unet_forward.21} parent=23 // pred_fallthru
        _
      // Predicated region
      $region29: #{unet_forward.21} parent=23 // pred_check
        %p185 = pneg %p74
      $region30: #{unet_forward.21} parent=23 // pred_check_branch
        %187 = sbr.rel (%p185) target = $region32
      $region31: #{unet_forward.21} parent=23 // pred_region
        %s188 = sadd.s32 %s18, 1
        %p189 = scmp.lt.s32.totalorder %s17, 1
        %s190 = scalar_select %p189, %s17, 1
        %p191 = scmp.lt.s32.totalorder %s188, 1
        %s192 = scalar_select %p191, %s188, 1
        %s193 = smul.addr %s190, 2
        %s194 = sadd.s32 %s192, %s193
        %s195 = scalar_lea.vmem %s1, %s194
        %s196 = sadd.s32 %s18, 1
      $region32: #{unet_forward.21} parent=23 // pred_fallthru
        _
    $region24: #{unet_forward.21} parent=5 // pred_fallthru
      _
    %p197 = scmp.le.s32.totalorder 1, %s10
    %p198 = scmp.lt.s32.totalorder %s10, 3
    %p199 = pnand %p197, %p198
    %p200 = pneg %p199
    // Predicated region
    $region33: #{unet_forward.21} parent=5 // pred_check
      _
    $region34: #{unet_forward.21} parent=5 // pred_check_branch
      %202 = sbr.rel (%p199) target = $region36
    $region35: #{unet_forward.21} parent=5 // pred_region
      %s203 = ssub.s32 %s10, 1
      %p204 = scmp.lt.s32.totalorder %s19, 1
      %s205 = scalar_select %p204, %s19, 1
      %p206 = scmp.lt.s32.totalorder %s20, 1
      %s207 = scalar_select %p206, %s20, 1
      %s208 = smul.addr %s205, 2
      %s209 = sadd.s32 %s207, %s208
      %s210 = scalar_lea.vmem %s0, %s209
      %p211 = pneg %p50
      %p212 = pneg %p47
      %s213 = sadd.s32 %s20, 1
      %p214 = scmp.lt.s32.totalorder %s19, 1
      %s215 = scalar_select %p214, %s19, 1
      %p216 = scmp.lt.s32.totalorder %s213, 1
      %s217 = scalar_select %p216, %s213, 1
      %s218 = smul.addr %s215, 2
      %s219 = sadd.s32 %s217, %s218
      %s220 = scalar_lea.vmem %s1, %s219
      %p221 = pneg %p80
      %p222 = pneg %p77
      %p223 = pneg %p101
      %p224 = pneg %p98
      %p225 = pneg %p122
      %p226 = pneg %p119
      %p227 = pneg %p150
      %p228 = pneg %p147
      %p229 = scmp.lt.s32.totalorder %s19, 1
      %s230 = scalar_select %p229, %s19, 1
      %p231 = scmp.lt.s32.totalorder %s20, 0
      %s232 = scalar_select %p231, %s20, 0
      %s233 = smul.addr %s232, 2
      %s234 = smul.addr %s230, 2
      %s235 = sadd.s32 %s233, %s234
      %s236 = scalar_lea.vmem %s4, %s235
      %p237 = scmp.lt.s32.totalorder %s19, 1
      %s238 = scalar_select %p237, %s19, 1
      %p239 = scmp.lt.s32.totalorder %s20, 1
      %s240 = scalar_select %p239, %s20, 1
      %s241 = smul.addr %s238, 2
      %s242 = sadd.s32 %s240, %s241
      %s243 = scalar_lea.vmem %s0, %s242
      %s244 = sadd.s32 %s20, 1
      %p245 = scmp.lt.s32.totalorder %s19, 1
      %s246 = scalar_select %p245, %s19, 1
      %p247 = scmp.lt.s32.totalorder %s244, 1
      %s248 = scalar_select %p247, %s244, 1
      %s249 = smul.addr %s246, 2
      %s250 = sadd.s32 %s248, %s249
      %s251 = scalar_lea.vmem %s1, %s250
      %s252 = sadd.s32 %s20, 1
      %p253 = scmp.lt.s32.totalorder %s19, 1
      %s254 = scalar_select %p253, %s19, 1
      %p255 = scmp.lt.s32.totalorder %s20, 0
      %s256 = scalar_select %p255, %s20, 0
      %s257 = smul.addr %s256, 2
      %s258 = smul.addr %s254, 2
      %s259 = sadd.s32 %s257, %s258
      %s260 = scalar_lea.vmem %s4, %s259
      %v262 = vld [vmem:[%s243] sm:$0x1]
      %v263 = vld [vmem:[%s251] sm:$0x1]
      %v264 = vld [vmem:[%s2] sm:$0xff]
      %v265 = vld [vmem:[%s2 + $0x8] sm:$0xff]
      %v266 = vld [vmem:[%s2 + $0x10] sm:$0xff]
      %v267 = vld [vmem:[%s2 + $0x18] sm:$0xff]
      %v268 = vld [vmem:[%s2 + $0x20] sm:$0xff]
      %v269 = vld [vmem:[%s2 + $0x28] sm:$0xff]
      %v270 = vld [vmem:[%s2 + $0x30] sm:$0xff]
      %v271 = vld [vmem:[%s2 + $0x38] sm:$0xff]
      %v272 = vld [vmem:[%s2 + $0x40] sm:$0xff]
      %v273 = vld [vmem:[%s2 + $0x48] sm:$0xff]
      %v274 = vld [vmem:[%s2 + $0x50] sm:$0xff]
      %v275 = vld [vmem:[%s2 + $0x58] sm:$0xff]
      %v276 = vld [vmem:[%s2 + $0x60] sm:$0xff]
      %v277 = vld [vmem:[%s2 + $0x68] sm:$0xff]
      %v278 = vld [vmem:[%s2 + $0x70] sm:$0xff]
      %v279 = vld [vmem:[%s2 + $0x78] sm:$0xff]
      %v280 = vld [vmem:[%s2 + $0x80] sm:$0xff]
      %v281 = vld [vmem:[%s2 + $0x88] sm:$0xff]
      %v282 = vld [vmem:[%s2 + $0x90] sm:$0xff]
      %v283 = vld [vmem:[%s2 + $0x98] sm:$0xff]
      %v284 = vld [vmem:[%s2 + $0xa0] sm:$0xff]
      %v285 = vld [vmem:[%s2 + $0xa8] sm:$0xff]
      %v286 = vld [vmem:[%s2 + $0xb0] sm:$0xff]
      %v287 = vld [vmem:[%s2 + $0xb8] sm:$0xff]
      %v288 = vld [vmem:[%s2 + $0xc0] sm:$0xff]
      %v289 = vld [vmem:[%s2 + $0xc8] sm:$0xff]
      %v290 = vld [vmem:[%s2 + $0xd0] sm:$0xff]
      %v291 = vld [vmem:[%s2 + $0xd8] sm:$0xff]
      %v292 = vld [vmem:[%s2 + $0xe0] sm:$0xff]
      %v293 = vld [vmem:[%s2 + $0xe8] sm:$0xff]
      %v294 = vld [vmem:[%s2 + $0xf0] sm:$0xff]
      %v295 = vld [vmem:[%s2 + $0xf8] sm:$0xff]
      %v298 = vunpack.c.l.s4 1966171168
      %v299 = vunpack.c.0.s8 %v298
      %v300 = vlaneseq
      %v301 = vshrl.u32 %v300, 7
      %v302 = vsub.s32 %v299, %v301
      %v303 = vrot.slane %v262, %v302
      %v305 = vunpack.c.l.s4 1966171168
      %v306 = vunpack.c.0.s8 %v305
      %v307 = vlaneseq
      %v308 = vshrl.u32 %v307, 7
      %v309 = vsub.s32 %v306, %v308
      %v310 = vrot.slane %v303, %v309
      %v312 = vshrl.u32 %v310, 16
      %v331 = vunpack.c.l.b16 %v280
      %v332 = vunpack.c.h.b16 %v280
      %v333 = vunpack.c.l.b16 %v281
      %v334 = vunpack.c.h.b16 %v281
      %v335 = vunpack.c.l.b16 %v282
      %v336 = vunpack.c.h.b16 %v282
      %v337 = vunpack.c.l.b16 %v283
      %v338 = vunpack.c.h.b16 %v283
      %v339 = vunpack.c.l.b16 %v284
      %v340 = vunpack.c.h.b16 %v284
      %v341 = vunpack.c.l.b16 %v285
      %v342 = vunpack.c.h.b16 %v285
      %v343 = vunpack.c.l.b16 %v286
      %v344 = vunpack.c.h.b16 %v286
      %v345 = vunpack.c.l.b16 %v287
      %v346 = vunpack.c.h.b16 %v287
      %v347 = vunpack.c.l.b16 %v288
      %v348 = vunpack.c.h.b16 %v288
      %v349 = vunpack.c.l.b16 %v289
      %v350 = vunpack.c.h.b16 %v289
      %v351 = vunpack.c.l.b16 %v290
      %v352 = vunpack.c.h.b16 %v290
      %v353 = vunpack.c.l.b16 %v291
      %v354 = vunpack.c.h.b16 %v291
      %v355 = vunpack.c.l.b16 %v292
      %v356 = vunpack.c.h.b16 %v292
      %v357 = vunpack.c.l.b16 %v293
      %v358 = vunpack.c.h.b16 %v293
      %v359 = vunpack.c.l.b16 %v294
      %v360 = vunpack.c.h.b16 %v294
      %v361 = vunpack.c.l.b16 %v295
      %v362 = vunpack.c.h.b16 %v295
      %v363 = vpack.c.b16 %v333, %v331
      %v364 = vpack.c.b16 %v334, %v332
      %v365 = vpack.c.b16 %v337, %v335
      %v366 = vpack.c.b16 %v338, %v336
      %v367 = vpack.c.b16 %v341, %v339
      %v368 = vpack.c.b16 %v342, %v340
      %v369 = vpack.c.b16 %v345, %v343
      %v370 = vpack.c.b16 %v346, %v344
      %v371 = vpack.c.b16 %v349, %v347
      %v372 = vpack.c.b16 %v350, %v348
      %v373 = vpack.c.b16 %v353, %v351
      %v374 = vpack.c.b16 %v354, %v352
      %v375 = vpack.c.b16 %v357, %v355
      %v376 = vpack.c.b16 %v358, %v356
      %v377 = vpack.c.b16 %v361, %v359
      %v378 = vpack.c.b16 %v362, %v360
      %395 = vmatprep.subr.bf16.mxu0 %v364
      %396 = vmatpush1.bf16.msra.mxu0 %v363
      %397 = vmatprep.subr.bf16.mxu0 %v366
      %398 = vmatpush1.bf16.msra.mxu0 %v365
      %399 = vmatprep.subr.bf16.mxu0 %v368
      %400 = vmatpush1.bf16.msra.mxu0 %v367
      %401 = vmatprep.subr.bf16.mxu0 %v370
      %402 = vmatpush1.bf16.msra.mxu0 %v369
      %403 = vmatprep.subr.bf16.mxu0 %v372
      %404 = vmatpush1.bf16.msra.mxu0 %v371
      %405 = vmatprep.subr.bf16.mxu0 %v374
      %406 = vmatpush1.bf16.msra.mxu0 %v373
      %407 = vmatprep.subr.bf16.mxu0 %v376
      %408 = vmatpush1.bf16.msra.mxu0 %v375
      %409 = vmatprep.subr.bf16.mxu0 %v378
      %410 = vmatpush1.bf16.msra.mxu0 %v377
      %411 = vmatprep.subr.bf16.mxu0 0
      %412 = vmatpush1.bf16.msra.mxu0 0
      %413 = vmatprep.subr.bf16.mxu0 0
      %414 = vmatpush1.bf16.msra.mxu0 0
      %415 = vmatprep.subr.bf16.mxu0 0
      %416 = vmatpush1.bf16.msra.mxu0 0
      %417 = vmatprep.subr.bf16.mxu0 0
      %418 = vmatpush1.bf16.msra.mxu0 0
      %419 = vmatprep.subr.bf16.mxu0 0
      %420 = vmatpush1.bf16.msra.mxu0 0
      %421 = vmatprep.subr.bf16.mxu0 0
      %422 = vmatpush1.bf16.msra.mxu0 0
      %423 = vmatprep.subr.bf16.mxu0 0
      %424 = vmatpush1.bf16.msra.mxu0 0
      %425 = vmatprep.subr.bf16.mxu0 0
      %426 = vmatpush1.bf16.msra.mxu0 0
      %427 = vmatprep.mubr.bf16.mxu0 0
      %428 = vmatmul.mubr.bf16.gmra.mrb[0].mxu0 %v312
      %v429 = vpop.f32.mrb[0].mxu0
      %v430 = vadd.f32 0.0, %v429
      %v431 = vpop.f32.mrb[0].mxu0
      %v432 = vadd.f32 0.0, %v431
      %v433 = vpop.f32.mrb[0].mxu0
      %v434 = vpop.f32.mrb[0].mxu0
      %435 = vdwg.mxu0
      %v452 = vunpack.c.l.b16 %v264
      %v453 = vunpack.c.h.b16 %v264
      %v454 = vunpack.c.l.b16 %v265
      %v455 = vunpack.c.h.b16 %v265
      %v456 = vunpack.c.l.b16 %v266
      %v457 = vunpack.c.h.b16 %v266
      %v458 = vunpack.c.l.b16 %v267
      %v459 = vunpack.c.h.b16 %v267
      %v460 = vunpack.c.l.b16 %v268
      %v461 = vunpack.c.h.b16 %v268
      %v462 = vunpack.c.l.b16 %v269
      %v463 = vunpack.c.h.b16 %v269
      %v464 = vunpack.c.l.b16 %v270
      %v465 = vunpack.c.h.b16 %v270
      %v466 = vunpack.c.l.b16 %v271
      %v467 = vunpack.c.h.b16 %v271
      %v468 = vunpack.c.l.b16 %v272
      %v469 = vunpack.c.h.b16 %v272
      %v470 = vunpack.c.l.b16 %v273
      %v471 = vunpack.c.h.b16 %v273
      %v472 = vunpack.c.l.b16 %v274
      %v473 = vunpack.c.h.b16 %v274
      %v474 = vunpack.c.l.b16 %v275
      %v475 = vunpack.c.h.b16 %v275
      %v476 = vunpack.c.l.b16 %v276
      %v477 = vunpack.c.h.b16 %v276
      %v478 = vunpack.c.l.b16 %v277
      %v479 = vunpack.c.h.b16 %v277
      %v480 = vunpack.c.l.b16 %v278
      %v481 = vunpack.c.h.b16 %v278
      %v482 = vunpack.c.l.b16 %v279
      %v483 = vunpack.c.h.b16 %v279
      %v484 = vpack.c.b16 %v454, %v452
      %v485 = vpack.c.b16 %v455, %v453
      %v486 = vpack.c.b16 %v458, %v456
      %v487 = vpack.c.b16 %v459, %v457
      %v488 = vpack.c.b16 %v462, %v460
      %v489 = vpack.c.b16 %v463, %v461
      %v490 = vpack.c.b16 %v466, %v464
      %v491 = vpack.c.b16 %v467, %v465
      %v492 = vpack.c.b16 %v470, %v468
      %v493 = vpack.c.b16 %v471, %v469
      %v494 = vpack.c.b16 %v474, %v472
      %v495 = vpack.c.b16 %v475, %v473
      %v496 = vpack.c.b16 %v478, %v476
      %v497 = vpack.c.b16 %v479, %v477
      %v498 = vpack.c.b16 %v482, %v480
      %v499 = vpack.c.b16 %v483, %v481
      %516 = vmatprep.subr.bf16.mxu0 %v485
      %517 = vmatpush1.bf16.msra.mxu0 %v484
      %518 = vmatprep.subr.bf16.mxu0 %v487
      %519 = vmatpush1.bf16.msra.mxu0 %v486
      %520 = vmatprep.subr.bf16.mxu0 %v489
      %521 = vmatpush1.bf16.msra.mxu0 %v488
      %522 = vmatprep.subr.bf16.mxu0 %v491
      %523 = vmatpush1.bf16.msra.mxu0 %v490
      %524 = vmatprep.subr.bf16.mxu0 %v493
      %525 = vmatpush1.bf16.msra.mxu0 %v492
      %526 = vmatprep.subr.bf16.mxu0 %v495
      %527 = vmatpush1.bf16.msra.mxu0 %v494
      %528 = vmatprep.subr.bf16.mxu0 %v497
      %529 = vmatpush1.bf16.msra.mxu0 %v496
      %530 = vmatprep.subr.bf16.mxu0 %v499
      %531 = vmatpush1.bf16.msra.mxu0 %v498
      %532 = vmatprep.subr.bf16.mxu0 0
      %533 = vmatpush1.bf16.msra.mxu0 0
      %534 = vmatprep.subr.bf16.mxu0 0
      %535 = vmatpush1.bf16.msra.mxu0 0
      %536 = vmatprep.subr.bf16.mxu0 0
      %537 = vmatpush1.bf16.msra.mxu0 0
      %538 = vmatprep.subr.bf16.mxu0 0
      %539 = vmatpush1.bf16.msra.mxu0 0
      %540 = vmatprep.subr.bf16.mxu0 0
      %541 = vmatpush1.bf16.msra.mxu0 0
      %542 = vmatprep.subr.bf16.mxu0 0
      %543 = vmatpush1.bf16.msra.mxu0 0
      %544 = vmatprep.subr.bf16.mxu0 0
      %545 = vmatpush1.bf16.msra.mxu0 0
      %546 = vmatprep.subr.bf16.mxu0 0
      %547 = vmatpush1.bf16.msra.mxu0 0
      %548 = vmatprep.mubr.bf16.mxu0 0
      %549 = vmatmul.mubr.bf16.gmra.mrb[0].mxu0 %v262
      %v550 = vpop.f32.mrb[0].mxu0
      %v551 = vadd.f32 %v430, %v550
      %v552 = vpop.f32.mrb[0].mxu0
      %v553 = vadd.f32 %v432, %v552
      %v554 = vpop.f32.mrb[0].mxu0
      %v555 = vpop.f32.mrb[0].mxu0
      %556 = vdwg.mxu0
      %v557 = vld [vmem:[%s2 + $0x100] sm:$0xff]
      %v558 = vld [vmem:[%s2 + $0x108] sm:$0xff]
      %v559 = vld [vmem:[%s2 + $0x110] sm:$0xff]
      %v560 = vld [vmem:[%s2 + $0x118] sm:$0xff]
      %v561 = vld [vmem:[%s2 + $0x120] sm:$0xff]
      %v562 = vld [vmem:[%s2 + $0x128] sm:$0xff]
      %v563 = vld [vmem:[%s2 + $0x130] sm:$0xff]
      %v564 = vld [vmem:[%s2 + $0x138] sm:$0xff]
      %v565 = vld [vmem:[%s2 + $0x140] sm:$0xff]
      %v566 = vld [vmem:[%s2 + $0x148] sm:$0xff]
      %v567 = vld [vmem:[%s2 + $0x150] sm:$0xff]
      %v568 = vld [vmem:[%s2 + $0x158] sm:$0xff]
      %v569 = vld [vmem:[%s2 + $0x160] sm:$0xff]
      %v570 = vld [vmem:[%s2 + $0x168] sm:$0xff]
      %v571 = vld [vmem:[%s2 + $0x170] sm:$0xff]
      %v572 = vld [vmem:[%s2 + $0x178] sm:$0xff]
      %v589 = vunpack.c.l.b16 %v557
      %v590 = vunpack.c.h.b16 %v557
      %v591 = vunpack.c.l.b16 %v558
      %v592 = vunpack.c.h.b16 %v558
      %v593 = vunpack.c.l.b16 %v559
      %v594 = vunpack.c.h.b16 %v559
      %v595 = vunpack.c.l.b16 %v560
      %v596 = vunpack.c.h.b16 %v560
      %v597 = vunpack.c.l.b16 %v561
      %v598 = vunpack.c.h.b16 %v561
      %v599 = vunpack.c.l.b16 %v562
      %v600 = vunpack.c.h.b16 %v562
      %v601 = vunpack.c.l.b16 %v563
      %v602 = vunpack.c.h.b16 %v563
      %v603 = vunpack.c.l.b16 %v564
      %v604 = vunpack.c.h.b16 %v564
      %v605 = vunpack.c.l.b16 %v565
      %v606 = vunpack.c.h.b16 %v565
      %v607 = vunpack.c.l.b16 %v566
      %v608 = vunpack.c.h.b16 %v566
      %v609 = vunpack.c.l.b16 %v567
      %v610 = vunpack.c.h.b16 %v567
      %v611 = vunpack.c.l.b16 %v568
      %v612 = vunpack.c.h.b16 %v568
      %v613 = vunpack.c.l.b16 %v569
      %v614 = vunpack.c.h.b16 %v569
      %v615 = vunpack.c.l.b16 %v570
      %v616 = vunpack.c.h.b16 %v570
      %v617 = vunpack.c.l.b16 %v571
      %v618 = vunpack.c.h.b16 %v571
      %v619 = vunpack.c.l.b16 %v572
      %v620 = vunpack.c.h.b16 %v572
      %v621 = vpack.c.b16 %v591, %v589
      %v622 = vpack.c.b16 %v592, %v590
      %v623 = vpack.c.b16 %v595, %v593
      %v624 = vpack.c.b16 %v596, %v594
      %v625 = vpack.c.b16 %v599, %v597
      %v626 = vpack.c.b16 %v600, %v598
      %v627 = vpack.c.b16 %v603, %v601
      %v628 = vpack.c.b16 %v604, %v602
      %v629 = vpack.c.b16 %v607, %v605
      %v630 = vpack.c.b16 %v608, %v606
      %v631 = vpack.c.b16 %v611, %v609
      %v632 = vpack.c.b16 %v612, %v610
      %v633 = vpack.c.b16 %v615, %v613
      %v634 = vpack.c.b16 %v616, %v614
      %v635 = vpack.c.b16 %v619, %v617
      %v636 = vpack.c.b16 %v620, %v618
      %653 = vmatprep.subr.bf16.mxu0 %v622
      %654 = vmatpush1.bf16.msra.mxu0 %v621
      %655 = vmatprep.subr.bf16.mxu0 %v624
      %656 = vmatpush1.bf16.msra.mxu0 %v623
      %657 = vmatprep.subr.bf16.mxu0 %v626
      %658 = vmatpush1.bf16.msra.mxu0 %v625
      %659 = vmatprep.subr.bf16.mxu0 %v628
      %660 = vmatpush1.bf16.msra.mxu0 %v627
      %661 = vmatprep.subr.bf16.mxu0 %v630
      %662 = vmatpush1.bf16.msra.mxu0 %v629
      %663 = vmatprep.subr.bf16.mxu0 %v632
      %664 = vmatpush1.bf16.msra.mxu0 %v631
      %665 = vmatprep.subr.bf16.mxu0 %v634
      %666 = vmatpush1.bf16.msra.mxu0 %v633
      %667 = vmatprep.subr.bf16.mxu0 %v636
      %668 = vmatpush1.bf16.msra.mxu0 %v635
      %669 = vmatprep.subr.bf16.mxu0 0
      %670 = vmatpush1.bf16.msra.mxu0 0
      %671 = vmatprep.subr.bf16.mxu0 0
      %672 = vmatpush1.bf16.msra.mxu0 0
      %673 = vmatprep.subr.bf16.mxu0 0
      %674 = vmatpush1.bf16.msra.mxu0 0
      %675 = vmatprep.subr.bf16.mxu0 0
      %676 = vmatpush1.bf16.msra.mxu0 0
      %677 = vmatprep.subr.bf16.mxu0 0
      %678 = vmatpush1.bf16.msra.mxu0 0
      %679 = vmatprep.subr.bf16.mxu0 0
      %680 = vmatpush1.bf16.msra.mxu0 0
      %681 = vmatprep.subr.bf16.mxu0 0
      %682 = vmatpush1.bf16.msra.mxu0 0
      %683 = vmatprep.subr.bf16.mxu0 0
      %684 = vmatpush1.bf16.msra.mxu0 0
      %685 = vmatprep.mubr.bf16.mxu0 0
      %686 = vmatmul.mubr.bf16.gmra.mrb[0].mxu0 %v263
      %v687 = vpop.f32.mrb[0].mxu0
      %v688 = vadd.f32 0.0, %v687
      %v689 = vpop.f32.mrb[0].mxu0
      %v690 = vadd.f32 0.0, %v689
      %v691 = vpop.f32.mrb[0].mxu0
      %v692 = vpop.f32.mrb[0].mxu0
      %693 = vdwg.mxu0
      %v694 = vadd.f32 %v551, %v688
      %v695 = vadd.f32 %v553, %v690
      %v696 = vld [vmem:[%s2 + $0x180] sm:$0xff]
      %v697 = vld [vmem:[%s2 + $0x188] sm:$0xff]
      %v698 = vld [vmem:[%s2 + $0x190] sm:$0xff]
      %v699 = vld [vmem:[%s2 + $0x198] sm:$0xff]
      %v700 = vld [vmem:[%s2 + $0x1a0] sm:$0xff]
      %v701 = vld [vmem:[%s2 + $0x1a8] sm:$0xff]
      %v702 = vld [vmem:[%s2 + $0x1b0] sm:$0xff]
      %v703 = vld [vmem:[%s2 + $0x1b8] sm:$0xff]
      %v704 = vld [vmem:[%s2 + $0x1c0] sm:$0xff]
      %v705 = vld [vmem:[%s2 + $0x1c8] sm:$0xff]
      %v706 = vld [vmem:[%s2 + $0x1d0] sm:$0xff]
      %v707 = vld [vmem:[%s2 + $0x1d8] sm:$0xff]
      %v708 = vld [vmem:[%s2 + $0x1e0] sm:$0xff]
      %v709 = vld [vmem:[%s2 + $0x1e8] sm:$0xff]
      %v710 = vld [vmem:[%s2 + $0x1f0] sm:$0xff]
      %v711 = vld [vmem:[%s2 + $0x1f8] sm:$0xff]
      %v714 = vunpack.c.l.s4 1966171168
      %v715 = vunpack.c.0.s8 %v714
      %v716 = vlaneseq
      %v717 = vshrl.u32 %v716, 7
      %v718 = vsub.s32 %v715, %v717
      %v719 = vrot.slane %v263, %v718
      %v721 = vunpack.c.l.s4 1966171168
      %v722 = vunpack.c.0.s8 %v721
      %v723 = vlaneseq
      %v724 = vshrl.u32 %v723, 7
      %v725 = vsub.s32 %v722, %v724
      %v726 = vrot.slane %v719, %v725
      %v728 = vshrl.u32 %v726, 16
      %v747 = vunpack.c.l.b16 %v696
      %v748 = vunpack.c.h.b16 %v696
      %v749 = vunpack.c.l.b16 %v697
      %v750 = vunpack.c.h.b16 %v697
      %v751 = vunpack.c.l.b16 %v698
      %v752 = vunpack.c.h.b16 %v698
      %v753 = vunpack.c.l.b16 %v699
      %v754 = vunpack.c.h.b16 %v699
      %v755 = vunpack.c.l.b16 %v700
      %v756 = vunpack.c.h.b16 %v700
      %v757 = vunpack.c.l.b16 %v701
      %v758 = vunpack.c.h.b16 %v701
      %v759 = vunpack.c.l.b16 %v702
      %v760 = vunpack.c.h.b16 %v702
      %v761 = vunpack.c.l.b16 %v703
      %v762 = vunpack.c.h.b16 %v703
      %v763 = vunpack.c.l.b16 %v704
      %v764 = vunpack.c.h.b16 %v704
      %v765 = vunpack.c.l.b16 %v705
      %v766 = vunpack.c.h.b16 %v705
      %v767 = vunpack.c.l.b16 %v706
      %v768 = vunpack.c.h.b16 %v706
      %v769 = vunpack.c.l.b16 %v707
      %v770 = vunpack.c.h.b16 %v707
      %v771 = vunpack.c.l.b16 %v708
      %v772 = vunpack.c.h.b16 %v708
      %v773 = vunpack.c.l.b16 %v709
      %v774 = vunpack.c.h.b16 %v709
      %v775 = vunpack.c.l.b16 %v710
      %v776 = vunpack.c.h.b16 %v710
      %v777 = vunpack.c.l.b16 %v711
      %v778 = vunpack.c.h.b16 %v711
      %v779 = vpack.c.b16 %v749, %v747
      %v780 = vpack.c.b16 %v750, %v748
      %v781 = vpack.c.b16 %v753, %v751
      %v782 = vpack.c.b16 %v754, %v752
      %v783 = vpack.c.b16 %v757, %v755
      %v784 = vpack.c.b16 %v758, %v756
      %v785 = vpack.c.b16 %v761, %v759
      %v786 = vpack.c.b16 %v762, %v760
      %v787 = vpack.c.b16 %v765, %v763
      %v788 = vpack.c.b16 %v766, %v764
      %v789 = vpack.c.b16 %v769, %v767
      %v790 = vpack.c.b16 %v770, %v768
      %v791 = vpack.c.b16 %v773, %v771
      %v792 = vpack.c.b16 %v774, %v772
      %v793 = vpack.c.b16 %v777, %v775
      %v794 = vpack.c.b16 %v778, %v776
      %811 = vmatprep.subr.bf16.mxu0 %v780
      %812 = vmatpush1.bf16.msra.mxu0 %v779
      %813 = vmatprep.subr.bf16.mxu0 %v782
      %814 = vmatpush1.bf16.msra.mxu0 %v781
      %815 = vmatprep.subr.bf16.mxu0 %v784
      %816 = vmatpush1.bf16.msra.mxu0 %v783
      %817 = vmatprep.subr.bf16.mxu0 %v786
      %818 = vmatpush1.bf16.msra.mxu0 %v785
      %819 = vmatprep.subr.bf16.mxu0 %v788
      %820 = vmatpush1.bf16.msra.mxu0 %v787
      %821 = vmatprep.subr.bf16.mxu0 %v790
      %822 = vmatpush1.bf16.msra.mxu0 %v789
      %823 = vmatprep.subr.bf16.mxu0 %v792
      %824 = vmatpush1.bf16.msra.mxu0 %v791
      %825 = vmatprep.subr.bf16.mxu0 %v794
      %826 = vmatpush1.bf16.msra.mxu0 %v793
      %827 = vmatprep.subr.bf16.mxu0 0
      %828 = vmatpush1.bf16.msra.mxu0 0
      %829 = vmatprep.subr.bf16.mxu0 0
      %830 = vmatpush1.bf16.msra.mxu0 0
      %831 = vmatprep.subr.bf16.mxu0 0
      %832 = vmatpush1.bf16.msra.mxu0 0
      %833 = vmatprep.subr.bf16.mxu0 0
      %834 = vmatpush1.bf16.msra.mxu0 0
      %835 = vmatprep.subr.bf16.mxu0 0
      %836 = vmatpush1.bf16.msra.mxu0 0
      %837 = vmatprep.subr.bf16.mxu0 0
      %838 = vmatpush1.bf16.msra.mxu0 0
      %839 = vmatprep.subr.bf16.mxu0 0
      %840 = vmatpush1.bf16.msra.mxu0 0
      %841 = vmatprep.subr.bf16.mxu0 0
      %842 = vmatpush1.bf16.msra.mxu0 0
      %843 = vmatprep.mubr.bf16.mxu0 0
      %844 = vmatmul.mubr.bf16.gmra.mrb[0].mxu0 %v728
      %v845 = vpop.f32.mrb[0].mxu0
      %v846 = vadd.f32 0.0, %v845
      %v847 = vpop.f32.mrb[0].mxu0
      %v848 = vadd.f32 0.0, %v847
      %v849 = vpop.f32.mrb[0].mxu0
      %v850 = vpop.f32.mrb[0].mxu0
      %851 = vdwg.mxu0
      %v852 = vadd.f32 %v694, %v846
      %v853 = vadd.f32 %v695, %v848
      %v854 = vld [vmem:[%s3] sm:$0x3]
      %v856 = vlaneseq
      %v857 = vshrl.u32 %v856, 7
      %v858 = vsub.s32 0, %v857
      %v859 = vrot.slane %v854, %v858
      %v860 = vlaneseq
      %v861 = vshrl.u32 %v860, 7
      %v862 = vsub.s32 1, %v861
      %v863 = vrot.slane %v854, %v862
      %v866 = vadd.f32 %v852, %v859
      %v867 = vadd.f32 %v853, %v863
      %v868 = vmax.f32 %v866, 0.0
      %v869 = vmax.f32 %v867, 0.0
      %v870 = vpack.c.bf16 %v868, %v868
      %v871 = vpack.c.bf16 %v869, %v869
      %v874 = vcombine.low %v870, %v871
      %v876 = vunpack.c.l.s4 1966171168
      %v877 = vunpack.c.0.s8 %v876
      %v878 = vlaneseq
      %v879 = vshrl.u32 %v878, 7
      %v880 = vsub.s32 %v877, %v879
      %v881 = vrot.slane %v874, %v880
      %v883 = vunpack.c.l.s4 1966171168
      %v884 = vunpack.c.0.s8 %v883
      %v885 = vlaneseq
      %v886 = vshrl.u32 %v885, 7
      %v887 = vsub.s32 %v884, %v886
      %v888 = vrot.slane %v881, %v887
      %vm890 = vcmask 1040384
      %vm891 = vsmask.f32 256
      %vm892 = vmand %vm890, %vm891
      %vm893 = vcmask 1041409
      %vm894 = vsmask.f32 1280
      %vm895 = vmand %vm893, %vm894
      %vm896 = vmor %vm895, %vm892
      %v897 = vld [vmem:[%s260] sm:$0x3]
      %v898 = vsel %vm896, %v888, %v897
      %899 = vst [vmem:[%s260] sm:$0x3] %v898
      %p900 = scmp.lt.s32.totalorder %s19, 1
      %s901 = scalar_select %p900, %s19, 1
      %p902 = scmp.lt.s32.totalorder %s20, 0
      %s903 = scalar_select %p902, %s20, 0
      %s904 = smul.addr %s903, 2
      %s905 = smul.addr %s901, 2
      %s906 = sadd.s32 %s904, %s905
      %s907 = scalar_lea.vmem %s4, %s906
      // Predicated region
      $region37: #{unet_forward.21} parent=35 // pred_check
        %p908 = pneg %p147
      $region38: #{unet_forward.21} parent=35 // pred_check_branch
        %910 = sbr.rel (%p908) target = $region40
      $region39: #{unet_forward.21} parent=35 // pred_region
        _
      $region40: #{unet_forward.21} parent=35 // pred_fallthru
        _
    $region36: #{unet_forward.21} parent=5 // pred_fallthru
      _
    %p911 = scmp.le.s32.totalorder 2, %s10
    // Predicated region
    $region41: #{unet_forward.21} parent=5 // pred_check
      %p912 = pneg %p911
    $region42: #{unet_forward.21} parent=5 // pred_check_branch
      %914 = sbr.rel (%p912) target = $region44
    $region43: #{unet_forward.21} parent=5 // pred_region
      %s915 = ssub.s32 %s10, 2
      // Predicated region
      $region45: #{unet_forward.21} parent=43 // pred_check
        %p916 = pneg %p153
      $region46: #{unet_forward.21} parent=43 // pred_check_branch
        %918 = sbr.rel (%p916) target = $region48
      $region47: #{unet_forward.21} parent=43 // pred_region
        %p919 = scmp.lt.s32.totalorder %s21, 1
        %s920 = scalar_select %p919, %s21, 1
        %p921 = scmp.lt.s32.totalorder %s22, 0
        %s922 = scalar_select %p921, %s22, 0
        %s923 = smul.addr %s922, 2
        %s924 = smul.addr %s920, 2
        %s925 = sadd.s32 %s923, %s924
        %s926 = scalar_lea.vmem %s4, %s925
      $region48: #{unet_forward.21} parent=43 // pred_fallthru
        _
    $region44: #{unet_forward.21} parent=5 // pred_fallthru
      _
  $region6: #{unet_forward.21} parent=0 // loop_footer
    %s14 = sadd.s32 1, %s10
  $region7: #{unet_forward.21} parent=0 // loop_footer_branch
    %9 = sbr.rel target = $region3
  $region8: #{unet_forward.21} parent=0 // loop_exit
    _

// kernel: unet_forward.22
$region0: #{unet_forward.22}
  #allocation0 [shape = 'u32[]', space=smem, size = 0x4, offset = 0x4, fixed_abs, tag = 'smem constant byte address 0x4 - core index']
  #allocation1 [shape = 'u32[144,128]{1,0:T(1,128)}', space=vmem, size = 0x12000, scoped, tag = 'internal scratch']
  %s0 = inlined_call_operand.vmem [shape: bf16[2,3,3,64], index: 0, kind: input, shape index: {}, may-alias: {0,1}]
  %s1 = inlined_call_operand.vmem [shape: bf16[2,3,3,64], index: 1, kind: input, shape index: {}, may-alias: {0,1}]
  %s2 = inlined_call_operand.vmem [shape: bf16[256,128], index: 2, kind: input, shape index: {}]
  %s3 = inlined_call_operand.vmem [shape: f32[1,128], index: 3, kind: input, shape index: {}]
  %s4 = inlined_call_operand.vmem [shape: bf16[2,2,2,128], index: 4, kind: output, shape index: {}]
  %s5 = sld [smem:[#allocation0]]
  $region49: #{unet_forward.22} parent=0
    _
  %s7 = ssub.s32 1, %s5
  %s8 = scalar_select 0, %s7, %s5
  loop: start=0, step=1, limit=6
  $region2: #{unet_forward.22} parent=0 // loop_pre_header
    _
  $region3: #{unet_forward.22} parent=0 // loop_header
    %s10 = sphi 0, %s14
    %p11 = scmp.ge.s32.totalorder %s10, 6
    %s17 = sphi 0, %s29
    %s18 = sphi 0, %s25
    %s19 = sphi 0, %s17
    %s20 = sphi 0, %s18
    %s21 = sphi 0, %s19
    %s22 = sphi 0, %s20
    %s34 = sphi 0, %s36
    %s37 = sphi 0, %s34
    %s38 = sphi 0, %s37
    %s54 = sphi 0, %s38
    %s64 = sphi 0, %s66
    %s67 = sphi 0, %s64
    %s68 = sphi 0, %s67
    %s84 = sphi 0, %s68
    %s88 = sphi 0, %s88
    %s90 = sphi 0, %s88
    %s91 = sphi 0, %s90
    %s105 = sphi 0, %s91
    %s109 = sphi 0, %s109
    %s111 = sphi 0, %s109
    %s112 = sphi 0, %s111
    %s126 = sphi 0, %s112
    %s134 = sphi 0, %s136
    %s137 = sphi 0, %s134
    %s138 = sphi 0, %s137
    %s154 = sphi 0, %s138
  $region4: #{unet_forward.22} parent=0 // loop_header_branch
    %13 = sbr.rel (%p11) target = $region8
  $region5: #{unet_forward.22} parent=0 // loop_body
    %s15 = ssub.s32 %s10, 1
    %s16 = ssub.s32 %s10, 2
    %s23 = sadd.s32 1, %s18
    %p24 = scmp.ge.s32.totalorder %s23, 2
    %s25 = scalar_select %p24, 0, %s23
    %s26 = sadd.s32 1, %s17
    %s27 = scalar_select %p24, %s26, %s17
    %p28 = scmp.ge.s32.totalorder %s27, 2
    %s29 = scalar_select %p28, 0, %s27
    %s30 = ssub.s32 %s17, %s29
    %s31 = ssub.s32 %s18, %s25
    %s32 = sor.u32 %s30, %s31
    %p33 = scmp.eq.s32.totalorder %s32, 0
    %s35 = sadd.s32 %s34, 1
    %s36 = scalar_select %p33, %s34, %s35
    %p39 = pneg %p33
    %p40 = scmp.eq.s32.totalorder %s10, 3
    %p41 = por %p39, %p40
    %p42 = scmp.ne.s32.totalorder %s34, %s37
    %p43 = scmp.eq.s32.totalorder %s10, 0
    %p44 = por %p42, %p43
    %p45 = scmp.ne.s32.totalorder %s34, %s37
    %p46 = scmp.eq.s32.totalorder %s15, 3
    %p47 = por %p45, %p46
    %p48 = scmp.ne.s32.totalorder %s37, %s38
    %p49 = scmp.eq.s32.totalorder %s15, 0
    %p50 = por %p48, %p49
    %p51 = scmp.ne.s32.totalorder %s37, %s38
    %p52 = scmp.eq.s32.totalorder %s16, 3
    %p53 = por %p51, %p52
    %p55 = scmp.ne.s32.totalorder %s38, %s54
    %p56 = scmp.eq.s32.totalorder %s16, 0
    %p57 = por %p55, %p56
    %s58 = sadd.s32 %s18, 1
    %s59 = sadd.s32 %s25, 1
    %s60 = ssub.s32 %s17, %s29
    %s61 = ssub.s32 %s58, %s59
    %s62 = sor.u32 %s60, %s61
    %p63 = scmp.eq.s32.totalorder %s62, 0
    %s65 = sadd.s32 %s64, 1
    %s66 = scalar_select %p63, %s64, %s65
    %p69 = pneg %p63
    %p70 = scmp.eq.s32.totalorder %s10, 3
    %p71 = por %p69, %p70
    %p72 = scmp.ne.s32.totalorder %s64, %s67
    %p73 = scmp.eq.s32.totalorder %s10, 0
    %p74 = por %p72, %p73
    %p75 = scmp.ne.s32.totalorder %s64, %s67
    %p76 = scmp.eq.s32.totalorder %s15, 3
    %p77 = por %p75, %p76
    %p78 = scmp.ne.s32.totalorder %s67, %s68
    %p79 = scmp.eq.s32.totalorder %s15, 0
    %p80 = por %p78, %p79
    %p81 = scmp.ne.s32.totalorder %s67, %s68
    %p82 = scmp.eq.s32.totalorder %s16, 3
    %p83 = por %p81, %p82
    %p85 = scmp.ne.s32.totalorder %s68, %s84
    %p86 = scmp.eq.s32.totalorder %s16, 0
    %p87 = por %p85, %p86
    %s89 = sadd.s32 %s88, 1
    %p92 = scmp.eq.s32.totalorder %s10, 3
    %p93 = scmp.ne.s32.totalorder %s88, %s90
    %p94 = scmp.eq.s32.totalorder %s10, 0
    %p95 = por %p93, %p94
    %p96 = scmp.ne.s32.totalorder %s88, %s90
    %p97 = scmp.eq.s32.totalorder %s15, 3
    %p98 = por %p96, %p97
    %p99 = scmp.ne.s32.totalorder %s90, %s91
    %p100 = scmp.eq.s32.totalorder %s15, 0
    %p101 = por %p99, %p100
    %p102 = scmp.ne.s32.totalorder %s90, %s91
    %p103 = scmp.eq.s32.totalorder %s16, 3
    %p104 = por %p102, %p103
    %p106 = scmp.ne.s32.totalorder %s91, %s105
    %p107 = scmp.eq.s32.totalorder %s16, 0
    %p108 = por %p106, %p107
    %s110 = sadd.s32 %s109, 1
    %p113 = scmp.eq.s32.totalorder %s10, 3
    %p114 = scmp.ne.s32.totalorder %s109, %s111
    %p115 = scmp.eq.s32.totalorder %s10, 0
    %p116 = por %p114, %p115
    %p117 = scmp.ne.s32.totalorder %s109, %s111
    %p118 = scmp.eq.s32.totalorder %s15, 3
    %p119 = por %p117, %p118
    %p120 = scmp.ne.s32.totalorder %s111, %s112
    %p121 = scmp.eq.s32.totalorder %s15, 0
    %p122 = por %p120, %p121
    %p123 = scmp.ne.s32.totalorder %s111, %s112
    %p124 = scmp.eq.s32.totalorder %s16, 3
    %p125 = por %p123, %p124
    %p127 = scmp.ne.s32.totalorder %s112, %s126
    %p128 = scmp.eq.s32.totalorder %s16, 0
    %p129 = por %p127, %p128
    %s130 = ssub.s32 %s17, %s29
    %s131 = ssub.s32 %s18, %s25
    %s132 = sor.u32 %s130, %s131
    %p133 = scmp.eq.s32.totalorder %s132, 0
    %s135 = sadd.s32 %s134, 1
    %s136 = scalar_select %p133, %s134, %s135
    %p139 = pneg %p133
    %p140 = scmp.eq.s32.totalorder %s10, 3
    %p141 = por %p139, %p140
    %p142 = scmp.ne.s32.totalorder %s134, %s137
    %p143 = scmp.eq.s32.totalorder %s10, 0
    %p144 = por %p142, %p143
    %p145 = scmp.ne.s32.totalorder %s134, %s137
    %p146 = scmp.eq.s32.totalorder %s15, 3
    %p147 = por %p145, %p146
    %p148 = scmp.ne.s32.totalorder %s137, %s138
    %p149 = scmp.eq.s32.totalorder %s15, 0
    %p150 = por %p148, %p149
    %p151 = scmp.ne.s32.totalorder %s137, %s138
    %p152 = scmp.eq.s32.totalorder %s16, 3
    %p153 = por %p151, %p152
    %p155 = scmp.ne.s32.totalorder %s138, %s154
    %p156 = scmp.eq.s32.totalorder %s16, 0
    %p157 = por %p155, %p156
    %p158 = scmp.le.s32.totalorder 1, %s10
    %p159 = scmp.lt.s32.totalorder %s10, 5
    %p160 = pnand %p158, %p159
    %p161 = pneg %p160
    // Predicated region
    $region9: #{unet_forward.22} parent=5 // pred_check
      _
    $region10: #{unet_forward.22} parent=5 // pred_check_branch
      %163 = sbr.rel (%p160) target = $region12
    $region11: #{unet_forward.22} parent=5 // pred_region
      %s164 = ssub.s32 %s10, 1
      // Predicated region
      $region13: #{unet_forward.22} parent=11 // pred_check
        %p165 = pneg %p101
      $region14: #{unet_forward.22} parent=11 // pred_check_branch
        %167 = sbr.rel (%p165) target = $region16
      $region15: #{unet_forward.22} parent=11 // pred_region
        _
      $region16: #{unet_forward.22} parent=11 // pred_fallthru
        _
      // Predicated region
      $region17: #{unet_forward.22} parent=11 // pred_check
        %p168 = pneg %p122
      $region18: #{unet_forward.22} parent=11 // pred_check_branch
        %170 = sbr.rel (%p168) target = $region20
      $region19: #{unet_forward.22} parent=11 // pred_region
        _
      $region20: #{unet_forward.22} parent=11 // pred_fallthru
        _
    $region12: #{unet_forward.22} parent=5 // pred_fallthru
      _
    %p171 = scmp.lt.s32.totalorder %s10, 4
    // Predicated region
    $region21: #{unet_forward.22} parent=5 // pred_check
      %p172 = pneg %p171
    $region22: #{unet_forward.22} parent=5 // pred_check_branch
      %174 = sbr.rel (%p172) target = $region24
    $region23: #{unet_forward.22} parent=5 // pred_region
      // Predicated region
      $region25: #{unet_forward.22} parent=23 // pred_check
        %p175 = pneg %p44
      $region26: #{unet_forward.22} parent=23 // pred_check_branch
        %177 = sbr.rel (%p175) target = $region28
      $region27: #{unet_forward.22} parent=23 // pred_region
        %p178 = scmp.lt.s32.totalorder %s17, 1
        %s179 = scalar_select %p178, %s17, 1
        %p180 = scmp.lt.s32.totalorder %s18, 2
        %s181 = scalar_select %p180, %s18, 2
        %s182 = smul.addr %s179, 3
        %s183 = sadd.s32 %s181, %s182
        %s184 = smul.addr %s183, 2
        %s185 = scalar_lea.vmem %s0, %s184
      $region28: #{unet_forward.22} parent=23 // pred_fallthru
        _
      // Predicated region
      $region29: #{unet_forward.22} parent=23 // pred_check
        %p186 = pneg %p74
      $region30: #{unet_forward.22} parent=23 // pred_check_branch
        %188 = sbr.rel (%p186) target = $region32
      $region31: #{unet_forward.22} parent=23 // pred_region
        %s189 = sadd.s32 %s18, 1
        %p190 = scmp.lt.s32.totalorder %s17, 1
        %s191 = scalar_select %p190, %s17, 1
        %p192 = scmp.lt.s32.totalorder %s189, 2
        %s193 = scalar_select %p192, %s189, 2
        %s194 = smul.addr %s191, 3
        %s195 = sadd.s32 %s193, %s194
        %s196 = smul.addr %s195, 2
        %s197 = scalar_lea.vmem %s1, %s196
        %s198 = sadd.s32 %s18, 1
      $region32: #{unet_forward.22} parent=23 // pred_fallthru
        _
    $region24: #{unet_forward.22} parent=5 // pred_fallthru
      _
    %p199 = scmp.le.s32.totalorder 1, %s10
    %p200 = scmp.lt.s32.totalorder %s10, 5
    %p201 = pnand %p199, %p200
    %p202 = pneg %p201
    // Predicated region
    $region33: #{unet_forward.22} parent=5 // pred_check
      _
    $region34: #{unet_forward.22} parent=5 // pred_check_branch
      %204 = sbr.rel (%p201) target = $region36
    $region35: #{unet_forward.22} parent=5 // pred_region
      %s205 = ssub.s32 %s10, 1
      %p206 = scmp.lt.s32.totalorder %s19, 1
      %s207 = scalar_select %p206, %s19, 1
      %p208 = scmp.lt.s32.totalorder %s20, 2
      %s209 = scalar_select %p208, %s20, 2
      %s210 = smul.addr %s207, 3
      %s211 = sadd.s32 %s209, %s210
      %s212 = smul.addr %s211, 2
      %s213 = scalar_lea.vmem %s0, %s212
      %p214 = pneg %p50
      %p215 = pneg %p47
      %s216 = sadd.s32 %s20, 1
      %p217 = scmp.lt.s32.totalorder %s19, 1
      %s218 = scalar_select %p217, %s19, 1
      %p219 = scmp.lt.s32.totalorder %s216, 2
      %s220 = scalar_select %p219, %s216, 2
      %s221 = smul.addr %s218, 3
      %s222 = sadd.s32 %s220, %s221
      %s223 = smul.addr %s222, 2
      %s224 = scalar_lea.vmem %s1, %s223
      %p225 = pneg %p80
      %p226 = pneg %p77
      %p227 = pneg %p101
      %p228 = pneg %p98
      %p229 = pneg %p122
      %p230 = pneg %p119
      %p231 = pneg %p150
      %p232 = pneg %p147
      %p233 = scmp.lt.s32.totalorder %s19, 1
      %s234 = scalar_select %p233, %s19, 1
      %p235 = scmp.lt.s32.totalorder %s20, 1
      %s236 = scalar_select %p235, %s20, 1
      %s237 = smul.addr %s234, 2
      %s238 = sadd.s32 %s236, %s237
      %s239 = scalar_lea.vmem %s4, %s238
      %p240 = scmp.lt.s32.totalorder %s19, 1
      %s241 = scalar_select %p240, %s19, 1
      %p242 = scmp.lt.s32.totalorder %s20, 2
      %s243 = scalar_select %p242, %s20, 2
      %s244 = smul.addr %s241, 3
      %s245 = sadd.s32 %s243, %s244
      %s246 = smul.addr %s245, 2
      %s247 = scalar_lea.vmem %s0, %s246
      %s248 = sadd.s32 %s20, 1
      %p249 = scmp.lt.s32.totalorder %s19, 1
      %s250 = scalar_select %p249, %s19, 1
      %p251 = scmp.lt.s32.totalorder %s248, 2
      %s252 = scalar_select %p251, %s248, 2
      %s253 = smul.addr %s250, 3
      %s254 = sadd.s32 %s252, %s253
      %s255 = smul.addr %s254, 2
      %s256 = scalar_lea.vmem %s1, %s255
      %s257 = sadd.s32 %s20, 1
      %p258 = scmp.lt.s32.totalorder %s19, 1
      %s259 = scalar_select %p258, %s19, 1
      %p260 = scmp.lt.s32.totalorder %s20, 1
      %s261 = scalar_select %p260, %s20, 1
      %s262 = smul.addr %s259, 2
      %s263 = sadd.s32 %s261, %s262
      %s264 = scalar_lea.vmem %s4, %s263
      %v266 = vld [vmem:[%s247] sm:$0x3]
      %v267 = vld [vmem:[%s256] sm:$0x3]
      %v268 = vld [vmem:[%s2] sm:$0xf]
      %v269 = vld [vmem:[%s2 + $0x4] sm:$0xf]
      %v270 = vld [vmem:[%s2 + $0x8] sm:$0xf]
      %v271 = vld [vmem:[%s2 + $0xc] sm:$0xf]
      %v272 = vld [vmem:[%s2 + $0x10] sm:$0xf]
      %v273 = vld [vmem:[%s2 + $0x14] sm:$0xf]
      %v274 = vld [vmem:[%s2 + $0x18] sm:$0xf]
      %v275 = vld [vmem:[%s2 + $0x1c] sm:$0xf]
      %v276 = vld [vmem:[%s2 + $0x20] sm:$0xf]
      %v277 = vld [vmem:[%s2 + $0x24] sm:$0xf]
      %v278 = vld [vmem:[%s2 + $0x28] sm:$0xf]
      %v279 = vld [vmem:[%s2 + $0x2c] sm:$0xf]
      %v280 = vld [vmem:[%s2 + $0x30] sm:$0xf]
      %v281 = vld [vmem:[%s2 + $0x34] sm:$0xf]
      %v282 = vld [vmem:[%s2 + $0x38] sm:$0xf]
      %v283 = vld [vmem:[%s2 + $0x3c] sm:$0xf]
      %v286 = vunpack.c.l.s4 1983009808
      %v287 = vunpack.c.0.s8 %v286
      %v288 = vlaneseq
      %v289 = vshrl.u32 %v288, 7
      %v290 = vsub.s32 %v287, %v289
      %v291 = vrot.slane %v266, %v290
      %v293 = vshrl.u32 %v291, 16
      %v295 = vshll.u32 %v291, 16
      %v297 = vrot.slane %v295, 1
      %v298 = vor.u32 %v293, %v297
      %v307 = vunpack.c.l.b16 %v276
      %v308 = vunpack.c.l.b16 %v277
      %v309 = vunpack.c.l.b16 %v278
      %v310 = vunpack.c.l.b16 %v279
      %v311 = vunpack.c.l.b16 %v280
      %v312 = vunpack.c.l.b16 %v281
      %v313 = vunpack.c.l.b16 %v282
      %v314 = vunpack.c.l.b16 %v283
      %v315 = vpack.c.b16 %v308, %v307
      %v316 = vpack.c.b16 %v310, %v309
      %v317 = vpack.c.b16 %v312, %v311
      %v318 = vpack.c.b16 %v314, %v313
      %vm323 = vcmask 523264
      %v325 = vsel %vm323, %v298, 0
      %327 = vmatprep.subr.bf16.mxu0 0
      %328 = vmatpush1.bf16.msra.mxu0 %v315
      %329 = vmatprep.subr.bf16.mxu0 0
      %330 = vmatpush1.bf16.msra.mxu0 %v316
      %331 = vmatprep.subr.bf16.mxu0 0
      %332 = vmatpush1.bf16.msra.mxu0 %v317
      %333 = vmatprep.subr.bf16.mxu0 0
      %334 = vmatpush1.bf16.msra.mxu0 %v318
      %335 = vmatprep.subr.bf16.mxu0 0
      %336 = vmatpush1.bf16.msra.mxu0 0
      %337 = vmatprep.subr.bf16.mxu0 0
      %338 = vmatpush1.bf16.msra.mxu0 0
      %339 = vmatprep.subr.bf16.mxu0 0
      %340 = vmatpush1.bf16.msra.mxu0 0
      %341 = vmatprep.subr.bf16.mxu0 0
      %342 = vmatpush1.bf16.msra.mxu0 0
      %343 = vmatprep.subr.bf16.mxu0 0
      %344 = vmatpush1.bf16.msra.mxu0 0
      %345 = vmatprep.subr.bf16.mxu0 0
      %346 = vmatpush1.bf16.msra.mxu0 0
      %347 = vmatprep.subr.bf16.mxu0 0
      %348 = vmatpush1.bf16.msra.mxu0 0
      %349 = vmatprep.subr.bf16.mxu0 0
      %350 = vmatpush1.bf16.msra.mxu0 0
      %351 = vmatprep.subr.bf16.mxu0 0
      %352 = vmatpush1.bf16.msra.mxu0 0
      %353 = vmatprep.subr.bf16.mxu0 0
      %354 = vmatpush1.bf16.msra.mxu0 0
      %355 = vmatprep.subr.bf16.mxu0 0
      %356 = vmatpush1.bf16.msra.mxu0 0
      %357 = vmatprep.subr.bf16.mxu0 0
      %358 = vmatpush1.bf16.msra.mxu0 0
      %359 = vmatprep.mubr.bf16.mxu0 0
      %360 = vmatmul.mubr.bf16.gmra.mrb[0].mxu0 %v325
      %v361 = vpop.f32.mrb[0].mxu0
      %v362 = vadd.f32 0.0, %v361
      %v363 = vpop.f32.mrb[0].mxu0
      %v364 = vpop.f32.mrb[0].mxu0
      %v365 = vpop.f32.mrb[0].mxu0
      %366 = vdwg.mxu0
      %v375 = vunpack.c.l.b16 %v268
      %v376 = vunpack.c.l.b16 %v269
      %v377 = vunpack.c.l.b16 %v270
      %v378 = vunpack.c.l.b16 %v271
      %v379 = vunpack.c.l.b16 %v272
      %v380 = vunpack.c.l.b16 %v273
      %v381 = vunpack.c.l.b16 %v274
      %v382 = vunpack.c.l.b16 %v275
      %v383 = vpack.c.b16 %v376, %v375
      %v384 = vpack.c.b16 %v378, %v377
      %v385 = vpack.c.b16 %v380, %v379
      %v386 = vpack.c.b16 %v382, %v381
      %v392 = vsel %vm323, %v266, 0
      %394 = vmatprep.subr.bf16.mxu0 0
      %395 = vmatpush1.bf16.msra.mxu0 %v383
      %396 = vmatprep.subr.bf16.mxu0 0
      %397 = vmatpush1.bf16.msra.mxu0 %v384
      %398 = vmatprep.subr.bf16.mxu0 0
      %399 = vmatpush1.bf16.msra.mxu0 %v385
      %400 = vmatprep.subr.bf16.mxu0 0
      %401 = vmatpush1.bf16.msra.mxu0 %v386
      %402 = vmatprep.subr.bf16.mxu0 0
      %403 = vmatpush1.bf16.msra.mxu0 0
      %404 = vmatprep.subr.bf16.mxu0 0
      %405 = vmatpush1.bf16.msra.mxu0 0
      %406 = vmatprep.subr.bf16.mxu0 0
      %407 = vmatpush1.bf16.msra.mxu0 0
      %408 = vmatprep.subr.bf16.mxu0 0
      %409 = vmatpush1.bf16.msra.mxu0 0
      %410 = vmatprep.subr.bf16.mxu0 0
      %411 = vmatpush1.bf16.msra.mxu0 0
      %412 = vmatprep.subr.bf16.mxu0 0
      %413 = vmatpush1.bf16.msra.mxu0 0
      %414 = vmatprep.subr.bf16.mxu0 0
      %415 = vmatpush1.bf16.msra.mxu0 0
      %416 = vmatprep.subr.bf16.mxu0 0
      %417 = vmatpush1.bf16.msra.mxu0 0
      %418 = vmatprep.subr.bf16.mxu0 0
      %419 = vmatpush1.bf16.msra.mxu0 0
      %420 = vmatprep.subr.bf16.mxu0 0
      %421 = vmatpush1.bf16.msra.mxu0 0
      %422 = vmatprep.subr.bf16.mxu0 0
      %423 = vmatpush1.bf16.msra.mxu0 0
      %424 = vmatprep.subr.bf16.mxu0 0
      %425 = vmatpush1.bf16.msra.mxu0 0
      %426 = vmatprep.mubr.bf16.mxu0 0
      %427 = vmatmul.mubr.bf16.gmra.mrb[0].mxu0 %v392
      %v428 = vpop.f32.mrb[0].mxu0
      %v429 = vadd.f32 %v362, %v428
      %v430 = vpop.f32.mrb[0].mxu0
      %v431 = vpop.f32.mrb[0].mxu0
      %v432 = vpop.f32.mrb[0].mxu0
      %433 = vdwg.mxu0
      %v434 = vld [vmem:[%s2 + $0x40] sm:$0xf]
      %v435 = vld [vmem:[%s2 + $0x44] sm:$0xf]
      %v436 = vld [vmem:[%s2 + $0x48] sm:$0xf]
      %v437 = vld [vmem:[%s2 + $0x4c] sm:$0xf]
      %v438 = vld [vmem:[%s2 + $0x50] sm:$0xf]
      %v439 = vld [vmem:[%s2 + $0x54] sm:$0xf]
      %v440 = vld [vmem:[%s2 + $0x58] sm:$0xf]
      %v441 = vld [vmem:[%s2 + $0x5c] sm:$0xf]
      %v450 = vunpack.c.l.b16 %v434
      %v451 = vunpack.c.l.b16 %v435
      %v452 = vunpack.c.l.b16 %v436
      %v453 = vunpack.c.l.b16 %v437
      %v454 = vunpack.c.l.b16 %v438
      %v455 = vunpack.c.l.b16 %v439
      %v456 = vunpack.c.l.b16 %v440
      %v457 = vunpack.c.l.b16 %v441
      %v458 = vpack.c.b16 %v451, %v450
      %v459 = vpack.c.b16 %v453, %v452
      %v460 = vpack.c.b16 %v455, %v454
      %v461 = vpack.c.b16 %v457, %v456
      %v467 = vsel %vm323, %v267, 0
      %469 = vmatprep.subr.bf16.mxu0 0
      %470 = vmatpush1.bf16.msra.mxu0 %v458
      %471 = vmatprep.subr.bf16.mxu0 0
      %472 = vmatpush1.bf16.msra.mxu0 %v459
      %473 = vmatprep.subr.bf16.mxu0 0
      %474 = vmatpush1.bf16.msra.mxu0 %v460
      %475 = vmatprep.subr.bf16.mxu0 0
      %476 = vmatpush1.bf16.msra.mxu0 %v461
      %477 = vmatprep.subr.bf16.mxu0 0
      %478 = vmatpush1.bf16.msra.mxu0 0
      %479 = vmatprep.subr.bf16.mxu0 0
      %480 = vmatpush1.bf16.msra.mxu0 0
      %481 = vmatprep.subr.bf16.mxu0 0
      %482 = vmatpush1.bf16.msra.mxu0 0
      %483 = vmatprep.subr.bf16.mxu0 0
      %484 = vmatpush1.bf16.msra.mxu0 0
      %485 = vmatprep.subr.bf16.mxu0 0
      %486 = vmatpush1.bf16.msra.mxu0 0
      %487 = vmatprep.subr.bf16.mxu0 0
      %488 = vmatpush1.bf16.msra.mxu0 0
      %489 = vmatprep.subr.bf16.mxu0 0
      %490 = vmatpush1.bf16.msra.mxu0 0
      %491 = vmatprep.subr.bf16.mxu0 0
      %492 = vmatpush1.bf16.msra.mxu0 0
      %493 = vmatprep.subr.bf16.mxu0 0
      %494 = vmatpush1.bf16.msra.mxu0 0
      %495 = vmatprep.subr.bf16.mxu0 0
      %496 = vmatpush1.bf16.msra.mxu0 0
      %497 = vmatprep.subr.bf16.mxu0 0
      %498 = vmatpush1.bf16.msra.mxu0 0
      %499 = vmatprep.subr.bf16.mxu0 0
      %500 = vmatpush1.bf16.msra.mxu0 0
      %501 = vmatprep.mubr.bf16.mxu0 0
      %502 = vmatmul.mubr.bf16.gmra.mrb[0].mxu0 %v467
      %v503 = vpop.f32.mrb[0].mxu0
      %v504 = vadd.f32 0.0, %v503
      %v505 = vpop.f32.mrb[0].mxu0
      %v506 = vpop.f32.mrb[0].mxu0
      %v507 = vpop.f32.mrb[0].mxu0
      %508 = vdwg.mxu0
      %v509 = vadd.f32 %v429, %v504
      %v510 = vld [vmem:[%s2 + $0x60] sm:$0xf]
      %v511 = vld [vmem:[%s2 + $0x64] sm:$0xf]
      %v512 = vld [vmem:[%s2 + $0x68] sm:$0xf]
      %v513 = vld [vmem:[%s2 + $0x6c] sm:$0xf]
      %v514 = vld [vmem:[%s2 + $0x70] sm:$0xf]
      %v515 = vld [vmem:[%s2 + $0x74] sm:$0xf]
      %v516 = vld [vmem:[%s2 + $0x78] sm:$0xf]
      %v517 = vld [vmem:[%s2 + $0x7c] sm:$0xf]
      %v520 = vunpack.c.l.s4 1983009808
      %v521 = vunpack.c.0.s8 %v520
      %v522 = vlaneseq
      %v523 = vshrl.u32 %v522, 7
      %v524 = vsub.s32 %v521, %v523
      %v525 = vrot.slane %v267, %v524
      %v527 = vshrl.u32 %v525, 16
      %v529 = vshll.u32 %v525, 16
      %v531 = vrot.slane %v529, 1
      %v532 = vor.u32 %v527, %v531
      %v541 = vunpack.c.l.b16 %v510
      %v542 = vunpack.c.l.b16 %v511
      %v543 = vunpack.c.l.b16 %v512
      %v544 = vunpack.c.l.b16 %v513
      %v545 = vunpack.c.l.b16 %v514
      %v546 = vunpack.c.l.b16 %v515
      %v547 = vunpack.c.l.b16 %v516
      %v548 = vunpack.c.l.b16 %v517
      %v549 = vpack.c.b16 %v542, %v541
      %v550 = vpack.c.b16 %v544, %v543
      %v551 = vpack.c.b16 %v546, %v545
      %v552 = vpack.c.b16 %v548, %v547
      %v558 = vsel %vm323, %v532, 0
      %560 = vmatprep.subr.bf16.mxu0 0
      %561 = vmatpush1.bf16.msra.mxu0 %v549
      %562 = vmatprep.subr.bf16.mxu0 0
      %563 = vmatpush1.bf16.msra.mxu0 %v550
      %564 = vmatprep.subr.bf16.mxu0 0
      %565 = vmatpush1.bf16.msra.mxu0 %v551
      %566 = vmatprep.subr.bf16.mxu0 0
      %567 = vmatpush1.bf16.msra.mxu0 %v552
      %568 = vmatprep.subr.bf16.mxu0 0
      %569 = vmatpush1.bf16.msra.mxu0 0
      %570 = vmatprep.subr.bf16.mxu0 0
      %571 = vmatpush1.bf16.msra.mxu0 0
      %572 = vmatprep.subr.bf16.mxu0 0
      %573 = vmatpush1.bf16.msra.mxu0 0
      %574 = vmatprep.subr.bf16.mxu0 0
      %575 = vmatpush1.bf16.msra.mxu0 0
      %576 = vmatprep.subr.bf16.mxu0 0
      %577 = vmatpush1.bf16.msra.mxu0 0
      %578 = vmatprep.subr.bf16.mxu0 0
      %579 = vmatpush1.bf16.msra.mxu0 0
      %580 = vmatprep.subr.bf16.mxu0 0
      %581 = vmatpush1.bf16.msra.mxu0 0
      %582 = vmatprep.subr.bf16.mxu0 0
      %583 = vmatpush1.bf16.msra.mxu0 0
      %584 = vmatprep.subr.bf16.mxu0 0
      %585 = vmatpush1.bf16.msra.mxu0 0
      %586 = vmatprep.subr.bf16.mxu0 0
      %587 = vmatpush1.bf16.msra.mxu0 0
      %588 = vmatprep.subr.bf16.mxu0 0
      %589 = vmatpush1.bf16.msra.mxu0 0
      %590 = vmatprep.subr.bf16.mxu0 0
      %591 = vmatpush1.bf16.msra.mxu0 0
      %592 = vmatprep.mubr.bf16.mxu0 0
      %593 = vmatmul.mubr.bf16.gmra.mrb[0].mxu0 %v558
      %v594 = vpop.f32.mrb[0].mxu0
      %v595 = vadd.f32 0.0, %v594
      %v596 = vpop.f32.mrb[0].mxu0
      %v597 = vpop.f32.mrb[0].mxu0
      %v598 = vpop.f32.mrb[0].mxu0
      %599 = vdwg.mxu0
      %v600 = vadd.f32 %v509, %v595
      %v601 = vld [vmem:[%s3] sm:$0x1]
      %v603 = vlaneseq
      %v604 = vshrl.u32 %v603, 7
      %v605 = vsub.s32 0, %v604
      %v606 = vrot.slane %v601, %v605
      %v608 = vadd.f32 %v600, %v606
      %v609 = vmax.f32 %v608, 0.0
      %v610 = vpack.c.bf16 %v609, %v609
      %611 = vst [vmem:[%s264] sm:$0x1] %v610
      %p612 = scmp.lt.s32.totalorder %s19, 1
      %s613 = scalar_select %p612, %s19, 1
      %p614 = scmp.lt.s32.totalorder %s20, 1
      %s615 = scalar_select %p614, %s20, 1
      %s616 = smul.addr %s613, 2
      %s617 = sadd.s32 %s615, %s616
      %s618 = scalar_lea.vmem %s4, %s617
      // Predicated region
      $region37: #{unet_forward.22} parent=35 // pred_check
        %p619 = pneg %p147
      $region38: #{unet_forward.22} parent=35 // pred_check_branch
        %621 = sbr.rel (%p619) target = $region40
      $region39: #{unet_forward.22} parent=35 // pred_region
        _
      $region40: #{unet_forward.22} parent=35 // pred_fallthru
        _
    $region36: #{unet_forward.22} parent=5 // pred_fallthru
      _
    %p622 = scmp.le.s32.totalorder 2, %s10
    // Predicated region
    $region41: #{unet_forward.22} parent=5 // pred_check
      %p623 = pneg %p622
    $region42: #{unet_forward.22} parent=5 // pred_check_branch
      %625 = sbr.rel (%p623) target = $region44
    $region43: #{unet_forward.22} parent=5 // pred_region
      %s626 = ssub.s32 %s10, 2
      // Predicated region
      $region45: #{unet_forward.22} parent=43 // pred_check
        %p627 = pneg %p153
      $region46: #{unet_forward.22} parent=43 // pred_check_branch
        %629 = sbr.rel (%p627) target = $region48
      $region47: #{unet_forward.22} parent=43 // pred_region
        %p630 = scmp.lt.s32.totalorder %s21, 1
        %s631 = scalar_select %p630, %s21, 1
        %p632 = scmp.lt.s32.totalorder %s22, 1
        %s633 = scalar_select %p632, %s22, 1
        %s634 = smul.addr %s631, 2
        %s635 = sadd.s32 %s633, %s634
        %s636 = scalar_lea.vmem %s4, %s635
      $region48: #{unet_forward.22} parent=43 // pred_fallthru
        _
    $region44: #{unet_forward.22} parent=5 // pred_fallthru
      _
  $region6: #{unet_forward.22} parent=0 // loop_footer
    %s14 = sadd.s32 1, %s10
  $region7: #{unet_forward.22} parent=0 // loop_footer_branch
    %9 = sbr.rel target = $region3
  $region8: #{unet_forward.22} parent=0 // loop_exit
    _

// kernel: tile.68
$region0: #{tile.68}
  #allocation0 [shape = 's32[1]{0}', space=sflag, size = 0x4, scoped, tag = 'scoped memory for tile.68']
  %s0 = inlined_call_operand.vmem [shape: f32[16], index: 0, kind: input, shape index: {}]
  %s1 = inlined_call_operand.vmem [shape: f32[4,16], index: 1, kind: output, shape index: {}]
  // Predicated region
  $region2: #{tile.68} parent=0 // pred_check
    _
  $region3: #{tile.68} parent=0 // pred_check_branch
    %3 = sbr.rel (0) target = $region5
  $region4: #{tile.68} parent=0 // pred_region
    _
  $region5: #{tile.68} parent=0 // pred_fallthru
    _
  %v4 = vld [vmem:[%s0] ss:$0 sm:$0xff]
  %5 = vst [vmem:[%s1] sm:$0xf] %v4

// kernel: tile.69
$region0: #{tile.69}
  %s0 = inlined_call_operand.vmem [shape: f32[4,16], index: 0, kind: input, shape index: {}]
  %s1 = inlined_call_operand.vmem [shape: f32[1,64], index: 1, kind: output, shape index: {}]
  $region1: #{tile.69} parent=0
    #allocation0 [shape = 'u8[4096]{0}', space=vmem, size = 0x1000, scoped, tag = 'scoped mem for output reshape']
    #allocation1 [shape = 'u8[4096]{0}', space=vmem, size = 0x1000, scoped, tag = 'scoped mem for input reshape']
    %s3 = sshllo.u32 0, 4
    %v4 = vld [vmem:[%s0] sm:%s3]
    %5 = vst [vmem:[#allocation1] sm:%s3] %v4
    %v6 = vld [vmem:[#allocation1] sm:$0x1]
    %vm7 = vcmask 130048
    %8 = vst.msk [vmem:[#allocation0] sm:$0x1] %vm7, %v6
    %s9 = scalar_lea.vmem [#allocation1], 3
    %v10 = vld [vmem:[%s9] sm:$0x1]
    %11 = vrot.lane.b32.xlu0 %v10, 48
    %v12 = vpop.permute.xlu0 %11
    %vm13 = vcmask 523648
    %14 = vst.msk [vmem:[#allocation0] sm:$0x1] %vm13, %v12
    %s15 = scalar_lea.vmem [#allocation1], 2
    %v16 = vld [vmem:[%s15] sm:$0x1]
    %17 = vrot.lane.b32.xlu0 %v16, 32
    %v18 = vpop.permute.xlu0 %17
    %vm19 = vcmask 392448
    %20 = vst.msk [vmem:[#allocation0] sm:$0x1] %vm19, %v18
    %s21 = scalar_lea.vmem [#allocation1], 1
    %v22 = vld [vmem:[%s21] sm:$0x1]
    %23 = vrot.lane.b32.xlu0 %v22, 16
    %v24 = vpop.permute.xlu0 %23
    %vm25 = vcmask 261248
    %26 = vst.msk [vmem:[#allocation0] sm:$0x1] %vm25, %v24
    %s28 = sshllo.u32 0, 1
    %v30 = vld [vmem:[#allocation0] sm:%s28]
    %s31 = sshllo.u32 0, 1
    %32 = vst [vmem:[%s1] sm:%s31] %v30

// kernel: unet_forward.23
$region0: #{unet_forward.23}
  #allocation0 [shape = 'u32[]', space=smem, size = 0x4, offset = 0x4, fixed_abs, tag = 'smem constant byte address 0x4 - core index']
  #allocation1 [shape = 'u32[144,128]{1,0:T(1,128)}', space=vmem, size = 0x12000, scoped, tag = 'internal scratch']
  %s0 = inlined_call_operand.vmem [shape: bf16[2,5,5,32], index: 0, kind: input, shape index: {}, may-alias: {0,1}]
  %s1 = inlined_call_operand.vmem [shape: bf16[2,5,5,32], index: 1, kind: input, shape index: {}, may-alias: {0,1}]
  %s2 = inlined_call_operand.vmem [shape: bf16[128,64], index: 2, kind: input, shape index: {}]
  %s3 = inlined_call_operand.vmem [shape: f32[1,64], index: 3, kind: input, shape index: {}]
  %s4 = inlined_call_operand.vmem [shape: bf16[2,4,4,64], index: 4, kind: output, shape index: {}]
  %s5 = sld [smem:[#allocation0]]
  $region49: #{unet_forward.23} parent=0
    _
  %s7 = ssub.s32 1, %s5
  %s8 = scalar_select 0, %s7, %s5
  loop: start=0, step=1, limit=10
  $region2: #{unet_forward.23} parent=0 // loop_pre_header
    _
  $region3: #{unet_forward.23} parent=0 // loop_header
    %s10 = sphi 0, %s14
    %p11 = scmp.ge.s32.totalorder %s10, 10
    %s17 = sphi 0, %s29
    %s18 = sphi 0, %s25
    %s19 = sphi 0, %s17
    %s20 = sphi 0, %s18
    %s21 = sphi 0, %s19
    %s22 = sphi 0, %s20
    %s34 = sphi 0, %s36
    %s37 = sphi 0, %s34
    %s38 = sphi 0, %s37
    %s54 = sphi 0, %s38
    %s64 = sphi 0, %s66
    %s67 = sphi 0, %s64
    %s68 = sphi 0, %s67
    %s84 = sphi 0, %s68
    %s88 = sphi 0, %s88
    %s90 = sphi 0, %s88
    %s91 = sphi 0, %s90
    %s105 = sphi 0, %s91
    %s109 = sphi 0, %s109
    %s111 = sphi 0, %s109
    %s112 = sphi 0, %s111
    %s126 = sphi 0, %s112
    %s134 = sphi 0, %s136
    %s137 = sphi 0, %s134
    %s138 = sphi 0, %s137
    %s154 = sphi 0, %s138
  $region4: #{unet_forward.23} parent=0 // loop_header_branch
    %13 = sbr.rel (%p11) target = $region8
  $region5: #{unet_forward.23} parent=0 // loop_body
    %s15 = ssub.s32 %s10, 1
    %s16 = ssub.s32 %s10, 2
    %s23 = sadd.s32 1, %s18
    %p24 = scmp.ge.s32.totalorder %s23, 4
    %s25 = scalar_select %p24, 0, %s23
    %s26 = sadd.s32 1, %s17
    %s27 = scalar_select %p24, %s26, %s17
    %p28 = scmp.ge.s32.totalorder %s27, 2
    %s29 = scalar_select %p28, 0, %s27
    %s30 = ssub.s32 %s17, %s29
    %s31 = ssub.s32 %s18, %s25
    %s32 = sor.u32 %s30, %s31
    %p33 = scmp.eq.s32.totalorder %s32, 0
    %s35 = sadd.s32 %s34, 1
    %s36 = scalar_select %p33, %s34, %s35
    %p39 = pneg %p33
    %p40 = scmp.eq.s32.totalorder %s10, 7
    %p41 = por %p39, %p40
    %p42 = scmp.ne.s32.totalorder %s34, %s37
    %p43 = scmp.eq.s32.totalorder %s10, 0
    %p44 = por %p42, %p43
    %p45 = scmp.ne.s32.totalorder %s34, %s37
    %p46 = scmp.eq.s32.totalorder %s15, 7
    %p47 = por %p45, %p46
    %p48 = scmp.ne.s32.totalorder %s37, %s38
    %p49 = scmp.eq.s32.totalorder %s15, 0
    %p50 = por %p48, %p49
    %p51 = scmp.ne.s32.totalorder %s37, %s38
    %p52 = scmp.eq.s32.totalorder %s16, 7
    %p53 = por %p51, %p52
    %p55 = scmp.ne.s32.totalorder %s38, %s54
    %p56 = scmp.eq.s32.totalorder %s16, 0
    %p57 = por %p55, %p56
    %s58 = sadd.s32 %s18, 1
    %s59 = sadd.s32 %s25, 1
    %s60 = ssub.s32 %s17, %s29
    %s61 = ssub.s32 %s58, %s59
    %s62 = sor.u32 %s60, %s61
    %p63 = scmp.eq.s32.totalorder %s62, 0
    %s65 = sadd.s32 %s64, 1
    %s66 = scalar_select %p63, %s64, %s65
    %p69 = pneg %p63
    %p70 = scmp.eq.s32.totalorder %s10, 7
    %p71 = por %p69, %p70
    %p72 = scmp.ne.s32.totalorder %s64, %s67
    %p73 = scmp.eq.s32.totalorder %s10, 0
    %p74 = por %p72, %p73
    %p75 = scmp.ne.s32.totalorder %s64, %s67
    %p76 = scmp.eq.s32.totalorder %s15, 7
    %p77 = por %p75, %p76
    %p78 = scmp.ne.s32.totalorder %s67, %s68
    %p79 = scmp.eq.s32.totalorder %s15, 0
    %p80 = por %p78, %p79
    %p81 = scmp.ne.s32.totalorder %s67, %s68
    %p82 = scmp.eq.s32.totalorder %s16, 7
    %p83 = por %p81, %p82
    %p85 = scmp.ne.s32.totalorder %s68, %s84
    %p86 = scmp.eq.s32.totalorder %s16, 0
    %p87 = por %p85, %p86
    %s89 = sadd.s32 %s88, 1
    %p92 = scmp.eq.s32.totalorder %s10, 7
    %p93 = scmp.ne.s32.totalorder %s88, %s90
    %p94 = scmp.eq.s32.totalorder %s10, 0
    %p95 = por %p93, %p94
    %p96 = scmp.ne.s32.totalorder %s88, %s90
    %p97 = scmp.eq.s32.totalorder %s15, 7
    %p98 = por %p96, %p97
    %p99 = scmp.ne.s32.totalorder %s90, %s91
    %p100 = scmp.eq.s32.totalorder %s15, 0
    %p101 = por %p99, %p100
    %p102 = scmp.ne.s32.totalorder %s90, %s91
    %p103 = scmp.eq.s32.totalorder %s16, 7
    %p104 = por %p102, %p103
    %p106 = scmp.ne.s32.totalorder %s91, %s105
    %p107 = scmp.eq.s32.totalorder %s16, 0
    %p108 = por %p106, %p107
    %s110 = sadd.s32 %s109, 1
    %p113 = scmp.eq.s32.totalorder %s10, 7
    %p114 = scmp.ne.s32.totalorder %s109, %s111
    %p115 = scmp.eq.s32.totalorder %s10, 0
    %p116 = por %p114, %p115
    %p117 = scmp.ne.s32.totalorder %s109, %s111
    %p118 = scmp.eq.s32.totalorder %s15, 7
    %p119 = por %p117, %p118
    %p120 = scmp.ne.s32.totalorder %s111, %s112
    %p121 = scmp.eq.s32.totalorder %s15, 0
    %p122 = por %p120, %p121
    %p123 = scmp.ne.s32.totalorder %s111, %s112
    %p124 = scmp.eq.s32.totalorder %s16, 7
    %p125 = por %p123, %p124
    %p127 = scmp.ne.s32.totalorder %s112, %s126
    %p128 = scmp.eq.s32.totalorder %s16, 0
    %p129 = por %p127, %p128
    %s130 = ssub.s32 %s17, %s29
    %s131 = ssub.s32 %s18, %s25
    %s132 = sor.u32 %s130, %s131
    %p133 = scmp.eq.s32.totalorder %s132, 0
    %s135 = sadd.s32 %s134, 1
    %s136 = scalar_select %p133, %s134, %s135
    %p139 = pneg %p133
    %p140 = scmp.eq.s32.totalorder %s10, 7
    %p141 = por %p139, %p140
    %p142 = scmp.ne.s32.totalorder %s134, %s137
    %p143 = scmp.eq.s32.totalorder %s10, 0
    %p144 = por %p142, %p143
    %p145 = scmp.ne.s32.totalorder %s134, %s137
    %p146 = scmp.eq.s32.totalorder %s15, 7
    %p147 = por %p145, %p146
    %p148 = scmp.ne.s32.totalorder %s137, %s138
    %p149 = scmp.eq.s32.totalorder %s15, 0
    %p150 = por %p148, %p149
    %p151 = scmp.ne.s32.totalorder %s137, %s138
    %p152 = scmp.eq.s32.totalorder %s16, 7
    %p153 = por %p151, %p152
    %p155 = scmp.ne.s32.totalorder %s138, %s154
    %p156 = scmp.eq.s32.totalorder %s16, 0
    %p157 = por %p155, %p156
    %p158 = scmp.le.s32.totalorder 1, %s10
    %p159 = scmp.lt.s32.totalorder %s10, 9
    %p160 = pnand %p158, %p159
    %p161 = pneg %p160
    // Predicated region
    $region9: #{unet_forward.23} parent=5 // pred_check
      _
    $region10: #{unet_forward.23} parent=5 // pred_check_branch
      %163 = sbr.rel (%p160) target = $region12
    $region11: #{unet_forward.23} parent=5 // pred_region
      %s164 = ssub.s32 %s10, 1
      // Predicated region
      $region13: #{unet_forward.23} parent=11 // pred_check
        %p165 = pneg %p101
      $region14: #{unet_forward.23} parent=11 // pred_check_branch
        %167 = sbr.rel (%p165) target = $region16
      $region15: #{unet_forward.23} parent=11 // pred_region
        _
      $region16: #{unet_forward.23} parent=11 // pred_fallthru
        _
      // Predicated region
      $region17: #{unet_forward.23} parent=11 // pred_check
        %p168 = pneg %p122
      $region18: #{unet_forward.23} parent=11 // pred_check_branch
        %170 = sbr.rel (%p168) target = $region20
      $region19: #{unet_forward.23} parent=11 // pred_region
        _
      $region20: #{unet_forward.23} parent=11 // pred_fallthru
        _
    $region12: #{unet_forward.23} parent=5 // pred_fallthru
      _
    %p171 = scmp.lt.s32.totalorder %s10, 8
    // Predicated region
    $region21: #{unet_forward.23} parent=5 // pred_check
      %p172 = pneg %p171
    $region22: #{unet_forward.23} parent=5 // pred_check_branch
      %174 = sbr.rel (%p172) target = $region24
    $region23: #{unet_forward.23} parent=5 // pred_region
      // Predicated region
      $region25: #{unet_forward.23} parent=23 // pred_check
        %p175 = pneg %p44
      $region26: #{unet_forward.23} parent=23 // pred_check_branch
        %177 = sbr.rel (%p175) target = $region28
      $region27: #{unet_forward.23} parent=23 // pred_region
        %p178 = scmp.lt.s32.totalorder %s17, 1
        %s179 = scalar_select %p178, %s17, 1
        %p180 = scmp.lt.s32.totalorder %s18, 4
        %s181 = scalar_select %p180, %s18, 4
        %s182 = smul.addr %s179, 5
        %s183 = sadd.s32 %s181, %s182
        %s184 = smul.addr %s183, 4
        %s185 = scalar_lea.vmem %s0, %s184
      $region28: #{unet_forward.23} parent=23 // pred_fallthru
        _
      // Predicated region
      $region29: #{unet_forward.23} parent=23 // pred_check
        %p186 = pneg %p74
      $region30: #{unet_forward.23} parent=23 // pred_check_branch
        %188 = sbr.rel (%p186) target = $region32
      $region31: #{unet_forward.23} parent=23 // pred_region
        %s189 = sadd.s32 %s18, 1
        %p190 = scmp.lt.s32.totalorder %s17, 1
        %s191 = scalar_select %p190, %s17, 1
        %p192 = scmp.lt.s32.totalorder %s189, 4
        %s193 = scalar_select %p192, %s189, 4
        %s194 = smul.addr %s191, 5
        %s195 = sadd.s32 %s193, %s194
        %s196 = smul.addr %s195, 4
        %s197 = scalar_lea.vmem %s1, %s196
        %s198 = sadd.s32 %s18, 1
      $region32: #{unet_forward.23} parent=23 // pred_fallthru
        _
    $region24: #{unet_forward.23} parent=5 // pred_fallthru
      _
    %p199 = scmp.le.s32.totalorder 1, %s10
    %p200 = scmp.lt.s32.totalorder %s10, 9
    %p201 = pnand %p199, %p200
    %p202 = pneg %p201
    // Predicated region
    $region33: #{unet_forward.23} parent=5 // pred_check
      _
    $region34: #{unet_forward.23} parent=5 // pred_check_branch
      %204 = sbr.rel (%p201) target = $region36
    $region35: #{unet_forward.23} parent=5 // pred_region
      %s205 = ssub.s32 %s10, 1
      %p206 = scmp.lt.s32.totalorder %s19, 1
      %s207 = scalar_select %p206, %s19, 1
      %p208 = scmp.lt.s32.totalorder %s20, 4
      %s209 = scalar_select %p208, %s20, 4
      %s210 = smul.addr %s207, 5
      %s211 = sadd.s32 %s209, %s210
      %s212 = smul.addr %s211, 4
      %s213 = scalar_lea.vmem %s0, %s212
      %p214 = pneg %p50
      %p215 = pneg %p47
      %s216 = sadd.s32 %s20, 1
      %p217 = scmp.lt.s32.totalorder %s19, 1
      %s218 = scalar_select %p217, %s19, 1
      %p219 = scmp.lt.s32.totalorder %s216, 4
      %s220 = scalar_select %p219, %s216, 4
      %s221 = smul.addr %s218, 5
      %s222 = sadd.s32 %s220, %s221
      %s223 = smul.addr %s222, 4
      %s224 = scalar_lea.vmem %s1, %s223
      %p225 = pneg %p80
      %p226 = pneg %p77
      %p227 = pneg %p101
      %p228 = pneg %p98
      %p229 = pneg %p122
      %p230 = pneg %p119
      %p231 = pneg %p150
      %p232 = pneg %p147
      %p233 = scmp.lt.s32.totalorder %s19, 1
      %s234 = scalar_select %p233, %s19, 1
      %p235 = scmp.lt.s32.totalorder %s20, 3
      %s236 = scalar_select %p235, %s20, 3
      %s237 = smul.addr %s234, 4
      %s238 = sadd.s32 %s236, %s237
      %s239 = smul.addr %s238, 2
      %s240 = scalar_lea.vmem %s4, %s239
      %p241 = scmp.lt.s32.totalorder %s19, 1
      %s242 = scalar_select %p241, %s19, 1
      %p243 = scmp.lt.s32.totalorder %s20, 4
      %s244 = scalar_select %p243, %s20, 4
      %s245 = smul.addr %s242, 5
      %s246 = sadd.s32 %s244, %s245
      %s247 = smul.addr %s246, 4
      %s248 = scalar_lea.vmem %s0, %s247
      %s249 = sadd.s32 %s20, 1
      %p250 = scmp.lt.s32.totalorder %s19, 1
      %s251 = scalar_select %p250, %s19, 1
      %p252 = scmp.lt.s32.totalorder %s249, 4
      %s253 = scalar_select %p252, %s249, 4
      %s254 = smul.addr %s251, 5
      %s255 = sadd.s32 %s253, %s254
      %s256 = smul.addr %s255, 4
      %s257 = scalar_lea.vmem %s1, %s256
      %s258 = sadd.s32 %s20, 1
      %p259 = scmp.lt.s32.totalorder %s19, 1
      %s260 = scalar_select %p259, %s19, 1
      %p261 = scmp.lt.s32.totalorder %s20, 3
      %s262 = scalar_select %p261, %s20, 3
      %s263 = smul.addr %s260, 4
      %s264 = sadd.s32 %s262, %s263
      %s265 = smul.addr %s264, 2
      %s266 = scalar_lea.vmem %s4, %s265
      %v268 = vld [vmem:[%s248] sm:$0x7]
      %v269 = vld [vmem:[%s257] sm:$0x7]
      %v270 = vld [vmem:[%s2] sm:$0xf]
      %v271 = vld [vmem:[%s2 + $0x4] sm:$0xf]
      %v272 = vld [vmem:[%s2 + $0x8] sm:$0xf]
      %v273 = vld [vmem:[%s2 + $0xc] sm:$0xf]
      %v274 = vld [vmem:[%s2 + $0x10] sm:$0xf]
      %v275 = vld [vmem:[%s2 + $0x14] sm:$0xf]
      %v276 = vld [vmem:[%s2 + $0x18] sm:$0xf]
      %v277 = vld [vmem:[%s2 + $0x1c] sm:$0xf]
      %v279 = vunpack.c.l.b16 %v268
      %v280 = vpack.c.b16 %v279, %v279
      %v282 = vshrl.u32 %v280, 16
      %v284 = vshll.u32 %v280, 16
      %v286 = vrot.slane %v284, 1
      %v287 = vor.u32 %v282, %v286
      %v292 = vunpack.c.l.b16 %v274
      %v293 = vunpack.c.l.b16 %v275
      %v294 = vunpack.c.l.b16 %v276
      %v295 = vunpack.c.l.b16 %v277
      %v296 = vpack.c.b16 %v293, %v292
      %v297 = vpack.c.b16 %v295, %v294
      %vm300 = vcmask 261120
      %v302 = vsel %vm300, %v287, 0
      %304 = vmatprep.subr.bf16.mxu0 0
      %305 = vmatpush1.bf16.msra.mxu0 %v296
      %306 = vmatprep.subr.bf16.mxu0 0
      %307 = vmatpush1.bf16.msra.mxu0 %v297
      %308 = vmatprep.subr.bf16.mxu0 0
      %309 = vmatpush1.bf16.msra.mxu0 0
      %310 = vmatprep.subr.bf16.mxu0 0
      %311 = vmatpush1.bf16.msra.mxu0 0
      %312 = vmatprep.subr.bf16.mxu0 0
      %313 = vmatpush1.bf16.msra.mxu0 0
      %314 = vmatprep.subr.bf16.mxu0 0
      %315 = vmatpush1.bf16.msra.mxu0 0
      %316 = vmatprep.subr.bf16.mxu0 0
      %317 = vmatpush1.bf16.msra.mxu0 0
      %318 = vmatprep.subr.bf16.mxu0 0
      %319 = vmatpush1.bf16.msra.mxu0 0
      %320 = vmatprep.subr.bf16.mxu0 0
      %321 = vmatpush1.bf16.msra.mxu0 0
      %322 = vmatprep.subr.bf16.mxu0 0
      %323 = vmatpush1.bf16.msra.mxu0 0
      %324 = vmatprep.subr.bf16.mxu0 0
      %325 = vmatpush1.bf16.msra.mxu0 0
      %326 = vmatprep.subr.bf16.mxu0 0
      %327 = vmatpush1.bf16.msra.mxu0 0
      %328 = vmatprep.subr.bf16.mxu0 0
      %329 = vmatpush1.bf16.msra.mxu0 0
      %330 = vmatprep.subr.bf16.mxu0 0
      %331 = vmatpush1.bf16.msra.mxu0 0
      %332 = vmatprep.subr.bf16.mxu0 0
      %333 = vmatpush1.bf16.msra.mxu0 0
      %334 = vmatprep.subr.bf16.mxu0 0
      %335 = vmatpush1.bf16.msra.mxu0 0
      %336 = vmatprep.mubr.bf16.mxu0 0
      %337 = vmatmul.mubr.bf16.gmra.mrb[0].mxu0 %v302
      %v338 = vpop.f32.mrb[0].mxu0
      %v339 = vadd.f32 0.0, %v338
      %v340 = vpop.f32.mrb[0].mxu0
      %v341 = vpop.f32.mrb[0].mxu0
      %v342 = vpop.f32.mrb[0].mxu0
      %343 = vdwg.mxu0
      %v348 = vunpack.c.l.b16 %v270
      %v349 = vunpack.c.l.b16 %v271
      %v350 = vunpack.c.l.b16 %v272
      %v351 = vunpack.c.l.b16 %v273
      %v352 = vpack.c.b16 %v349, %v348
      %v353 = vpack.c.b16 %v351, %v350
      %v357 = vsel %vm300, %v268, 0
      %359 = vmatprep.subr.bf16.mxu0 0
      %360 = vmatpush1.bf16.msra.mxu0 %v352
      %361 = vmatprep.subr.bf16.mxu0 0
      %362 = vmatpush1.bf16.msra.mxu0 %v353
      %363 = vmatprep.subr.bf16.mxu0 0
      %364 = vmatpush1.bf16.msra.mxu0 0
      %365 = vmatprep.subr.bf16.mxu0 0
      %366 = vmatpush1.bf16.msra.mxu0 0
      %367 = vmatprep.subr.bf16.mxu0 0
      %368 = vmatpush1.bf16.msra.mxu0 0
      %369 = vmatprep.subr.bf16.mxu0 0
      %370 = vmatpush1.bf16.msra.mxu0 0
      %371 = vmatprep.subr.bf16.mxu0 0
      %372 = vmatpush1.bf16.msra.mxu0 0
      %373 = vmatprep.subr.bf16.mxu0 0
      %374 = vmatpush1.bf16.msra.mxu0 0
      %375 = vmatprep.subr.bf16.mxu0 0
      %376 = vmatpush1.bf16.msra.mxu0 0
      %377 = vmatprep.subr.bf16.mxu0 0
      %378 = vmatpush1.bf16.msra.mxu0 0
      %379 = vmatprep.subr.bf16.mxu0 0
      %380 = vmatpush1.bf16.msra.mxu0 0
      %381 = vmatprep.subr.bf16.mxu0 0
      %382 = vmatpush1.bf16.msra.mxu0 0
      %383 = vmatprep.subr.bf16.mxu0 0
      %384 = vmatpush1.bf16.msra.mxu0 0
      %385 = vmatprep.subr.bf16.mxu0 0
      %386 = vmatpush1.bf16.msra.mxu0 0
      %387 = vmatprep.subr.bf16.mxu0 0
      %388 = vmatpush1.bf16.msra.mxu0 0
      %389 = vmatprep.subr.bf16.mxu0 0
      %390 = vmatpush1.bf16.msra.mxu0 0
      %391 = vmatprep.mubr.bf16.mxu0 0
      %392 = vmatmul.mubr.bf16.gmra.mrb[0].mxu0 %v357
      %v393 = vpop.f32.mrb[0].mxu0
      %v394 = vadd.f32 %v339, %v393
      %v395 = vpop.f32.mrb[0].mxu0
      %v396 = vpop.f32.mrb[0].mxu0
      %v397 = vpop.f32.mrb[0].mxu0
      %398 = vdwg.mxu0
      %v399 = vld [vmem:[%s2 + $0x20] sm:$0xf]
      %v400 = vld [vmem:[%s2 + $0x24] sm:$0xf]
      %v401 = vld [vmem:[%s2 + $0x28] sm:$0xf]
      %v402 = vld [vmem:[%s2 + $0x2c] sm:$0xf]
      %v407 = vunpack.c.l.b16 %v399
      %v408 = vunpack.c.l.b16 %v400
      %v409 = vunpack.c.l.b16 %v401
      %v410 = vunpack.c.l.b16 %v402
      %v411 = vpack.c.b16 %v408, %v407
      %v412 = vpack.c.b16 %v410, %v409
      %v416 = vsel %vm300, %v269, 0
      %418 = vmatprep.subr.bf16.mxu0 0
      %419 = vmatpush1.bf16.msra.mxu0 %v411
      %420 = vmatprep.subr.bf16.mxu0 0
      %421 = vmatpush1.bf16.msra.mxu0 %v412
      %422 = vmatprep.subr.bf16.mxu0 0
      %423 = vmatpush1.bf16.msra.mxu0 0
      %424 = vmatprep.subr.bf16.mxu0 0
      %425 = vmatpush1.bf16.msra.mxu0 0
      %426 = vmatprep.subr.bf16.mxu0 0
      %427 = vmatpush1.bf16.msra.mxu0 0
      %428 = vmatprep.subr.bf16.mxu0 0
      %429 = vmatpush1.bf16.msra.mxu0 0
      %430 = vmatprep.subr.bf16.mxu0 0
      %431 = vmatpush1.bf16.msra.mxu0 0
      %432 = vmatprep.subr.bf16.mxu0 0
      %433 = vmatpush1.bf16.msra.mxu0 0
      %434 = vmatprep.subr.bf16.mxu0 0
      %435 = vmatpush1.bf16.msra.mxu0 0
      %436 = vmatprep.subr.bf16.mxu0 0
      %437 = vmatpush1.bf16.msra.mxu0 0
      %438 = vmatprep.subr.bf16.mxu0 0
      %439 = vmatpush1.bf16.msra.mxu0 0
      %440 = vmatprep.subr.bf16.mxu0 0
      %441 = vmatpush1.bf16.msra.mxu0 0
      %442 = vmatprep.subr.bf16.mxu0 0
      %443 = vmatpush1.bf16.msra.mxu0 0
      %444 = vmatprep.subr.bf16.mxu0 0
      %445 = vmatpush1.bf16.msra.mxu0 0
      %446 = vmatprep.subr.bf16.mxu0 0
      %447 = vmatpush1.bf16.msra.mxu0 0
      %448 = vmatprep.subr.bf16.mxu0 0
      %449 = vmatpush1.bf16.msra.mxu0 0
      %450 = vmatprep.mubr.bf16.mxu0 0
      %451 = vmatmul.mubr.bf16.gmra.mrb[0].mxu0 %v416
      %v452 = vpop.f32.mrb[0].mxu0
      %v453 = vadd.f32 0.0, %v452
      %v454 = vpop.f32.mrb[0].mxu0
      %v455 = vpop.f32.mrb[0].mxu0
      %v456 = vpop.f32.mrb[0].mxu0
      %457 = vdwg.mxu0
      %v458 = vadd.f32 %v394, %v453
      %v459 = vld [vmem:[%s2 + $0x30] sm:$0xf]
      %v460 = vld [vmem:[%s2 + $0x34] sm:$0xf]
      %v461 = vld [vmem:[%s2 + $0x38] sm:$0xf]
      %v462 = vld [vmem:[%s2 + $0x3c] sm:$0xf]
      %v464 = vunpack.c.l.b16 %v269
      %v465 = vpack.c.b16 %v464, %v464
      %v467 = vshrl.u32 %v465, 16
      %v469 = vshll.u32 %v465, 16
      %v471 = vrot.slane %v469, 1
      %v472 = vor.u32 %v467, %v471
      %v477 = vunpack.c.l.b16 %v459
      %v478 = vunpack.c.l.b16 %v460
      %v479 = vunpack.c.l.b16 %v461
      %v480 = vunpack.c.l.b16 %v462
      %v481 = vpack.c.b16 %v478, %v477
      %v482 = vpack.c.b16 %v480, %v479
      %v486 = vsel %vm300, %v472, 0
      %488 = vmatprep.subr.bf16.mxu0 0
      %489 = vmatpush1.bf16.msra.mxu0 %v481
      %490 = vmatprep.subr.bf16.mxu0 0
      %491 = vmatpush1.bf16.msra.mxu0 %v482
      %492 = vmatprep.subr.bf16.mxu0 0
      %493 = vmatpush1.bf16.msra.mxu0 0
      %494 = vmatprep.subr.bf16.mxu0 0
      %495 = vmatpush1.bf16.msra.mxu0 0
      %496 = vmatprep.subr.bf16.mxu0 0
      %497 = vmatpush1.bf16.msra.mxu0 0
      %498 = vmatprep.subr.bf16.mxu0 0
      %499 = vmatpush1.bf16.msra.mxu0 0
      %500 = vmatprep.subr.bf16.mxu0 0
      %501 = vmatpush1.bf16.msra.mxu0 0
      %502 = vmatprep.subr.bf16.mxu0 0
      %503 = vmatpush1.bf16.msra.mxu0 0
      %504 = vmatprep.subr.bf16.mxu0 0
      %505 = vmatpush1.bf16.msra.mxu0 0
      %506 = vmatprep.subr.bf16.mxu0 0
      %507 = vmatpush1.bf16.msra.mxu0 0
      %508 = vmatprep.subr.bf16.mxu0 0
      %509 = vmatpush1.bf16.msra.mxu0 0
      %510 = vmatprep.subr.bf16.mxu0 0
      %511 = vmatpush1.bf16.msra.mxu0 0
      %512 = vmatprep.subr.bf16.mxu0 0
      %513 = vmatpush1.bf16.msra.mxu0 0
      %514 = vmatprep.subr.bf16.mxu0 0
      %515 = vmatpush1.bf16.msra.mxu0 0
      %516 = vmatprep.subr.bf16.mxu0 0
      %517 = vmatpush1.bf16.msra.mxu0 0
      %518 = vmatprep.subr.bf16.mxu0 0
      %519 = vmatpush1.bf16.msra.mxu0 0
      %520 = vmatprep.mubr.bf16.mxu0 0
      %521 = vmatmul.mubr.bf16.gmra.mrb[0].mxu0 %v486
      %v522 = vpop.f32.mrb[0].mxu0
      %v523 = vadd.f32 0.0, %v522
      %v524 = vpop.f32.mrb[0].mxu0
      %v525 = vpop.f32.mrb[0].mxu0
      %v526 = vpop.f32.mrb[0].mxu0
      %527 = vdwg.mxu0
      %v528 = vadd.f32 %v458, %v523
      %v529 = vld [vmem:[%s3] sm:$0x1]
      %v531 = vlaneseq
      %v532 = vshrl.u32 %v531, 7
      %v533 = vsub.s32 0, %v532
      %v534 = vrot.slane %v529, %v533
      %v536 = vadd.f32 %v528, %v534
      %v537 = vmax.f32 %v536, 0.0
      %v538 = vpack.c.bf16 %v537, %v537
      %vm539 = vcmask 517120
      %540 = vst.msk [vmem:[%s266] sm:$0x3] %vm539, %v538
      %p541 = scmp.lt.s32.totalorder %s19, 1
      %s542 = scalar_select %p541, %s19, 1
      %p543 = scmp.lt.s32.totalorder %s20, 3
      %s544 = scalar_select %p543, %s20, 3
      %s545 = smul.addr %s542, 4
      %s546 = sadd.s32 %s544, %s545
      %s547 = smul.addr %s546, 2
      %s548 = scalar_lea.vmem %s4, %s547
      // Predicated region
      $region37: #{unet_forward.23} parent=35 // pred_check
        %p549 = pneg %p147
      $region38: #{unet_forward.23} parent=35 // pred_check_branch
        %551 = sbr.rel (%p549) target = $region40
      $region39: #{unet_forward.23} parent=35 // pred_region
        _
      $region40: #{unet_forward.23} parent=35 // pred_fallthru
        _
    $region36: #{unet_forward.23} parent=5 // pred_fallthru
      _
    %p552 = scmp.le.s32.totalorder 2, %s10
    // Predicated region
    $region41: #{unet_forward.23} parent=5 // pred_check
      %p553 = pneg %p552
    $region42: #{unet_forward.23} parent=5 // pred_check_branch
      %555 = sbr.rel (%p553) target = $region44
    $region43: #{unet_forward.23} parent=5 // pred_region
      %s556 = ssub.s32 %s10, 2
      // Predicated region
      $region45: #{unet_forward.23} parent=43 // pred_check
        %p557 = pneg %p153
      $region46: #{unet_forward.23} parent=43 // pred_check_branch
        %559 = sbr.rel (%p557) target = $region48
      $region47: #{unet_forward.23} parent=43 // pred_region
        %p560 = scmp.lt.s32.totalorder %s21, 1
        %s561 = scalar_select %p560, %s21, 1
        %p562 = scmp.lt.s32.totalorder %s22, 3
        %s563 = scalar_select %p562, %s22, 3
        %s564 = smul.addr %s561, 4
        %s565 = sadd.s32 %s563, %s564
        %s566 = smul.addr %s565, 2
        %s567 = scalar_lea.vmem %s4, %s566
      $region48: #{unet_forward.23} parent=43 // pred_fallthru
        _
    $region44: #{unet_forward.23} parent=5 // pred_fallthru
      _
  $region6: #{unet_forward.23} parent=0 // loop_footer
    %s14 = sadd.s32 1, %s10
  $region7: #{unet_forward.23} parent=0 // loop_footer_branch
    %9 = sbr.rel target = $region3
  $region8: #{unet_forward.23} parent=0 // loop_exit
    _

// kernel: tile.78
$region0: #{tile.78}
  #allocation0 [shape = 's32[1]{0}', space=sflag, size = 0x4, scoped, tag = 'scoped memory for tile.78']
  %s0 = inlined_call_operand.vmem [shape: f32[3], index: 0, kind: input, shape index: {}]
  %s1 = inlined_call_operand.vmem [shape: f32[4,3], index: 1, kind: output, shape index: {}]
  // Predicated region
  $region2: #{tile.78} parent=0 // pred_check
    _
  $region3: #{tile.78} parent=0 // pred_check_branch
    %3 = sbr.rel (0) target = $region5
  $region4: #{tile.78} parent=0 // pred_region
    _
  $region5: #{tile.78} parent=0 // pred_fallthru
    _
  %v4 = vld [vmem:[%s0] ss:$0 sm:$0xff]
  %5 = vst [vmem:[%s1] sm:$0xf] %v4

// kernel: tile.79
$region0: #{tile.79}
  %s0 = inlined_call_operand.vmem [shape: f32[4,3], index: 0, kind: input, shape index: {}]
  %s1 = inlined_call_operand.vmem [shape: f32[1,12], index: 1, kind: output, shape index: {}]
  $region1: #{tile.79} parent=0
    #allocation0 [shape = 'u8[4096]{0}', space=vmem, size = 0x1000, scoped, tag = 'scoped mem for output reshape']
    #allocation1 [shape = 'u8[4096]{0}', space=vmem, size = 0x1000, scoped, tag = 'scoped mem for input reshape']
    %s3 = sshllo.u32 0, 4
    %v4 = vld [vmem:[%s0] sm:%s3]
    %5 = vst [vmem:[#allocation1] sm:%s3] %v4
    %v6 = vld [vmem:[#allocation1] sm:$0x1]
    %vm7 = vcmask 23552
    %8 = vst.msk [vmem:[#allocation0] sm:$0x1] %vm7, %v6
    %s9 = scalar_lea.vmem [#allocation1], 3
    %v10 = vld [vmem:[%s9] sm:$0x1]
    %11 = vrot.lane.b32.xlu0 %v10, 9
    %v12 = vpop.permute.xlu0 %11
    %vm13 = vcmask 97352
    %14 = vst.msk [vmem:[#allocation0] sm:$0x1] %vm13, %v12
    %s15 = scalar_lea.vmem [#allocation1], 2
    %v16 = vld [vmem:[%s15] sm:$0x1]
    %17 = vrot.lane.b32.xlu0 %v16, 6
    %v18 = vpop.permute.xlu0 %17
    %vm19 = vcmask 72752
    %20 = vst.msk [vmem:[#allocation0] sm:$0x1] %vm19, %v18
    %s21 = scalar_lea.vmem [#allocation1], 1
    %v22 = vld [vmem:[%s21] sm:$0x1]
    %23 = vrot.lane.b32.xlu0 %v22, 3
    %v24 = vpop.permute.xlu0 %23
    %vm25 = vcmask 48152
    %26 = vst.msk [vmem:[#allocation0] sm:$0x1] %vm25, %v24
    %s28 = sshllo.u32 0, 1
    %v30 = vld [vmem:[#allocation0] sm:%s28]
    %s31 = sshllo.u32 0, 1
    %32 = vst [vmem:[%s1] sm:%s31] %v30

// kernel: unet_forward.24
$region0: #{unet_forward.24}
  #allocation0 [shape = 'u32[]', space=smem, size = 0x4, offset = 0x4, fixed_abs, tag = 'smem constant byte address 0x4 - core index']
  #allocation1 [shape = 'u32[144,128]{1,0:T(1,128)}', space=vmem, size = 0x12000, scoped, tag = 'internal scratch']
  %s0 = inlined_call_operand.vmem [shape: bf16[2,9,9,16], index: 0, kind: input, shape index: {}, may-alias: {0,1}]
  %s1 = inlined_call_operand.vmem [shape: bf16[2,9,9,16], index: 1, kind: input, shape index: {}, may-alias: {0,1}]
  %s2 = inlined_call_operand.vmem [shape: bf16[64,64], index: 2, kind: input, shape index: {}]
  %s3 = inlined_call_operand.vmem [shape: f32[1,64], index: 3, kind: input, shape index: {}]
  %s4 = inlined_call_operand.vmem [shape: bf16[2,8,8,64], index: 4, kind: output, shape index: {}]
  %s5 = sld [smem:[#allocation0]]
  $region49: #{unet_forward.24} parent=0
    _
  %s7 = ssub.s32 1, %s5
  %s8 = scalar_select 0, %s7, %s5
  loop: start=0, step=1, limit=18
  $region2: #{unet_forward.24} parent=0 // loop_pre_header
    _
  $region3: #{unet_forward.24} parent=0 // loop_header
    %s10 = sphi 0, %s14
    %p11 = scmp.ge.s32.totalorder %s10, 18
    %s17 = sphi 0, %s29
    %s18 = sphi 0, %s25
    %s19 = sphi 0, %s17
    %s20 = sphi 0, %s18
    %s21 = sphi 0, %s19
    %s22 = sphi 0, %s20
    %s34 = sphi 0, %s36
    %s37 = sphi 0, %s34
    %s38 = sphi 0, %s37
    %s54 = sphi 0, %s38
    %s64 = sphi 0, %s66
    %s67 = sphi 0, %s64
    %s68 = sphi 0, %s67
    %s84 = sphi 0, %s68
    %s88 = sphi 0, %s88
    %s90 = sphi 0, %s88
    %s91 = sphi 0, %s90
    %s105 = sphi 0, %s91
    %s109 = sphi 0, %s109
    %s111 = sphi 0, %s109
    %s112 = sphi 0, %s111
    %s126 = sphi 0, %s112
    %s134 = sphi 0, %s136
    %s137 = sphi 0, %s134
    %s138 = sphi 0, %s137
    %s154 = sphi 0, %s138
  $region4: #{unet_forward.24} parent=0 // loop_header_branch
    %13 = sbr.rel (%p11) target = $region8
  $region5: #{unet_forward.24} parent=0 // loop_body
    %s15 = ssub.s32 %s10, 1
    %s16 = ssub.s32 %s10, 2
    %s23 = sadd.s32 1, %s18
    %p24 = scmp.ge.s32.totalorder %s23, 8
    %s25 = scalar_select %p24, 0, %s23
    %s26 = sadd.s32 1, %s17
    %s27 = scalar_select %p24, %s26, %s17
    %p28 = scmp.ge.s32.totalorder %s27, 2
    %s29 = scalar_select %p28, 0, %s27
    %s30 = ssub.s32 %s17, %s29
    %s31 = ssub.s32 %s18, %s25
    %s32 = sor.u32 %s30, %s31
    %p33 = scmp.eq.s32.totalorder %s32, 0
    %s35 = sadd.s32 %s34, 1
    %s36 = scalar_select %p33, %s34, %s35
    %p39 = pneg %p33
    %p40 = scmp.eq.s32.totalorder %s10, 15
    %p41 = por %p39, %p40
    %p42 = scmp.ne.s32.totalorder %s34, %s37
    %p43 = scmp.eq.s32.totalorder %s10, 0
    %p44 = por %p42, %p43
    %p45 = scmp.ne.s32.totalorder %s34, %s37
    %p46 = scmp.eq.s32.totalorder %s15, 15
    %p47 = por %p45, %p46
    %p48 = scmp.ne.s32.totalorder %s37, %s38
    %p49 = scmp.eq.s32.totalorder %s15, 0
    %p50 = por %p48, %p49
    %p51 = scmp.ne.s32.totalorder %s37, %s38
    %p52 = scmp.eq.s32.totalorder %s16, 15
    %p53 = por %p51, %p52
    %p55 = scmp.ne.s32.totalorder %s38, %s54
    %p56 = scmp.eq.s32.totalorder %s16, 0
    %p57 = por %p55, %p56
    %s58 = sadd.s32 %s18, 1
    %s59 = sadd.s32 %s25, 1
    %s60 = ssub.s32 %s17, %s29
    %s61 = ssub.s32 %s58, %s59
    %s62 = sor.u32 %s60, %s61
    %p63 = scmp.eq.s32.totalorder %s62, 0
    %s65 = sadd.s32 %s64, 1
    %s66 = scalar_select %p63, %s64, %s65
    %p69 = pneg %p63
    %p70 = scmp.eq.s32.totalorder %s10, 15
    %p71 = por %p69, %p70
    %p72 = scmp.ne.s32.totalorder %s64, %s67
    %p73 = scmp.eq.s32.totalorder %s10, 0
    %p74 = por %p72, %p73
    %p75 = scmp.ne.s32.totalorder %s64, %s67
    %p76 = scmp.eq.s32.totalorder %s15, 15
    %p77 = por %p75, %p76
    %p78 = scmp.ne.s32.totalorder %s67, %s68
    %p79 = scmp.eq.s32.totalorder %s15, 0
    %p80 = por %p78, %p79
    %p81 = scmp.ne.s32.totalorder %s67, %s68
    %p82 = scmp.eq.s32.totalorder %s16, 15
    %p83 = por %p81, %p82
    %p85 = scmp.ne.s32.totalorder %s68, %s84
    %p86 = scmp.eq.s32.totalorder %s16, 0
    %p87 = por %p85, %p86
    %s89 = sadd.s32 %s88, 1
    %p92 = scmp.eq.s32.totalorder %s10, 15
    %p93 = scmp.ne.s32.totalorder %s88, %s90
    %p94 = scmp.eq.s32.totalorder %s10, 0
    %p95 = por %p93, %p94
    %p96 = scmp.ne.s32.totalorder %s88, %s90
    %p97 = scmp.eq.s32.totalorder %s15, 15
    %p98 = por %p96, %p97
    %p99 = scmp.ne.s32.totalorder %s90, %s91
    %p100 = scmp.eq.s32.totalorder %s15, 0
    %p101 = por %p99, %p100
    %p102 = scmp.ne.s32.totalorder %s90, %s91
    %p103 = scmp.eq.s32.totalorder %s16, 15
    %p104 = por %p102, %p103
    %p106 = scmp.ne.s32.totalorder %s91, %s105
    %p107 = scmp.eq.s32.totalorder %s16, 0
    %p108 = por %p106, %p107
    %s110 = sadd.s32 %s109, 1
    %p113 = scmp.eq.s32.totalorder %s10, 15
    %p114 = scmp.ne.s32.totalorder %s109, %s111
    %p115 = scmp.eq.s32.totalorder %s10, 0
    %p116 = por %p114, %p115
    %p117 = scmp.ne.s32.totalorder %s109, %s111
    %p118 = scmp.eq.s32.totalorder %s15, 15
    %p119 = por %p117, %p118
    %p120 = scmp.ne.s32.totalorder %s111, %s112
    %p121 = scmp.eq.s32.totalorder %s15, 0
    %p122 = por %p120, %p121
    %p123 = scmp.ne.s32.totalorder %s111, %s112
    %p124 = scmp.eq.s32.totalorder %s16, 15
    %p125 = por %p123, %p124
    %p127 = scmp.ne.s32.totalorder %s112, %s126
    %p128 = scmp.eq.s32.totalorder %s16, 0
    %p129 = por %p127, %p128
    %s130 = ssub.s32 %s17, %s29
    %s131 = ssub.s32 %s18, %s25
    %s132 = sor.u32 %s130, %s131
    %p133 = scmp.eq.s32.totalorder %s132, 0
    %s135 = sadd.s32 %s134, 1
    %s136 = scalar_select %p133, %s134, %s135
    %p139 = pneg %p133
    %p140 = scmp.eq.s32.totalorder %s10, 15
    %p141 = por %p139, %p140
    %p142 = scmp.ne.s32.totalorder %s134, %s137
    %p143 = scmp.eq.s32.totalorder %s10, 0
    %p144 = por %p142, %p143
    %p145 = scmp.ne.s32.totalorder %s134, %s137
    %p146 = scmp.eq.s32.totalorder %s15, 15
    %p147 = por %p145, %p146
    %p148 = scmp.ne.s32.totalorder %s137, %s138
    %p149 = scmp.eq.s32.totalorder %s15, 0
    %p150 = por %p148, %p149
    %p151 = scmp.ne.s32.totalorder %s137, %s138
    %p152 = scmp.eq.s32.totalorder %s16, 15
    %p153 = por %p151, %p152
    %p155 = scmp.ne.s32.totalorder %s138, %s154
    %p156 = scmp.eq.s32.totalorder %s16, 0
    %p157 = por %p155, %p156
    %p158 = scmp.le.s32.totalorder 1, %s10
    %p159 = scmp.lt.s32.totalorder %s10, 17
    %p160 = pnand %p158, %p159
    %p161 = pneg %p160
    // Predicated region
    $region9: #{unet_forward.24} parent=5 // pred_check
      _
    $region10: #{unet_forward.24} parent=5 // pred_check_branch
      %163 = sbr.rel (%p160) target = $region12
    $region11: #{unet_forward.24} parent=5 // pred_region
      %s164 = ssub.s32 %s10, 1
      // Predicated region
      $region13: #{unet_forward.24} parent=11 // pred_check
        %p165 = pneg %p101
      $region14: #{unet_forward.24} parent=11 // pred_check_branch
        %167 = sbr.rel (%p165) target = $region16
      $region15: #{unet_forward.24} parent=11 // pred_region
        _
      $region16: #{unet_forward.24} parent=11 // pred_fallthru
        _
      // Predicated region
      $region17: #{unet_forward.24} parent=11 // pred_check
        %p168 = pneg %p122
      $region18: #{unet_forward.24} parent=11 // pred_check_branch
        %170 = sbr.rel (%p168) target = $region20
      $region19: #{unet_forward.24} parent=11 // pred_region
        _
      $region20: #{unet_forward.24} parent=11 // pred_fallthru
        _
    $region12: #{unet_forward.24} parent=5 // pred_fallthru
      _
    %p171 = scmp.lt.s32.totalorder %s10, 16
    // Predicated region
    $region21: #{unet_forward.24} parent=5 // pred_check
      %p172 = pneg %p171
    $region22: #{unet_forward.24} parent=5 // pred_check_branch
      %174 = sbr.rel (%p172) target = $region24
    $region23: #{unet_forward.24} parent=5 // pred_region
      // Predicated region
      $region25: #{unet_forward.24} parent=23 // pred_check
        %p175 = pneg %p44
      $region26: #{unet_forward.24} parent=23 // pred_check_branch
        %177 = sbr.rel (%p175) target = $region28
      $region27: #{unet_forward.24} parent=23 // pred_region
        %p178 = scmp.lt.s32.totalorder %s17, 1
        %s179 = scalar_select %p178, %s17, 1
        %p180 = scmp.lt.s32.totalorder %s18, 8
        %s181 = scalar_select %p180, %s18, 8
        %s182 = smul.addr %s181, 2
        %s183 = smul.addr %s179, 18
        %s184 = sadd.s32 %s182, %s183
        %s185 = smul.addr %s184, 4
        %s186 = scalar_lea.vmem %s0, %s185
      $region28: #{unet_forward.24} parent=23 // pred_fallthru
        _
      // Predicated region
      $region29: #{unet_forward.24} parent=23 // pred_check
        %p187 = pneg %p74
      $region30: #{unet_forward.24} parent=23 // pred_check_branch
        %189 = sbr.rel (%p187) target = $region32
      $region31: #{unet_forward.24} parent=23 // pred_region
        %s190 = sadd.s32 %s18, 1
        %p191 = scmp.lt.s32.totalorder %s17, 1
        %s192 = scalar_select %p191, %s17, 1
        %p193 = scmp.lt.s32.totalorder %s190, 8
        %s194 = scalar_select %p193, %s190, 8
        %s195 = smul.addr %s194, 2
        %s196 = smul.addr %s192, 18
        %s197 = sadd.s32 %s195, %s196
        %s198 = smul.addr %s197, 4
        %s199 = scalar_lea.vmem %s1, %s198
        %s200 = sadd.s32 %s18, 1
      $region32: #{unet_forward.24} parent=23 // pred_fallthru
        _
    $region24: #{unet_forward.24} parent=5 // pred_fallthru
      _
    %p201 = scmp.le.s32.totalorder 1, %s10
    %p202 = scmp.lt.s32.totalorder %s10, 17
    %p203 = pnand %p201, %p202
    %p204 = pneg %p203
    // Predicated region
    $region33: #{unet_forward.24} parent=5 // pred_check
      _
    $region34: #{unet_forward.24} parent=5 // pred_check_branch
      %206 = sbr.rel (%p203) target = $region36
    $region35: #{unet_forward.24} parent=5 // pred_region
      %s207 = ssub.s32 %s10, 1
      %p208 = scmp.lt.s32.totalorder %s19, 1
      %s209 = scalar_select %p208, %s19, 1
      %p210 = scmp.lt.s32.totalorder %s20, 8
      %s211 = scalar_select %p210, %s20, 8
      %s212 = smul.addr %s211, 2
      %s213 = smul.addr %s209, 18
      %s214 = sadd.s32 %s212, %s213
      %s215 = smul.addr %s214, 4
      %s216 = scalar_lea.vmem %s0, %s215
      %p217 = pneg %p50
      %p218 = pneg %p47
      %s219 = sadd.s32 %s20, 1
      %p220 = scmp.lt.s32.totalorder %s19, 1
      %s221 = scalar_select %p220, %s19, 1
      %p222 = scmp.lt.s32.totalorder %s219, 8
      %s223 = scalar_select %p222, %s219, 8
      %s224 = smul.addr %s223, 2
      %s225 = smul.addr %s221, 18
      %s226 = sadd.s32 %s224, %s225
      %s227 = smul.addr %s226, 4
      %s228 = scalar_lea.vmem %s1, %s227
      %p229 = pneg %p80
      %p230 = pneg %p77
      %p231 = pneg %p101
      %p232 = pneg %p98
      %p233 = pneg %p122
      %p234 = pneg %p119
      %p235 = pneg %p150
      %p236 = pneg %p147
      %p237 = scmp.lt.s32.totalorder %s19, 1
      %s238 = scalar_select %p237, %s19, 1
      %p239 = scmp.lt.s32.totalorder %s20, 7
      %s240 = scalar_select %p239, %s20, 7
      %s241 = smul.addr %s238, 8
      %s242 = sadd.s32 %s240, %s241
      %s243 = smul.addr %s242, 4
      %s244 = scalar_lea.vmem %s4, %s243
      %p245 = scmp.lt.s32.totalorder %s19, 1
      %s246 = scalar_select %p245, %s19, 1
      %p247 = scmp.lt.s32.totalorder %s20, 8
      %s248 = scalar_select %p247, %s20, 8
      %s249 = smul.addr %s248, 2
      %s250 = smul.addr %s246, 18
      %s251 = sadd.s32 %s249, %s250
      %s252 = smul.addr %s251, 4
      %s253 = scalar_lea.vmem %s0, %s252
      %s254 = sadd.s32 %s20, 1
      %p255 = scmp.lt.s32.totalorder %s19, 1
      %s256 = scalar_select %p255, %s19, 1
      %p257 = scmp.lt.s32.totalorder %s254, 8
      %s258 = scalar_select %p257, %s254, 8
      %s259 = smul.addr %s258, 2
      %s260 = smul.addr %s256, 18
      %s261 = sadd.s32 %s259, %s260
      %s262 = smul.addr %s261, 4
      %s263 = scalar_lea.vmem %s1, %s262
      %s264 = sadd.s32 %s20, 1
      %p265 = scmp.lt.s32.totalorder %s19, 1
      %s266 = scalar_select %p265, %s19, 1
      %p267 = scmp.lt.s32.totalorder %s20, 7
      %s268 = scalar_select %p267, %s20, 7
      %s269 = smul.addr %s266, 8
      %s270 = sadd.s32 %s268, %s269
      %s271 = smul.addr %s270, 4
      %s272 = scalar_lea.vmem %s4, %s271
      %v274 = vld [vmem:[%s253] sm:$0xf]
      %v275 = vld [vmem:[%s253 + $0x4] sm:$0x1]
      %v276 = vld [vmem:[%s263] sm:$0xf]
      %v277 = vld [vmem:[%s263 + $0x4] sm:$0x1]
      %v278 = vld [vmem:[%s2] sm:$0xf]
      %v279 = vld [vmem:[%s2 + $0x4] sm:$0xf]
      %v280 = vld [vmem:[%s2 + $0x8] sm:$0xf]
      %v281 = vld [vmem:[%s2 + $0xc] sm:$0xf]
      %v284 = vunpack.c.l.b16 %v274
      %v285 = vunpack.c.l.b16 %v275
      %v286 = vpack.c.b16 %v285, %v284
      %v288 = vshrl.u32 %v286, 16
      %v290 = vshll.u32 %v286, 16
      %v292 = vrot.slane %v290, 1
      %v293 = vor.u32 %v288, %v292
      %v296 = vunpack.c.l.b16 %v280
      %v297 = vunpack.c.l.b16 %v281
      %v298 = vpack.c.b16 %v297, %v296
      %vm300 = vcmask 130048
      %v302 = vsel %vm300, %v293, 0
      %304 = vmatprep.subr.bf16.mxu0 0
      %305 = vmatpush1.bf16.msra.mxu0 %v298
      %306 = vmatprep.subr.bf16.mxu0 0
      %307 = vmatpush1.bf16.msra.mxu0 0
      %308 = vmatprep.subr.bf16.mxu0 0
      %309 = vmatpush1.bf16.msra.mxu0 0
      %310 = vmatprep.subr.bf16.mxu0 0
      %311 = vmatpush1.bf16.msra.mxu0 0
      %312 = vmatprep.subr.bf16.mxu0 0
      %313 = vmatpush1.bf16.msra.mxu0 0
      %314 = vmatprep.subr.bf16.mxu0 0
      %315 = vmatpush1.bf16.msra.mxu0 0
      %316 = vmatprep.subr.bf16.mxu0 0
      %317 = vmatpush1.bf16.msra.mxu0 0
      %318 = vmatprep.subr.bf16.mxu0 0
      %319 = vmatpush1.bf16.msra.mxu0 0
      %320 = vmatprep.subr.bf16.mxu0 0
      %321 = vmatpush1.bf16.msra.mxu0 0
      %322 = vmatprep.subr.bf16.mxu0 0
      %323 = vmatpush1.bf16.msra.mxu0 0
      %324 = vmatprep.subr.bf16.mxu0 0
      %325 = vmatpush1.bf16.msra.mxu0 0
      %326 = vmatprep.subr.bf16.mxu0 0
      %327 = vmatpush1.bf16.msra.mxu0 0
      %328 = vmatprep.subr.bf16.mxu0 0
      %329 = vmatpush1.bf16.msra.mxu0 0
      %330 = vmatprep.subr.bf16.mxu0 0
      %331 = vmatpush1.bf16.msra.mxu0 0
      %332 = vmatprep.subr.bf16.mxu0 0
      %333 = vmatpush1.bf16.msra.mxu0 0
      %334 = vmatprep.subr.bf16.mxu0 0
      %335 = vmatpush1.bf16.msra.mxu0 0
      %336 = vmatprep.mubr.bf16.mxu0 0
      %337 = vmatmul.mubr.bf16.gmra.mrb[0].mxu0 %v302
      %v338 = vpop.f32.mrb[0].mxu0
      %v339 = vadd.f32 0.0, %v338
      %v340 = vpop.f32.mrb[0].mxu0
      %v341 = vpop.f32.mrb[0].mxu0
      %v342 = vpop.f32.mrb[0].mxu0
      %343 = vdwg.mxu0
      %v346 = vunpack.c.l.b16 %v278
      %v347 = vunpack.c.l.b16 %v279
      %v348 = vpack.c.b16 %v347, %v346
      %v351 = vsel %vm300, %v274, 0
      %353 = vmatprep.subr.bf16.mxu0 0
      %354 = vmatpush1.bf16.msra.mxu0 %v348
      %355 = vmatprep.subr.bf16.mxu0 0
      %356 = vmatpush1.bf16.msra.mxu0 0
      %357 = vmatprep.subr.bf16.mxu0 0
      %358 = vmatpush1.bf16.msra.mxu0 0
      %359 = vmatprep.subr.bf16.mxu0 0
      %360 = vmatpush1.bf16.msra.mxu0 0
      %361 = vmatprep.subr.bf16.mxu0 0
      %362 = vmatpush1.bf16.msra.mxu0 0
      %363 = vmatprep.subr.bf16.mxu0 0
      %364 = vmatpush1.bf16.msra.mxu0 0
      %365 = vmatprep.subr.bf16.mxu0 0
      %366 = vmatpush1.bf16.msra.mxu0 0
      %367 = vmatprep.subr.bf16.mxu0 0
      %368 = vmatpush1.bf16.msra.mxu0 0
      %369 = vmatprep.subr.bf16.mxu0 0
      %370 = vmatpush1.bf16.msra.mxu0 0
      %371 = vmatprep.subr.bf16.mxu0 0
      %372 = vmatpush1.bf16.msra.mxu0 0
      %373 = vmatprep.subr.bf16.mxu0 0
      %374 = vmatpush1.bf16.msra.mxu0 0
      %375 = vmatprep.subr.bf16.mxu0 0
      %376 = vmatpush1.bf16.msra.mxu0 0
      %377 = vmatprep.subr.bf16.mxu0 0
      %378 = vmatpush1.bf16.msra.mxu0 0
      %379 = vmatprep.subr.bf16.mxu0 0
      %380 = vmatpush1.bf16.msra.mxu0 0
      %381 = vmatprep.subr.bf16.mxu0 0
      %382 = vmatpush1.bf16.msra.mxu0 0
      %383 = vmatprep.subr.bf16.mxu0 0
      %384 = vmatpush1.bf16.msra.mxu0 0
      %385 = vmatprep.mubr.bf16.mxu0 0
      %386 = vmatmul.mubr.bf16.gmra.mrb[0].mxu0 %v351
      %v387 = vpop.f32.mrb[0].mxu0
      %v388 = vadd.f32 %v339, %v387
      %v389 = vpop.f32.mrb[0].mxu0
      %v390 = vpop.f32.mrb[0].mxu0
      %v391 = vpop.f32.mrb[0].mxu0
      %392 = vdwg.mxu0
      %v393 = vld [vmem:[%s2 + $0x10] sm:$0xf]
      %v394 = vld [vmem:[%s2 + $0x14] sm:$0xf]
      %v397 = vunpack.c.l.b16 %v393
      %v398 = vunpack.c.l.b16 %v394
      %v399 = vpack.c.b16 %v398, %v397
      %v402 = vsel %vm300, %v276, 0
      %404 = vmatprep.subr.bf16.mxu0 0
      %405 = vmatpush1.bf16.msra.mxu0 %v399
      %406 = vmatprep.subr.bf16.mxu0 0
      %407 = vmatpush1.bf16.msra.mxu0 0
      %408 = vmatprep.subr.bf16.mxu0 0
      %409 = vmatpush1.bf16.msra.mxu0 0
      %410 = vmatprep.subr.bf16.mxu0 0
      %411 = vmatpush1.bf16.msra.mxu0 0
      %412 = vmatprep.subr.bf16.mxu0 0
      %413 = vmatpush1.bf16.msra.mxu0 0
      %414 = vmatprep.subr.bf16.mxu0 0
      %415 = vmatpush1.bf16.msra.mxu0 0
      %416 = vmatprep.subr.bf16.mxu0 0
      %417 = vmatpush1.bf16.msra.mxu0 0
      %418 = vmatprep.subr.bf16.mxu0 0
      %419 = vmatpush1.bf16.msra.mxu0 0
      %420 = vmatprep.subr.bf16.mxu0 0
      %421 = vmatpush1.bf16.msra.mxu0 0
      %422 = vmatprep.subr.bf16.mxu0 0
      %423 = vmatpush1.bf16.msra.mxu0 0
      %424 = vmatprep.subr.bf16.mxu0 0
      %425 = vmatpush1.bf16.msra.mxu0 0
      %426 = vmatprep.subr.bf16.mxu0 0
      %427 = vmatpush1.bf16.msra.mxu0 0
      %428 = vmatprep.subr.bf16.mxu0 0
      %429 = vmatpush1.bf16.msra.mxu0 0
      %430 = vmatprep.subr.bf16.mxu0 0
      %431 = vmatpush1.bf16.msra.mxu0 0
      %432 = vmatprep.subr.bf16.mxu0 0
      %433 = vmatpush1.bf16.msra.mxu0 0
      %434 = vmatprep.subr.bf16.mxu0 0
      %435 = vmatpush1.bf16.msra.mxu0 0
      %436 = vmatprep.mubr.bf16.mxu0 0
      %437 = vmatmul.mubr.bf16.gmra.mrb[0].mxu0 %v402
      %v438 = vpop.f32.mrb[0].mxu0
      %v439 = vadd.f32 0.0, %v438
      %v440 = vpop.f32.mrb[0].mxu0
      %v441 = vpop.f32.mrb[0].mxu0
      %v442 = vpop.f32.mrb[0].mxu0
      %443 = vdwg.mxu0
      %v444 = vadd.f32 %v388, %v439
      %v445 = vld [vmem:[%s2 + $0x18] sm:$0xf]
      %v446 = vld [vmem:[%s2 + $0x1c] sm:$0xf]
      %v449 = vunpack.c.l.b16 %v276
      %v450 = vunpack.c.l.b16 %v277
      %v451 = vpack.c.b16 %v450, %v449
      %v453 = vshrl.u32 %v451, 16
      %v455 = vshll.u32 %v451, 16
      %v457 = vrot.slane %v455, 1
      %v458 = vor.u32 %v453, %v457
      %v461 = vunpack.c.l.b16 %v445
      %v462 = vunpack.c.l.b16 %v446
      %v463 = vpack.c.b16 %v462, %v461
      %v466 = vsel %vm300, %v458, 0
      %468 = vmatprep.subr.bf16.mxu0 0
      %469 = vmatpush1.bf16.msra.mxu0 %v463
      %470 = vmatprep.subr.bf16.mxu0 0
      %471 = vmatpush1.bf16.msra.mxu0 0
      %472 = vmatprep.subr.bf16.mxu0 0
      %473 = vmatpush1.bf16.msra.mxu0 0
      %474 = vmatprep.subr.bf16.mxu0 0
      %475 = vmatpush1.bf16.msra.mxu0 0
      %476 = vmatprep.subr.bf16.mxu0 0
      %477 = vmatpush1.bf16.msra.mxu0 0
      %478 = vmatprep.subr.bf16.mxu0 0
      %479 = vmatpush1.bf16.msra.mxu0 0
      %480 = vmatprep.subr.bf16.mxu0 0
      %481 = vmatpush1.bf16.msra.mxu0 0
      %482 = vmatprep.subr.bf16.mxu0 0
      %483 = vmatpush1.bf16.msra.mxu0 0
      %484 = vmatprep.subr.bf16.mxu0 0
      %485 = vmatpush1.bf16.msra.mxu0 0
      %486 = vmatprep.subr.bf16.mxu0 0
      %487 = vmatpush1.bf16.msra.mxu0 0
      %488 = vmatprep.subr.bf16.mxu0 0
      %489 = vmatpush1.bf16.msra.mxu0 0
      %490 = vmatprep.subr.bf16.mxu0 0
      %491 = vmatpush1.bf16.msra.mxu0 0
      %492 = vmatprep.subr.bf16.mxu0 0
      %493 = vmatpush1.bf16.msra.mxu0 0
      %494 = vmatprep.subr.bf16.mxu0 0
      %495 = vmatpush1.bf16.msra.mxu0 0
      %496 = vmatprep.subr.bf16.mxu0 0
      %497 = vmatpush1.bf16.msra.mxu0 0
      %498 = vmatprep.subr.bf16.mxu0 0
      %499 = vmatpush1.bf16.msra.mxu0 0
      %500 = vmatprep.mubr.bf16.mxu0 0
      %501 = vmatmul.mubr.bf16.gmra.mrb[0].mxu0 %v466
      %v502 = vpop.f32.mrb[0].mxu0
      %v503 = vadd.f32 0.0, %v502
      %v504 = vpop.f32.mrb[0].mxu0
      %v505 = vpop.f32.mrb[0].mxu0
      %v506 = vpop.f32.mrb[0].mxu0
      %507 = vdwg.mxu0
      %v508 = vadd.f32 %v444, %v503
      %v509 = vld [vmem:[%s3] sm:$0x1]
      %v511 = vlaneseq
      %v512 = vshrl.u32 %v511, 7
      %v513 = vsub.s32 0, %v512
      %v514 = vrot.slane %v509, %v513
      %v516 = vadd.f32 %v508, %v514
      %v517 = vmax.f32 %v516, 0.0
      %v518 = vpack.c.bf16 %v517, %v517
      %vm519 = vcmask 519168
      %520 = vst.msk [vmem:[%s272] sm:$0xf] %vm519, %v518
      %p521 = scmp.lt.s32.totalorder %s19, 1
      %s522 = scalar_select %p521, %s19, 1
      %p523 = scmp.lt.s32.totalorder %s20, 7
      %s524 = scalar_select %p523, %s20, 7
      %s525 = smul.addr %s522, 8
      %s526 = sadd.s32 %s524, %s525
      %s527 = smul.addr %s526, 4
      %s528 = scalar_lea.vmem %s4, %s527
      // Predicated region
      $region37: #{unet_forward.24} parent=35 // pred_check
        %p529 = pneg %p147
      $region38: #{unet_forward.24} parent=35 // pred_check_branch
        %531 = sbr.rel (%p529) target = $region40
      $region39: #{unet_forward.24} parent=35 // pred_region
        _
      $region40: #{unet_forward.24} parent=35 // pred_fallthru
        _
    $region36: #{unet_forward.24} parent=5 // pred_fallthru
      _
    %p532 = scmp.le.s32.totalorder 2, %s10
    // Predicated region
    $region41: #{unet_forward.24} parent=5 // pred_check
      %p533 = pneg %p532
    $region42: #{unet_forward.24} parent=5 // pred_check_branch
      %535 = sbr.rel (%p533) target = $region44
    $region43: #{unet_forward.24} parent=5 // pred_region
      %s536 = ssub.s32 %s10, 2
      // Predicated region
      $region45: #{unet_forward.24} parent=43 // pred_check
        %p537 = pneg %p153
      $region46: #{unet_forward.24} parent=43 // pred_check_branch
        %539 = sbr.rel (%p537) target = $region48
      $region47: #{unet_forward.24} parent=43 // pred_region
        %p540 = scmp.lt.s32.totalorder %s21, 1
        %s541 = scalar_select %p540, %s21, 1
        %p542 = scmp.lt.s32.totalorder %s22, 7
        %s543 = scalar_select %p542, %s22, 7
        %s544 = smul.addr %s541, 8
        %s545 = sadd.s32 %s543, %s544
        %s546 = smul.addr %s545, 4
        %s547 = scalar_lea.vmem %s4, %s546
      $region48: #{unet_forward.24} parent=43 // pred_fallthru
        _
    $region44: #{unet_forward.24} parent=5 // pred_fallthru
      _
  $region6: #{unet_forward.24} parent=0 // loop_footer
    %s14 = sadd.s32 1, %s10
  $region7: #{unet_forward.24} parent=0 // loop_footer_branch
    %9 = sbr.rel target = $region3
  $region8: #{unet_forward.24} parent=0 // loop_exit
    _

// kernel: unet_forward.25
$region0: #{unet_forward.25}
  #allocation0 [shape = 'u32[]', space=smem, size = 0x4, offset = 0x4, fixed_abs, tag = 'smem constant byte address 0x4 - core index']
  #allocation1 [shape = 'u32[144,128]{1,0:T(1,128)}', space=vmem, size = 0x12000, scoped, tag = 'internal scratch']
  %s0 = inlined_call_operand.vmem [shape: bf16[128,64], index: 0, kind: input, shape index: {}]
  %s1 = inlined_call_operand.vmem [shape: bf16[64,12], index: 1, kind: input, shape index: {}]
  %s2 = inlined_call_operand.vmem [shape: f32[1,12], index: 2, kind: input, shape index: {}]
  %s3 = inlined_call_operand.vmem [shape: f32[128,12], index: 3, kind: output, shape index: {}]
  %s4 = sld [smem:[#allocation0]]
  $region22: #{unet_forward.25} parent=0
    _
  %s6 = ssub.s32 1, %s4
  %s7 = scalar_select 0, %s6, %s4
  // Predicated region
  $region2: #{unet_forward.25} parent=0 // pred_check
    _
  $region3: #{unet_forward.25} parent=0 // pred_check_branch
    %9 = sbr.rel (0) target = $region5
  $region4: #{unet_forward.25} parent=0 // pred_region
    _
  $region5: #{unet_forward.25} parent=0 // pred_fallthru
    _
  // Predicated region
  $region6: #{unet_forward.25} parent=0 // pred_check
    _
  $region7: #{unet_forward.25} parent=0 // pred_check_branch
    %11 = sbr.rel (0) target = $region9
  $region8: #{unet_forward.25} parent=0 // pred_region
    _
  $region9: #{unet_forward.25} parent=0 // pred_fallthru
    _
  // Predicated region
  $region10: #{unet_forward.25} parent=0 // pred_check
    _
  $region11: #{unet_forward.25} parent=0 // pred_check_branch
    %13 = sbr.rel (0) target = $region13
  $region12: #{unet_forward.25} parent=0 // pred_region
    _
  $region13: #{unet_forward.25} parent=0 // pred_fallthru
    _
  %v15 = vld [vmem:[%s0] sm:$0xf]
  %v16 = vld [vmem:[%s0 + $0x4] sm:$0xf]
  %v17 = vld [vmem:[%s0 + $0x8] sm:$0xf]
  %v18 = vld [vmem:[%s0 + $0xc] sm:$0xf]
  %v19 = vld [vmem:[%s0 + $0x10] sm:$0xf]
  %v20 = vld [vmem:[%s0 + $0x14] sm:$0xf]
  %v21 = vld [vmem:[%s0 + $0x18] sm:$0xf]
  %v22 = vld [vmem:[%s0 + $0x1c] sm:$0xf]
  %v23 = vld [vmem:[%s0 + $0x20] sm:$0xf]
  %v24 = vld [vmem:[%s0 + $0x24] sm:$0xf]
  %v25 = vld [vmem:[%s0 + $0x28] sm:$0xf]
  %v26 = vld [vmem:[%s0 + $0x2c] sm:$0xf]
  %v27 = vld [vmem:[%s0 + $0x30] sm:$0xf]
  %v28 = vld [vmem:[%s0 + $0x34] sm:$0xf]
  %v29 = vld [vmem:[%s0 + $0x38] sm:$0xf]
  %v30 = vld [vmem:[%s0 + $0x3c] sm:$0xf]
  %v31 = vld [vmem:[%s1] sm:$0xf]
  %v32 = vld [vmem:[%s1 + $0x4] sm:$0xf]
  %v33 = vld [vmem:[%s1 + $0x8] sm:$0xf]
  %v34 = vld [vmem:[%s1 + $0xc] sm:$0xf]
  %v35 = vld [vmem:[%s1 + $0x10] sm:$0xf]
  %v36 = vld [vmem:[%s1 + $0x14] sm:$0xf]
  %v37 = vld [vmem:[%s1 + $0x18] sm:$0xf]
  %v38 = vld [vmem:[%s1 + $0x1c] sm:$0xf]
  %v39 = vld [vmem:[%s2] sm:$0x1]
  %v41 = vlaneseq
  %v42 = vshrl.u32 %v41, 7
  %v43 = vsub.s32 0, %v42
  %v44 = vrot.slane %v39, %v43
  %v62 = vunpack.c.l.b16 %v15
  %v63 = vunpack.c.l.b16 %v16
  %v64 = vunpack.c.l.b16 %v17
  %v65 = vunpack.c.l.b16 %v18
  %v66 = vunpack.c.l.b16 %v19
  %v67 = vunpack.c.l.b16 %v20
  %v68 = vunpack.c.l.b16 %v21
  %v69 = vunpack.c.l.b16 %v22
  %v70 = vunpack.c.l.b16 %v23
  %v71 = vunpack.c.l.b16 %v24
  %v72 = vunpack.c.l.b16 %v25
  %v73 = vunpack.c.l.b16 %v26
  %v74 = vunpack.c.l.b16 %v27
  %v75 = vunpack.c.l.b16 %v28
  %v76 = vunpack.c.l.b16 %v29
  %v77 = vunpack.c.l.b16 %v30
  %v78 = vpack.c.b16 %v63, %v62
  %v79 = vpack.c.b16 %v65, %v64
  %v80 = vpack.c.b16 %v67, %v66
  %v81 = vpack.c.b16 %v69, %v68
  %v82 = vpack.c.b16 %v71, %v70
  %v83 = vpack.c.b16 %v73, %v72
  %v84 = vpack.c.b16 %v75, %v74
  %v85 = vpack.c.b16 %v77, %v76
  %v94 = vunpack.c.l.b16 %v31
  %v95 = vunpack.c.l.b16 %v32
  %v96 = vunpack.c.l.b16 %v33
  %v97 = vunpack.c.l.b16 %v34
  %v98 = vunpack.c.l.b16 %v35
  %v99 = vunpack.c.l.b16 %v36
  %v100 = vunpack.c.l.b16 %v37
  %v101 = vunpack.c.l.b16 %v38
  %v102 = vpack.c.b16 %v95, %v94
  %v103 = vpack.c.b16 %v97, %v96
  %v104 = vpack.c.b16 %v99, %v98
  %v105 = vpack.c.b16 %v101, %v100
  %vm110 = vcmask 523264
  %v112 = vsel %vm110, %v78, 0
  %v115 = vsel %vm110, %v79, 0
  %v118 = vsel %vm110, %v80, 0
  %v121 = vsel %vm110, %v81, 0
  %v124 = vsel %vm110, %v82, 0
  %v127 = vsel %vm110, %v83, 0
  %v130 = vsel %vm110, %v84, 0
  %v133 = vsel %vm110, %v85, 0
  %135 = vmatprep.subr.bf16.mxu0 0
  %136 = vmatpush1.bf16.msra.mxu0 %v102
  %137 = vmatprep.subr.bf16.mxu0 0
  %138 = vmatpush1.bf16.msra.mxu0 %v103
  %139 = vmatprep.subr.bf16.mxu0 0
  %140 = vmatpush1.bf16.msra.mxu0 %v104
  %141 = vmatprep.subr.bf16.mxu0 0
  %142 = vmatpush1.bf16.msra.mxu0 %v105
  %143 = vmatprep.subr.bf16.mxu0 0
  %144 = vmatpush1.bf16.msra.mxu0 0
  %145 = vmatprep.subr.bf16.mxu0 0
  %146 = vmatpush1.bf16.msra.mxu0 0
  %147 = vmatprep.subr.bf16.mxu0 0
  %148 = vmatpush1.bf16.msra.mxu0 0
  %149 = vmatprep.subr.bf16.mxu0 0
  %150 = vmatpush1.bf16.msra.mxu0 0
  %151 = vmatprep.subr.bf16.mxu0 0
  %152 = vmatpush1.bf16.msra.mxu0 0
  %153 = vmatprep.subr.bf16.mxu0 0
  %154 = vmatpush1.bf16.msra.mxu0 0
  %155 = vmatprep.subr.bf16.mxu0 0
  %156 = vmatpush1.bf16.msra.mxu0 0
  %157 = vmatprep.subr.bf16.mxu0 0
  %158 = vmatpush1.bf16.msra.mxu0 0
  %159 = vmatprep.subr.bf16.mxu0 0
  %160 = vmatpush1.bf16.msra.mxu0 0
  %161 = vmatprep.subr.bf16.mxu0 0
  %162 = vmatpush1.bf16.msra.mxu0 0
  %163 = vmatprep.subr.bf16.mxu0 0
  %164 = vmatpush1.bf16.msra.mxu0 0
  %165 = vmatprep.subr.bf16.mxu0 0
  %166 = vmatpush1.bf16.msra.mxu0 0
  %167 = vmatprep.mubr.bf16.mxu0 0
  %168 = vmatmul.mubr.bf16.gmra.mrb[0].mxu0 %v112
  %v169 = vpop.f32.mrb[0].mxu0
  %v170 = vadd.f32 %v44, %v169
  %v171 = vpop.f32.mrb[0].mxu0
  %v172 = vpop.f32.mrb[0].mxu0
  %v173 = vadd.f32 %v44, %v172
  %v174 = vpop.f32.mrb[0].mxu0
  %175 = vmatprep.mubr.bf16.mxu0 0
  %176 = vmatmul.mubr.bf16.gmra.mrb[0].mxu0 %v115
  %v177 = vpop.f32.mrb[0].mxu0
  %v178 = vadd.f32 %v44, %v177
  %v179 = vpop.f32.mrb[0].mxu0
  %v180 = vpop.f32.mrb[0].mxu0
  %v181 = vadd.f32 %v44, %v180
  %v182 = vpop.f32.mrb[0].mxu0
  %183 = vmatprep.mubr.bf16.mxu0 0
  %184 = vmatmul.mubr.bf16.gmra.mrb[0].mxu0 %v118
  %v185 = vpop.f32.mrb[0].mxu0
  %v186 = vadd.f32 %v44, %v185
  %v187 = vpop.f32.mrb[0].mxu0
  %v188 = vpop.f32.mrb[0].mxu0
  %v189 = vadd.f32 %v44, %v188
  %v190 = vpop.f32.mrb[0].mxu0
  %191 = vmatprep.mubr.bf16.mxu0 0
  %192 = vmatmul.mubr.bf16.gmra.mrb[0].mxu0 %v121
  %v193 = vpop.f32.mrb[0].mxu0
  %v194 = vadd.f32 %v44, %v193
  %v195 = vpop.f32.mrb[0].mxu0
  %v196 = vpop.f32.mrb[0].mxu0
  %v197 = vadd.f32 %v44, %v196
  %v198 = vpop.f32.mrb[0].mxu0
  %199 = vmatprep.mubr.bf16.mxu0 0
  %200 = vmatmul.mubr.bf16.gmra.mrb[0].mxu0 %v124
  %v201 = vpop.f32.mrb[0].mxu0
  %v202 = vadd.f32 %v44, %v201
  %v203 = vpop.f32.mrb[0].mxu0
  %v204 = vpop.f32.mrb[0].mxu0
  %v205 = vadd.f32 %v44, %v204
  %v206 = vpop.f32.mrb[0].mxu0
  %207 = vmatprep.mubr.bf16.mxu0 0
  %208 = vmatmul.mubr.bf16.gmra.mrb[0].mxu0 %v127
  %v209 = vpop.f32.mrb[0].mxu0
  %v210 = vadd.f32 %v44, %v209
  %v211 = vpop.f32.mrb[0].mxu0
  %v212 = vpop.f32.mrb[0].mxu0
  %v213 = vadd.f32 %v44, %v212
  %v214 = vpop.f32.mrb[0].mxu0
  %215 = vmatprep.mubr.bf16.mxu0 0
  %216 = vmatmul.mubr.bf16.gmra.mrb[0].mxu0 %v130
  %v217 = vpop.f32.mrb[0].mxu0
  %v218 = vadd.f32 %v44, %v217
  %v219 = vpop.f32.mrb[0].mxu0
  %v220 = vpop.f32.mrb[0].mxu0
  %v221 = vadd.f32 %v44, %v220
  %v222 = vpop.f32.mrb[0].mxu0
  %223 = vmatprep.mubr.bf16.mxu0 0
  %224 = vmatmul.mubr.bf16.gmra.mrb[0].mxu0 %v133
  %v225 = vpop.f32.mrb[0].mxu0
  %v226 = vadd.f32 %v44, %v225
  %v227 = vpop.f32.mrb[0].mxu0
  %v228 = vpop.f32.mrb[0].mxu0
  %v229 = vadd.f32 %v44, %v228
  %v230 = vpop.f32.mrb[0].mxu0
  %231 = vdwg.mxu0
  %vm232 = vcmask 97280
  %233 = vst.msk [vmem:[%s3] sm:$0xff] %vm232, %v170
  %234 = vst.msk [vmem:[%s3 + $0x8] sm:$0xff] %vm232, %v173
  %235 = vst.msk [vmem:[%s3 + $0x10] sm:$0xff] %vm232, %v178
  %236 = vst.msk [vmem:[%s3 + $0x18] sm:$0xff] %vm232, %v181
  %237 = vst.msk [vmem:[%s3 + $0x20] sm:$0xff] %vm232, %v186
  %238 = vst.msk [vmem:[%s3 + $0x28] sm:$0xff] %vm232, %v189
  %239 = vst.msk [vmem:[%s3 + $0x30] sm:$0xff] %vm232, %v194
  %240 = vst.msk [vmem:[%s3 + $0x38] sm:$0xff] %vm232, %v197
  %241 = vst.msk [vmem:[%s3 + $0x40] sm:$0xff] %vm232, %v202
  %242 = vst.msk [vmem:[%s3 + $0x48] sm:$0xff] %vm232, %v205
  %243 = vst.msk [vmem:[%s3 + $0x50] sm:$0xff] %vm232, %v210
  %244 = vst.msk [vmem:[%s3 + $0x58] sm:$0xff] %vm232, %v213
  %245 = vst.msk [vmem:[%s3 + $0x60] sm:$0xff] %vm232, %v218
  %246 = vst.msk [vmem:[%s3 + $0x68] sm:$0xff] %vm232, %v221
  %247 = vst.msk [vmem:[%s3 + $0x70] sm:$0xff] %vm232, %v226
  %248 = vst.msk [vmem:[%s3 + $0x78] sm:$0xff] %vm232, %v229
  // Predicated region
  $region14: #{unet_forward.25} parent=0 // pred_check
    _
  $region15: #{unet_forward.25} parent=0 // pred_check_branch
    %250 = sbr.rel (0) target = $region17
  $region16: #{unet_forward.25} parent=0 // pred_region
    _
  $region17: #{unet_forward.25} parent=0 // pred_fallthru
    _
  // Predicated region
  $region18: #{unet_forward.25} parent=0 // pred_check
    _
  $region19: #{unet_forward.25} parent=0 // pred_check_branch
    %252 = sbr.rel (0) target = $region21
  $region20: #{unet_forward.25} parent=0 // pred_region
    _
  $region21: #{unet_forward.25} parent=0 // pred_fallthru
    _

</llo_original>
